<compile_context>
chip_gen: v6e
topology: v6e:2x2x1
jax: 0.10.0
libtpu: 0.0.40
codegen_flags: <defaults>
</compile_context>

<pallas_src>
import numpy as np
import jax
import jax.numpy as jnp
from jax.experimental import pallas as pl
from jax.experimental.pallas import tpu as pltpu


# ----------------------------------------------------------------------------
# Host-side constants: per-tap 0/1 routing matrices.
# ----------------------------------------------------------------------------
def _conv_tap_routing(n, hin, win):
    """Conv2d(k=3, s=2, p=1).  Returns (9, n*hin*win, n*ho*wo) 0/1 matrices in
    right-multiply form: column (n, ho, wo) of tap (kh, kw) picks input pixel
    (h, w) = (2*ho+kh-1, 2*wo+kw-1); out-of-range taps == zero padding."""
    ho, wo = hin // 2, win // 2
    eye_n = np.eye(n, dtype=np.float32)
    mats = []
    for kh in range(3):
        for kw in range(3):
            r = np.zeros((hin * win, ho * wo), np.float32)
            for oh in range(ho):
                h = 2 * oh + kh - 1
                if h < 0 or h >= hin:
                    continue
                for ow in range(wo):
                    w = 2 * ow + kw - 1
                    if w < 0 or w >= win:
                        continue
                    r[h * win + w, oh * wo + ow] = 1.0
            mats.append(np.kron(eye_n, r))
    return np.stack(mats)


def _convT_tap_routing(n, hin, win):
    """ConvTranspose2d(k=3, s=2, p=1, output_padding=1): out spatial = (2*hin, 2*win).
    Sub-pixel scatter: output (oh, ow) receives tap (kh, kw) from input
    (ih, iw) = ((oh+1-kh)/2, (ow+1-kw)/2) when integral and in range."""
    hout, wout = 2 * hin, 2 * win
    eye_n = np.eye(n, dtype=np.float32)
    mats = []
    for kh in range(3):
        for kw in range(3):
            r = np.zeros((hin * win, hout * wout), np.float32)
            for oh in range(hout):
                th = oh + 1 - kh
                if th % 2 != 0:
                    continue
                ih = th // 2
                if ih < 0 or ih >= hin:
                    continue
                for ow in range(wout):
                    tw = ow + 1 - kw
                    if tw % 2 != 0:
                        continue
                    iw = tw // 2
                    if iw < 0 or iw >= win:
                        continue
                    r[ih * win + iw, oh * wout + ow] = 1.0
            mats.append(np.kron(eye_n, r))
    return np.stack(mats)


# ----------------------------------------------------------------------------
# BN folding + per-layer kernel operands (host side, eager).
# ----------------------------------------------------------------------------
def _fold_bn(bias, bn):
    """Fold conv bias + eval-mode BatchNorm into per-output-channel (scale, shift)."""
    if bn is None:
        return jnp.ones_like(bias), bias
    gamma, beta, mean, var, eps = bn
    s = gamma / jnp.sqrt(var + eps)
    return s, (bias - mean) * s + beta


def _conv_layer_operands(w, b, bn, n, hin, win):
    """nn.Conv2d(3x3, stride 2, pad 1): w (Cout, Cin, 3, 3) -> (routing, taps, shift)."""
    cout = w.shape[0]
    scale, shift = _fold_bn(b, bn)
    taps = jnp.stack([w[:, :, kh, kw] * scale[:, None]
                      for kh in range(3) for kw in range(3)])          # (9, Cout, Cin)
    route = _conv_tap_routing(n, hin, win)                             # (9, N*S, N*Y)
    return (jnp.asarray(route, jnp.bfloat16),
            taps.astype(jnp.bfloat16),
            shift.reshape(cout, 1).astype(jnp.float32))


def _convT_layer_operands(w, b, bn, n, hin, win):
    """nn.ConvTranspose2d(3x3, stride 2, pad 1, out_pad 1): w (Cin, Cout, 3, 3)."""
    cout = w.shape[1]
    scale, shift = _fold_bn(b, bn)
    taps = jnp.stack([w[:, :, kh, kw].T * scale[:, None]
                      for kh in range(3) for kw in range(3)])          # (9, Cout, Cin)
    route = _convT_tap_routing(n, hin, win)                            # (9, N*S, N*Y)
    return (jnp.asarray(route, jnp.bfloat16),
            taps.astype(jnp.bfloat16),
            shift.reshape(cout, 1).astype(jnp.float32))


def make_autoencoder_ops(params, n, hh, ww):
    """Eagerly build the 18 kernel operands (6 layers x (route, taps, shift))."""
    ops = []
    ops += _conv_layer_operands(*params["enc1"], params["bn_e1"], n, hh, ww)
    ops += _conv_layer_operands(*params["enc2"], params["bn_e2"], n, hh // 2, ww // 2)
    ops += _conv_layer_operands(*params["enc3"], params["bn_e3"], n, hh // 4, ww // 4)
    ops += _convT_layer_operands(*params["dec1"], params["bn_d1"], n, hh // 8, ww // 8)
    ops += _convT_layer_operands(*params["dec2"], params["bn_d2"], n, hh // 4, ww // 4)
    ops += _convT_layer_operands(*params["dec3"], None, n, hh // 2, ww // 2)
    return tuple(ops)


# ----------------------------------------------------------------------------
# Pallas kernel: whole forward pass, everything VMEM-resident.
# ----------------------------------------------------------------------------
def _tap_layer(x, route_ref, tap_ref, shift_ref, act, route_first):
    """One fused (transposed-)conv + folded-BN affine + activation.

    x:         (Cin,  M_in)     f32/bf16 value
    route_ref: (9, M_in, M_out) bf16 0/1 routing (stride/pad/sub-pixel scatter)
    tap_ref:   (9, Cout, Cin)   bf16 tap weights, BN scale folded in
    shift_ref: (Cout, 1)        f32 folded conv-bias + BN shift
    returns    (Cout, M_out)    f32
    """
    m_out = route_ref.shape[2]
    cout = tap_ref.shape[1]
    xb = x.astype(jnp.bfloat16)
    acc = jnp.zeros((cout, m_out), jnp.float32)
    for t in range(9):                      # static unroll: 18 small 2-D MXU matmuls
        r = route_ref[t]
        w = tap_ref[t]
        if route_first:                     # encoder: spatial shrinks -> route first
            xr = jnp.dot(xb, r, preferred_element_type=jnp.float32)        # (Cin, M_out)
            acc = acc + jnp.dot(w, xr.astype(jnp.bfloat16),
                                preferred_element_type=jnp.float32)
        else:                               # decoder: spatial grows -> channels first
            wx = jnp.dot(w, xb, preferred_element_type=jnp.float32)        # (Cout, M_in)
            acc = acc + jnp.dot(wx.astype(jnp.bfloat16), r,
                                preferred_element_type=jnp.float32)
    y = acc + shift_ref[...]                # per-output-channel affine (f32, VPU)
    if act == "leaky_relu":
        y = jnp.where(y >= 0.0, y, 0.2 * y)
    elif act == "tanh":
        y = jnp.tanh(y)
    return y


def _autoencoder_kernel(x_ref,
                        r1, w1, s1, r2, w2, s2, r3, w3, s3,
                        r4, w4, s4, r5, w5, s5, r6, w6, s6,
                        enc_ref, dec_ref):
    h = x_ref[...]
    # encoder: Conv2d -> BN -> LeakyReLU(0.2) (Dropout(0.1) == identity in eval mode)
    h = _tap_layer(h, r1, w1, s1, "leaky_relu", True)
    h = _tap_layer(h, r2, w2, s2, "leaky_relu", True)
    h = _tap_layer(h, r3, w3, s3, "leaky_relu", True)
    enc_ref[...] = h.astype(enc_ref.dtype)
    # decoder: ConvTranspose2d -> BN -> LeakyReLU(0.2); last layer -> Tanh
    d = _tap_layer(h, r4, w4, s4, "leaky_relu", False)
    d = _tap_layer(d, r5, w5, s5, "leaky_relu", False)
    d = _tap_layer(d, r6, w6, s6, "tanh", False)
    dec_ref[...] = d.astype(dec_ref.dtype)


# ----------------------------------------------------------------------------
# Forward pass (mirrors Autoencoder.forward, NCHW in / NCHW out).
# ----------------------------------------------------------------------------
@jax.jit
def _forward_impl(x, ops):
    n, cin, hh, ww = x.shape
    c_lat = ops[7].shape[1]                 # enc3 taps: (9, Cout, Cin) -> 32
    c_out = ops[16].shape[1]                # dec3 taps -> 3
    he, we = hh // 8, ww // 8

    # channel-major, flat batch*spatial on the lane axis (done once, outside kernel)
    x_cm = x.transpose(1, 0, 2, 3).reshape(cin, n * hh * ww).astype(jnp.bfloat16)

    vmem = pl.BlockSpec(memory_space=pltpu.MemorySpace.VMEM)
    enc_cm, dec_cm = pl.pallas_call(
        _autoencoder_kernel,
        out_shape=(jax.ShapeDtypeStruct((c_lat, n * he * we), jnp.float32),
                   jax.ShapeDtypeStruct((c_out, n * hh * ww), jnp.float32)),
        in_specs=[vmem] * (1 + len(ops)),
        out_specs=(vmem, vmem),
    )(x_cm, *ops)

    encoded = enc_cm.reshape(c_lat, n, he, we).transpose(1, 0, 2, 3)
    decoded = dec_cm.reshape(c_out, n, hh, ww).transpose(1, 0, 2, 3)
    return encoded, decoded


def autoencoder_forward(params, x):
    n, cin, hh, ww = x.shape
    assert cin == 3 and hh % 8 == 0 and ww % 8 == 0, x.shape
    ops = make_autoencoder_ops(params, n, hh, ww)
    return _forward_impl(x, ops)


# ----------------------------------------------------------------------------
# Parameter construction (deterministic, PyTorch-like fan-in uniform init).
# ----------------------------------------------------------------------------
def _init_conv(key, cout, cin, k):
    fan_in = cin * k * k
    bound = 1.0 / (fan_in ** 0.5)
    kw_, kb_ = jax.random.split(key)
    w = jax.random.uniform(kw_, (cout, cin, k, k), jnp.float32, -bound, bound)
    b = jax.random.uniform(kb_, (cout,), jnp.float32, -bound, bound)
    return w, b


def _init_convT(key, cin, cout, k):
    fan_in = cout * k * k          # PyTorch ConvTranspose2d uses weight.size(1)*k*k
    bound = 1.0 / (fan_in ** 0.5)
    kw_, kb_ = jax.random.split(key)
    w = jax.random.uniform(kw_, (cin, cout, k, k), jnp.float32, -bound, bound)
    b = jax.random.uniform(kb_, (cout,), jnp.float32, -bound, bound)
    return w, b


def _init_bn(c, eps=1e-5):
    return (jnp.ones((c,), jnp.float32), jnp.zeros((c,), jnp.float32),
            jnp.zeros((c,), jnp.float32), jnp.ones((c,), jnp.float32), eps)


def init_autoencoder_params(key):
    keys = jax.random.split(key, 6)
    return {
        "enc1": _init_conv(keys[0], 16, 3, 3), "bn_e1": _init_bn(16),
        "enc2": _init_conv(keys[1], 32, 16, 3), "bn_e2": _init_bn(32),
        "enc3": _init_conv(keys[2], 32, 32, 3), "bn_e3": _init_bn(32),
        "dec1": _init_convT(keys[3], 32, 32, 3), "bn_d1": _init_bn(32),
        "dec2": _init_convT(keys[4], 32, 16, 3), "bn_d2": _init_bn(16),
        "dec3": _init_convT(keys[5], 16, 3, 3),
    }


# ----------------------------------------------------------------------------
# Pure-XLA reference (f32) for a numerical sanity check.
# ----------------------------------------------------------------------------
def _reference_forward(params, x):
    def bn_act(y, bn, act):
        if bn is not None:
            gamma, beta, mean, var, eps = bn
            inv = gamma / jnp.sqrt(var + eps)
            y = (y - mean.reshape(1, -1, 1, 1)) * inv.reshape(1, -1, 1, 1) \
                + beta.reshape(1, -1, 1, 1)
        return jnp.where(y >= 0, y, 0.2 * y) if act == "leaky_relu" else jnp.tanh(y)

    def conv(x, w, b, bn, act):
        y = jax.lax.conv_general_dilated(
            x, w, window_strides=(2, 2), padding=((1, 1), (1, 1)),
            dimension_numbers=("NCHW", "OIHW", "NCHW"))
        return bn_act(y + b.reshape(1, -1, 1, 1), bn, act)

    def convT(x, w, b, bn, act):
        w_eq = jnp.flip(w, axis=(2, 3)).transpose(1, 0, 2, 3)      # (Cout, Cin, 3, 3)
        y = jax.lax.conv_general_dilated(
            x, w_eq, window_strides=(1, 1), padding=((1, 2), (1, 2)),
            lhs_dilation=(2, 2), dimension_numbers=("NCHW", "OIHW", "NCHW"))
        return bn_act(y + b.reshape(1, -1, 1, 1), bn, act)

    h = conv(x, *params["enc1"], params["bn_e1"], "leaky_relu")
    h = conv(h, *params["enc2"], params["bn_e2"], "leaky_relu")
    enc = conv(h, *params["enc3"], params["bn_e3"], "leaky_relu")
    d = convT(enc, *params["dec1"], params["bn_d1"], "leaky_relu")
    d = convT(d, *params["dec2"], params["bn_d2"], "leaky_relu")
    dec = convT(d, *params["dec3"], None, "tanh")
    return enc, dec


if __name__ == "__main__":
    key = jax.random.PRNGKey(0)
    k_params, k_x = jax.random.split(key)
    params = init_autoencoder_params(k_params)

    # small NCHW input consistent with the module (Conv2d expects 3 input channels)
    x = jax.random.normal(k_x, (2, 3, 16, 16), jnp.float32)

    encoded, decoded = autoencoder_forward(params, x)
    jax.block_until_ready(encoded)
    jax.block_until_ready(decoded)

    assert encoded.shape == (2, 32, 2, 2), encoded.shape
    assert decoded.shape == (2, 3, 16, 16), decoded.shape
    assert bool(jnp.all(jnp.isfinite(encoded))) and bool(jnp.all(jnp.isfinite(decoded)))

    # numerical sanity check vs. a pure-XLA f32 reference (bf16 MXU operands -> loose tol)
    enc_ref, dec_ref = _reference_forward(params, x)
    np.testing.assert_allclose(np.asarray(encoded), np.asarray(enc_ref),
                               atol=5e-2, rtol=5e-2)
    np.testing.assert_allclose(np.asarray(decoded), np.asarray(dec_ref),
                               atol=5e-2, rtol=5e-2)

    print("KERNEL_OK")
</pallas_src>

<mosaic_0001>
module attributes {stable_mosaic.version = 11 : i64} {
  func.func @_autoencoder_kernel(%arg0: memref<3x512xbf16, #tpu.memory_space<vmem>>, %arg1: memref<9x512x128xbf16, #tpu.memory_space<vmem>>, %arg2: memref<9x16x3xbf16, #tpu.memory_space<vmem>>, %arg3: memref<16x1xf32, #tpu.memory_space<vmem>>, %arg4: memref<9x128x32xbf16, #tpu.memory_space<vmem>>, %arg5: memref<9x32x16xbf16, #tpu.memory_space<vmem>>, %arg6: memref<32x1xf32, #tpu.memory_space<vmem>>, %arg7: memref<9x32x8xbf16, #tpu.memory_space<vmem>>, %arg8: memref<9x32x32xbf16, #tpu.memory_space<vmem>>, %arg9: memref<32x1xf32, #tpu.memory_space<vmem>>, %arg10: memref<9x8x32xbf16, #tpu.memory_space<vmem>>, %arg11: memref<9x32x32xbf16, #tpu.memory_space<vmem>>, %arg12: memref<32x1xf32, #tpu.memory_space<vmem>>, %arg13: memref<9x32x128xbf16, #tpu.memory_space<vmem>>, %arg14: memref<9x16x32xbf16, #tpu.memory_space<vmem>>, %arg15: memref<16x1xf32, #tpu.memory_space<vmem>>, %arg16: memref<9x128x512xbf16, #tpu.memory_space<vmem>>, %arg17: memref<9x3x16xbf16, #tpu.memory_space<vmem>>, %arg18: memref<3x1xf32, #tpu.memory_space<vmem>>, %arg19: memref<32x8xf32, #tpu.memory_space<vmem>>, %arg20: memref<3x512xf32, #tpu.memory_space<vmem>>) attributes {dimension_semantics = [], scalar_prefetch = 0 : i64, scratch_operands = 0 : i64, tpu.core_type = #tpu.core_type<tc>} {
    %c0 = arith.constant 0 : index
    %c0_0 = arith.constant 0 : index
    %0 = vector.load %arg0[%c0, %c0_0] : memref<3x512xbf16, #tpu.memory_space<vmem>>, vector<3x512xbf16>
    %cst = arith.constant 0.000000e+00 : f32
    %1 = vector.broadcast %cst : f32 to vector<16x128xf32>
    %c0_1 = arith.constant 0 : index
    %c0_2 = arith.constant 0 : index
    %c0_3 = arith.constant 0 : index
    %2 = vector.load %arg1[%c0_1, %c0_2, %c0_3] : memref<9x512x128xbf16, #tpu.memory_space<vmem>>, vector<1x512x128xbf16>
    %3 = vector.shape_cast %2 : vector<1x512x128xbf16> to vector<512x128xbf16>
    %c0_4 = arith.constant 0 : index
    %c0_5 = arith.constant 0 : index
    %c0_6 = arith.constant 0 : index
    %4 = vector.load %arg2[%c0_4, %c0_5, %c0_6] : memref<9x16x3xbf16, #tpu.memory_space<vmem>>, vector<1x16x3xbf16>
    %5 = vector.shape_cast %4 : vector<1x16x3xbf16> to vector<16x3xbf16>
    %cst_7 = arith.constant dense<0.000000e+00> : vector<3x128xf32>
    %6 = tpu.matmul %0, %3, %cst_7 {dimension_numbers = #tpu.dot_dimension_numbers<[1], [0], [0], [1], [0, 0, 1, 1], [], []>} : vector<3x512xbf16>, vector<512x128xbf16>, vector<3x128xf32> -> vector<3x128xf32>
    %7 = arith.truncf %6 : vector<3x128xf32> to vector<3x128xbf16>
    %cst_8 = arith.constant dense<0.000000e+00> : vector<16x128xf32>
    %8 = tpu.matmul %5, %7, %cst_8 {dimension_numbers = #tpu.dot_dimension_numbers<[1], [0], [0], [1], [0, 0, 1, 1], [], []>} : vector<16x3xbf16>, vector<3x128xbf16>, vector<16x128xf32> -> vector<16x128xf32>
    %9 = arith.addf %1, %8 : vector<16x128xf32>
    %c1 = arith.constant 1 : index
    %c0_9 = arith.constant 0 : index
    %c0_10 = arith.constant 0 : index
    %10 = vector.load %arg1[%c1, %c0_9, %c0_10] : memref<9x512x128xbf16, #tpu.memory_space<vmem>>, vector<1x512x128xbf16>
    %11 = vector.shape_cast %10 : vector<1x512x128xbf16> to vector<512x128xbf16>
    %c1_11 = arith.constant 1 : index
    %c0_12 = arith.constant 0 : index
    %c0_13 = arith.constant 0 : index
    %12 = vector.load %arg2[%c1_11, %c0_12, %c0_13] : memref<9x16x3xbf16, #tpu.memory_space<vmem>>, vector<1x16x3xbf16>
    %13 = vector.shape_cast %12 : vector<1x16x3xbf16> to vector<16x3xbf16>
    %cst_14 = arith.constant dense<0.000000e+00> : vector<3x128xf32>
    %14 = tpu.matmul %0, %11, %cst_14 {dimension_numbers = #tpu.dot_dimension_numbers<[1], [0], [0], [1], [0, 0, 1, 1], [], []>} : vector<3x512xbf16>, vector<512x128xbf16>, vector<3x128xf32> -> vector<3x128xf32>
    %15 = arith.truncf %14 : vector<3x128xf32> to vector<3x128xbf16>
    %cst_15 = arith.constant dense<0.000000e+00> : vector<16x128xf32>
    %16 = tpu.matmul %13, %15, %cst_15 {dimension_numbers = #tpu.dot_dimension_numbers<[1], [0], [0], [1], [0, 0, 1, 1], [], []>} : vector<16x3xbf16>, vector<3x128xbf16>, vector<16x128xf32> -> vector<16x128xf32>
    %17 = arith.addf %9, %16 : vector<16x128xf32>
    %c2 = arith.constant 2 : index
    %c0_16 = arith.constant 0 : index
    %c0_17 = arith.constant 0 : index
    %18 = vector.load %arg1[%c2, %c0_16, %c0_17] : memref<9x512x128xbf16, #tpu.memory_space<vmem>>, vector<1x512x128xbf16>
    %19 = vector.shape_cast %18 : vector<1x512x128xbf16> to vector<512x128xbf16>
    %c2_18 = arith.constant 2 : index
    %c0_19 = arith.constant 0 : index
    %c0_20 = arith.constant 0 : index
    %20 = vector.load %arg2[%c2_18, %c0_19, %c0_20] : memref<9x16x3xbf16, #tpu.memory_space<vmem>>, vector<1x16x3xbf16>
    %21 = vector.shape_cast %20 : vector<1x16x3xbf16> to vector<16x3xbf16>
    %cst_21 = arith.constant dense<0.000000e+00> : vector<3x128xf32>
    %22 = tpu.matmul %0, %19, %cst_21 {dimension_numbers = #tpu.dot_dimension_numbers<[1], [0], [0], [1], [0, 0, 1, 1], [], []>} : vector<3x512xbf16>, vector<512x128xbf16>, vector<3x128xf32> -> vector<3x128xf32>
    %23 = arith.truncf %22 : vector<3x128xf32> to vector<3x128xbf16>
    %cst_22 = arith.constant dense<0.000000e+00> : vector<16x128xf32>
    %24 = tpu.matmul %21, %23, %cst_22 {dimension_numbers = #tpu.dot_dimension_numbers<[1], [0], [0], [1], [0, 0, 1, 1], [], []>} : vector<16x3xbf16>, vector<3x128xbf16>, vector<16x128xf32> -> vector<16x128xf32>
    %25 = arith.addf %17, %24 : vector<16x128xf32>
    %c3 = arith.constant 3 : index
    %c0_23 = arith.constant 0 : index
    %c0_24 = arith.constant 0 : index
    %26 = vector.load %arg1[%c3, %c0_23, %c0_24] : memref<9x512x128xbf16, #tpu.memory_space<vmem>>, vector<1x512x128xbf16>
    %27 = vector.shape_cast %26 : vector<1x512x128xbf16> to vector<512x128xbf16>
    %c3_25 = arith.constant 3 : index
    %c0_26 = arith.constant 0 : index
    %c0_27 = arith.constant 0 : index
    %28 = vector.load %arg2[%c3_25, %c0_26, %c0_27] : memref<9x16x3xbf16, #tpu.memory_space<vmem>>, vector<1x16x3xbf16>
    %29 = vector.shape_cast %28 : vector<1x16x3xbf16> to vector<16x3xbf16>
    %cst_28 = arith.constant dense<0.000000e+00> : vector<3x128xf32>
    %30 = tpu.matmul %0, %27, %cst_28 {dimension_numbers = #tpu.dot_dimension_numbers<[1], [0], [0], [1], [0, 0, 1, 1], [], []>} : vector<3x512xbf16>, vector<512x128xbf16>, vector<3x128xf32> -> vector<3x128xf32>
    %31 = arith.truncf %30 : vector<3x128xf32> to vector<3x128xbf16>
    %cst_29 = arith.constant dense<0.000000e+00> : vector<16x128xf32>
    %32 = tpu.matmul %29, %31, %cst_29 {dimension_numbers = #tpu.dot_dimension_numbers<[1], [0], [0], [1], [0, 0, 1, 1], [], []>} : vector<16x3xbf16>, vector<3x128xbf16>, vector<16x128xf32> -> vector<16x128xf32>
    %33 = arith.addf %25, %32 : vector<16x128xf32>
    %c4 = arith.constant 4 : index
    %c0_30 = arith.constant 0 : index
    %c0_31 = arith.constant 0 : index
    %34 = vector.load %arg1[%c4, %c0_30, %c0_31] : memref<9x512x128xbf16, #tpu.memory_space<vmem>>, vector<1x512x128xbf16>
    %35 = vector.shape_cast %34 : vector<1x512x128xbf16> to vector<512x128xbf16>
    %c4_32 = arith.constant 4 : index
    %c0_33 = arith.constant 0 : index
    %c0_34 = arith.constant 0 : index
    %36 = vector.load %arg2[%c4_32, %c0_33, %c0_34] : memref<9x16x3xbf16, #tpu.memory_space<vmem>>, vector<1x16x3xbf16>
    %37 = vector.shape_cast %36 : vector<1x16x3xbf16> to vector<16x3xbf16>
    %cst_35 = arith.constant dense<0.000000e+00> : vector<3x128xf32>
    %38 = tpu.matmul %0, %35, %cst_35 {dimension_numbers = #tpu.dot_dimension_numbers<[1], [0], [0], [1], [0, 0, 1, 1], [], []>} : vector<3x512xbf16>, vector<512x128xbf16>, vector<3x128xf32> -> vector<3x128xf32>
    %39 = arith.truncf %38 : vector<3x128xf32> to vector<3x128xbf16>
    %cst_36 = arith.constant dense<0.000000e+00> : vector<16x128xf32>
    %40 = tpu.matmul %37, %39, %cst_36 {dimension_numbers = #tpu.dot_dimension_numbers<[1], [0], [0], [1], [0, 0, 1, 1], [], []>} : vector<16x3xbf16>, vector<3x128xbf16>, vector<16x128xf32> -> vector<16x128xf32>
    %41 = arith.addf %33, %40 : vector<16x128xf32>
    %c5 = arith.constant 5 : index
    %c0_37 = arith.constant 0 : index
    %c0_38 = arith.constant 0 : index
    %42 = vector.load %arg1[%c5, %c0_37, %c0_38] : memref<9x512x128xbf16, #tpu.memory_space<vmem>>, vector<1x512x128xbf16>
    %43 = vector.shape_cast %42 : vector<1x512x128xbf16> to vector<512x128xbf16>
    %c5_39 = arith.constant 5 : index
    %c0_40 = arith.constant 0 : index
    %c0_41 = arith.constant 0 : index
    %44 = vector.load %arg2[%c5_39, %c0_40, %c0_41] : memref<9x16x3xbf16, #tpu.memory_space<vmem>>, vector<1x16x3xbf16>
    %45 = vector.shape_cast %44 : vector<1x16x3xbf16> to vector<16x3xbf16>
    %cst_42 = arith.constant dense<0.000000e+00> : vector<3x128xf32>
    %46 = tpu.matmul %0, %43, %cst_42 {dimension_numbers = #tpu.dot_dimension_numbers<[1], [0], [0], [1], [0, 0, 1, 1], [], []>} : vector<3x512xbf16>, vector<512x128xbf16>, vector<3x128xf32> -> vector<3x128xf32>
    %47 = arith.truncf %46 : vector<3x128xf32> to vector<3x128xbf16>
    %cst_43 = arith.constant dense<0.000000e+00> : vector<16x128xf32>
    %48 = tpu.matmul %45, %47, %cst_43 {dimension_numbers = #tpu.dot_dimension_numbers<[1], [0], [0], [1], [0, 0, 1, 1], [], []>} : vector<16x3xbf16>, vector<3x128xbf16>, vector<16x128xf32> -> vector<16x128xf32>
    %49 = arith.addf %41, %48 : vector<16x128xf32>
    %c6 = arith.constant 6 : index
    %c0_44 = arith.constant 0 : index
    %c0_45 = arith.constant 0 : index
    %50 = vector.load %arg1[%c6, %c0_44, %c0_45] : memref<9x512x128xbf16, #tpu.memory_space<vmem>>, vector<1x512x128xbf16>
    %51 = vector.shape_cast %50 : vector<1x512x128xbf16> to vector<512x128xbf16>
    %c6_46 = arith.constant 6 : index
    %c0_47 = arith.constant 0 : index
    %c0_48 = arith.constant 0 : index
    %52 = vector.load %arg2[%c6_46, %c0_47, %c0_48] : memref<9x16x3xbf16, #tpu.memory_space<vmem>>, vector<1x16x3xbf16>
    %53 = vector.shape_cast %52 : vector<1x16x3xbf16> to vector<16x3xbf16>
    %cst_49 = arith.constant dense<0.000000e+00> : vector<3x128xf32>
    %54 = tpu.matmul %0, %51, %cst_49 {dimension_numbers = #tpu.dot_dimension_numbers<[1], [0], [0], [1], [0, 0, 1, 1], [], []>} : vector<3x512xbf16>, vector<512x128xbf16>, vector<3x128xf32> -> vector<3x128xf32>
    %55 = arith.truncf %54 : vector<3x128xf32> to vector<3x128xbf16>
    %cst_50 = arith.constant dense<0.000000e+00> : vector<16x128xf32>
    %56 = tpu.matmul %53, %55, %cst_50 {dimension_numbers = #tpu.dot_dimension_numbers<[1], [0], [0], [1], [0, 0, 1, 1], [], []>} : vector<16x3xbf16>, vector<3x128xbf16>, vector<16x128xf32> -> vector<16x128xf32>
    %57 = arith.addf %49, %56 : vector<16x128xf32>
    %c7 = arith.constant 7 : index
    %c0_51 = arith.constant 0 : index
    %c0_52 = arith.constant 0 : index
    %58 = vector.load %arg1[%c7, %c0_51, %c0_52] : memref<9x512x128xbf16, #tpu.memory_space<vmem>>, vector<1x512x128xbf16>
    %59 = vector.shape_cast %58 : vector<1x512x128xbf16> to vector<512x128xbf16>
    %c7_53 = arith.constant 7 : index
    %c0_54 = arith.constant 0 : index
    %c0_55 = arith.constant 0 : index
    %60 = vector.load %arg2[%c7_53, %c0_54, %c0_55] : memref<9x16x3xbf16, #tpu.memory_space<vmem>>, vector<1x16x3xbf16>
    %61 = vector.shape_cast %60 : vector<1x16x3xbf16> to vector<16x3xbf16>
    %cst_56 = arith.constant dense<0.000000e+00> : vector<3x128xf32>
    %62 = tpu.matmul %0, %59, %cst_56 {dimension_numbers = #tpu.dot_dimension_numbers<[1], [0], [0], [1], [0, 0, 1, 1], [], []>} : vector<3x512xbf16>, vector<512x128xbf16>, vector<3x128xf32> -> vector<3x128xf32>
    %63 = arith.truncf %62 : vector<3x128xf32> to vector<3x128xbf16>
    %cst_57 = arith.constant dense<0.000000e+00> : vector<16x128xf32>
    %64 = tpu.matmul %61, %63, %cst_57 {dimension_numbers = #tpu.dot_dimension_numbers<[1], [0], [0], [1], [0, 0, 1, 1], [], []>} : vector<16x3xbf16>, vector<3x128xbf16>, vector<16x128xf32> -> vector<16x128xf32>
    %65 = arith.addf %57, %64 : vector<16x128xf32>
    %c8 = arith.constant 8 : index
    %c0_58 = arith.constant 0 : index
    %c0_59 = arith.constant 0 : index
    %66 = vector.load %arg1[%c8, %c0_58, %c0_59] : memref<9x512x128xbf16, #tpu.memory_space<vmem>>, vector<1x512x128xbf16>
    %67 = vector.shape_cast %66 : vector<1x512x128xbf16> to vector<512x128xbf16>
    %c8_60 = arith.constant 8 : index
    %c0_61 = arith.constant 0 : index
    %c0_62 = arith.constant 0 : index
    %68 = vector.load %arg2[%c8_60, %c0_61, %c0_62] : memref<9x16x3xbf16, #tpu.memory_space<vmem>>, vector<1x16x3xbf16>
    %69 = vector.shape_cast %68 : vector<1x16x3xbf16> to vector<16x3xbf16>
    %cst_63 = arith.constant dense<0.000000e+00> : vector<3x128xf32>
    %70 = tpu.matmul %0, %67, %cst_63 {dimension_numbers = #tpu.dot_dimension_numbers<[1], [0], [0], [1], [0, 0, 1, 1], [], []>} : vector<3x512xbf16>, vector<512x128xbf16>, vector<3x128xf32> -> vector<3x128xf32>
    %71 = arith.truncf %70 : vector<3x128xf32> to vector<3x128xbf16>
    %cst_64 = arith.constant dense<0.000000e+00> : vector<16x128xf32>
    %72 = tpu.matmul %69, %71, %cst_64 {dimension_numbers = #tpu.dot_dimension_numbers<[1], [0], [0], [1], [0, 0, 1, 1], [], []>} : vector<16x3xbf16>, vector<3x128xbf16>, vector<16x128xf32> -> vector<16x128xf32>
    %73 = arith.addf %65, %72 : vector<16x128xf32>
    %c0_65 = arith.constant 0 : index
    %c0_66 = arith.constant 0 : index
    %74 = vector.load %arg3[%c0_65, %c0_66] : memref<16x1xf32, #tpu.memory_space<vmem>>, vector<16x1xf32>
    %75 = vector.broadcast %74 : vector<16x1xf32> to vector<16x128xf32>
    %76 = arith.addf %73, %75 : vector<16x128xf32>
    %cst_67 = arith.constant 0.000000e+00 : f32
    %77 = vector.broadcast %cst_67 : f32 to vector<16x128xf32>
    %78 = arith.cmpf oge, %76, %77 : vector<16x128xf32>
    %cst_68 = arith.constant 2.000000e-01 : f32
    %79 = vector.broadcast %cst_68 : f32 to vector<16x128xf32>
    %80 = arith.mulf %79, %76 : vector<16x128xf32>
    %81 = arith.select %78, %76, %80 : vector<16x128xi1>, vector<16x128xf32>
    %82 = arith.truncf %81 : vector<16x128xf32> to vector<16x128xbf16>
    %cst_69 = arith.constant 0.000000e+00 : f32
    %83 = vector.broadcast %cst_69 : f32 to vector<32x32xf32>
    %c0_70 = arith.constant 0 : index
    %c0_71 = arith.constant 0 : index
    %c0_72 = arith.constant 0 : index
    %84 = vector.load %arg4[%c0_70, %c0_71, %c0_72] : memref<9x128x32xbf16, #tpu.memory_space<vmem>>, vector<1x128x32xbf16>
    %85 = vector.shape_cast %84 : vector<1x128x32xbf16> to vector<128x32xbf16>
    %c0_73 = arith.constant 0 : index
    %c0_74 = arith.constant 0 : index
    %c0_75 = arith.constant 0 : index
    %86 = vector.load %arg5[%c0_73, %c0_74, %c0_75] : memref<9x32x16xbf16, #tpu.memory_space<vmem>>, vector<1x32x16xbf16>
    %87 = vector.shape_cast %86 : vector<1x32x16xbf16> to vector<32x16xbf16>
    %cst_76 = arith.constant dense<0.000000e+00> : vector<16x32xf32>
    %88 = tpu.matmul %82, %85, %cst_76 {dimension_numbers = #tpu.dot_dimension_numbers<[1], [0], [0], [1], [0, 0, 1, 1], [], []>} : vector<16x128xbf16>, vector<128x32xbf16>, vector<16x32xf32> -> vector<16x32xf32>
    %89 = arith.truncf %88 : vector<16x32xf32> to vector<16x32xbf16>
    %cst_77 = arith.constant dense<0.000000e+00> : vector<32x32xf32>
    %90 = tpu.matmul %87, %89, %cst_77 {dimension_numbers = #tpu.dot_dimension_numbers<[1], [0], [0], [1], [0, 0, 1, 1], [], []>} : vector<32x16xbf16>, vector<16x32xbf16>, vector<32x32xf32> -> vector<32x32xf32>
    %91 = arith.addf %83, %90 : vector<32x32xf32>
    %c1_78 = arith.constant 1 : index
    %c0_79 = arith.constant 0 : index
    %c0_80 = arith.constant 0 : index
    %92 = vector.load %arg4[%c1_78, %c0_79, %c0_80] : memref<9x128x32xbf16, #tpu.memory_space<vmem>>, vector<1x128x32xbf16>
    %93 = vector.shape_cast %92 : vector<1x128x32xbf16> to vector<128x32xbf16>
    %c1_81 = arith.constant 1 : index
    %c0_82 = arith.constant 0 : index
    %c0_83 = arith.constant 0 : index
    %94 = vector.load %arg5[%c1_81, %c0_82, %c0_83] : memref<9x32x16xbf16, #tpu.memory_space<vmem>>, vector<1x32x16xbf16>
    %95 = vector.shape_cast %94 : vector<1x32x16xbf16> to vector<32x16xbf16>
    %cst_84 = arith.constant dense<0.000000e+00> : vector<16x32xf32>
    %96 = tpu.matmul %82, %93, %cst_84 {dimension_numbers = #tpu.dot_dimension_numbers<[1], [0], [0], [1], [0, 0, 1, 1], [], []>} : vector<16x128xbf16>, vector<128x32xbf16>, vector<16x32xf32> -> vector<16x32xf32>
    %97 = arith.truncf %96 : vector<16x32xf32> to vector<16x32xbf16>
    %cst_85 = arith.constant dense<0.000000e+00> : vector<32x32xf32>
    %98 = tpu.matmul %95, %97, %cst_85 {dimension_numbers = #tpu.dot_dimension_numbers<[1], [0], [0], [1], [0, 0, 1, 1], [], []>} : vector<32x16xbf16>, vector<16x32xbf16>, vector<32x32xf32> -> vector<32x32xf32>
    %99 = arith.addf %91, %98 : vector<32x32xf32>
    %c2_86 = arith.constant 2 : index
    %c0_87 = arith.constant 0 : index
    %c0_88 = arith.constant 0 : index
    %100 = vector.load %arg4[%c2_86, %c0_87, %c0_88] : memref<9x128x32xbf16, #tpu.memory_space<vmem>>, vector<1x128x32xbf16>
    %101 = vector.shape_cast %100 : vector<1x128x32xbf16> to vector<128x32xbf16>
    %c2_89 = arith.constant 2 : index
    %c0_90 = arith.constant 0 : index
    %c0_91 = arith.constant 0 : index
    %102 = vector.load %arg5[%c2_89, %c0_90, %c0_91] : memref<9x32x16xbf16, #tpu.memory_space<vmem>>, vector<1x32x16xbf16>
    %103 = vector.shape_cast %102 : vector<1x32x16xbf16> to vector<32x16xbf16>
    %cst_92 = arith.constant dense<0.000000e+00> : vector<16x32xf32>
    %104 = tpu.matmul %82, %101, %cst_92 {dimension_numbers = #tpu.dot_dimension_numbers<[1], [0], [0], [1], [0, 0, 1, 1], [], []>} : vector<16x128xbf16>, vector<128x32xbf16>, vector<16x32xf32> -> vector<16x32xf32>
    %105 = arith.truncf %104 : vector<16x32xf32> to vector<16x32xbf16>
    %cst_93 = arith.constant dense<0.000000e+00> : vector<32x32xf32>
    %106 = tpu.matmul %103, %105, %cst_93 {dimension_numbers = #tpu.dot_dimension_numbers<[1], [0], [0], [1], [0, 0, 1, 1], [], []>} : vector<32x16xbf16>, vector<16x32xbf16>, vector<32x32xf32> -> vector<32x32xf32>
    %107 = arith.addf %99, %106 : vector<32x32xf32>
    %c3_94 = arith.constant 3 : index
    %c0_95 = arith.constant 0 : index
    %c0_96 = arith.constant 0 : index
    %108 = vector.load %arg4[%c3_94, %c0_95, %c0_96] : memref<9x128x32xbf16, #tpu.memory_space<vmem>>, vector<1x128x32xbf16>
    %109 = vector.shape_cast %108 : vector<1x128x32xbf16> to vector<128x32xbf16>
    %c3_97 = arith.constant 3 : index
    %c0_98 = arith.constant 0 : index
    %c0_99 = arith.constant 0 : index
    %110 = vector.load %arg5[%c3_97, %c0_98, %c0_99] : memref<9x32x16xbf16, #tpu.memory_space<vmem>>, vector<1x32x16xbf16>
    %111 = vector.shape_cast %110 : vector<1x32x16xbf16> to vector<32x16xbf16>
    %cst_100 = arith.constant dense<0.000000e+00> : vector<16x32xf32>
    %112 = tpu.matmul %82, %109, %cst_100 {dimension_numbers = #tpu.dot_dimension_numbers<[1], [0], [0], [1], [0, 0, 1, 1], [], []>} : vector<16x128xbf16>, vector<128x32xbf16>, vector<16x32xf32> -> vector<16x32xf32>
    %113 = arith.truncf %112 : vector<16x32xf32> to vector<16x32xbf16>
    %cst_101 = arith.constant dense<0.000000e+00> : vector<32x32xf32>
    %114 = tpu.matmul %111, %113, %cst_101 {dimension_numbers = #tpu.dot_dimension_numbers<[1], [0], [0], [1], [0, 0, 1, 1], [], []>} : vector<32x16xbf16>, vector<16x32xbf16>, vector<32x32xf32> -> vector<32x32xf32>
    %115 = arith.addf %107, %114 : vector<32x32xf32>
    %c4_102 = arith.constant 4 : index
    %c0_103 = arith.constant 0 : index
    %c0_104 = arith.constant 0 : index
    %116 = vector.load %arg4[%c4_102, %c0_103, %c0_104] : memref<9x128x32xbf16, #tpu.memory_space<vmem>>, vector<1x128x32xbf16>
    %117 = vector.shape_cast %116 : vector<1x128x32xbf16> to vector<128x32xbf16>
    %c4_105 = arith.constant 4 : index
    %c0_106 = arith.constant 0 : index
    %c0_107 = arith.constant 0 : index
    %118 = vector.load %arg5[%c4_105, %c0_106, %c0_107] : memref<9x32x16xbf16, #tpu.memory_space<vmem>>, vector<1x32x16xbf16>
    %119 = vector.shape_cast %118 : vector<1x32x16xbf16> to vector<32x16xbf16>
    %cst_108 = arith.constant dense<0.000000e+00> : vector<16x32xf32>
    %120 = tpu.matmul %82, %117, %cst_108 {dimension_numbers = #tpu.dot_dimension_numbers<[1], [0], [0], [1], [0, 0, 1, 1], [], []>} : vector<16x128xbf16>, vector<128x32xbf16>, vector<16x32xf32> -> vector<16x32xf32>
    %121 = arith.truncf %120 : vector<16x32xf32> to vector<16x32xbf16>
    %cst_109 = arith.constant dense<0.000000e+00> : vector<32x32xf32>
    %122 = tpu.matmul %119, %121, %cst_109 {dimension_numbers = #tpu.dot_dimension_numbers<[1], [0], [0], [1], [0, 0, 1, 1], [], []>} : vector<32x16xbf16>, vector<16x32xbf16>, vector<32x32xf32> -> vector<32x32xf32>
    %123 = arith.addf %115, %122 : vector<32x32xf32>
    %c5_110 = arith.constant 5 : index
    %c0_111 = arith.constant 0 : index
    %c0_112 = arith.constant 0 : index
    %124 = vector.load %arg4[%c5_110, %c0_111, %c0_112] : memref<9x128x32xbf16, #tpu.memory_space<vmem>>, vector<1x128x32xbf16>
    %125 = vector.shape_cast %124 : vector<1x128x32xbf16> to vector<128x32xbf16>
    %c5_113 = arith.constant 5 : index
    %c0_114 = arith.constant 0 : index
    %c0_115 = arith.constant 0 : index
    %126 = vector.load %arg5[%c5_113, %c0_114, %c0_115] : memref<9x32x16xbf16, #tpu.memory_space<vmem>>, vector<1x32x16xbf16>
    %127 = vector.shape_cast %126 : vector<1x32x16xbf16> to vector<32x16xbf16>
    %cst_116 = arith.constant dense<0.000000e+00> : vector<16x32xf32>
    %128 = tpu.matmul %82, %125, %cst_116 {dimension_numbers = #tpu.dot_dimension_numbers<[1], [0], [0], [1], [0, 0, 1, 1], [], []>} : vector<16x128xbf16>, vector<128x32xbf16>, vector<16x32xf32> -> vector<16x32xf32>
    %129 = arith.truncf %128 : vector<16x32xf32> to vector<16x32xbf16>
    %cst_117 = arith.constant dense<0.000000e+00> : vector<32x32xf32>
    %130 = tpu.matmul %127, %129, %cst_117 {dimension_numbers = #tpu.dot_dimension_numbers<[1], [0], [0], [1], [0, 0, 1, 1], [], []>} : vector<32x16xbf16>, vector<16x32xbf16>, vector<32x32xf32> -> vector<32x32xf32>
    %131 = arith.addf %123, %130 : vector<32x32xf32>
    %c6_118 = arith.constant 6 : index
    %c0_119 = arith.constant 0 : index
    %c0_120 = arith.constant 0 : index
    %132 = vector.load %arg4[%c6_118, %c0_119, %c0_120] : memref<9x128x32xbf16, #tpu.memory_space<vmem>>, vector<1x128x32xbf16>
    %133 = vector.shape_cast %132 : vector<1x128x32xbf16> to vector<128x32xbf16>
    %c6_121 = arith.constant 6 : index
    %c0_122 = arith.constant 0 : index
    %c0_123 = arith.constant 0 : index
    %134 = vector.load %arg5[%c6_121, %c0_122, %c0_123] : memref<9x32x16xbf16, #tpu.memory_space<vmem>>, vector<1x32x16xbf16>
    %135 = vector.shape_cast %134 : vector<1x32x16xbf16> to vector<32x16xbf16>
    %cst_124 = arith.constant dense<0.000000e+00> : vector<16x32xf32>
    %136 = tpu.matmul %82, %133, %cst_124 {dimension_numbers = #tpu.dot_dimension_numbers<[1], [0], [0], [1], [0, 0, 1, 1], [], []>} : vector<16x128xbf16>, vector<128x32xbf16>, vector<16x32xf32> -> vector<16x32xf32>
    %137 = arith.truncf %136 : vector<16x32xf32> to vector<16x32xbf16>
    %cst_125 = arith.constant dense<0.000000e+00> : vector<32x32xf32>
    %138 = tpu.matmul %135, %137, %cst_125 {dimension_numbers = #tpu.dot_dimension_numbers<[1], [0], [0], [1], [0, 0, 1, 1], [], []>} : vector<32x16xbf16>, vector<16x32xbf16>, vector<32x32xf32> -> vector<32x32xf32>
    %139 = arith.addf %131, %138 : vector<32x32xf32>
    %c7_126 = arith.constant 7 : index
    %c0_127 = arith.constant 0 : index
    %c0_128 = arith.constant 0 : index
    %140 = vector.load %arg4[%c7_126, %c0_127, %c0_128] : memref<9x128x32xbf16, #tpu.memory_space<vmem>>, vector<1x128x32xbf16>
    %141 = vector.shape_cast %140 : vector<1x128x32xbf16> to vector<128x32xbf16>
    %c7_129 = arith.constant 7 : index
    %c0_130 = arith.constant 0 : index
    %c0_131 = arith.constant 0 : index
    %142 = vector.load %arg5[%c7_129, %c0_130, %c0_131] : memref<9x32x16xbf16, #tpu.memory_space<vmem>>, vector<1x32x16xbf16>
    %143 = vector.shape_cast %142 : vector<1x32x16xbf16> to vector<32x16xbf16>
    %cst_132 = arith.constant dense<0.000000e+00> : vector<16x32xf32>
    %144 = tpu.matmul %82, %141, %cst_132 {dimension_numbers = #tpu.dot_dimension_numbers<[1], [0], [0], [1], [0, 0, 1, 1], [], []>} : vector<16x128xbf16>, vector<128x32xbf16>, vector<16x32xf32> -> vector<16x32xf32>
    %145 = arith.truncf %144 : vector<16x32xf32> to vector<16x32xbf16>
    %cst_133 = arith.constant dense<0.000000e+00> : vector<32x32xf32>
    %146 = tpu.matmul %143, %145, %cst_133 {dimension_numbers = #tpu.dot_dimension_numbers<[1], [0], [0], [1], [0, 0, 1, 1], [], []>} : vector<32x16xbf16>, vector<16x32xbf16>, vector<32x32xf32> -> vector<32x32xf32>
    %147 = arith.addf %139, %146 : vector<32x32xf32>
    %c8_134 = arith.constant 8 : index
    %c0_135 = arith.constant 0 : index
    %c0_136 = arith.constant 0 : index
    %148 = vector.load %arg4[%c8_134, %c0_135, %c0_136] : memref<9x128x32xbf16, #tpu.memory_space<vmem>>, vector<1x128x32xbf16>
    %149 = vector.shape_cast %148 : vector<1x128x32xbf16> to vector<128x32xbf16>
    %c8_137 = arith.constant 8 : index
    %c0_138 = arith.constant 0 : index
    %c0_139 = arith.constant 0 : index
    %150 = vector.load %arg5[%c8_137, %c0_138, %c0_139] : memref<9x32x16xbf16, #tpu.memory_space<vmem>>, vector<1x32x16xbf16>
    %151 = vector.shape_cast %150 : vector<1x32x16xbf16> to vector<32x16xbf16>
    %cst_140 = arith.constant dense<0.000000e+00> : vector<16x32xf32>
    %152 = tpu.matmul %82, %149, %cst_140 {dimension_numbers = #tpu.dot_dimension_numbers<[1], [0], [0], [1], [0, 0, 1, 1], [], []>} : vector<16x128xbf16>, vector<128x32xbf16>, vector<16x32xf32> -> vector<16x32xf32>
    %153 = arith.truncf %152 : vector<16x32xf32> to vector<16x32xbf16>
    %cst_141 = arith.constant dense<0.000000e+00> : vector<32x32xf32>
    %154 = tpu.matmul %151, %153, %cst_141 {dimension_numbers = #tpu.dot_dimension_numbers<[1], [0], [0], [1], [0, 0, 1, 1], [], []>} : vector<32x16xbf16>, vector<16x32xbf16>, vector<32x32xf32> -> vector<32x32xf32>
    %155 = arith.addf %147, %154 : vector<32x32xf32>
    %c0_142 = arith.constant 0 : index
    %c0_143 = arith.constant 0 : index
    %156 = vector.load %arg6[%c0_142, %c0_143] : memref<32x1xf32, #tpu.memory_space<vmem>>, vector<32x1xf32>
    %157 = vector.broadcast %156 : vector<32x1xf32> to vector<32x32xf32>
    %158 = arith.addf %155, %157 : vector<32x32xf32>
    %cst_144 = arith.constant 0.000000e+00 : f32
    %159 = vector.broadcast %cst_144 : f32 to vector<32x32xf32>
    %160 = arith.cmpf oge, %158, %159 : vector<32x32xf32>
    %cst_145 = arith.constant 2.000000e-01 : f32
    %161 = vector.broadcast %cst_145 : f32 to vector<32x32xf32>
    %162 = arith.mulf %161, %158 : vector<32x32xf32>
    %163 = arith.select %160, %158, %162 : vector<32x32xi1>, vector<32x32xf32>
    %164 = arith.truncf %163 : vector<32x32xf32> to vector<32x32xbf16>
    %cst_146 = arith.constant 0.000000e+00 : f32
    %165 = vector.broadcast %cst_146 : f32 to vector<32x8xf32>
    %c0_147 = arith.constant 0 : index
    %c0_148 = arith.constant 0 : index
    %c0_149 = arith.constant 0 : index
    %166 = vector.load %arg7[%c0_147, %c0_148, %c0_149] : memref<9x32x8xbf16, #tpu.memory_space<vmem>>, vector<1x32x8xbf16>
    %167 = vector.shape_cast %166 : vector<1x32x8xbf16> to vector<32x8xbf16>
    %c0_150 = arith.constant 0 : index
    %c0_151 = arith.constant 0 : index
    %c0_152 = arith.constant 0 : index
    %168 = vector.load %arg8[%c0_150, %c0_151, %c0_152] : memref<9x32x32xbf16, #tpu.memory_space<vmem>>, vector<1x32x32xbf16>
    %169 = vector.shape_cast %168 : vector<1x32x32xbf16> to vector<32x32xbf16>
    %cst_153 = arith.constant dense<0.000000e+00> : vector<32x8xf32>
    %170 = tpu.matmul %164, %167, %cst_153 {dimension_numbers = #tpu.dot_dimension_numbers<[1], [0], [0], [1], [0, 0, 1, 1], [], []>} : vector<32x32xbf16>, vector<32x8xbf16>, vector<32x8xf32> -> vector<32x8xf32>
    %171 = arith.truncf %170 : vector<32x8xf32> to vector<32x8xbf16>
    %cst_154 = arith.constant dense<0.000000e+00> : vector<32x8xf32>
    %172 = tpu.matmul %169, %171, %cst_154 {dimension_numbers = #tpu.dot_dimension_numbers<[1], [0], [0], [1], [0, 0, 1, 1], [], []>} : vector<32x32xbf16>, vector<32x8xbf16>, vector<32x8xf32> -> vector<32x8xf32>
    %173 = arith.addf %165, %172 : vector<32x8xf32>
    %c1_155 = arith.constant 1 : index
    %c0_156 = arith.constant 0 : index
    %c0_157 = arith.constant 0 : index
    %174 = vector.load %arg7[%c1_155, %c0_156, %c0_157] : memref<9x32x8xbf16, #tpu.memory_space<vmem>>, vector<1x32x8xbf16>
    %175 = vector.shape_cast %174 : vector<1x32x8xbf16> to vector<32x8xbf16>
    %c1_158 = arith.constant 1 : index
    %c0_159 = arith.constant 0 : index
    %c0_160 = arith.constant 0 : index
    %176 = vector.load %arg8[%c1_158, %c0_159, %c0_160] : memref<9x32x32xbf16, #tpu.memory_space<vmem>>, vector<1x32x32xbf16>
    %177 = vector.shape_cast %176 : vector<1x32x32xbf16> to vector<32x32xbf16>
    %cst_161 = arith.constant dense<0.000000e+00> : vector<32x8xf32>
    %178 = tpu.matmul %164, %175, %cst_161 {dimension_numbers = #tpu.dot_dimension_numbers<[1], [0], [0], [1], [0, 0, 1, 1], [], []>} : vector<32x32xbf16>, vector<32x8xbf16>, vector<32x8xf32> -> vector<32x8xf32>
    %179 = arith.truncf %178 : vector<32x8xf32> to vector<32x8xbf16>
    %cst_162 = arith.constant dense<0.000000e+00> : vector<32x8xf32>
    %180 = tpu.matmul %177, %179, %cst_162 {dimension_numbers = #tpu.dot_dimension_numbers<[1], [0], [0], [1], [0, 0, 1, 1], [], []>} : vector<32x32xbf16>, vector<32x8xbf16>, vector<32x8xf32> -> vector<32x8xf32>
    %181 = arith.addf %173, %180 : vector<32x8xf32>
    %c2_163 = arith.constant 2 : index
    %c0_164 = arith.constant 0 : index
    %c0_165 = arith.constant 0 : index
    %182 = vector.load %arg7[%c2_163, %c0_164, %c0_165] : memref<9x32x8xbf16, #tpu.memory_space<vmem>>, vector<1x32x8xbf16>
    %183 = vector.shape_cast %182 : vector<1x32x8xbf16> to vector<32x8xbf16>
    %c2_166 = arith.constant 2 : index
    %c0_167 = arith.constant 0 : index
    %c0_168 = arith.constant 0 : index
    %184 = vector.load %arg8[%c2_166, %c0_167, %c0_168] : memref<9x32x32xbf16, #tpu.memory_space<vmem>>, vector<1x32x32xbf16>
    %185 = vector.shape_cast %184 : vector<1x32x32xbf16> to vector<32x32xbf16>
    %cst_169 = arith.constant dense<0.000000e+00> : vector<32x8xf32>
    %186 = tpu.matmul %164, %183, %cst_169 {dimension_numbers = #tpu.dot_dimension_numbers<[1], [0], [0], [1], [0, 0, 1, 1], [], []>} : vector<32x32xbf16>, vector<32x8xbf16>, vector<32x8xf32> -> vector<32x8xf32>
    %187 = arith.truncf %186 : vector<32x8xf32> to vector<32x8xbf16>
    %cst_170 = arith.constant dense<0.000000e+00> : vector<32x8xf32>
    %188 = tpu.matmul %185, %187, %cst_170 {dimension_numbers = #tpu.dot_dimension_numbers<[1], [0], [0], [1], [0, 0, 1, 1], [], []>} : vector<32x32xbf16>, vector<32x8xbf16>, vector<32x8xf32> -> vector<32x8xf32>
    %189 = arith.addf %181, %188 : vector<32x8xf32>
    %c3_171 = arith.constant 3 : index
    %c0_172 = arith.constant 0 : index
    %c0_173 = arith.constant 0 : index
    %190 = vector.load %arg7[%c3_171, %c0_172, %c0_173] : memref<9x32x8xbf16, #tpu.memory_space<vmem>>, vector<1x32x8xbf16>
    %191 = vector.shape_cast %190 : vector<1x32x8xbf16> to vector<32x8xbf16>
    %c3_174 = arith.constant 3 : index
    %c0_175 = arith.constant 0 : index
    %c0_176 = arith.constant 0 : index
    %192 = vector.load %arg8[%c3_174, %c0_175, %c0_176] : memref<9x32x32xbf16, #tpu.memory_space<vmem>>, vector<1x32x32xbf16>
    %193 = vector.shape_cast %192 : vector<1x32x32xbf16> to vector<32x32xbf16>
    %cst_177 = arith.constant dense<0.000000e+00> : vector<32x8xf32>
    %194 = tpu.matmul %164, %191, %cst_177 {dimension_numbers = #tpu.dot_dimension_numbers<[1], [0], [0], [1], [0, 0, 1, 1], [], []>} : vector<32x32xbf16>, vector<32x8xbf16>, vector<32x8xf32> -> vector<32x8xf32>
    %195 = arith.truncf %194 : vector<32x8xf32> to vector<32x8xbf16>
    %cst_178 = arith.constant dense<0.000000e+00> : vector<32x8xf32>
    %196 = tpu.matmul %193, %195, %cst_178 {dimension_numbers = #tpu.dot_dimension_numbers<[1], [0], [0], [1], [0, 0, 1, 1], [], []>} : vector<32x32xbf16>, vector<32x8xbf16>, vector<32x8xf32> -> vector<32x8xf32>
    %197 = arith.addf %189, %196 : vector<32x8xf32>
    %c4_179 = arith.constant 4 : index
    %c0_180 = arith.constant 0 : index
    %c0_181 = arith.constant 0 : index
    %198 = vector.load %arg7[%c4_179, %c0_180, %c0_181] : memref<9x32x8xbf16, #tpu.memory_space<vmem>>, vector<1x32x8xbf16>
    %199 = vector.shape_cast %198 : vector<1x32x8xbf16> to vector<32x8xbf16>
    %c4_182 = arith.constant 4 : index
    %c0_183 = arith.constant 0 : index
    %c0_184 = arith.constant 0 : index
    %200 = vector.load %arg8[%c4_182, %c0_183, %c0_184] : memref<9x32x32xbf16, #tpu.memory_space<vmem>>, vector<1x32x32xbf16>
    %201 = vector.shape_cast %200 : vector<1x32x32xbf16> to vector<32x32xbf16>
    %cst_185 = arith.constant dense<0.000000e+00> : vector<32x8xf32>
    %202 = tpu.matmul %164, %199, %cst_185 {dimension_numbers = #tpu.dot_dimension_numbers<[1], [0], [0], [1], [0, 0, 1, 1], [], []>} : vector<32x32xbf16>, vector<32x8xbf16>, vector<32x8xf32> -> vector<32x8xf32>
    %203 = arith.truncf %202 : vector<32x8xf32> to vector<32x8xbf16>
    %cst_186 = arith.constant dense<0.000000e+00> : vector<32x8xf32>
    %204 = tpu.matmul %201, %203, %cst_186 {dimension_numbers = #tpu.dot_dimension_numbers<[1], [0], [0], [1], [0, 0, 1, 1], [], []>} : vector<32x32xbf16>, vector<32x8xbf16>, vector<32x8xf32> -> vector<32x8xf32>
    %205 = arith.addf %197, %204 : vector<32x8xf32>
    %c5_187 = arith.constant 5 : index
    %c0_188 = arith.constant 0 : index
    %c0_189 = arith.constant 0 : index
    %206 = vector.load %arg7[%c5_187, %c0_188, %c0_189] : memref<9x32x8xbf16, #tpu.memory_space<vmem>>, vector<1x32x8xbf16>
    %207 = vector.shape_cast %206 : vector<1x32x8xbf16> to vector<32x8xbf16>
    %c5_190 = arith.constant 5 : index
    %c0_191 = arith.constant 0 : index
    %c0_192 = arith.constant 0 : index
    %208 = vector.load %arg8[%c5_190, %c0_191, %c0_192] : memref<9x32x32xbf16, #tpu.memory_space<vmem>>, vector<1x32x32xbf16>
    %209 = vector.shape_cast %208 : vector<1x32x32xbf16> to vector<32x32xbf16>
    %cst_193 = arith.constant dense<0.000000e+00> : vector<32x8xf32>
    %210 = tpu.matmul %164, %207, %cst_193 {dimension_numbers = #tpu.dot_dimension_numbers<[1], [0], [0], [1], [0, 0, 1, 1], [], []>} : vector<32x32xbf16>, vector<32x8xbf16>, vector<32x8xf32> -> vector<32x8xf32>
    %211 = arith.truncf %210 : vector<32x8xf32> to vector<32x8xbf16>
    %cst_194 = arith.constant dense<0.000000e+00> : vector<32x8xf32>
    %212 = tpu.matmul %209, %211, %cst_194 {dimension_numbers = #tpu.dot_dimension_numbers<[1], [0], [0], [1], [0, 0, 1, 1], [], []>} : vector<32x32xbf16>, vector<32x8xbf16>, vector<32x8xf32> -> vector<32x8xf32>
    %213 = arith.addf %205, %212 : vector<32x8xf32>
    %c6_195 = arith.constant 6 : index
    %c0_196 = arith.constant 0 : index
    %c0_197 = arith.constant 0 : index
    %214 = vector.load %arg7[%c6_195, %c0_196, %c0_197] : memref<9x32x8xbf16, #tpu.memory_space<vmem>>, vector<1x32x8xbf16>
    %215 = vector.shape_cast %214 : vector<1x32x8xbf16> to vector<32x8xbf16>
    %c6_198 = arith.constant 6 : index
    %c0_199 = arith.constant 0 : index
    %c0_200 = arith.constant 0 : index
    %216 = vector.load %arg8[%c6_198, %c0_199, %c0_200] : memref<9x32x32xbf16, #tpu.memory_space<vmem>>, vector<1x32x32xbf16>
    %217 = vector.shape_cast %216 : vector<1x32x32xbf16> to vector<32x32xbf16>
    %cst_201 = arith.constant dense<0.000000e+00> : vector<32x8xf32>
    %218 = tpu.matmul %164, %215, %cst_201 {dimension_numbers = #tpu.dot_dimension_numbers<[1], [0], [0], [1], [0, 0, 1, 1], [], []>} : vector<32x32xbf16>, vector<32x8xbf16>, vector<32x8xf32> -> vector<32x8xf32>
    %219 = arith.truncf %218 : vector<32x8xf32> to vector<32x8xbf16>
    %cst_202 = arith.constant dense<0.000000e+00> : vector<32x8xf32>
    %220 = tpu.matmul %217, %219, %cst_202 {dimension_numbers = #tpu.dot_dimension_numbers<[1], [0], [0], [1], [0, 0, 1, 1], [], []>} : vector<32x32xbf16>, vector<32x8xbf16>, vector<32x8xf32> -> vector<32x8xf32>
    %221 = arith.addf %213, %220 : vector<32x8xf32>
    %c7_203 = arith.constant 7 : index
    %c0_204 = arith.constant 0 : index
    %c0_205 = arith.constant 0 : index
    %222 = vector.load %arg7[%c7_203, %c0_204, %c0_205] : memref<9x32x8xbf16, #tpu.memory_space<vmem>>, vector<1x32x8xbf16>
    %223 = vector.shape_cast %222 : vector<1x32x8xbf16> to vector<32x8xbf16>
    %c7_206 = arith.constant 7 : index
    %c0_207 = arith.constant 0 : index
    %c0_208 = arith.constant 0 : index
    %224 = vector.load %arg8[%c7_206, %c0_207, %c0_208] : memref<9x32x32xbf16, #tpu.memory_space<vmem>>, vector<1x32x32xbf16>
    %225 = vector.shape_cast %224 : vector<1x32x32xbf16> to vector<32x32xbf16>
    %cst_209 = arith.constant dense<0.000000e+00> : vector<32x8xf32>
    %226 = tpu.matmul %164, %223, %cst_209 {dimension_numbers = #tpu.dot_dimension_numbers<[1], [0], [0], [1], [0, 0, 1, 1], [], []>} : vector<32x32xbf16>, vector<32x8xbf16>, vector<32x8xf32> -> vector<32x8xf32>
    %227 = arith.truncf %226 : vector<32x8xf32> to vector<32x8xbf16>
    %cst_210 = arith.constant dense<0.000000e+00> : vector<32x8xf32>
    %228 = tpu.matmul %225, %227, %cst_210 {dimension_numbers = #tpu.dot_dimension_numbers<[1], [0], [0], [1], [0, 0, 1, 1], [], []>} : vector<32x32xbf16>, vector<32x8xbf16>, vector<32x8xf32> -> vector<32x8xf32>
    %229 = arith.addf %221, %228 : vector<32x8xf32>
    %c8_211 = arith.constant 8 : index
    %c0_212 = arith.constant 0 : index
    %c0_213 = arith.constant 0 : index
    %230 = vector.load %arg7[%c8_211, %c0_212, %c0_213] : memref<9x32x8xbf16, #tpu.memory_space<vmem>>, vector<1x32x8xbf16>
    %231 = vector.shape_cast %230 : vector<1x32x8xbf16> to vector<32x8xbf16>
    %c8_214 = arith.constant 8 : index
    %c0_215 = arith.constant 0 : index
    %c0_216 = arith.constant 0 : index
    %232 = vector.load %arg8[%c8_214, %c0_215, %c0_216] : memref<9x32x32xbf16, #tpu.memory_space<vmem>>, vector<1x32x32xbf16>
    %233 = vector.shape_cast %232 : vector<1x32x32xbf16> to vector<32x32xbf16>
    %cst_217 = arith.constant dense<0.000000e+00> : vector<32x8xf32>
    %234 = tpu.matmul %164, %231, %cst_217 {dimension_numbers = #tpu.dot_dimension_numbers<[1], [0], [0], [1], [0, 0, 1, 1], [], []>} : vector<32x32xbf16>, vector<32x8xbf16>, vector<32x8xf32> -> vector<32x8xf32>
    %235 = arith.truncf %234 : vector<32x8xf32> to vector<32x8xbf16>
    %cst_218 = arith.constant dense<0.000000e+00> : vector<32x8xf32>
    %236 = tpu.matmul %233, %235, %cst_218 {dimension_numbers = #tpu.dot_dimension_numbers<[1], [0], [0], [1], [0, 0, 1, 1], [], []>} : vector<32x32xbf16>, vector<32x8xbf16>, vector<32x8xf32> -> vector<32x8xf32>
    %237 = arith.addf %229, %236 : vector<32x8xf32>
    %c0_219 = arith.constant 0 : index
    %c0_220 = arith.constant 0 : index
    %238 = vector.load %arg9[%c0_219, %c0_220] : memref<32x1xf32, #tpu.memory_space<vmem>>, vector<32x1xf32>
    %239 = vector.broadcast %238 : vector<32x1xf32> to vector<32x8xf32>
    %240 = arith.addf %237, %239 : vector<32x8xf32>
    %cst_221 = arith.constant 0.000000e+00 : f32
    %241 = vector.broadcast %cst_221 : f32 to vector<32x8xf32>
    %242 = arith.cmpf oge, %240, %241 : vector<32x8xf32>
    %cst_222 = arith.constant 2.000000e-01 : f32
    %243 = vector.broadcast %cst_222 : f32 to vector<32x8xf32>
    %244 = arith.mulf %243, %240 : vector<32x8xf32>
    %245 = arith.select %242, %240, %244 : vector<32x8xi1>, vector<32x8xf32>
    %c0_223 = arith.constant 0 : index
    %c0_224 = arith.constant 0 : index
    %246 = vector.load %arg19[%c0_223, %c0_224] : memref<32x8xf32, #tpu.memory_space<vmem>>, vector<32x8xf32>
    tpu.vector_store %arg19[%c0_223, %c0_224], %245 {strides = array<i32>} : memref<32x8xf32, #tpu.memory_space<vmem>>, vector<32x8xf32>,
    %247 = arith.truncf %245 : vector<32x8xf32> to vector<32x8xbf16>
    %cst_225 = arith.constant 0.000000e+00 : f32
    %248 = vector.broadcast %cst_225 : f32 to vector<32x32xf32>
    %c0_226 = arith.constant 0 : index
    %c0_227 = arith.constant 0 : index
    %c0_228 = arith.constant 0 : index
    %249 = vector.load %arg10[%c0_226, %c0_227, %c0_228] : memref<9x8x32xbf16, #tpu.memory_space<vmem>>, vector<1x8x32xbf16>
    %250 = vector.shape_cast %249 : vector<1x8x32xbf16> to vector<8x32xbf16>
    %c0_229 = arith.constant 0 : index
    %c0_230 = arith.constant 0 : index
    %c0_231 = arith.constant 0 : index
    %251 = vector.load %arg11[%c0_229, %c0_230, %c0_231] : memref<9x32x32xbf16, #tpu.memory_space<vmem>>, vector<1x32x32xbf16>
    %252 = vector.shape_cast %251 : vector<1x32x32xbf16> to vector<32x32xbf16>
    %cst_232 = arith.constant dense<0.000000e+00> : vector<32x8xf32>
    %253 = tpu.matmul %252, %247, %cst_232 {dimension_numbers = #tpu.dot_dimension_numbers<[1], [0], [0], [1], [0, 0, 1, 1], [], []>} : vector<32x32xbf16>, vector<32x8xbf16>, vector<32x8xf32> -> vector<32x8xf32>
    %254 = arith.truncf %253 : vector<32x8xf32> to vector<32x8xbf16>
    %cst_233 = arith.constant dense<0.000000e+00> : vector<32x32xf32>
    %255 = tpu.matmul %254, %250, %cst_233 {dimension_numbers = #tpu.dot_dimension_numbers<[1], [0], [0], [1], [0, 0, 1, 1], [], []>} : vector<32x8xbf16>, vector<8x32xbf16>, vector<32x32xf32> -> vector<32x32xf32>
    %256 = arith.addf %248, %255 : vector<32x32xf32>
    %c1_234 = arith.constant 1 : index
    %c0_235 = arith.constant 0 : index
    %c0_236 = arith.constant 0 : index
    %257 = vector.load %arg10[%c1_234, %c0_235, %c0_236] : memref<9x8x32xbf16, #tpu.memory_space<vmem>>, vector<1x8x32xbf16>
    %258 = vector.shape_cast %257 : vector<1x8x32xbf16> to vector<8x32xbf16>
    %c1_237 = arith.constant 1 : index
    %c0_238 = arith.constant 0 : index
    %c0_239 = arith.constant 0 : index
    %259 = vector.load %arg11[%c1_237, %c0_238, %c0_239] : memref<9x32x32xbf16, #tpu.memory_space<vmem>>, vector<1x32x32xbf16>
    %260 = vector.shape_cast %259 : vector<1x32x32xbf16> to vector<32x32xbf16>
    %cst_240 = arith.constant dense<0.000000e+00> : vector<32x8xf32>
    %261 = tpu.matmul %260, %247, %cst_240 {dimension_numbers = #tpu.dot_dimension_numbers<[1], [0], [0], [1], [0, 0, 1, 1], [], []>} : vector<32x32xbf16>, vector<32x8xbf16>, vector<32x8xf32> -> vector<32x8xf32>
    %262 = arith.truncf %261 : vector<32x8xf32> to vector<32x8xbf16>
    %cst_241 = arith.constant dense<0.000000e+00> : vector<32x32xf32>
    %263 = tpu.matmul %262, %258, %cst_241 {dimension_numbers = #tpu.dot_dimension_numbers<[1], [0], [0], [1], [0, 0, 1, 1], [], []>} : vector<32x8xbf16>, vector<8x32xbf16>, vector<32x32xf32> -> vector<32x32xf32>
    %264 = arith.addf %256, %263 : vector<32x32xf32>
    %c2_242 = arith.constant 2 : index
    %c0_243 = arith.constant 0 : index
    %c0_244 = arith.constant 0 : index
    %265 = vector.load %arg10[%c2_242, %c0_243, %c0_244] : memref<9x8x32xbf16, #tpu.memory_space<vmem>>, vector<1x8x32xbf16>
    %266 = vector.shape_cast %265 : vector<1x8x32xbf16> to vector<8x32xbf16>
    %c2_245 = arith.constant 2 : index
    %c0_246 = arith.constant 0 : index
    %c0_247 = arith.constant 0 : index
    %267 = vector.load %arg11[%c2_245, %c0_246, %c0_247] : memref<9x32x32xbf16, #tpu.memory_space<vmem>>, vector<1x32x32xbf16>
    %268 = vector.shape_cast %267 : vector<1x32x32xbf16> to vector<32x32xbf16>
    %cst_248 = arith.constant dense<0.000000e+00> : vector<32x8xf32>
    %269 = tpu.matmul %268, %247, %cst_248 {dimension_numbers = #tpu.dot_dimension_numbers<[1], [0], [0], [1], [0, 0, 1, 1], [], []>} : vector<32x32xbf16>, vector<32x8xbf16>, vector<32x8xf32> -> vector<32x8xf32>
    %270 = arith.truncf %269 : vector<32x8xf32> to vector<32x8xbf16>
    %cst_249 = arith.constant dense<0.000000e+00> : vector<32x32xf32>
    %271 = tpu.matmul %270, %266, %cst_249 {dimension_numbers = #tpu.dot_dimension_numbers<[1], [0], [0], [1], [0, 0, 1, 1], [], []>} : vector<32x8xbf16>, vector<8x32xbf16>, vector<32x32xf32> -> vector<32x32xf32>
    %272 = arith.addf %264, %271 : vector<32x32xf32>
    %c3_250 = arith.constant 3 : index
    %c0_251 = arith.constant 0 : index
    %c0_252 = arith.constant 0 : index
    %273 = vector.load %arg10[%c3_250, %c0_251, %c0_252] : memref<9x8x32xbf16, #tpu.memory_space<vmem>>, vector<1x8x32xbf16>
    %274 = vector.shape_cast %273 : vector<1x8x32xbf16> to vector<8x32xbf16>
    %c3_253 = arith.constant 3 : index
    %c0_254 = arith.constant 0 : index
    %c0_255 = arith.constant 0 : index
    %275 = vector.load %arg11[%c3_253, %c0_254, %c0_255] : memref<9x32x32xbf16, #tpu.memory_space<vmem>>, vector<1x32x32xbf16>
    %276 = vector.shape_cast %275 : vector<1x32x32xbf16> to vector<32x32xbf16>
    %cst_256 = arith.constant dense<0.000000e+00> : vector<32x8xf32>
    %277 = tpu.matmul %276, %247, %cst_256 {dimension_numbers = #tpu.dot_dimension_numbers<[1], [0], [0], [1], [0, 0, 1, 1], [], []>} : vector<32x32xbf16>, vector<32x8xbf16>, vector<32x8xf32> -> vector<32x8xf32>
    %278 = arith.truncf %277 : vector<32x8xf32> to vector<32x8xbf16>
    %cst_257 = arith.constant dense<0.000000e+00> : vector<32x32xf32>
    %279 = tpu.matmul %278, %274, %cst_257 {dimension_numbers = #tpu.dot_dimension_numbers<[1], [0], [0], [1], [0, 0, 1, 1], [], []>} : vector<32x8xbf16>, vector<8x32xbf16>, vector<32x32xf32> -> vector<32x32xf32>
    %280 = arith.addf %272, %279 : vector<32x32xf32>
    %c4_258 = arith.constant 4 : index
    %c0_259 = arith.constant 0 : index
    %c0_260 = arith.constant 0 : index
    %281 = vector.load %arg10[%c4_258, %c0_259, %c0_260] : memref<9x8x32xbf16, #tpu.memory_space<vmem>>, vector<1x8x32xbf16>
    %282 = vector.shape_cast %281 : vector<1x8x32xbf16> to vector<8x32xbf16>
    %c4_261 = arith.constant 4 : index
    %c0_262 = arith.constant 0 : index
    %c0_263 = arith.constant 0 : index
    %283 = vector.load %arg11[%c4_261, %c0_262, %c0_263] : memref<9x32x32xbf16, #tpu.memory_space<vmem>>, vector<1x32x32xbf16>
    %284 = vector.shape_cast %283 : vector<1x32x32xbf16> to vector<32x32xbf16>
    %cst_264 = arith.constant dense<0.000000e+00> : vector<32x8xf32>
    %285 = tpu.matmul %284, %247, %cst_264 {dimension_numbers = #tpu.dot_dimension_numbers<[1], [0], [0], [1], [0, 0, 1, 1], [], []>} : vector<32x32xbf16>, vector<32x8xbf16>, vector<32x8xf32> -> vector<32x8xf32>
    %286 = arith.truncf %285 : vector<32x8xf32> to vector<32x8xbf16>
    %cst_265 = arith.constant dense<0.000000e+00> : vector<32x32xf32>
    %287 = tpu.matmul %286, %282, %cst_265 {dimension_numbers = #tpu.dot_dimension_numbers<[1], [0], [0], [1], [0, 0, 1, 1], [], []>} : vector<32x8xbf16>, vector<8x32xbf16>, vector<32x32xf32> -> vector<32x32xf32>
    %288 = arith.addf %280, %287 : vector<32x32xf32>
    %c5_266 = arith.constant 5 : index
    %c0_267 = arith.constant 0 : index
    %c0_268 = arith.constant 0 : index
    %289 = vector.load %arg10[%c5_266, %c0_267, %c0_268] : memref<9x8x32xbf16, #tpu.memory_space<vmem>>, vector<1x8x32xbf16>
    %290 = vector.shape_cast %289 : vector<1x8x32xbf16> to vector<8x32xbf16>
    %c5_269 = arith.constant 5 : index
    %c0_270 = arith.constant 0 : index
    %c0_271 = arith.constant 0 : index
    %291 = vector.load %arg11[%c5_269, %c0_270, %c0_271] : memref<9x32x32xbf16, #tpu.memory_space<vmem>>, vector<1x32x32xbf16>
    %292 = vector.shape_cast %291 : vector<1x32x32xbf16> to vector<32x32xbf16>
    %cst_272 = arith.constant dense<0.000000e+00> : vector<32x8xf32>
    %293 = tpu.matmul %292, %247, %cst_272 {dimension_numbers = #tpu.dot_dimension_numbers<[1], [0], [0], [1], [0, 0, 1, 1], [], []>} : vector<32x32xbf16>, vector<32x8xbf16>, vector<32x8xf32> -> vector<32x8xf32>
    %294 = arith.truncf %293 : vector<32x8xf32> to vector<32x8xbf16>
    %cst_273 = arith.constant dense<0.000000e+00> : vector<32x32xf32>
    %295 = tpu.matmul %294, %290, %cst_273 {dimension_numbers = #tpu.dot_dimension_numbers<[1], [0], [0], [1], [0, 0, 1, 1], [], []>} : vector<32x8xbf16>, vector<8x32xbf16>, vector<32x32xf32> -> vector<32x32xf32>
    %296 = arith.addf %288, %295 : vector<32x32xf32>
    %c6_274 = arith.constant 6 : index
    %c0_275 = arith.constant 0 : index
    %c0_276 = arith.constant 0 : index
    %297 = vector.load %arg10[%c6_274, %c0_275, %c0_276] : memref<9x8x32xbf16, #tpu.memory_space<vmem>>, vector<1x8x32xbf16>
    %298 = vector.shape_cast %297 : vector<1x8x32xbf16> to vector<8x32xbf16>
    %c6_277 = arith.constant 6 : index
    %c0_278 = arith.constant 0 : index
    %c0_279 = arith.constant 0 : index
    %299 = vector.load %arg11[%c6_277, %c0_278, %c0_279] : memref<9x32x32xbf16, #tpu.memory_space<vmem>>, vector<1x32x32xbf16>
    %300 = vector.shape_cast %299 : vector<1x32x32xbf16> to vector<32x32xbf16>
    %cst_280 = arith.constant dense<0.000000e+00> : vector<32x8xf32>
    %301 = tpu.matmul %300, %247, %cst_280 {dimension_numbers = #tpu.dot_dimension_numbers<[1], [0], [0], [1], [0, 0, 1, 1], [], []>} : vector<32x32xbf16>, vector<32x8xbf16>, vector<32x8xf32> -> vector<32x8xf32>
    %302 = arith.truncf %301 : vector<32x8xf32> to vector<32x8xbf16>
    %cst_281 = arith.constant dense<0.000000e+00> : vector<32x32xf32>
    %303 = tpu.matmul %302, %298, %cst_281 {dimension_numbers = #tpu.dot_dimension_numbers<[1], [0], [0], [1], [0, 0, 1, 1], [], []>} : vector<32x8xbf16>, vector<8x32xbf16>, vector<32x32xf32> -> vector<32x32xf32>
    %304 = arith.addf %296, %303 : vector<32x32xf32>
    %c7_282 = arith.constant 7 : index
    %c0_283 = arith.constant 0 : index
    %c0_284 = arith.constant 0 : index
    %305 = vector.load %arg10[%c7_282, %c0_283, %c0_284] : memref<9x8x32xbf16, #tpu.memory_space<vmem>>, vector<1x8x32xbf16>
    %306 = vector.shape_cast %305 : vector<1x8x32xbf16> to vector<8x32xbf16>
    %c7_285 = arith.constant 7 : index
    %c0_286 = arith.constant 0 : index
    %c0_287 = arith.constant 0 : index
    %307 = vector.load %arg11[%c7_285, %c0_286, %c0_287] : memref<9x32x32xbf16, #tpu.memory_space<vmem>>, vector<1x32x32xbf16>
    %308 = vector.shape_cast %307 : vector<1x32x32xbf16> to vector<32x32xbf16>
    %cst_288 = arith.constant dense<0.000000e+00> : vector<32x8xf32>
    %309 = tpu.matmul %308, %247, %cst_288 {dimension_numbers = #tpu.dot_dimension_numbers<[1], [0], [0], [1], [0, 0, 1, 1], [], []>} : vector<32x32xbf16>, vector<32x8xbf16>, vector<32x8xf32> -> vector<32x8xf32>
    %310 = arith.truncf %309 : vector<32x8xf32> to vector<32x8xbf16>
    %cst_289 = arith.constant dense<0.000000e+00> : vector<32x32xf32>
    %311 = tpu.matmul %310, %306, %cst_289 {dimension_numbers = #tpu.dot_dimension_numbers<[1], [0], [0], [1], [0, 0, 1, 1], [], []>} : vector<32x8xbf16>, vector<8x32xbf16>, vector<32x32xf32> -> vector<32x32xf32>
    %312 = arith.addf %304, %311 : vector<32x32xf32>
    %c8_290 = arith.constant 8 : index
    %c0_291 = arith.constant 0 : index
    %c0_292 = arith.constant 0 : index
    %313 = vector.load %arg10[%c8_290, %c0_291, %c0_292] : memref<9x8x32xbf16, #tpu.memory_space<vmem>>, vector<1x8x32xbf16>
    %314 = vector.shape_cast %313 : vector<1x8x32xbf16> to vector<8x32xbf16>
    %c8_293 = arith.constant 8 : index
    %c0_294 = arith.constant 0 : index
    %c0_295 = arith.constant 0 : index
    %315 = vector.load %arg11[%c8_293, %c0_294, %c0_295] : memref<9x32x32xbf16, #tpu.memory_space<vmem>>, vector<1x32x32xbf16>
    %316 = vector.shape_cast %315 : vector<1x32x32xbf16> to vector<32x32xbf16>
    %cst_296 = arith.constant dense<0.000000e+00> : vector<32x8xf32>
    %317 = tpu.matmul %316, %247, %cst_296 {dimension_numbers = #tpu.dot_dimension_numbers<[1], [0], [0], [1], [0, 0, 1, 1], [], []>} : vector<32x32xbf16>, vector<32x8xbf16>, vector<32x8xf32> -> vector<32x8xf32>
    %318 = arith.truncf %317 : vector<32x8xf32> to vector<32x8xbf16>
    %cst_297 = arith.constant dense<0.000000e+00> : vector<32x32xf32>
    %319 = tpu.matmul %318, %314, %cst_297 {dimension_numbers = #tpu.dot_dimension_numbers<[1], [0], [0], [1], [0, 0, 1, 1], [], []>} : vector<32x8xbf16>, vector<8x32xbf16>, vector<32x32xf32> -> vector<32x32xf32>
    %320 = arith.addf %312, %319 : vector<32x32xf32>
    %c0_298 = arith.constant 0 : index
    %c0_299 = arith.constant 0 : index
    %321 = vector.load %arg12[%c0_298, %c0_299] : memref<32x1xf32, #tpu.memory_space<vmem>>, vector<32x1xf32>
    %322 = vector.broadcast %321 : vector<32x1xf32> to vector<32x32xf32>
    %323 = arith.addf %320, %322 : vector<32x32xf32>
    %cst_300 = arith.constant 0.000000e+00 : f32
    %324 = vector.broadcast %cst_300 : f32 to vector<32x32xf32>
    %325 = arith.cmpf oge, %323, %324 : vector<32x32xf32>
    %cst_301 = arith.constant 2.000000e-01 : f32
    %326 = vector.broadcast %cst_301 : f32 to vector<32x32xf32>
    %327 = arith.mulf %326, %323 : vector<32x32xf32>
    %328 = arith.select %325, %323, %327 : vector<32x32xi1>, vector<32x32xf32>
    %329 = arith.truncf %328 : vector<32x32xf32> to vector<32x32xbf16>
    %cst_302 = arith.constant 0.000000e+00 : f32
    %330 = vector.broadcast %cst_302 : f32 to vector<16x128xf32>
    %c0_303 = arith.constant 0 : index
    %c0_304 = arith.constant 0 : index
    %c0_305 = arith.constant 0 : index
    %331 = vector.load %arg13[%c0_303, %c0_304, %c0_305] : memref<9x32x128xbf16, #tpu.memory_space<vmem>>, vector<1x32x128xbf16>
    %332 = vector.shape_cast %331 : vector<1x32x128xbf16> to vector<32x128xbf16>
    %c0_306 = arith.constant 0 : index
    %c0_307 = arith.constant 0 : index
    %c0_308 = arith.constant 0 : index
    %333 = vector.load %arg14[%c0_306, %c0_307, %c0_308] : memref<9x16x32xbf16, #tpu.memory_space<vmem>>, vector<1x16x32xbf16>
    %334 = vector.shape_cast %333 : vector<1x16x32xbf16> to vector<16x32xbf16>
    %cst_309 = arith.constant dense<0.000000e+00> : vector<16x32xf32>
    %335 = tpu.matmul %334, %329, %cst_309 {dimension_numbers = #tpu.dot_dimension_numbers<[1], [0], [0], [1], [0, 0, 1, 1], [], []>} : vector<16x32xbf16>, vector<32x32xbf16>, vector<16x32xf32> -> vector<16x32xf32>
    %336 = arith.truncf %335 : vector<16x32xf32> to vector<16x32xbf16>
    %cst_310 = arith.constant dense<0.000000e+00> : vector<16x128xf32>
    %337 = tpu.matmul %336, %332, %cst_310 {dimension_numbers = #tpu.dot_dimension_numbers<[1], [0], [0], [1], [0, 0, 1, 1], [], []>} : vector<16x32xbf16>, vector<32x128xbf16>, vector<16x128xf32> -> vector<16x128xf32>
    %338 = arith.addf %330, %337 : vector<16x128xf32>
    %c1_311 = arith.constant 1 : index
    %c0_312 = arith.constant 0 : index
    %c0_313 = arith.constant 0 : index
    %339 = vector.load %arg13[%c1_311, %c0_312, %c0_313] : memref<9x32x128xbf16, #tpu.memory_space<vmem>>, vector<1x32x128xbf16>
    %340 = vector.shape_cast %339 : vector<1x32x128xbf16> to vector<32x128xbf16>
    %c1_314 = arith.constant 1 : index
    %c0_315 = arith.constant 0 : index
    %c0_316 = arith.constant 0 : index
    %341 = vector.load %arg14[%c1_314, %c0_315, %c0_316] : memref<9x16x32xbf16, #tpu.memory_space<vmem>>, vector<1x16x32xbf16>
    %342 = vector.shape_cast %341 : vector<1x16x32xbf16> to vector<16x32xbf16>
    %cst_317 = arith.constant dense<0.000000e+00> : vector<16x32xf32>
    %343 = tpu.matmul %342, %329, %cst_317 {dimension_numbers = #tpu.dot_dimension_numbers<[1], [0], [0], [1], [0, 0, 1, 1], [], []>} : vector<16x32xbf16>, vector<32x32xbf16>, vector<16x32xf32> -> vector<16x32xf32>
    %344 = arith.truncf %343 : vector<16x32xf32> to vector<16x32xbf16>
    %cst_318 = arith.constant dense<0.000000e+00> : vector<16x128xf32>
    %345 = tpu.matmul %344, %340, %cst_318 {dimension_numbers = #tpu.dot_dimension_numbers<[1], [0], [0], [1], [0, 0, 1, 1], [], []>} : vector<16x32xbf16>, vector<32x128xbf16>, vector<16x128xf32> -> vector<16x128xf32>
    %346 = arith.addf %338, %345 : vector<16x128xf32>
    %c2_319 = arith.constant 2 : index
    %c0_320 = arith.constant 0 : index
    %c0_321 = arith.constant 0 : index
    %347 = vector.load %arg13[%c2_319, %c0_320, %c0_321] : memref<9x32x128xbf16, #tpu.memory_space<vmem>>, vector<1x32x128xbf16>
    %348 = vector.shape_cast %347 : vector<1x32x128xbf16> to vector<32x128xbf16>
    %c2_322 = arith.constant 2 : index
    %c0_323 = arith.constant 0 : index
    %c0_324 = arith.constant 0 : index
    %349 = vector.load %arg14[%c2_322, %c0_323, %c0_324] : memref<9x16x32xbf16, #tpu.memory_space<vmem>>, vector<1x16x32xbf16>
    %350 = vector.shape_cast %349 : vector<1x16x32xbf16> to vector<16x32xbf16>
    %cst_325 = arith.constant dense<0.000000e+00> : vector<16x32xf32>
    %351 = tpu.matmul %350, %329, %cst_325 {dimension_numbers = #tpu.dot_dimension_numbers<[1], [0], [0], [1], [0, 0, 1, 1], [], []>} : vector<16x32xbf16>, vector<32x32xbf16>, vector<16x32xf32> -> vector<16x32xf32>
    %352 = arith.truncf %351 : vector<16x32xf32> to vector<16x32xbf16>
    %cst_326 = arith.constant dense<0.000000e+00> : vector<16x128xf32>
    %353 = tpu.matmul %352, %348, %cst_326 {dimension_numbers = #tpu.dot_dimension_numbers<[1], [0], [0], [1], [0, 0, 1, 1], [], []>} : vector<16x32xbf16>, vector<32x128xbf16>, vector<16x128xf32> -> vector<16x128xf32>
    %354 = arith.addf %346, %353 : vector<16x128xf32>
    %c3_327 = arith.constant 3 : index
    %c0_328 = arith.constant 0 : index
    %c0_329 = arith.constant 0 : index
    %355 = vector.load %arg13[%c3_327, %c0_328, %c0_329] : memref<9x32x128xbf16, #tpu.memory_space<vmem>>, vector<1x32x128xbf16>
    %356 = vector.shape_cast %355 : vector<1x32x128xbf16> to vector<32x128xbf16>
    %c3_330 = arith.constant 3 : index
    %c0_331 = arith.constant 0 : index
    %c0_332 = arith.constant 0 : index
    %357 = vector.load %arg14[%c3_330, %c0_331, %c0_332] : memref<9x16x32xbf16, #tpu.memory_space<vmem>>, vector<1x16x32xbf16>
    %358 = vector.shape_cast %357 : vector<1x16x32xbf16> to vector<16x32xbf16>
    %cst_333 = arith.constant dense<0.000000e+00> : vector<16x32xf32>
    %359 = tpu.matmul %358, %329, %cst_333 {dimension_numbers = #tpu.dot_dimension_numbers<[1], [0], [0], [1], [0, 0, 1, 1], [], []>} : vector<16x32xbf16>, vector<32x32xbf16>, vector<16x32xf32> -> vector<16x32xf32>
    %360 = arith.truncf %359 : vector<16x32xf32> to vector<16x32xbf16>
    %cst_334 = arith.constant dense<0.000000e+00> : vector<16x128xf32>
    %361 = tpu.matmul %360, %356, %cst_334 {dimension_numbers = #tpu.dot_dimension_numbers<[1], [0], [0], [1], [0, 0, 1, 1], [], []>} : vector<16x32xbf16>, vector<32x128xbf16>, vector<16x128xf32> -> vector<16x128xf32>
    %362 = arith.addf %354, %361 : vector<16x128xf32>
    %c4_335 = arith.constant 4 : index
    %c0_336 = arith.constant 0 : index
    %c0_337 = arith.constant 0 : index
    %363 = vector.load %arg13[%c4_335, %c0_336, %c0_337] : memref<9x32x128xbf16, #tpu.memory_space<vmem>>, vector<1x32x128xbf16>
    %364 = vector.shape_cast %363 : vector<1x32x128xbf16> to vector<32x128xbf16>
    %c4_338 = arith.constant 4 : index
    %c0_339 = arith.constant 0 : index
    %c0_340 = arith.constant 0 : index
    %365 = vector.load %arg14[%c4_338, %c0_339, %c0_340] : memref<9x16x32xbf16, #tpu.memory_space<vmem>>, vector<1x16x32xbf16>
    %366 = vector.shape_cast %365 : vector<1x16x32xbf16> to vector<16x32xbf16>
    %cst_341 = arith.constant dense<0.000000e+00> : vector<16x32xf32>
    %367 = tpu.matmul %366, %329, %cst_341 {dimension_numbers = #tpu.dot_dimension_numbers<[1], [0], [0], [1], [0, 0, 1, 1], [], []>} : vector<16x32xbf16>, vector<32x32xbf16>, vector<16x32xf32> -> vector<16x32xf32>
    %368 = arith.truncf %367 : vector<16x32xf32> to vector<16x32xbf16>
    %cst_342 = arith.constant dense<0.000000e+00> : vector<16x128xf32>
    %369 = tpu.matmul %368, %364, %cst_342 {dimension_numbers = #tpu.dot_dimension_numbers<[1], [0], [0], [1], [0, 0, 1, 1], [], []>} : vector<16x32xbf16>, vector<32x128xbf16>, vector<16x128xf32> -> vector<16x128xf32>
    %370 = arith.addf %362, %369 : vector<16x128xf32>
    %c5_343 = arith.constant 5 : index
    %c0_344 = arith.constant 0 : index
    %c0_345 = arith.constant 0 : index
    %371 = vector.load %arg13[%c5_343, %c0_344, %c0_345] : memref<9x32x128xbf16, #tpu.memory_space<vmem>>, vector<1x32x128xbf16>
    %372 = vector.shape_cast %371 : vector<1x32x128xbf16> to vector<32x128xbf16>
    %c5_346 = arith.constant 5 : index
    %c0_347 = arith.constant 0 : index
    %c0_348 = arith.constant 0 : index
    %373 = vector.load %arg14[%c5_346, %c0_347, %c0_348] : memref<9x16x32xbf16, #tpu.memory_space<vmem>>, vector<1x16x32xbf16>
    %374 = vector.shape_cast %373 : vector<1x16x32xbf16> to vector<16x32xbf16>
    %cst_349 = arith.constant dense<0.000000e+00> : vector<16x32xf32>
    %375 = tpu.matmul %374, %329, %cst_349 {dimension_numbers = #tpu.dot_dimension_numbers<[1], [0], [0], [1], [0, 0, 1, 1], [], []>} : vector<16x32xbf16>, vector<32x32xbf16>, vector<16x32xf32> -> vector<16x32xf32>
    %376 = arith.truncf %375 : vector<16x32xf32> to vector<16x32xbf16>
    %cst_350 = arith.constant dense<0.000000e+00> : vector<16x128xf32>
    %377 = tpu.matmul %376, %372, %cst_350 {dimension_numbers = #tpu.dot_dimension_numbers<[1], [0], [0], [1], [0, 0, 1, 1], [], []>} : vector<16x32xbf16>, vector<32x128xbf16>, vector<16x128xf32> -> vector<16x128xf32>
    %378 = arith.addf %370, %377 : vector<16x128xf32>
    %c6_351 = arith.constant 6 : index
    %c0_352 = arith.constant 0 : index
    %c0_353 = arith.constant 0 : index
    %379 = vector.load %arg13[%c6_351, %c0_352, %c0_353] : memref<9x32x128xbf16, #tpu.memory_space<vmem>>, vector<1x32x128xbf16>
    %380 = vector.shape_cast %379 : vector<1x32x128xbf16> to vector<32x128xbf16>
    %c6_354 = arith.constant 6 : index
    %c0_355 = arith.constant 0 : index
    %c0_356 = arith.constant 0 : index
    %381 = vector.load %arg14[%c6_354, %c0_355, %c0_356] : memref<9x16x32xbf16, #tpu.memory_space<vmem>>, vector<1x16x32xbf16>
    %382 = vector.shape_cast %381 : vector<1x16x32xbf16> to vector<16x32xbf16>
    %cst_357 = arith.constant dense<0.000000e+00> : vector<16x32xf32>
    %383 = tpu.matmul %382, %329, %cst_357 {dimension_numbers = #tpu.dot_dimension_numbers<[1], [0], [0], [1], [0, 0, 1, 1], [], []>} : vector<16x32xbf16>, vector<32x32xbf16>, vector<16x32xf32> -> vector<16x32xf32>
    %384 = arith.truncf %383 : vector<16x32xf32> to vector<16x32xbf16>
    %cst_358 = arith.constant dense<0.000000e+00> : vector<16x128xf32>
    %385 = tpu.matmul %384, %380, %cst_358 {dimension_numbers = #tpu.dot_dimension_numbers<[1], [0], [0], [1], [0, 0, 1, 1], [], []>} : vector<16x32xbf16>, vector<32x128xbf16>, vector<16x128xf32> -> vector<16x128xf32>
    %386 = arith.addf %378, %385 : vector<16x128xf32>
    %c7_359 = arith.constant 7 : index
    %c0_360 = arith.constant 0 : index
    %c0_361 = arith.constant 0 : index
    %387 = vector.load %arg13[%c7_359, %c0_360, %c0_361] : memref<9x32x128xbf16, #tpu.memory_space<vmem>>, vector<1x32x128xbf16>
    %388 = vector.shape_cast %387 : vector<1x32x128xbf16> to vector<32x128xbf16>
    %c7_362 = arith.constant 7 : index
    %c0_363 = arith.constant 0 : index
    %c0_364 = arith.constant 0 : index
    %389 = vector.load %arg14[%c7_362, %c0_363, %c0_364] : memref<9x16x32xbf16, #tpu.memory_space<vmem>>, vector<1x16x32xbf16>
    %390 = vector.shape_cast %389 : vector<1x16x32xbf16> to vector<16x32xbf16>
    %cst_365 = arith.constant dense<0.000000e+00> : vector<16x32xf32>
    %391 = tpu.matmul %390, %329, %cst_365 {dimension_numbers = #tpu.dot_dimension_numbers<[1], [0], [0], [1], [0, 0, 1, 1], [], []>} : vector<16x32xbf16>, vector<32x32xbf16>, vector<16x32xf32> -> vector<16x32xf32>
    %392 = arith.truncf %391 : vector<16x32xf32> to vector<16x32xbf16>
    %cst_366 = arith.constant dense<0.000000e+00> : vector<16x128xf32>
    %393 = tpu.matmul %392, %388, %cst_366 {dimension_numbers = #tpu.dot_dimension_numbers<[1], [0], [0], [1], [0, 0, 1, 1], [], []>} : vector<16x32xbf16>, vector<32x128xbf16>, vector<16x128xf32> -> vector<16x128xf32>
    %394 = arith.addf %386, %393 : vector<16x128xf32>
    %c8_367 = arith.constant 8 : index
    %c0_368 = arith.constant 0 : index
    %c0_369 = arith.constant 0 : index
    %395 = vector.load %arg13[%c8_367, %c0_368, %c0_369] : memref<9x32x128xbf16, #tpu.memory_space<vmem>>, vector<1x32x128xbf16>
    %396 = vector.shape_cast %395 : vector<1x32x128xbf16> to vector<32x128xbf16>
    %c8_370 = arith.constant 8 : index
    %c0_371 = arith.constant 0 : index
    %c0_372 = arith.constant 0 : index
    %397 = vector.load %arg14[%c8_370, %c0_371, %c0_372] : memref<9x16x32xbf16, #tpu.memory_space<vmem>>, vector<1x16x32xbf16>
    %398 = vector.shape_cast %397 : vector<1x16x32xbf16> to vector<16x32xbf16>
    %cst_373 = arith.constant dense<0.000000e+00> : vector<16x32xf32>
    %399 = tpu.matmul %398, %329, %cst_373 {dimension_numbers = #tpu.dot_dimension_numbers<[1], [0], [0], [1], [0, 0, 1, 1], [], []>} : vector<16x32xbf16>, vector<32x32xbf16>, vector<16x32xf32> -> vector<16x32xf32>
    %400 = arith.truncf %399 : vector<16x32xf32> to vector<16x32xbf16>
    %cst_374 = arith.constant dense<0.000000e+00> : vector<16x128xf32>
    %401 = tpu.matmul %400, %396, %cst_374 {dimension_numbers = #tpu.dot_dimension_numbers<[1], [0], [0], [1], [0, 0, 1, 1], [], []>} : vector<16x32xbf16>, vector<32x128xbf16>, vector<16x128xf32> -> vector<16x128xf32>
    %402 = arith.addf %394, %401 : vector<16x128xf32>
    %c0_375 = arith.constant 0 : index
    %c0_376 = arith.constant 0 : index
    %403 = vector.load %arg15[%c0_375, %c0_376] : memref<16x1xf32, #tpu.memory_space<vmem>>, vector<16x1xf32>
    %404 = vector.broadcast %403 : vector<16x1xf32> to vector<16x128xf32>
    %405 = arith.addf %402, %404 : vector<16x128xf32>
    %cst_377 = arith.constant 0.000000e+00 : f32
    %406 = vector.broadcast %cst_377 : f32 to vector<16x128xf32>
    %407 = arith.cmpf oge, %405, %406 : vector<16x128xf32>
    %cst_378 = arith.constant 2.000000e-01 : f32
    %408 = vector.broadcast %cst_378 : f32 to vector<16x128xf32>
    %409 = arith.mulf %408, %405 : vector<16x128xf32>
    %410 = arith.select %407, %405, %409 : vector<16x128xi1>, vector<16x128xf32>
    %411 = arith.truncf %410 : vector<16x128xf32> to vector<16x128xbf16>
    %cst_379 = arith.constant 0.000000e+00 : f32
    %412 = vector.broadcast %cst_379 : f32 to vector<3x512xf32>
    %c0_380 = arith.constant 0 : index
    %c0_381 = arith.constant 0 : index
    %c0_382 = arith.constant 0 : index
    %413 = vector.load %arg16[%c0_380, %c0_381, %c0_382] : memref<9x128x512xbf16, #tpu.memory_space<vmem>>, vector<1x128x512xbf16>
    %414 = vector.shape_cast %413 : vector<1x128x512xbf16> to vector<128x512xbf16>
    %c0_383 = arith.constant 0 : index
    %c0_384 = arith.constant 0 : index
    %c0_385 = arith.constant 0 : index
    %415 = vector.load %arg17[%c0_383, %c0_384, %c0_385] : memref<9x3x16xbf16, #tpu.memory_space<vmem>>, vector<1x3x16xbf16>
    %416 = vector.shape_cast %415 : vector<1x3x16xbf16> to vector<3x16xbf16>
    %cst_386 = arith.constant dense<0.000000e+00> : vector<3x128xf32>
    %417 = tpu.matmul %416, %411, %cst_386 {dimension_numbers = #tpu.dot_dimension_numbers<[1], [0], [0], [1], [0, 0, 1, 1], [], []>} : vector<3x16xbf16>, vector<16x128xbf16>, vector<3x128xf32> -> vector<3x128xf32>
    %418 = arith.truncf %417 : vector<3x128xf32> to vector<3x128xbf16>
    %cst_387 = arith.constant dense<0.000000e+00> : vector<3x512xf32>
    %419 = tpu.matmul %418, %414, %cst_387 {dimension_numbers = #tpu.dot_dimension_numbers<[1], [0], [0], [1], [0, 0, 1, 1], [], []>} : vector<3x128xbf16>, vector<128x512xbf16>, vector<3x512xf32> -> vector<3x512xf32>
    %420 = arith.addf %412, %419 : vector<3x512xf32>
    %c1_388 = arith.constant 1 : index
    %c0_389 = arith.constant 0 : index
    %c0_390 = arith.constant 0 : index
    %421 = vector.load %arg16[%c1_388, %c0_389, %c0_390] : memref<9x128x512xbf16, #tpu.memory_space<vmem>>, vector<1x128x512xbf16>
    %422 = vector.shape_cast %421 : vector<1x128x512xbf16> to vector<128x512xbf16>
    %c1_391 = arith.constant 1 : index
    %c0_392 = arith.constant 0 : index
    %c0_393 = arith.constant 0 : index
    %423 = vector.load %arg17[%c1_391, %c0_392, %c0_393] : memref<9x3x16xbf16, #tpu.memory_space<vmem>>, vector<1x3x16xbf16>
    %424 = vector.shape_cast %423 : vector<1x3x16xbf16> to vector<3x16xbf16>
    %cst_394 = arith.constant dense<0.000000e+00> : vector<3x128xf32>
    %425 = tpu.matmul %424, %411, %cst_394 {dimension_numbers = #tpu.dot_dimension_numbers<[1], [0], [0], [1], [0, 0, 1, 1], [], []>} : vector<3x16xbf16>, vector<16x128xbf16>, vector<3x128xf32> -> vector<3x128xf32>
    %426 = arith.truncf %425 : vector<3x128xf32> to vector<3x128xbf16>
    %cst_395 = arith.constant dense<0.000000e+00> : vector<3x512xf32>
    %427 = tpu.matmul %426, %422, %cst_395 {dimension_numbers = #tpu.dot_dimension_numbers<[1], [0], [0], [1], [0, 0, 1, 1], [], []>} : vector<3x128xbf16>, vector<128x512xbf16>, vector<3x512xf32> -> vector<3x512xf32>
    %428 = arith.addf %420, %427 : vector<3x512xf32>
    %c2_396 = arith.constant 2 : index
    %c0_397 = arith.constant 0 : index
    %c0_398 = arith.constant 0 : index
    %429 = vector.load %arg16[%c2_396, %c0_397, %c0_398] : memref<9x128x512xbf16, #tpu.memory_space<vmem>>, vector<1x128x512xbf16>
    %430 = vector.shape_cast %429 : vector<1x128x512xbf16> to vector<128x512xbf16>
    %c2_399 = arith.constant 2 : index
    %c0_400 = arith.constant 0 : index
    %c0_401 = arith.constant 0 : index
    %431 = vector.load %arg17[%c2_399, %c0_400, %c0_401] : memref<9x3x16xbf16, #tpu.memory_space<vmem>>, vector<1x3x16xbf16>
    %432 = vector.shape_cast %431 : vector<1x3x16xbf16> to vector<3x16xbf16>
    %cst_402 = arith.constant dense<0.000000e+00> : vector<3x128xf32>
    %433 = tpu.matmul %432, %411, %cst_402 {dimension_numbers = #tpu.dot_dimension_numbers<[1], [0], [0], [1], [0, 0, 1, 1], [], []>} : vector<3x16xbf16>, vector<16x128xbf16>, vector<3x128xf32> -> vector<3x128xf32>
    %434 = arith.truncf %433 : vector<3x128xf32> to vector<3x128xbf16>
    %cst_403 = arith.constant dense<0.000000e+00> : vector<3x512xf32>
    %435 = tpu.matmul %434, %430, %cst_403 {dimension_numbers = #tpu.dot_dimension_numbers<[1], [0], [0], [1], [0, 0, 1, 1], [], []>} : vector<3x128xbf16>, vector<128x512xbf16>, vector<3x512xf32> -> vector<3x512xf32>
    %436 = arith.addf %428, %435 : vector<3x512xf32>
    %c3_404 = arith.constant 3 : index
    %c0_405 = arith.constant 0 : index
    %c0_406 = arith.constant 0 : index
    %437 = vector.load %arg16[%c3_404, %c0_405, %c0_406] : memref<9x128x512xbf16, #tpu.memory_space<vmem>>, vector<1x128x512xbf16>
    %438 = vector.shape_cast %437 : vector<1x128x512xbf16> to vector<128x512xbf16>
    %c3_407 = arith.constant 3 : index
    %c0_408 = arith.constant 0 : index
    %c0_409 = arith.constant 0 : index
    %439 = vector.load %arg17[%c3_407, %c0_408, %c0_409] : memref<9x3x16xbf16, #tpu.memory_space<vmem>>, vector<1x3x16xbf16>
    %440 = vector.shape_cast %439 : vector<1x3x16xbf16> to vector<3x16xbf16>
    %cst_410 = arith.constant dense<0.000000e+00> : vector<3x128xf32>
    %441 = tpu.matmul %440, %411, %cst_410 {dimension_numbers = #tpu.dot_dimension_numbers<[1], [0], [0], [1], [0, 0, 1, 1], [], []>} : vector<3x16xbf16>, vector<16x128xbf16>, vector<3x128xf32> -> vector<3x128xf32>
    %442 = arith.truncf %441 : vector<3x128xf32> to vector<3x128xbf16>
    %cst_411 = arith.constant dense<0.000000e+00> : vector<3x512xf32>
    %443 = tpu.matmul %442, %438, %cst_411 {dimension_numbers = #tpu.dot_dimension_numbers<[1], [0], [0], [1], [0, 0, 1, 1], [], []>} : vector<3x128xbf16>, vector<128x512xbf16>, vector<3x512xf32> -> vector<3x512xf32>
    %444 = arith.addf %436, %443 : vector<3x512xf32>
    %c4_412 = arith.constant 4 : index
    %c0_413 = arith.constant 0 : index
    %c0_414 = arith.constant 0 : index
    %445 = vector.load %arg16[%c4_412, %c0_413, %c0_414] : memref<9x128x512xbf16, #tpu.memory_space<vmem>>, vector<1x128x512xbf16>
    %446 = vector.shape_cast %445 : vector<1x128x512xbf16> to vector<128x512xbf16>
    %c4_415 = arith.constant 4 : index
    %c0_416 = arith.constant 0 : index
    %c0_417 = arith.constant 0 : index
    %447 = vector.load %arg17[%c4_415, %c0_416, %c0_417] : memref<9x3x16xbf16, #tpu.memory_space<vmem>>, vector<1x3x16xbf16>
    %448 = vector.shape_cast %447 : vector<1x3x16xbf16> to vector<3x16xbf16>
    %cst_418 = arith.constant dense<0.000000e+00> : vector<3x128xf32>
    %449 = tpu.matmul %448, %411, %cst_418 {dimension_numbers = #tpu.dot_dimension_numbers<[1], [0], [0], [1], [0, 0, 1, 1], [], []>} : vector<3x16xbf16>, vector<16x128xbf16>, vector<3x128xf32> -> vector<3x128xf32>
    %450 = arith.truncf %449 : vector<3x128xf32> to vector<3x128xbf16>
    %cst_419 = arith.constant dense<0.000000e+00> : vector<3x512xf32>
    %451 = tpu.matmul %450, %446, %cst_419 {dimension_numbers = #tpu.dot_dimension_numbers<[1], [0], [0], [1], [0, 0, 1, 1], [], []>} : vector<3x128xbf16>, vector<128x512xbf16>, vector<3x512xf32> -> vector<3x512xf32>
    %452 = arith.addf %444, %451 : vector<3x512xf32>
    %c5_420 = arith.constant 5 : index
    %c0_421 = arith.constant 0 : index
    %c0_422 = arith.constant 0 : index
    %453 = vector.load %arg16[%c5_420, %c0_421, %c0_422] : memref<9x128x512xbf16, #tpu.memory_space<vmem>>, vector<1x128x512xbf16>
    %454 = vector.shape_cast %453 : vector<1x128x512xbf16> to vector<128x512xbf16>
    %c5_423 = arith.constant 5 : index
    %c0_424 = arith.constant 0 : index
    %c0_425 = arith.constant 0 : index
    %455 = vector.load %arg17[%c5_423, %c0_424, %c0_425] : memref<9x3x16xbf16, #tpu.memory_space<vmem>>, vector<1x3x16xbf16>
    %456 = vector.shape_cast %455 : vector<1x3x16xbf16> to vector<3x16xbf16>
    %cst_426 = arith.constant dense<0.000000e+00> : vector<3x128xf32>
    %457 = tpu.matmul %456, %411, %cst_426 {dimension_numbers = #tpu.dot_dimension_numbers<[1], [0], [0], [1], [0, 0, 1, 1], [], []>} : vector<3x16xbf16>, vector<16x128xbf16>, vector<3x128xf32> -> vector<3x128xf32>
    %458 = arith.truncf %457 : vector<3x128xf32> to vector<3x128xbf16>
    %cst_427 = arith.constant dense<0.000000e+00> : vector<3x512xf32>
    %459 = tpu.matmul %458, %454, %cst_427 {dimension_numbers = #tpu.dot_dimension_numbers<[1], [0], [0], [1], [0, 0, 1, 1], [], []>} : vector<3x128xbf16>, vector<128x512xbf16>, vector<3x512xf32> -> vector<3x512xf32>
    %460 = arith.addf %452, %459 : vector<3x512xf32>
    %c6_428 = arith.constant 6 : index
    %c0_429 = arith.constant 0 : index
    %c0_430 = arith.constant 0 : index
    %461 = vector.load %arg16[%c6_428, %c0_429, %c0_430] : memref<9x128x512xbf16, #tpu.memory_space<vmem>>, vector<1x128x512xbf16>
    %462 = vector.shape_cast %461 : vector<1x128x512xbf16> to vector<128x512xbf16>
    %c6_431 = arith.constant 6 : index
    %c0_432 = arith.constant 0 : index
    %c0_433 = arith.constant 0 : index
    %463 = vector.load %arg17[%c6_431, %c0_432, %c0_433] : memref<9x3x16xbf16, #tpu.memory_space<vmem>>, vector<1x3x16xbf16>
    %464 = vector.shape_cast %463 : vector<1x3x16xbf16> to vector<3x16xbf16>
    %cst_434 = arith.constant dense<0.000000e+00> : vector<3x128xf32>
    %465 = tpu.matmul %464, %411, %cst_434 {dimension_numbers = #tpu.dot_dimension_numbers<[1], [0], [0], [1], [0, 0, 1, 1], [], []>} : vector<3x16xbf16>, vector<16x128xbf16>, vector<3x128xf32> -> vector<3x128xf32>
    %466 = arith.truncf %465 : vector<3x128xf32> to vector<3x128xbf16>
    %cst_435 = arith.constant dense<0.000000e+00> : vector<3x512xf32>
    %467 = tpu.matmul %466, %462, %cst_435 {dimension_numbers = #tpu.dot_dimension_numbers<[1], [0], [0], [1], [0, 0, 1, 1], [], []>} : vector<3x128xbf16>, vector<128x512xbf16>, vector<3x512xf32> -> vector<3x512xf32>
    %468 = arith.addf %460, %467 : vector<3x512xf32>
    %c7_436 = arith.constant 7 : index
    %c0_437 = arith.constant 0 : index
    %c0_438 = arith.constant 0 : index
    %469 = vector.load %arg16[%c7_436, %c0_437, %c0_438] : memref<9x128x512xbf16, #tpu.memory_space<vmem>>, vector<1x128x512xbf16>
    %470 = vector.shape_cast %469 : vector<1x128x512xbf16> to vector<128x512xbf16>
    %c7_439 = arith.constant 7 : index
    %c0_440 = arith.constant 0 : index
    %c0_441 = arith.constant 0 : index
    %471 = vector.load %arg17[%c7_439, %c0_440, %c0_441] : memref<9x3x16xbf16, #tpu.memory_space<vmem>>, vector<1x3x16xbf16>
    %472 = vector.shape_cast %471 : vector<1x3x16xbf16> to vector<3x16xbf16>
    %cst_442 = arith.constant dense<0.000000e+00> : vector<3x128xf32>
    %473 = tpu.matmul %472, %411, %cst_442 {dimension_numbers = #tpu.dot_dimension_numbers<[1], [0], [0], [1], [0, 0, 1, 1], [], []>} : vector<3x16xbf16>, vector<16x128xbf16>, vector<3x128xf32> -> vector<3x128xf32>
    %474 = arith.truncf %473 : vector<3x128xf32> to vector<3x128xbf16>
    %cst_443 = arith.constant dense<0.000000e+00> : vector<3x512xf32>
    %475 = tpu.matmul %474, %470, %cst_443 {dimension_numbers = #tpu.dot_dimension_numbers<[1], [0], [0], [1], [0, 0, 1, 1], [], []>} : vector<3x128xbf16>, vector<128x512xbf16>, vector<3x512xf32> -> vector<3x512xf32>
    %476 = arith.addf %468, %475 : vector<3x512xf32>
    %c8_444 = arith.constant 8 : index
    %c0_445 = arith.constant 0 : index
    %c0_446 = arith.constant 0 : index
    %477 = vector.load %arg16[%c8_444, %c0_445, %c0_446] : memref<9x128x512xbf16, #tpu.memory_space<vmem>>, vector<1x128x512xbf16>
    %478 = vector.shape_cast %477 : vector<1x128x512xbf16> to vector<128x512xbf16>
    %c8_447 = arith.constant 8 : index
    %c0_448 = arith.constant 0 : index
    %c0_449 = arith.constant 0 : index
    %479 = vector.load %arg17[%c8_447, %c0_448, %c0_449] : memref<9x3x16xbf16, #tpu.memory_space<vmem>>, vector<1x3x16xbf16>
    %480 = vector.shape_cast %479 : vector<1x3x16xbf16> to vector<3x16xbf16>
    %cst_450 = arith.constant dense<0.000000e+00> : vector<3x128xf32>
    %481 = tpu.matmul %480, %411, %cst_450 {dimension_numbers = #tpu.dot_dimension_numbers<[1], [0], [0], [1], [0, 0, 1, 1], [], []>} : vector<3x16xbf16>, vector<16x128xbf16>, vector<3x128xf32> -> vector<3x128xf32>
    %482 = arith.truncf %481 : vector<3x128xf32> to vector<3x128xbf16>
    %cst_451 = arith.constant dense<0.000000e+00> : vector<3x512xf32>
    %483 = tpu.matmul %482, %478, %cst_451 {dimension_numbers = #tpu.dot_dimension_numbers<[1], [0], [0], [1], [0, 0, 1, 1], [], []>} : vector<3x128xbf16>, vector<128x512xbf16>, vector<3x512xf32> -> vector<3x512xf32>
    %484 = arith.addf %476, %483 : vector<3x512xf32>
    %c0_452 = arith.constant 0 : index
    %c0_453 = arith.constant 0 : index
    %485 = vector.load %arg18[%c0_452, %c0_453] : memref<3x1xf32, #tpu.memory_space<vmem>>, vector<3x1xf32>
    %486 = vector.broadcast %485 : vector<3x1xf32> to vector<3x512xf32>
    %487 = arith.addf %484, %486 : vector<3x512xf32>
    %488 = math.tanh %487 : vector<3x512xf32>
    %c0_454 = arith.constant 0 : index
    %c0_455 = arith.constant 0 : index
    %489 = vector.load %arg20[%c0_454, %c0_455] : memref<3x512xf32, #tpu.memory_space<vmem>>, vector<3x512xf32>
    tpu.vector_store %arg20[%c0_454, %c0_455], %488 {strides = array<i32>} : memref<3x512xf32, #tpu.memory_space<vmem>>, vector<3x512xf32>,
    return
  }
}

</mosaic_0001>

<llo_original>
// kernel: _forward_impl.1
$region0: #{_forward_impl.1}
  #allocation0 [shape = 'u32[]', space=smem, size = 0x4, offset = 0x4, fixed_abs, tag = 'smem constant byte address 0x4 - core index']
  #allocation1 [shape = 'u32[144,128]{1,0:T(1,128)}', space=vmem, size = 0x12000, scoped, tag = 'internal scratch']
  %s0 = inlined_call_operand.vmem [shape: bf16[3,512], index: 0, kind: input, shape index: {}]
  %s1 = inlined_call_operand.hbm [shape: bf16[9,512,128], index: 1, kind: input, shape index: {}]
  %s2 = inlined_call_operand.vmem [shape: bf16[9,16,3], index: 2, kind: input, shape index: {}]
  %s3 = inlined_call_operand.vmem [shape: f32[16,1], index: 3, kind: input, shape index: {}]
  %s4 = inlined_call_operand.vmem [shape: bf16[9,128,32], index: 4, kind: input, shape index: {}]
  %s5 = inlined_call_operand.vmem [shape: bf16[9,32,16], index: 5, kind: input, shape index: {}]
  %s6 = inlined_call_operand.vmem [shape: f32[32,1], index: 6, kind: input, shape index: {}]
  %s7 = inlined_call_operand.vmem [shape: bf16[9,32,8], index: 7, kind: input, shape index: {}]
  %s8 = inlined_call_operand.hbm [shape: bf16[9,32,32], index: 8, kind: input, shape index: {}]
  %s9 = inlined_call_operand.vmem [shape: f32[32,1], index: 9, kind: input, shape index: {}]
  %s10 = inlined_call_operand.hbm [shape: bf16[9,8,32], index: 10, kind: input, shape index: {}]
  %s11 = inlined_call_operand.hbm [shape: bf16[9,32,32], index: 11, kind: input, shape index: {}]
  %s12 = inlined_call_operand.vmem [shape: f32[32,1], index: 12, kind: input, shape index: {}]
  %s13 = inlined_call_operand.hbm [shape: bf16[9,32,128], index: 13, kind: input, shape index: {}]
  %s14 = inlined_call_operand.hbm [shape: bf16[9,16,32], index: 14, kind: input, shape index: {}]
  %s15 = inlined_call_operand.vmem [shape: f32[16,1], index: 15, kind: input, shape index: {}]
  %s16 = inlined_call_operand.hbm [shape: bf16[9,128,512], index: 16, kind: input, shape index: {}]
  %s17 = inlined_call_operand.hbm [shape: bf16[9,3,16], index: 17, kind: input, shape index: {}]
  %s18 = inlined_call_operand.vmem [shape: f32[3,1], index: 18, kind: input, shape index: {}]
  %s19 = inlined_call_operand.vmem [shape: f32[32,8], index: 19, kind: output, shape index: {0}]
  %s20 = inlined_call_operand.vmem [shape: f32[3,512], index: 20, kind: output, shape index: {1}]
  %21 = xla_tuple %s19, %s20
  %s22 = sld [smem:[#allocation0]]
  $region126: #{_forward_impl.1} parent=0
    _
  %s24 = ssub.s32 1, %s22
  %s25 = scalar_select 0, %s24, %s22
  $region1: #{_forward_impl.1} parent=0
    #allocation2 [shape = 'u8[1179648]{0}', space=vmem, size = 0x120000, scoped, tag = 'input window, operand 1, single buffered']
    #allocation3 [shape = 's32[1]{0}', space=sflag, size = 0x4, scoped, tag = 'scoped memory for _forward_impl.1']
    #allocation4 [shape = 'u8[73728]{0}', space=vmem, size = 0x12000, scoped, tag = 'input window, operand 8, single buffered']
    #allocation5 [shape = 's32[1]{0}', space=sflag, size = 0x4, scoped, tag = 'scoped memory for _forward_impl.1']
    #allocation6 [shape = 'u8[18432]{0}', space=vmem, size = 0x4800, scoped, tag = 'input window, operand 10, single buffered']
    #allocation7 [shape = 'u8[73728]{0}', space=vmem, size = 0x12000, scoped, tag = 'input window, operand 11, single buffered']
    #allocation8 [shape = 's32[1]{0}', space=sflag, size = 0x4, scoped, tag = 'scoped memory for _forward_impl.1']
    #allocation9 [shape = 'u8[73728]{0}', space=vmem, size = 0x12000, scoped, tag = 'input window, operand 13, single buffered']
    #allocation10 [shape = 'u8[36864]{0}', space=vmem, size = 0x9000, scoped, tag = 'input window, operand 14, single buffered']
    #allocation11 [shape = 's32[1]{0}', space=sflag, size = 0x4, scoped, tag = 'scoped memory for _forward_impl.1']
    #allocation12 [shape = 'u8[1179648]{0}', space=vmem, size = 0x120000, scoped, tag = 'input window, operand 16, single buffered']
    #allocation13 [shape = 'u8[9216]{0}', space=vmem, size = 0x2400, scoped, tag = 'input window, operand 17, single buffered']
    #allocation14 [shape = 's32[1]{0}', space=sflag, size = 0x4, scoped, tag = 'scoped memory for _forward_impl.1']
    %26 = vsyncpa [#allocation3], 0
    %27 = vsyncpa [#allocation5], 0
    %28 = vsyncpa [#allocation8], 0
    %29 = vsyncpa [#allocation11], 0
    %30 = vsyncpa [#allocation14], 0
    // Predicated region
    $region2: #{_forward_impl.1} parent=1 // pred_check
      _
    $region3: #{_forward_impl.1} parent=1 // pred_check_branch
      %32 = sbr.rel (0) target = $region5
    $region4: #{_forward_impl.1} parent=1 // pred_region
      _
    $region5: #{_forward_impl.1} parent=1 // pred_fallthru
      _
    // Predicated region
    $region6: #{_forward_impl.1} parent=1 // pred_check
      _
    $region7: #{_forward_impl.1} parent=1 // pred_check_branch
      %34 = sbr.rel (0) target = $region9
    $region8: #{_forward_impl.1} parent=1 // pred_region
      %s36 = ssub.s32 36864, 36864
      %37 = vsyncadd [#allocation3], %s36
      %s38 = sshll.u32 [#allocation2], 4
      %s39 = int_to_ptr.vmem [resolvable:$true] %s38
      %44 = dma.hbm_to_vmem [thread:$0]  %s1, 36864, %s39, [#allocation3], 64, 64, 4
    $region9: #{_forward_impl.1} parent=1 // pred_fallthru
      _
    // Predicated region
    $region10: #{_forward_impl.1} parent=1 // pred_check
      _
    $region11: #{_forward_impl.1} parent=1 // pred_check_branch
      %46 = sbr.rel (0) target = $region13
    $region12: #{_forward_impl.1} parent=1 // pred_region
      _
    $region13: #{_forward_impl.1} parent=1 // pred_fallthru
      _
    // Predicated region
    $region14: #{_forward_impl.1} parent=1 // pred_check
      _
    $region15: #{_forward_impl.1} parent=1 // pred_check_branch
      %48 = sbr.rel (0) target = $region17
    $region16: #{_forward_impl.1} parent=1 // pred_region
      _
    $region17: #{_forward_impl.1} parent=1 // pred_fallthru
      _
    // Predicated region
    $region18: #{_forward_impl.1} parent=1 // pred_check
      _
    $region19: #{_forward_impl.1} parent=1 // pred_check_branch
      %50 = sbr.rel (0) target = $region21
    $region20: #{_forward_impl.1} parent=1 // pred_region
      _
    $region21: #{_forward_impl.1} parent=1 // pred_fallthru
      _
    // Predicated region
    $region22: #{_forward_impl.1} parent=1 // pred_check
      _
    $region23: #{_forward_impl.1} parent=1 // pred_check_branch
      %52 = sbr.rel (0) target = $region25
    $region24: #{_forward_impl.1} parent=1 // pred_region
      _
    $region25: #{_forward_impl.1} parent=1 // pred_fallthru
      _
    // Predicated region
    $region26: #{_forward_impl.1} parent=1 // pred_check
      _
    $region27: #{_forward_impl.1} parent=1 // pred_check_branch
      %54 = sbr.rel (0) target = $region29
    $region28: #{_forward_impl.1} parent=1 // pred_region
      _
    $region29: #{_forward_impl.1} parent=1 // pred_fallthru
      _
    // Predicated region
    $region30: #{_forward_impl.1} parent=1 // pred_check
      _
    $region31: #{_forward_impl.1} parent=1 // pred_check_branch
      %56 = sbr.rel (0) target = $region33
    $region32: #{_forward_impl.1} parent=1 // pred_region
      _
    $region33: #{_forward_impl.1} parent=1 // pred_fallthru
      _
    // Predicated region
    $region34: #{_forward_impl.1} parent=1 // pred_check
      _
    $region35: #{_forward_impl.1} parent=1 // pred_check_branch
      %58 = sbr.rel (0) target = $region37
    $region36: #{_forward_impl.1} parent=1 // pred_region
      %s60 = ssub.s32 2304, 2304
      %61 = vsyncadd [#allocation5], %s60
      %s62 = sshll.u32 [#allocation4], 4
      %s63 = int_to_ptr.vmem [resolvable:$true] %s62
      %68 = dma.hbm_to_vmem [thread:$0]  %s8, 2304, %s63, [#allocation5], 64, 64, 4
    $region37: #{_forward_impl.1} parent=1 // pred_fallthru
      _
    // Predicated region
    $region38: #{_forward_impl.1} parent=1 // pred_check
      _
    $region39: #{_forward_impl.1} parent=1 // pred_check_branch
      %70 = sbr.rel (0) target = $region41
    $region40: #{_forward_impl.1} parent=1 // pred_region
      _
    $region41: #{_forward_impl.1} parent=1 // pred_fallthru
      _
    // Predicated region
    $region42: #{_forward_impl.1} parent=1 // pred_check
      _
    $region43: #{_forward_impl.1} parent=1 // pred_check_branch
      %72 = sbr.rel (0) target = $region45
    $region44: #{_forward_impl.1} parent=1 // pred_region
      %s74 = ssub.s32 576, 576
      %75 = vsyncadd [#allocation5], %s74
      %s76 = sshll.u32 [#allocation6], 4
      %s77 = int_to_ptr.vmem [resolvable:$true] %s76
      %82 = dma.hbm_to_vmem [thread:$0]  %s10, 576, %s77, [#allocation5], 64, 64, 4
    $region45: #{_forward_impl.1} parent=1 // pred_fallthru
      _
    // Predicated region
    $region46: #{_forward_impl.1} parent=1 // pred_check
      _
    $region47: #{_forward_impl.1} parent=1 // pred_check_branch
      %84 = sbr.rel (0) target = $region49
    $region48: #{_forward_impl.1} parent=1 // pred_region
      %s86 = ssub.s32 2304, 2304
      %87 = vsyncadd [#allocation8], %s86
      %s88 = sshll.u32 [#allocation7], 4
      %s89 = int_to_ptr.vmem [resolvable:$true] %s88
      %94 = dma.hbm_to_vmem [thread:$0]  %s11, 2304, %s89, [#allocation8], 64, 64, 4
    $region49: #{_forward_impl.1} parent=1 // pred_fallthru
      _
    // Predicated region
    $region50: #{_forward_impl.1} parent=1 // pred_check
      _
    $region51: #{_forward_impl.1} parent=1 // pred_check_branch
      %96 = sbr.rel (0) target = $region53
    $region52: #{_forward_impl.1} parent=1 // pred_region
      _
    $region53: #{_forward_impl.1} parent=1 // pred_fallthru
      _
    // Predicated region
    $region54: #{_forward_impl.1} parent=1 // pred_check
      _
    $region55: #{_forward_impl.1} parent=1 // pred_check_branch
      %98 = sbr.rel (0) target = $region57
    $region56: #{_forward_impl.1} parent=1 // pred_region
      %s100 = ssub.s32 2304, 2304
      %101 = vsyncadd [#allocation8], %s100
      %s102 = sshll.u32 [#allocation9], 4
      %s103 = int_to_ptr.vmem [resolvable:$true] %s102
      %108 = dma.hbm_to_vmem [thread:$0]  %s13, 2304, %s103, [#allocation8], 64, 64, 4
    $region57: #{_forward_impl.1} parent=1 // pred_fallthru
      _
    // Predicated region
    $region58: #{_forward_impl.1} parent=1 // pred_check
      _
    $region59: #{_forward_impl.1} parent=1 // pred_check_branch
      %110 = sbr.rel (0) target = $region61
    $region60: #{_forward_impl.1} parent=1 // pred_region
      %s112 = ssub.s32 1152, 1152
      %113 = vsyncadd [#allocation11], %s112
      %s114 = sshll.u32 [#allocation10], 4
      %s115 = int_to_ptr.vmem [resolvable:$true] %s114
      %120 = dma.hbm_to_vmem [thread:$0]  %s14, 1152, %s115, [#allocation11], 64, 64, 4
    $region61: #{_forward_impl.1} parent=1 // pred_fallthru
      _
    // Predicated region
    $region62: #{_forward_impl.1} parent=1 // pred_check
      _
    $region63: #{_forward_impl.1} parent=1 // pred_check_branch
      %122 = sbr.rel (0) target = $region65
    $region64: #{_forward_impl.1} parent=1 // pred_region
      _
    $region65: #{_forward_impl.1} parent=1 // pred_fallthru
      _
    // Predicated region
    $region66: #{_forward_impl.1} parent=1 // pred_check
      _
    $region67: #{_forward_impl.1} parent=1 // pred_check_branch
      %124 = sbr.rel (0) target = $region69
    $region68: #{_forward_impl.1} parent=1 // pred_region
      %s126 = ssub.s32 36864, 36864
      %127 = vsyncadd [#allocation11], %s126
      %s128 = sshll.u32 [#allocation12], 4
      %s129 = int_to_ptr.vmem [resolvable:$true] %s128
      %134 = dma.hbm_to_vmem [thread:$0]  %s16, 36864, %s129, [#allocation11], 256, 256, 16
    $region69: #{_forward_impl.1} parent=1 // pred_fallthru
      _
    // Predicated region
    $region70: #{_forward_impl.1} parent=1 // pred_check
      _
    $region71: #{_forward_impl.1} parent=1 // pred_check_branch
      %136 = sbr.rel (0) target = $region73
    $region72: #{_forward_impl.1} parent=1 // pred_region
      %s138 = ssub.s32 288, 288
      %139 = vsyncadd [#allocation14], %s138
      %s140 = sshll.u32 [#allocation13], 4
      %s141 = int_to_ptr.vmem [resolvable:$true] %s140
      %146 = dma.hbm_to_vmem [thread:$0]  %s17, 288, %s141, [#allocation14], 32, 32, 2
    $region73: #{_forward_impl.1} parent=1 // pred_fallthru
      _
    // Predicated region
    $region74: #{_forward_impl.1} parent=1 // pred_check
      _
    $region75: #{_forward_impl.1} parent=1 // pred_check_branch
      %148 = sbr.rel (0) target = $region77
    $region76: #{_forward_impl.1} parent=1 // pred_region
      _
    $region77: #{_forward_impl.1} parent=1 // pred_fallthru
      _
    // Predicated region
    $region78: #{_forward_impl.1} parent=1 // pred_check
      _
    $region79: #{_forward_impl.1} parent=1 // pred_check_branch
      %150 = sbr.rel (0) target = $region81
    $region80: #{_forward_impl.1} parent=1 // pred_region
      %151 = dma.done [#allocation3], 36864
    $region81: #{_forward_impl.1} parent=1 // pred_fallthru
      _
    // Predicated region
    $region82: #{_forward_impl.1} parent=1 // pred_check
      _
    $region83: #{_forward_impl.1} parent=1 // pred_check_branch
      %153 = sbr.rel (0) target = $region85
    $region84: #{_forward_impl.1} parent=1 // pred_region
      %154 = dma.done [#allocation5], 2304
    $region85: #{_forward_impl.1} parent=1 // pred_fallthru
      _
    // Predicated region
    $region86: #{_forward_impl.1} parent=1 // pred_check
      _
    $region87: #{_forward_impl.1} parent=1 // pred_check_branch
      %156 = sbr.rel (0) target = $region89
    $region88: #{_forward_impl.1} parent=1 // pred_region
      %157 = dma.done [#allocation5], 576
    $region89: #{_forward_impl.1} parent=1 // pred_fallthru
      _
    // Predicated region
    $region90: #{_forward_impl.1} parent=1 // pred_check
      _
    $region91: #{_forward_impl.1} parent=1 // pred_check_branch
      %159 = sbr.rel (0) target = $region93
    $region92: #{_forward_impl.1} parent=1 // pred_region
      %160 = dma.done [#allocation8], 2304
    $region93: #{_forward_impl.1} parent=1 // pred_fallthru
      _
    // Predicated region
    $region94: #{_forward_impl.1} parent=1 // pred_check
      _
    $region95: #{_forward_impl.1} parent=1 // pred_check_branch
      %162 = sbr.rel (0) target = $region97
    $region96: #{_forward_impl.1} parent=1 // pred_region
      %163 = dma.done [#allocation8], 2304
    $region97: #{_forward_impl.1} parent=1 // pred_fallthru
      _
    // Predicated region
    $region98: #{_forward_impl.1} parent=1 // pred_check
      _
    $region99: #{_forward_impl.1} parent=1 // pred_check_branch
      %165 = sbr.rel (0) target = $region101
    $region100: #{_forward_impl.1} parent=1 // pred_region
      %166 = dma.done [#allocation11], 1152
    $region101: #{_forward_impl.1} parent=1 // pred_fallthru
      _
    // Predicated region
    $region102: #{_forward_impl.1} parent=1 // pred_check
      _
    $region103: #{_forward_impl.1} parent=1 // pred_check_branch
      %168 = sbr.rel (0) target = $region105
    $region104: #{_forward_impl.1} parent=1 // pred_region
      %169 = dma.done [#allocation11], 36864
    $region105: #{_forward_impl.1} parent=1 // pred_fallthru
      _
    // Predicated region
    $region106: #{_forward_impl.1} parent=1 // pred_check
      _
    $region107: #{_forward_impl.1} parent=1 // pred_check_branch
      %171 = sbr.rel (0) target = $region109
    $region108: #{_forward_impl.1} parent=1 // pred_region
      %172 = dma.done [#allocation14], 288
    $region109: #{_forward_impl.1} parent=1 // pred_fallthru
      _
    %v174 = vld [vmem:[%s0] sm:$0xff]
    %v175 = vld [vmem:[#allocation2] sm:$0xf]
    %v176 = vld [vmem:[#allocation2 + $0x4] sm:$0xf]
    %v177 = vld [vmem:[#allocation2 + $0x8] sm:$0xf]
    %v178 = vld [vmem:[#allocation2 + $0xc] sm:$0xf]
    %v179 = vld [vmem:[#allocation2 + $0x10] sm:$0xf]
    %v180 = vld [vmem:[#allocation2 + $0x14] sm:$0xf]
    %v181 = vld [vmem:[#allocation2 + $0x18] sm:$0xf]
    %v182 = vld [vmem:[#allocation2 + $0x1c] sm:$0xf]
    %v183 = vld [vmem:[#allocation2 + $0x20] sm:$0xf]
    %v184 = vld [vmem:[#allocation2 + $0x24] sm:$0xf]
    %v185 = vld [vmem:[#allocation2 + $0x28] sm:$0xf]
    %v186 = vld [vmem:[#allocation2 + $0x2c] sm:$0xf]
    %v187 = vld [vmem:[#allocation2 + $0x30] sm:$0xf]
    %v188 = vld [vmem:[#allocation2 + $0x34] sm:$0xf]
    %v189 = vld [vmem:[#allocation2 + $0x38] sm:$0xf]
    %v190 = vld [vmem:[#allocation2 + $0x3c] sm:$0xf]
    %v191 = vld [vmem:[#allocation2 + $0x40] sm:$0xf]
    %v192 = vld [vmem:[#allocation2 + $0x44] sm:$0xf]
    %v193 = vld [vmem:[#allocation2 + $0x48] sm:$0xf]
    %v194 = vld [vmem:[#allocation2 + $0x4c] sm:$0xf]
    %v195 = vld [vmem:[#allocation2 + $0x50] sm:$0xf]
    %v196 = vld [vmem:[#allocation2 + $0x54] sm:$0xf]
    %v197 = vld [vmem:[#allocation2 + $0x58] sm:$0xf]
    %v198 = vld [vmem:[#allocation2 + $0x5c] sm:$0xf]
    %v199 = vld [vmem:[#allocation2 + $0x60] sm:$0xf]
    %v200 = vld [vmem:[#allocation2 + $0x64] sm:$0xf]
    %v201 = vld [vmem:[#allocation2 + $0x68] sm:$0xf]
    %v202 = vld [vmem:[#allocation2 + $0x6c] sm:$0xf]
    %v203 = vld [vmem:[#allocation2 + $0x70] sm:$0xf]
    %v204 = vld [vmem:[#allocation2 + $0x74] sm:$0xf]
    %v205 = vld [vmem:[#allocation2 + $0x78] sm:$0xf]
    %v206 = vld [vmem:[#allocation2 + $0x7c] sm:$0xf]
    %v207 = vld [vmem:[#allocation2 + $0x80] sm:$0xf]
    %v208 = vld [vmem:[#allocation2 + $0x84] sm:$0xf]
    %v209 = vld [vmem:[#allocation2 + $0x88] sm:$0xf]
    %v210 = vld [vmem:[#allocation2 + $0x8c] sm:$0xf]
    %v211 = vld [vmem:[#allocation2 + $0x90] sm:$0xf]
    %v212 = vld [vmem:[#allocation2 + $0x94] sm:$0xf]
    %v213 = vld [vmem:[#allocation2 + $0x98] sm:$0xf]
    %v214 = vld [vmem:[#allocation2 + $0x9c] sm:$0xf]
    %v215 = vld [vmem:[#allocation2 + $0xa0] sm:$0xf]
    %v216 = vld [vmem:[#allocation2 + $0xa4] sm:$0xf]
    %v217 = vld [vmem:[#allocation2 + $0xa8] sm:$0xf]
    %v218 = vld [vmem:[#allocation2 + $0xac] sm:$0xf]
    %v219 = vld [vmem:[#allocation2 + $0xb0] sm:$0xf]
    %v220 = vld [vmem:[#allocation2 + $0xb4] sm:$0xf]
    %v221 = vld [vmem:[#allocation2 + $0xb8] sm:$0xf]
    %v222 = vld [vmem:[#allocation2 + $0xbc] sm:$0xf]
    %v223 = vld [vmem:[#allocation2 + $0xc0] sm:$0xf]
    %v224 = vld [vmem:[#allocation2 + $0xc4] sm:$0xf]
    %v225 = vld [vmem:[#allocation2 + $0xc8] sm:$0xf]
    %v226 = vld [vmem:[#allocation2 + $0xcc] sm:$0xf]
    %v227 = vld [vmem:[#allocation2 + $0xd0] sm:$0xf]
    %v228 = vld [vmem:[#allocation2 + $0xd4] sm:$0xf]
    %v229 = vld [vmem:[#allocation2 + $0xd8] sm:$0xf]
    %v230 = vld [vmem:[#allocation2 + $0xdc] sm:$0xf]
    %v231 = vld [vmem:[#allocation2 + $0xe0] sm:$0xf]
    %v232 = vld [vmem:[#allocation2 + $0xe4] sm:$0xf]
    %v233 = vld [vmem:[#allocation2 + $0xe8] sm:$0xf]
    %v234 = vld [vmem:[#allocation2 + $0xec] sm:$0xf]
    %v235 = vld [vmem:[#allocation2 + $0xf0] sm:$0xf]
    %v236 = vld [vmem:[#allocation2 + $0xf4] sm:$0xf]
    %v237 = vld [vmem:[#allocation2 + $0xf8] sm:$0xf]
    %v238 = vld [vmem:[#allocation2 + $0xfc] sm:$0xf]
    %v239 = vld [vmem:[%s2] sm:$0xf]
    %v240 = vld [vmem:[%s2 + $0x4] sm:$0xf]
    %v242 = vcombine.high %v174, %v174
    %v244 = vunpack.c.l.s4 1983009808
    %v245 = vunpack.c.0.s8 %v244
    %v246 = vlaneseq
    %v247 = vshrl.u32 %v246, 7
    %v248 = vsub.s32 %v245, %v247
    %v249 = vrot.slane %v174, %v248
    %v251 = vunpack.c.l.s4 1983009808
    %v252 = vunpack.c.0.s8 %v251
    %v253 = vlaneseq
    %v254 = vshrl.u32 %v253, 7
    %v255 = vsub.s32 %v252, %v254
    %v256 = vrot.slane %v242, %v255
    %v257 = vcombine.high %v249, %v249
    %v258 = vcombine.high %v256, %v256
    %v327 = vunpack.c.l.b16 %v175
    %v328 = vunpack.c.l.b16 %v176
    %v329 = vunpack.c.l.b16 %v177
    %v330 = vunpack.c.l.b16 %v178
    %v331 = vunpack.c.l.b16 %v179
    %v332 = vunpack.c.l.b16 %v180
    %v333 = vunpack.c.l.b16 %v181
    %v334 = vunpack.c.l.b16 %v182
    %v335 = vunpack.c.l.b16 %v183
    %v336 = vunpack.c.l.b16 %v184
    %v337 = vunpack.c.l.b16 %v185
    %v338 = vunpack.c.l.b16 %v186
    %v339 = vunpack.c.l.b16 %v187
    %v340 = vunpack.c.l.b16 %v188
    %v341 = vunpack.c.l.b16 %v189
    %v342 = vunpack.c.l.b16 %v190
    %v343 = vunpack.c.l.b16 %v191
    %v344 = vunpack.c.l.b16 %v192
    %v345 = vunpack.c.l.b16 %v193
    %v346 = vunpack.c.l.b16 %v194
    %v347 = vunpack.c.l.b16 %v195
    %v348 = vunpack.c.l.b16 %v196
    %v349 = vunpack.c.l.b16 %v197
    %v350 = vunpack.c.l.b16 %v198
    %v351 = vunpack.c.l.b16 %v199
    %v352 = vunpack.c.l.b16 %v200
    %v353 = vunpack.c.l.b16 %v201
    %v354 = vunpack.c.l.b16 %v202
    %v355 = vunpack.c.l.b16 %v203
    %v356 = vunpack.c.l.b16 %v204
    %v357 = vunpack.c.l.b16 %v205
    %v358 = vunpack.c.l.b16 %v206
    %v359 = vunpack.c.l.b16 %v207
    %v360 = vunpack.c.l.b16 %v208
    %v361 = vunpack.c.l.b16 %v209
    %v362 = vunpack.c.l.b16 %v210
    %v363 = vunpack.c.l.b16 %v211
    %v364 = vunpack.c.l.b16 %v212
    %v365 = vunpack.c.l.b16 %v213
    %v366 = vunpack.c.l.b16 %v214
    %v367 = vunpack.c.l.b16 %v215
    %v368 = vunpack.c.l.b16 %v216
    %v369 = vunpack.c.l.b16 %v217
    %v370 = vunpack.c.l.b16 %v218
    %v371 = vunpack.c.l.b16 %v219
    %v372 = vunpack.c.l.b16 %v220
    %v373 = vunpack.c.l.b16 %v221
    %v374 = vunpack.c.l.b16 %v222
    %v375 = vunpack.c.l.b16 %v223
    %v376 = vunpack.c.l.b16 %v224
    %v377 = vunpack.c.l.b16 %v225
    %v378 = vunpack.c.l.b16 %v226
    %v379 = vunpack.c.l.b16 %v227
    %v380 = vunpack.c.l.b16 %v228
    %v381 = vunpack.c.l.b16 %v229
    %v382 = vunpack.c.l.b16 %v230
    %v383 = vunpack.c.l.b16 %v231
    %v384 = vunpack.c.l.b16 %v232
    %v385 = vunpack.c.l.b16 %v233
    %v386 = vunpack.c.l.b16 %v234
    %v387 = vunpack.c.l.b16 %v235
    %v388 = vunpack.c.l.b16 %v236
    %v389 = vunpack.c.l.b16 %v237
    %v390 = vunpack.c.l.b16 %v238
    %v391 = vpack.c.b16 %v328, %v327
    %v392 = vpack.c.b16 %v330, %v329
    %v393 = vpack.c.b16 %v332, %v331
    %v394 = vpack.c.b16 %v334, %v333
    %v395 = vpack.c.b16 %v336, %v335
    %v396 = vpack.c.b16 %v338, %v337
    %v397 = vpack.c.b16 %v340, %v339
    %v398 = vpack.c.b16 %v342, %v341
    %v399 = vpack.c.b16 %v344, %v343
    %v400 = vpack.c.b16 %v346, %v345
    %v401 = vpack.c.b16 %v348, %v347
    %v402 = vpack.c.b16 %v350, %v349
    %v403 = vpack.c.b16 %v352, %v351
    %v404 = vpack.c.b16 %v354, %v353
    %v405 = vpack.c.b16 %v356, %v355
    %v406 = vpack.c.b16 %v358, %v357
    %v407 = vpack.c.b16 %v360, %v359
    %v408 = vpack.c.b16 %v362, %v361
    %v409 = vpack.c.b16 %v364, %v363
    %v410 = vpack.c.b16 %v366, %v365
    %v411 = vpack.c.b16 %v368, %v367
    %v412 = vpack.c.b16 %v370, %v369
    %v413 = vpack.c.b16 %v372, %v371
    %v414 = vpack.c.b16 %v374, %v373
    %v415 = vpack.c.b16 %v376, %v375
    %v416 = vpack.c.b16 %v378, %v377
    %v417 = vpack.c.b16 %v380, %v379
    %v418 = vpack.c.b16 %v382, %v381
    %v419 = vpack.c.b16 %v384, %v383
    %v420 = vpack.c.b16 %v386, %v385
    %v421 = vpack.c.b16 %v388, %v387
    %v422 = vpack.c.b16 %v390, %v389
    %455 = vmatprep.subr.bf16.mxu0 0
    %456 = vmatpush1.bf16.msra.mxu0 %v398
    %457 = vmatprep.subr.bf16.mxu0 0
    %458 = vmatpush1.bf16.msra.mxu0 %v397
    %459 = vmatprep.subr.bf16.mxu0 0
    %460 = vmatpush1.bf16.msra.mxu0 %v396
    %461 = vmatprep.subr.bf16.mxu0 0
    %462 = vmatpush1.bf16.msra.mxu0 %v395
    %463 = vmatprep.subr.bf16.mxu0 0
    %464 = vmatpush1.bf16.msra.mxu0 %v394
    %465 = vmatprep.subr.bf16.mxu0 0
    %466 = vmatpush1.bf16.msra.mxu0 %v393
    %467 = vmatprep.subr.bf16.mxu0 0
    %468 = vmatpush1.bf16.msra.mxu0 %v392
    %469 = vmatprep.subr.bf16.mxu0 0
    %470 = vmatpush1.bf16.msra.mxu0 %v391
    %471 = vmatprep.subr.bf16.mxu0 0
    %472 = vmatpush2.bf16.msra.mxu0 %v406
    %473 = vmatprep.subr.bf16.mxu0 0
    %474 = vmatpush2.bf16.msra.mxu0 %v405
    %475 = vmatprep.subr.bf16.mxu0 0
    %476 = vmatpush2.bf16.msra.mxu0 %v404
    %477 = vmatprep.subr.bf16.mxu0 0
    %478 = vmatpush2.bf16.msra.mxu0 %v403
    %479 = vmatprep.subr.bf16.mxu0 0
    %480 = vmatpush2.bf16.msra.mxu0 %v402
    %481 = vmatprep.subr.bf16.mxu0 0
    %482 = vmatpush2.bf16.msra.mxu0 %v401
    %483 = vmatprep.subr.bf16.mxu0 0
    %484 = vmatpush2.bf16.msra.mxu0 %v400
    %485 = vmatprep.subr.bf16.mxu0 0
    %486 = vmatpush2.bf16.msra.mxu0 %v399
    %487 = vmatprep.mubr.bf16.mxu0 %v257
    %488 = vmatmul.mubr.bf16.gmra.mxu0 %v249
    %v489 = vpop.f32.mrf.mxu0
    %v490 = vadd.f32 0.0, %v489
    %v491 = vpop.f32.mrf.mxu0
    %v492 = vpop.f32.mrf.mxu0
    %v493 = vpop.f32.mrf.mxu0
    %494 = vdwg.mxu0
    %495 = vmatprep.subr.bf16.mxu0 0
    %496 = vmatpush1.bf16.msra.mxu0 %v414
    %497 = vmatprep.subr.bf16.mxu0 0
    %498 = vmatpush1.bf16.msra.mxu0 %v413
    %499 = vmatprep.subr.bf16.mxu0 0
    %500 = vmatpush1.bf16.msra.mxu0 %v412
    %501 = vmatprep.subr.bf16.mxu0 0
    %502 = vmatpush1.bf16.msra.mxu0 %v411
    %503 = vmatprep.subr.bf16.mxu0 0
    %504 = vmatpush1.bf16.msra.mxu0 %v410
    %505 = vmatprep.subr.bf16.mxu0 0
    %506 = vmatpush1.bf16.msra.mxu0 %v409
    %507 = vmatprep.subr.bf16.mxu0 0
    %508 = vmatpush1.bf16.msra.mxu0 %v408
    %509 = vmatprep.subr.bf16.mxu0 0
    %510 = vmatpush1.bf16.msra.mxu0 %v407
    %511 = vmatprep.subr.bf16.mxu0 0
    %512 = vmatpush2.bf16.msra.mxu0 %v422
    %513 = vmatprep.subr.bf16.mxu0 0
    %514 = vmatpush2.bf16.msra.mxu0 %v421
    %515 = vmatprep.subr.bf16.mxu0 0
    %516 = vmatpush2.bf16.msra.mxu0 %v420
    %517 = vmatprep.subr.bf16.mxu0 0
    %518 = vmatpush2.bf16.msra.mxu0 %v419
    %519 = vmatprep.subr.bf16.mxu0 0
    %520 = vmatpush2.bf16.msra.mxu0 %v418
    %521 = vmatprep.subr.bf16.mxu0 0
    %522 = vmatpush2.bf16.msra.mxu0 %v417
    %523 = vmatprep.subr.bf16.mxu0 0
    %524 = vmatpush2.bf16.msra.mxu0 %v416
    %525 = vmatprep.subr.bf16.mxu0 0
    %526 = vmatpush2.bf16.msra.mxu0 %v415
    %527 = vmatprep.mubr.bf16.mxu0 %v258
    %528 = vmatmul.mubr.bf16.gmra.mxu0 %v256
    %v529 = vpop.f32.mrf.mxu0
    %v530 = vadd.f32 %v490, %v529
    %v531 = vpop.f32.mrf.mxu0
    %v532 = vpop.f32.mrf.mxu0
    %v533 = vpop.f32.mrf.mxu0
    %534 = vdwg.mxu0
    %v535 = vpack.c.bf16 %v530, %v530
    %s536 = scalar_lea.vmem [#allocation2], 256
    %v537 = vld [vmem:[%s536] sm:$0xf]
    %v538 = vld [vmem:[%s536 + $0x4] sm:$0xf]
    %v539 = vld [vmem:[%s536 + $0x8] sm:$0xf]
    %v540 = vld [vmem:[%s536 + $0xc] sm:$0xf]
    %v541 = vld [vmem:[%s536 + $0x10] sm:$0xf]
    %v542 = vld [vmem:[%s536 + $0x14] sm:$0xf]
    %v543 = vld [vmem:[%s536 + $0x18] sm:$0xf]
    %v544 = vld [vmem:[%s536 + $0x1c] sm:$0xf]
    %v545 = vld [vmem:[%s536 + $0x20] sm:$0xf]
    %v546 = vld [vmem:[%s536 + $0x24] sm:$0xf]
    %v547 = vld [vmem:[%s536 + $0x28] sm:$0xf]
    %v548 = vld [vmem:[%s536 + $0x2c] sm:$0xf]
    %v549 = vld [vmem:[%s536 + $0x30] sm:$0xf]
    %v550 = vld [vmem:[%s536 + $0x34] sm:$0xf]
    %v551 = vld [vmem:[%s536 + $0x38] sm:$0xf]
    %v552 = vld [vmem:[%s536 + $0x3c] sm:$0xf]
    %v553 = vld [vmem:[%s536 + $0x40] sm:$0xf]
    %v554 = vld [vmem:[%s536 + $0x44] sm:$0xf]
    %v555 = vld [vmem:[%s536 + $0x48] sm:$0xf]
    %v556 = vld [vmem:[%s536 + $0x4c] sm:$0xf]
    %v557 = vld [vmem:[%s536 + $0x50] sm:$0xf]
    %v558 = vld [vmem:[%s536 + $0x54] sm:$0xf]
    %v559 = vld [vmem:[%s536 + $0x58] sm:$0xf]
    %v560 = vld [vmem:[%s536 + $0x5c] sm:$0xf]
    %v561 = vld [vmem:[%s536 + $0x60] sm:$0xf]
    %v562 = vld [vmem:[%s536 + $0x64] sm:$0xf]
    %v563 = vld [vmem:[%s536 + $0x68] sm:$0xf]
    %v564 = vld [vmem:[%s536 + $0x6c] sm:$0xf]
    %v565 = vld [vmem:[%s536 + $0x70] sm:$0xf]
    %v566 = vld [vmem:[%s536 + $0x74] sm:$0xf]
    %v567 = vld [vmem:[%s536 + $0x78] sm:$0xf]
    %v568 = vld [vmem:[%s536 + $0x7c] sm:$0xf]
    %v569 = vld [vmem:[%s536 + $0x80] sm:$0xf]
    %v570 = vld [vmem:[%s536 + $0x84] sm:$0xf]
    %v571 = vld [vmem:[%s536 + $0x88] sm:$0xf]
    %v572 = vld [vmem:[%s536 + $0x8c] sm:$0xf]
    %v573 = vld [vmem:[%s536 + $0x90] sm:$0xf]
    %v574 = vld [vmem:[%s536 + $0x94] sm:$0xf]
    %v575 = vld [vmem:[%s536 + $0x98] sm:$0xf]
    %v576 = vld [vmem:[%s536 + $0x9c] sm:$0xf]
    %v577 = vld [vmem:[%s536 + $0xa0] sm:$0xf]
    %v578 = vld [vmem:[%s536 + $0xa4] sm:$0xf]
    %v579 = vld [vmem:[%s536 + $0xa8] sm:$0xf]
    %v580 = vld [vmem:[%s536 + $0xac] sm:$0xf]
    %v581 = vld [vmem:[%s536 + $0xb0] sm:$0xf]
    %v582 = vld [vmem:[%s536 + $0xb4] sm:$0xf]
    %v583 = vld [vmem:[%s536 + $0xb8] sm:$0xf]
    %v584 = vld [vmem:[%s536 + $0xbc] sm:$0xf]
    %v585 = vld [vmem:[%s536 + $0xc0] sm:$0xf]
    %v586 = vld [vmem:[%s536 + $0xc4] sm:$0xf]
    %v587 = vld [vmem:[%s536 + $0xc8] sm:$0xf]
    %v588 = vld [vmem:[%s536 + $0xcc] sm:$0xf]
    %v589 = vld [vmem:[%s536 + $0xd0] sm:$0xf]
    %v590 = vld [vmem:[%s536 + $0xd4] sm:$0xf]
    %v591 = vld [vmem:[%s536 + $0xd8] sm:$0xf]
    %v592 = vld [vmem:[%s536 + $0xdc] sm:$0xf]
    %v593 = vld [vmem:[%s536 + $0xe0] sm:$0xf]
    %v594 = vld [vmem:[%s536 + $0xe4] sm:$0xf]
    %v595 = vld [vmem:[%s536 + $0xe8] sm:$0xf]
    %v596 = vld [vmem:[%s536 + $0xec] sm:$0xf]
    %v597 = vld [vmem:[%s536 + $0xf0] sm:$0xf]
    %v598 = vld [vmem:[%s536 + $0xf4] sm:$0xf]
    %v599 = vld [vmem:[%s536 + $0xf8] sm:$0xf]
    %v600 = vld [vmem:[%s536 + $0xfc] sm:$0xf]
    %s601 = scalar_lea.vmem %s2, 8
    %v602 = vld [vmem:[%s601] sm:$0xf]
    %v603 = vld [vmem:[%s601 + $0x4] sm:$0xf]
    %v668 = vunpack.c.l.b16 %v537
    %v669 = vunpack.c.l.b16 %v538
    %v670 = vunpack.c.l.b16 %v539
    %v671 = vunpack.c.l.b16 %v540
    %v672 = vunpack.c.l.b16 %v541
    %v673 = vunpack.c.l.b16 %v542
    %v674 = vunpack.c.l.b16 %v543
    %v675 = vunpack.c.l.b16 %v544
    %v676 = vunpack.c.l.b16 %v545
    %v677 = vunpack.c.l.b16 %v546
    %v678 = vunpack.c.l.b16 %v547
    %v679 = vunpack.c.l.b16 %v548
    %v680 = vunpack.c.l.b16 %v549
    %v681 = vunpack.c.l.b16 %v550
    %v682 = vunpack.c.l.b16 %v551
    %v683 = vunpack.c.l.b16 %v552
    %v684 = vunpack.c.l.b16 %v553
    %v685 = vunpack.c.l.b16 %v554
    %v686 = vunpack.c.l.b16 %v555
    %v687 = vunpack.c.l.b16 %v556
    %v688 = vunpack.c.l.b16 %v557
    %v689 = vunpack.c.l.b16 %v558
    %v690 = vunpack.c.l.b16 %v559
    %v691 = vunpack.c.l.b16 %v560
    %v692 = vunpack.c.l.b16 %v561
    %v693 = vunpack.c.l.b16 %v562
    %v694 = vunpack.c.l.b16 %v563
    %v695 = vunpack.c.l.b16 %v564
    %v696 = vunpack.c.l.b16 %v565
    %v697 = vunpack.c.l.b16 %v566
    %v698 = vunpack.c.l.b16 %v567
    %v699 = vunpack.c.l.b16 %v568
    %v700 = vunpack.c.l.b16 %v569
    %v701 = vunpack.c.l.b16 %v570
    %v702 = vunpack.c.l.b16 %v571
    %v703 = vunpack.c.l.b16 %v572
    %v704 = vunpack.c.l.b16 %v573
    %v705 = vunpack.c.l.b16 %v574
    %v706 = vunpack.c.l.b16 %v575
    %v707 = vunpack.c.l.b16 %v576
    %v708 = vunpack.c.l.b16 %v577
    %v709 = vunpack.c.l.b16 %v578
    %v710 = vunpack.c.l.b16 %v579
    %v711 = vunpack.c.l.b16 %v580
    %v712 = vunpack.c.l.b16 %v581
    %v713 = vunpack.c.l.b16 %v582
    %v714 = vunpack.c.l.b16 %v583
    %v715 = vunpack.c.l.b16 %v584
    %v716 = vunpack.c.l.b16 %v585
    %v717 = vunpack.c.l.b16 %v586
    %v718 = vunpack.c.l.b16 %v587
    %v719 = vunpack.c.l.b16 %v588
    %v720 = vunpack.c.l.b16 %v589
    %v721 = vunpack.c.l.b16 %v590
    %v722 = vunpack.c.l.b16 %v591
    %v723 = vunpack.c.l.b16 %v592
    %v724 = vunpack.c.l.b16 %v593
    %v725 = vunpack.c.l.b16 %v594
    %v726 = vunpack.c.l.b16 %v595
    %v727 = vunpack.c.l.b16 %v596
    %v728 = vunpack.c.l.b16 %v597
    %v729 = vunpack.c.l.b16 %v598
    %v730 = vunpack.c.l.b16 %v599
    %v731 = vunpack.c.l.b16 %v600
    %v732 = vpack.c.b16 %v669, %v668
    %v733 = vpack.c.b16 %v671, %v670
    %v734 = vpack.c.b16 %v673, %v672
    %v735 = vpack.c.b16 %v675, %v674
    %v736 = vpack.c.b16 %v677, %v676
    %v737 = vpack.c.b16 %v679, %v678
    %v738 = vpack.c.b16 %v681, %v680
    %v739 = vpack.c.b16 %v683, %v682
    %v740 = vpack.c.b16 %v685, %v684
    %v741 = vpack.c.b16 %v687, %v686
    %v742 = vpack.c.b16 %v689, %v688
    %v743 = vpack.c.b16 %v691, %v690
    %v744 = vpack.c.b16 %v693, %v692
    %v745 = vpack.c.b16 %v695, %v694
    %v746 = vpack.c.b16 %v697, %v696
    %v747 = vpack.c.b16 %v699, %v698
    %v748 = vpack.c.b16 %v701, %v700
    %v749 = vpack.c.b16 %v703, %v702
    %v750 = vpack.c.b16 %v705, %v704
    %v751 = vpack.c.b16 %v707, %v706
    %v752 = vpack.c.b16 %v709, %v708
    %v753 = vpack.c.b16 %v711, %v710
    %v754 = vpack.c.b16 %v713, %v712
    %v755 = vpack.c.b16 %v715, %v714
    %v756 = vpack.c.b16 %v717, %v716
    %v757 = vpack.c.b16 %v719, %v718
    %v758 = vpack.c.b16 %v721, %v720
    %v759 = vpack.c.b16 %v723, %v722
    %v760 = vpack.c.b16 %v725, %v724
    %v761 = vpack.c.b16 %v727, %v726
    %v762 = vpack.c.b16 %v729, %v728
    %v763 = vpack.c.b16 %v731, %v730
    %796 = vmatprep.subr.bf16.mxu0 0
    %797 = vmatpush1.bf16.msra.mxu0 %v739
    %798 = vmatprep.subr.bf16.mxu0 0
    %799 = vmatpush1.bf16.msra.mxu0 %v738
    %800 = vmatprep.subr.bf16.mxu0 0
    %801 = vmatpush1.bf16.msra.mxu0 %v737
    %802 = vmatprep.subr.bf16.mxu0 0
    %803 = vmatpush1.bf16.msra.mxu0 %v736
    %804 = vmatprep.subr.bf16.mxu0 0
    %805 = vmatpush1.bf16.msra.mxu0 %v735
    %806 = vmatprep.subr.bf16.mxu0 0
    %807 = vmatpush1.bf16.msra.mxu0 %v734
    %808 = vmatprep.subr.bf16.mxu0 0
    %809 = vmatpush1.bf16.msra.mxu0 %v733
    %810 = vmatprep.subr.bf16.mxu0 0
    %811 = vmatpush1.bf16.msra.mxu0 %v732
    %812 = vmatprep.subr.bf16.mxu0 0
    %813 = vmatpush2.bf16.msra.mxu0 %v747
    %814 = vmatprep.subr.bf16.mxu0 0
    %815 = vmatpush2.bf16.msra.mxu0 %v746
    %816 = vmatprep.subr.bf16.mxu0 0
    %817 = vmatpush2.bf16.msra.mxu0 %v745
    %818 = vmatprep.subr.bf16.mxu0 0
    %819 = vmatpush2.bf16.msra.mxu0 %v744
    %820 = vmatprep.subr.bf16.mxu0 0
    %821 = vmatpush2.bf16.msra.mxu0 %v743
    %822 = vmatprep.subr.bf16.mxu0 0
    %823 = vmatpush2.bf16.msra.mxu0 %v742
    %824 = vmatprep.subr.bf16.mxu0 0
    %825 = vmatpush2.bf16.msra.mxu0 %v741
    %826 = vmatprep.subr.bf16.mxu0 0
    %827 = vmatpush2.bf16.msra.mxu0 %v740
    %828 = vmatprep.mubr.bf16.mxu0 %v257
    %829 = vmatmul.mubr.bf16.gmra.mxu0 %v249
    %v830 = vpop.f32.mrf.mxu0
    %v831 = vadd.f32 0.0, %v830
    %v832 = vpop.f32.mrf.mxu0
    %v833 = vpop.f32.mrf.mxu0
    %v834 = vpop.f32.mrf.mxu0
    %835 = vdwg.mxu0
    %836 = vmatprep.subr.bf16.mxu0 0
    %837 = vmatpush1.bf16.msra.mxu0 %v755
    %838 = vmatprep.subr.bf16.mxu0 0
    %839 = vmatpush1.bf16.msra.mxu0 %v754
    %840 = vmatprep.subr.bf16.mxu0 0
    %841 = vmatpush1.bf16.msra.mxu0 %v753
    %842 = vmatprep.subr.bf16.mxu0 0
    %843 = vmatpush1.bf16.msra.mxu0 %v752
    %844 = vmatprep.subr.bf16.mxu0 0
    %845 = vmatpush1.bf16.msra.mxu0 %v751
    %846 = vmatprep.subr.bf16.mxu0 0
    %847 = vmatpush1.bf16.msra.mxu0 %v750
    %848 = vmatprep.subr.bf16.mxu0 0
    %849 = vmatpush1.bf16.msra.mxu0 %v749
    %850 = vmatprep.subr.bf16.mxu0 0
    %851 = vmatpush1.bf16.msra.mxu0 %v748
    %852 = vmatprep.subr.bf16.mxu0 0
    %853 = vmatpush2.bf16.msra.mxu0 %v763
    %854 = vmatprep.subr.bf16.mxu0 0
    %855 = vmatpush2.bf16.msra.mxu0 %v762
    %856 = vmatprep.subr.bf16.mxu0 0
    %857 = vmatpush2.bf16.msra.mxu0 %v761
    %858 = vmatprep.subr.bf16.mxu0 0
    %859 = vmatpush2.bf16.msra.mxu0 %v760
    %860 = vmatprep.subr.bf16.mxu0 0
    %861 = vmatpush2.bf16.msra.mxu0 %v759
    %862 = vmatprep.subr.bf16.mxu0 0
    %863 = vmatpush2.bf16.msra.mxu0 %v758
    %864 = vmatprep.subr.bf16.mxu0 0
    %865 = vmatpush2.bf16.msra.mxu0 %v757
    %866 = vmatprep.subr.bf16.mxu0 0
    %867 = vmatpush2.bf16.msra.mxu0 %v756
    %868 = vmatprep.mubr.bf16.mxu0 %v258
    %869 = vmatmul.mubr.bf16.gmra.mxu0 %v256
    %v870 = vpop.f32.mrf.mxu0
    %v871 = vadd.f32 %v831, %v870
    %v872 = vpop.f32.mrf.mxu0
    %v873 = vpop.f32.mrf.mxu0
    %v874 = vpop.f32.mrf.mxu0
    %875 = vdwg.mxu0
    %v876 = vpack.c.bf16 %v871, %v871
    %v879 = vunpack.c.l.b16 %v602
    %v880 = vunpack.c.l.b16 %v603
    %v881 = vpack.c.b16 %v880, %v879
    %vm882 = vcmask 23552
    %v884 = vsel %vm882, %v881, 0
    %vm886 = vcmask 1040384
    %vm887 = vcmask 1041408
    %v888 = vsel %vm886, 4294967295, 65535
    %v889 = vsel %vm887, %v888, 0
    %v891 = vand.u32 %v876, %v889
    %893 = vmatprep.subr.bf16.mxu0 0
    %894 = vmatpush1.bf16.msra.mxu0 0
    %895 = vmatprep.subr.bf16.mxu0 0
    %896 = vmatpush1.bf16.msra.mxu0 0
    %897 = vmatprep.subr.bf16.mxu0 0
    %898 = vmatpush1.bf16.msra.mxu0 0
    %899 = vmatprep.subr.bf16.mxu0 0
    %900 = vmatpush1.bf16.msra.mxu0 0
    %901 = vmatprep.subr.bf16.mxu0 0
    %902 = vmatpush1.bf16.msra.mxu0 0
    %903 = vmatprep.subr.bf16.mxu0 0
    %904 = vmatpush1.bf16.msra.mxu0 0
    %905 = vmatprep.subr.bf16.mxu0 0
    %906 = vmatpush1.bf16.msra.mxu0 0
    %907 = vmatprep.subr.bf16.mxu0 0
    %908 = vmatpush1.bf16.msra.mxu0 %v891
    %909 = vmatprep.subr.bf16.mxu0 0
    %910 = vmatpush2.bf16.msra.mxu0 0
    %911 = vmatprep.subr.bf16.mxu0 0
    %912 = vmatpush2.bf16.msra.mxu0 0
    %913 = vmatprep.subr.bf16.mxu0 0
    %914 = vmatpush2.bf16.msra.mxu0 0
    %915 = vmatprep.subr.bf16.mxu0 0
    %916 = vmatpush2.bf16.msra.mxu0 0
    %917 = vmatprep.subr.bf16.mxu0 0
    %918 = vmatpush2.bf16.msra.mxu0 0
    %919 = vmatprep.subr.bf16.mxu0 0
    %920 = vmatpush2.bf16.msra.mxu0 0
    %921 = vmatprep.subr.bf16.mxu0 0
    %922 = vmatpush2.bf16.msra.mxu0 0
    %923 = vmatprep.subr.bf16.mxu0 0
    %924 = vmatpush2.bf16.msra.mxu0 0
    %925 = vmatprep.mubr.bf16.mxu0 0
    %926 = vmatmul.mubr.bf16.gmra.mxu0 %v884
    %v927 = vpop.f32.mrf.mxu0
    %v928 = vadd.f32 0.0, %v927
    %v929 = vpop.f32.mrf.mxu0
    %v930 = vpop.f32.mrf.mxu0
    %v931 = vadd.f32 0.0, %v930
    %v932 = vpop.f32.mrf.mxu0
    %933 = vdwg.mxu0
    %v936 = vunpack.c.l.b16 %v239
    %v937 = vunpack.c.l.b16 %v240
    %v938 = vpack.c.b16 %v937, %v936
    %v940 = vsel %vm882, %v938, 0
    %v943 = vand.u32 %v535, %v889
    %945 = vmatprep.subr.bf16.mxu0 0
    %946 = vmatpush1.bf16.msra.mxu0 0
    %947 = vmatprep.subr.bf16.mxu0 0
    %948 = vmatpush1.bf16.msra.mxu0 0
    %949 = vmatprep.subr.bf16.mxu0 0
    %950 = vmatpush1.bf16.msra.mxu0 0
    %951 = vmatprep.subr.bf16.mxu0 0
    %952 = vmatpush1.bf16.msra.mxu0 0
    %953 = vmatprep.subr.bf16.mxu0 0
    %954 = vmatpush1.bf16.msra.mxu0 0
    %955 = vmatprep.subr.bf16.mxu0 0
    %956 = vmatpush1.bf16.msra.mxu0 0
    %957 = vmatprep.subr.bf16.mxu0 0
    %958 = vmatpush1.bf16.msra.mxu0 0
    %959 = vmatprep.subr.bf16.mxu0 0
    %960 = vmatpush1.bf16.msra.mxu0 %v943
    %961 = vmatprep.subr.bf16.mxu0 0
    %962 = vmatpush2.bf16.msra.mxu0 0
    %963 = vmatprep.subr.bf16.mxu0 0
    %964 = vmatpush2.bf16.msra.mxu0 0
    %965 = vmatprep.subr.bf16.mxu0 0
    %966 = vmatpush2.bf16.msra.mxu0 0
    %967 = vmatprep.subr.bf16.mxu0 0
    %968 = vmatpush2.bf16.msra.mxu0 0
    %969 = vmatprep.subr.bf16.mxu0 0
    %970 = vmatpush2.bf16.msra.mxu0 0
    %971 = vmatprep.subr.bf16.mxu0 0
    %972 = vmatpush2.bf16.msra.mxu0 0
    %973 = vmatprep.subr.bf16.mxu0 0
    %974 = vmatpush2.bf16.msra.mxu0 0
    %975 = vmatprep.subr.bf16.mxu0 0
    %976 = vmatpush2.bf16.msra.mxu0 0
    %977 = vmatprep.mubr.bf16.mxu0 0
    %978 = vmatmul.mubr.bf16.gmra.mxu0 %v940
    %v979 = vpop.f32.mrf.mxu0
    %v980 = vadd.f32 %v928, %v979
    %v981 = vpop.f32.mrf.mxu0
    %v982 = vpop.f32.mrf.mxu0
    %v983 = vadd.f32 %v931, %v982
    %v984 = vpop.f32.mrf.mxu0
    %985 = vdwg.mxu0
    %s986 = scalar_lea.vmem [#allocation2], 512
    %v987 = vld [vmem:[%s986] sm:$0xf]
    %v988 = vld [vmem:[%s986 + $0x4] sm:$0xf]
    %v989 = vld [vmem:[%s986 + $0x8] sm:$0xf]
    %v990 = vld [vmem:[%s986 + $0xc] sm:$0xf]
    %v991 = vld [vmem:[%s986 + $0x10] sm:$0xf]
    %v992 = vld [vmem:[%s986 + $0x14] sm:$0xf]
    %v993 = vld [vmem:[%s986 + $0x18] sm:$0xf]
    %v994 = vld [vmem:[%s986 + $0x1c] sm:$0xf]
    %v995 = vld [vmem:[%s986 + $0x20] sm:$0xf]
    %v996 = vld [vmem:[%s986 + $0x24] sm:$0xf]
    %v997 = vld [vmem:[%s986 + $0x28] sm:$0xf]
    %v998 = vld [vmem:[%s986 + $0x2c] sm:$0xf]
    %v999 = vld [vmem:[%s986 + $0x30] sm:$0xf]
    %v1000 = vld [vmem:[%s986 + $0x34] sm:$0xf]
    %v1001 = vld [vmem:[%s986 + $0x38] sm:$0xf]
    %v1002 = vld [vmem:[%s986 + $0x3c] sm:$0xf]
    %v1003 = vld [vmem:[%s986 + $0x40] sm:$0xf]
    %v1004 = vld [vmem:[%s986 + $0x44] sm:$0xf]
    %v1005 = vld [vmem:[%s986 + $0x48] sm:$0xf]
    %v1006 = vld [vmem:[%s986 + $0x4c] sm:$0xf]
    %v1007 = vld [vmem:[%s986 + $0x50] sm:$0xf]
    %v1008 = vld [vmem:[%s986 + $0x54] sm:$0xf]
    %v1009 = vld [vmem:[%s986 + $0x58] sm:$0xf]
    %v1010 = vld [vmem:[%s986 + $0x5c] sm:$0xf]
    %v1011 = vld [vmem:[%s986 + $0x60] sm:$0xf]
    %v1012 = vld [vmem:[%s986 + $0x64] sm:$0xf]
    %v1013 = vld [vmem:[%s986 + $0x68] sm:$0xf]
    %v1014 = vld [vmem:[%s986 + $0x6c] sm:$0xf]
    %v1015 = vld [vmem:[%s986 + $0x70] sm:$0xf]
    %v1016 = vld [vmem:[%s986 + $0x74] sm:$0xf]
    %v1017 = vld [vmem:[%s986 + $0x78] sm:$0xf]
    %v1018 = vld [vmem:[%s986 + $0x7c] sm:$0xf]
    %v1019 = vld [vmem:[%s986 + $0x80] sm:$0xf]
    %v1020 = vld [vmem:[%s986 + $0x84] sm:$0xf]
    %v1021 = vld [vmem:[%s986 + $0x88] sm:$0xf]
    %v1022 = vld [vmem:[%s986 + $0x8c] sm:$0xf]
    %v1023 = vld [vmem:[%s986 + $0x90] sm:$0xf]
    %v1024 = vld [vmem:[%s986 + $0x94] sm:$0xf]
    %v1025 = vld [vmem:[%s986 + $0x98] sm:$0xf]
    %v1026 = vld [vmem:[%s986 + $0x9c] sm:$0xf]
    %v1027 = vld [vmem:[%s986 + $0xa0] sm:$0xf]
    %v1028 = vld [vmem:[%s986 + $0xa4] sm:$0xf]
    %v1029 = vld [vmem:[%s986 + $0xa8] sm:$0xf]
    %v1030 = vld [vmem:[%s986 + $0xac] sm:$0xf]
    %v1031 = vld [vmem:[%s986 + $0xb0] sm:$0xf]
    %v1032 = vld [vmem:[%s986 + $0xb4] sm:$0xf]
    %v1033 = vld [vmem:[%s986 + $0xb8] sm:$0xf]
    %v1034 = vld [vmem:[%s986 + $0xbc] sm:$0xf]
    %v1035 = vld [vmem:[%s986 + $0xc0] sm:$0xf]
    %v1036 = vld [vmem:[%s986 + $0xc4] sm:$0xf]
    %v1037 = vld [vmem:[%s986 + $0xc8] sm:$0xf]
    %v1038 = vld [vmem:[%s986 + $0xcc] sm:$0xf]
    %v1039 = vld [vmem:[%s986 + $0xd0] sm:$0xf]
    %v1040 = vld [vmem:[%s986 + $0xd4] sm:$0xf]
    %v1041 = vld [vmem:[%s986 + $0xd8] sm:$0xf]
    %v1042 = vld [vmem:[%s986 + $0xdc] sm:$0xf]
    %v1043 = vld [vmem:[%s986 + $0xe0] sm:$0xf]
    %v1044 = vld [vmem:[%s986 + $0xe4] sm:$0xf]
    %v1045 = vld [vmem:[%s986 + $0xe8] sm:$0xf]
    %v1046 = vld [vmem:[%s986 + $0xec] sm:$0xf]
    %v1047 = vld [vmem:[%s986 + $0xf0] sm:$0xf]
    %v1048 = vld [vmem:[%s986 + $0xf4] sm:$0xf]
    %v1049 = vld [vmem:[%s986 + $0xf8] sm:$0xf]
    %v1050 = vld [vmem:[%s986 + $0xfc] sm:$0xf]
    %s1051 = scalar_lea.vmem %s2, 16
    %v1052 = vld [vmem:[%s1051] sm:$0xf]
    %v1053 = vld [vmem:[%s1051 + $0x4] sm:$0xf]
    %v1118 = vunpack.c.l.b16 %v987
    %v1119 = vunpack.c.l.b16 %v988
    %v1120 = vunpack.c.l.b16 %v989
    %v1121 = vunpack.c.l.b16 %v990
    %v1122 = vunpack.c.l.b16 %v991
    %v1123 = vunpack.c.l.b16 %v992
    %v1124 = vunpack.c.l.b16 %v993
    %v1125 = vunpack.c.l.b16 %v994
    %v1126 = vunpack.c.l.b16 %v995
    %v1127 = vunpack.c.l.b16 %v996
    %v1128 = vunpack.c.l.b16 %v997
    %v1129 = vunpack.c.l.b16 %v998
    %v1130 = vunpack.c.l.b16 %v999
    %v1131 = vunpack.c.l.b16 %v1000
    %v1132 = vunpack.c.l.b16 %v1001
    %v1133 = vunpack.c.l.b16 %v1002
    %v1134 = vunpack.c.l.b16 %v1003
    %v1135 = vunpack.c.l.b16 %v1004
    %v1136 = vunpack.c.l.b16 %v1005
    %v1137 = vunpack.c.l.b16 %v1006
    %v1138 = vunpack.c.l.b16 %v1007
    %v1139 = vunpack.c.l.b16 %v1008
    %v1140 = vunpack.c.l.b16 %v1009
    %v1141 = vunpack.c.l.b16 %v1010
    %v1142 = vunpack.c.l.b16 %v1011
    %v1143 = vunpack.c.l.b16 %v1012
    %v1144 = vunpack.c.l.b16 %v1013
    %v1145 = vunpack.c.l.b16 %v1014
    %v1146 = vunpack.c.l.b16 %v1015
    %v1147 = vunpack.c.l.b16 %v1016
    %v1148 = vunpack.c.l.b16 %v1017
    %v1149 = vunpack.c.l.b16 %v1018
    %v1150 = vunpack.c.l.b16 %v1019
    %v1151 = vunpack.c.l.b16 %v1020
    %v1152 = vunpack.c.l.b16 %v1021
    %v1153 = vunpack.c.l.b16 %v1022
    %v1154 = vunpack.c.l.b16 %v1023
    %v1155 = vunpack.c.l.b16 %v1024
    %v1156 = vunpack.c.l.b16 %v1025
    %v1157 = vunpack.c.l.b16 %v1026
    %v1158 = vunpack.c.l.b16 %v1027
    %v1159 = vunpack.c.l.b16 %v1028
    %v1160 = vunpack.c.l.b16 %v1029
    %v1161 = vunpack.c.l.b16 %v1030
    %v1162 = vunpack.c.l.b16 %v1031
    %v1163 = vunpack.c.l.b16 %v1032
    %v1164 = vunpack.c.l.b16 %v1033
    %v1165 = vunpack.c.l.b16 %v1034
    %v1166 = vunpack.c.l.b16 %v1035
    %v1167 = vunpack.c.l.b16 %v1036
    %v1168 = vunpack.c.l.b16 %v1037
    %v1169 = vunpack.c.l.b16 %v1038
    %v1170 = vunpack.c.l.b16 %v1039
    %v1171 = vunpack.c.l.b16 %v1040
    %v1172 = vunpack.c.l.b16 %v1041
    %v1173 = vunpack.c.l.b16 %v1042
    %v1174 = vunpack.c.l.b16 %v1043
    %v1175 = vunpack.c.l.b16 %v1044
    %v1176 = vunpack.c.l.b16 %v1045
    %v1177 = vunpack.c.l.b16 %v1046
    %v1178 = vunpack.c.l.b16 %v1047
    %v1179 = vunpack.c.l.b16 %v1048
    %v1180 = vunpack.c.l.b16 %v1049
    %v1181 = vunpack.c.l.b16 %v1050
    %v1182 = vpack.c.b16 %v1119, %v1118
    %v1183 = vpack.c.b16 %v1121, %v1120
    %v1184 = vpack.c.b16 %v1123, %v1122
    %v1185 = vpack.c.b16 %v1125, %v1124
    %v1186 = vpack.c.b16 %v1127, %v1126
    %v1187 = vpack.c.b16 %v1129, %v1128
    %v1188 = vpack.c.b16 %v1131, %v1130
    %v1189 = vpack.c.b16 %v1133, %v1132
    %v1190 = vpack.c.b16 %v1135, %v1134
    %v1191 = vpack.c.b16 %v1137, %v1136
    %v1192 = vpack.c.b16 %v1139, %v1138
    %v1193 = vpack.c.b16 %v1141, %v1140
    %v1194 = vpack.c.b16 %v1143, %v1142
    %v1195 = vpack.c.b16 %v1145, %v1144
    %v1196 = vpack.c.b16 %v1147, %v1146
    %v1197 = vpack.c.b16 %v1149, %v1148
    %v1198 = vpack.c.b16 %v1151, %v1150
    %v1199 = vpack.c.b16 %v1153, %v1152
    %v1200 = vpack.c.b16 %v1155, %v1154
    %v1201 = vpack.c.b16 %v1157, %v1156
    %v1202 = vpack.c.b16 %v1159, %v1158
    %v1203 = vpack.c.b16 %v1161, %v1160
    %v1204 = vpack.c.b16 %v1163, %v1162
    %v1205 = vpack.c.b16 %v1165, %v1164
    %v1206 = vpack.c.b16 %v1167, %v1166
    %v1207 = vpack.c.b16 %v1169, %v1168
    %v1208 = vpack.c.b16 %v1171, %v1170
    %v1209 = vpack.c.b16 %v1173, %v1172
    %v1210 = vpack.c.b16 %v1175, %v1174
    %v1211 = vpack.c.b16 %v1177, %v1176
    %v1212 = vpack.c.b16 %v1179, %v1178
    %v1213 = vpack.c.b16 %v1181, %v1180
    %1246 = vmatprep.subr.bf16.mxu0 0
    %1247 = vmatpush1.bf16.msra.mxu0 %v1189
    %1248 = vmatprep.subr.bf16.mxu0 0
    %1249 = vmatpush1.bf16.msra.mxu0 %v1188
    %1250 = vmatprep.subr.bf16.mxu0 0
    %1251 = vmatpush1.bf16.msra.mxu0 %v1187
    %1252 = vmatprep.subr.bf16.mxu0 0
    %1253 = vmatpush1.bf16.msra.mxu0 %v1186
    %1254 = vmatprep.subr.bf16.mxu0 0
    %1255 = vmatpush1.bf16.msra.mxu0 %v1185
    %1256 = vmatprep.subr.bf16.mxu0 0
    %1257 = vmatpush1.bf16.msra.mxu0 %v1184
    %1258 = vmatprep.subr.bf16.mxu0 0
    %1259 = vmatpush1.bf16.msra.mxu0 %v1183
    %1260 = vmatprep.subr.bf16.mxu0 0
    %1261 = vmatpush1.bf16.msra.mxu0 %v1182
    %1262 = vmatprep.subr.bf16.mxu0 0
    %1263 = vmatpush2.bf16.msra.mxu0 %v1197
    %1264 = vmatprep.subr.bf16.mxu0 0
    %1265 = vmatpush2.bf16.msra.mxu0 %v1196
    %1266 = vmatprep.subr.bf16.mxu0 0
    %1267 = vmatpush2.bf16.msra.mxu0 %v1195
    %1268 = vmatprep.subr.bf16.mxu0 0
    %1269 = vmatpush2.bf16.msra.mxu0 %v1194
    %1270 = vmatprep.subr.bf16.mxu0 0
    %1271 = vmatpush2.bf16.msra.mxu0 %v1193
    %1272 = vmatprep.subr.bf16.mxu0 0
    %1273 = vmatpush2.bf16.msra.mxu0 %v1192
    %1274 = vmatprep.subr.bf16.mxu0 0
    %1275 = vmatpush2.bf16.msra.mxu0 %v1191
    %1276 = vmatprep.subr.bf16.mxu0 0
    %1277 = vmatpush2.bf16.msra.mxu0 %v1190
    %1278 = vmatprep.mubr.bf16.mxu0 %v257
    %1279 = vmatmul.mubr.bf16.gmra.mxu0 %v249
    %v1280 = vpop.f32.mrf.mxu0
    %v1281 = vadd.f32 0.0, %v1280
    %v1282 = vpop.f32.mrf.mxu0
    %v1283 = vpop.f32.mrf.mxu0
    %v1284 = vpop.f32.mrf.mxu0
    %1285 = vdwg.mxu0
    %1286 = vmatprep.subr.bf16.mxu0 0
    %1287 = vmatpush1.bf16.msra.mxu0 %v1205
    %1288 = vmatprep.subr.bf16.mxu0 0
    %1289 = vmatpush1.bf16.msra.mxu0 %v1204
    %1290 = vmatprep.subr.bf16.mxu0 0
    %1291 = vmatpush1.bf16.msra.mxu0 %v1203
    %1292 = vmatprep.subr.bf16.mxu0 0
    %1293 = vmatpush1.bf16.msra.mxu0 %v1202
    %1294 = vmatprep.subr.bf16.mxu0 0
    %1295 = vmatpush1.bf16.msra.mxu0 %v1201
    %1296 = vmatprep.subr.bf16.mxu0 0
    %1297 = vmatpush1.bf16.msra.mxu0 %v1200
    %1298 = vmatprep.subr.bf16.mxu0 0
    %1299 = vmatpush1.bf16.msra.mxu0 %v1199
    %1300 = vmatprep.subr.bf16.mxu0 0
    %1301 = vmatpush1.bf16.msra.mxu0 %v1198
    %1302 = vmatprep.subr.bf16.mxu0 0
    %1303 = vmatpush2.bf16.msra.mxu0 %v1213
    %1304 = vmatprep.subr.bf16.mxu0 0
    %1305 = vmatpush2.bf16.msra.mxu0 %v1212
    %1306 = vmatprep.subr.bf16.mxu0 0
    %1307 = vmatpush2.bf16.msra.mxu0 %v1211
    %1308 = vmatprep.subr.bf16.mxu0 0
    %1309 = vmatpush2.bf16.msra.mxu0 %v1210
    %1310 = vmatprep.subr.bf16.mxu0 0
    %1311 = vmatpush2.bf16.msra.mxu0 %v1209
    %1312 = vmatprep.subr.bf16.mxu0 0
    %1313 = vmatpush2.bf16.msra.mxu0 %v1208
    %1314 = vmatprep.subr.bf16.mxu0 0
    %1315 = vmatpush2.bf16.msra.mxu0 %v1207
    %1316 = vmatprep.subr.bf16.mxu0 0
    %1317 = vmatpush2.bf16.msra.mxu0 %v1206
    %1318 = vmatprep.mubr.bf16.mxu0 %v258
    %1319 = vmatmul.mubr.bf16.gmra.mxu0 %v256
    %v1320 = vpop.f32.mrf.mxu0
    %v1321 = vadd.f32 %v1281, %v1320
    %v1322 = vpop.f32.mrf.mxu0
    %v1323 = vpop.f32.mrf.mxu0
    %v1324 = vpop.f32.mrf.mxu0
    %1325 = vdwg.mxu0
    %v1326 = vpack.c.bf16 %v1321, %v1321
    %v1329 = vunpack.c.l.b16 %v1052
    %v1330 = vunpack.c.l.b16 %v1053
    %v1331 = vpack.c.b16 %v1330, %v1329
    %v1333 = vsel %vm882, %v1331, 0
    %v1336 = vand.u32 %v1326, %v889
    %1338 = vmatprep.subr.bf16.mxu0 0
    %1339 = vmatpush1.bf16.msra.mxu0 0
    %1340 = vmatprep.subr.bf16.mxu0 0
    %1341 = vmatpush1.bf16.msra.mxu0 0
    %1342 = vmatprep.subr.bf16.mxu0 0
    %1343 = vmatpush1.bf16.msra.mxu0 0
    %1344 = vmatprep.subr.bf16.mxu0 0
    %1345 = vmatpush1.bf16.msra.mxu0 0
    %1346 = vmatprep.subr.bf16.mxu0 0
    %1347 = vmatpush1.bf16.msra.mxu0 0
    %1348 = vmatprep.subr.bf16.mxu0 0
    %1349 = vmatpush1.bf16.msra.mxu0 0
    %1350 = vmatprep.subr.bf16.mxu0 0
    %1351 = vmatpush1.bf16.msra.mxu0 0
    %1352 = vmatprep.subr.bf16.mxu0 0
    %1353 = vmatpush1.bf16.msra.mxu0 %v1336
    %1354 = vmatprep.subr.bf16.mxu0 0
    %1355 = vmatpush2.bf16.msra.mxu0 0
    %1356 = vmatprep.subr.bf16.mxu0 0
    %1357 = vmatpush2.bf16.msra.mxu0 0
    %1358 = vmatprep.subr.bf16.mxu0 0
    %1359 = vmatpush2.bf16.msra.mxu0 0
    %1360 = vmatprep.subr.bf16.mxu0 0
    %1361 = vmatpush2.bf16.msra.mxu0 0
    %1362 = vmatprep.subr.bf16.mxu0 0
    %1363 = vmatpush2.bf16.msra.mxu0 0
    %1364 = vmatprep.subr.bf16.mxu0 0
    %1365 = vmatpush2.bf16.msra.mxu0 0
    %1366 = vmatprep.subr.bf16.mxu0 0
    %1367 = vmatpush2.bf16.msra.mxu0 0
    %1368 = vmatprep.subr.bf16.mxu0 0
    %1369 = vmatpush2.bf16.msra.mxu0 0
    %1370 = vmatprep.mubr.bf16.mxu0 0
    %1371 = vmatmul.mubr.bf16.gmra.mxu0 %v1333
    %v1372 = vpop.f32.mrf.mxu0
    %v1373 = vadd.f32 0.0, %v1372
    %v1374 = vpop.f32.mrf.mxu0
    %v1375 = vpop.f32.mrf.mxu0
    %v1376 = vadd.f32 0.0, %v1375
    %v1377 = vpop.f32.mrf.mxu0
    %1378 = vdwg.mxu0
    %v1379 = vadd.f32 %v980, %v1373
    %v1380 = vadd.f32 %v983, %v1376
    %s1381 = scalar_lea.vmem [#allocation2], 768
    %v1382 = vld [vmem:[%s1381] sm:$0xf]
    %v1383 = vld [vmem:[%s1381 + $0x4] sm:$0xf]
    %v1384 = vld [vmem:[%s1381 + $0x8] sm:$0xf]
    %v1385 = vld [vmem:[%s1381 + $0xc] sm:$0xf]
    %v1386 = vld [vmem:[%s1381 + $0x10] sm:$0xf]
    %v1387 = vld [vmem:[%s1381 + $0x14] sm:$0xf]
    %v1388 = vld [vmem:[%s1381 + $0x18] sm:$0xf]
    %v1389 = vld [vmem:[%s1381 + $0x1c] sm:$0xf]
    %v1390 = vld [vmem:[%s1381 + $0x20] sm:$0xf]
    %v1391 = vld [vmem:[%s1381 + $0x24] sm:$0xf]
    %v1392 = vld [vmem:[%s1381 + $0x28] sm:$0xf]
    %v1393 = vld [vmem:[%s1381 + $0x2c] sm:$0xf]
    %v1394 = vld [vmem:[%s1381 + $0x30] sm:$0xf]
    %v1395 = vld [vmem:[%s1381 + $0x34] sm:$0xf]
    %v1396 = vld [vmem:[%s1381 + $0x38] sm:$0xf]
    %v1397 = vld [vmem:[%s1381 + $0x3c] sm:$0xf]
    %v1398 = vld [vmem:[%s1381 + $0x40] sm:$0xf]
    %v1399 = vld [vmem:[%s1381 + $0x44] sm:$0xf]
    %v1400 = vld [vmem:[%s1381 + $0x48] sm:$0xf]
    %v1401 = vld [vmem:[%s1381 + $0x4c] sm:$0xf]
    %v1402 = vld [vmem:[%s1381 + $0x50] sm:$0xf]
    %v1403 = vld [vmem:[%s1381 + $0x54] sm:$0xf]
    %v1404 = vld [vmem:[%s1381 + $0x58] sm:$0xf]
    %v1405 = vld [vmem:[%s1381 + $0x5c] sm:$0xf]
    %v1406 = vld [vmem:[%s1381 + $0x60] sm:$0xf]
    %v1407 = vld [vmem:[%s1381 + $0x64] sm:$0xf]
    %v1408 = vld [vmem:[%s1381 + $0x68] sm:$0xf]
    %v1409 = vld [vmem:[%s1381 + $0x6c] sm:$0xf]
    %v1410 = vld [vmem:[%s1381 + $0x70] sm:$0xf]
    %v1411 = vld [vmem:[%s1381 + $0x74] sm:$0xf]
    %v1412 = vld [vmem:[%s1381 + $0x78] sm:$0xf]
    %v1413 = vld [vmem:[%s1381 + $0x7c] sm:$0xf]
    %v1414 = vld [vmem:[%s1381 + $0x80] sm:$0xf]
    %v1415 = vld [vmem:[%s1381 + $0x84] sm:$0xf]
    %v1416 = vld [vmem:[%s1381 + $0x88] sm:$0xf]
    %v1417 = vld [vmem:[%s1381 + $0x8c] sm:$0xf]
    %v1418 = vld [vmem:[%s1381 + $0x90] sm:$0xf]
    %v1419 = vld [vmem:[%s1381 + $0x94] sm:$0xf]
    %v1420 = vld [vmem:[%s1381 + $0x98] sm:$0xf]
    %v1421 = vld [vmem:[%s1381 + $0x9c] sm:$0xf]
    %v1422 = vld [vmem:[%s1381 + $0xa0] sm:$0xf]
    %v1423 = vld [vmem:[%s1381 + $0xa4] sm:$0xf]
    %v1424 = vld [vmem:[%s1381 + $0xa8] sm:$0xf]
    %v1425 = vld [vmem:[%s1381 + $0xac] sm:$0xf]
    %v1426 = vld [vmem:[%s1381 + $0xb0] sm:$0xf]
    %v1427 = vld [vmem:[%s1381 + $0xb4] sm:$0xf]
    %v1428 = vld [vmem:[%s1381 + $0xb8] sm:$0xf]
    %v1429 = vld [vmem:[%s1381 + $0xbc] sm:$0xf]
    %v1430 = vld [vmem:[%s1381 + $0xc0] sm:$0xf]
    %v1431 = vld [vmem:[%s1381 + $0xc4] sm:$0xf]
    %v1432 = vld [vmem:[%s1381 + $0xc8] sm:$0xf]
    %v1433 = vld [vmem:[%s1381 + $0xcc] sm:$0xf]
    %v1434 = vld [vmem:[%s1381 + $0xd0] sm:$0xf]
    %v1435 = vld [vmem:[%s1381 + $0xd4] sm:$0xf]
    %v1436 = vld [vmem:[%s1381 + $0xd8] sm:$0xf]
    %v1437 = vld [vmem:[%s1381 + $0xdc] sm:$0xf]
    %v1438 = vld [vmem:[%s1381 + $0xe0] sm:$0xf]
    %v1439 = vld [vmem:[%s1381 + $0xe4] sm:$0xf]
    %v1440 = vld [vmem:[%s1381 + $0xe8] sm:$0xf]
    %v1441 = vld [vmem:[%s1381 + $0xec] sm:$0xf]
    %v1442 = vld [vmem:[%s1381 + $0xf0] sm:$0xf]
    %v1443 = vld [vmem:[%s1381 + $0xf4] sm:$0xf]
    %v1444 = vld [vmem:[%s1381 + $0xf8] sm:$0xf]
    %v1445 = vld [vmem:[%s1381 + $0xfc] sm:$0xf]
    %s1446 = scalar_lea.vmem %s2, 24
    %v1447 = vld [vmem:[%s1446] sm:$0xf]
    %v1448 = vld [vmem:[%s1446 + $0x4] sm:$0xf]
    %v1513 = vunpack.c.l.b16 %v1382
    %v1514 = vunpack.c.l.b16 %v1383
    %v1515 = vunpack.c.l.b16 %v1384
    %v1516 = vunpack.c.l.b16 %v1385
    %v1517 = vunpack.c.l.b16 %v1386
    %v1518 = vunpack.c.l.b16 %v1387
    %v1519 = vunpack.c.l.b16 %v1388
    %v1520 = vunpack.c.l.b16 %v1389
    %v1521 = vunpack.c.l.b16 %v1390
    %v1522 = vunpack.c.l.b16 %v1391
    %v1523 = vunpack.c.l.b16 %v1392
    %v1524 = vunpack.c.l.b16 %v1393
    %v1525 = vunpack.c.l.b16 %v1394
    %v1526 = vunpack.c.l.b16 %v1395
    %v1527 = vunpack.c.l.b16 %v1396
    %v1528 = vunpack.c.l.b16 %v1397
    %v1529 = vunpack.c.l.b16 %v1398
    %v1530 = vunpack.c.l.b16 %v1399
    %v1531 = vunpack.c.l.b16 %v1400
    %v1532 = vunpack.c.l.b16 %v1401
    %v1533 = vunpack.c.l.b16 %v1402
    %v1534 = vunpack.c.l.b16 %v1403
    %v1535 = vunpack.c.l.b16 %v1404
    %v1536 = vunpack.c.l.b16 %v1405
    %v1537 = vunpack.c.l.b16 %v1406
    %v1538 = vunpack.c.l.b16 %v1407
    %v1539 = vunpack.c.l.b16 %v1408
    %v1540 = vunpack.c.l.b16 %v1409
    %v1541 = vunpack.c.l.b16 %v1410
    %v1542 = vunpack.c.l.b16 %v1411
    %v1543 = vunpack.c.l.b16 %v1412
    %v1544 = vunpack.c.l.b16 %v1413
    %v1545 = vunpack.c.l.b16 %v1414
    %v1546 = vunpack.c.l.b16 %v1415
    %v1547 = vunpack.c.l.b16 %v1416
    %v1548 = vunpack.c.l.b16 %v1417
    %v1549 = vunpack.c.l.b16 %v1418
    %v1550 = vunpack.c.l.b16 %v1419
    %v1551 = vunpack.c.l.b16 %v1420
    %v1552 = vunpack.c.l.b16 %v1421
    %v1553 = vunpack.c.l.b16 %v1422
    %v1554 = vunpack.c.l.b16 %v1423
    %v1555 = vunpack.c.l.b16 %v1424
    %v1556 = vunpack.c.l.b16 %v1425
    %v1557 = vunpack.c.l.b16 %v1426
    %v1558 = vunpack.c.l.b16 %v1427
    %v1559 = vunpack.c.l.b16 %v1428
    %v1560 = vunpack.c.l.b16 %v1429
    %v1561 = vunpack.c.l.b16 %v1430
    %v1562 = vunpack.c.l.b16 %v1431
    %v1563 = vunpack.c.l.b16 %v1432
    %v1564 = vunpack.c.l.b16 %v1433
    %v1565 = vunpack.c.l.b16 %v1434
    %v1566 = vunpack.c.l.b16 %v1435
    %v1567 = vunpack.c.l.b16 %v1436
    %v1568 = vunpack.c.l.b16 %v1437
    %v1569 = vunpack.c.l.b16 %v1438
    %v1570 = vunpack.c.l.b16 %v1439
    %v1571 = vunpack.c.l.b16 %v1440
    %v1572 = vunpack.c.l.b16 %v1441
    %v1573 = vunpack.c.l.b16 %v1442
    %v1574 = vunpack.c.l.b16 %v1443
    %v1575 = vunpack.c.l.b16 %v1444
    %v1576 = vunpack.c.l.b16 %v1445
    %v1577 = vpack.c.b16 %v1514, %v1513
    %v1578 = vpack.c.b16 %v1516, %v1515
    %v1579 = vpack.c.b16 %v1518, %v1517
    %v1580 = vpack.c.b16 %v1520, %v1519
    %v1581 = vpack.c.b16 %v1522, %v1521
    %v1582 = vpack.c.b16 %v1524, %v1523
    %v1583 = vpack.c.b16 %v1526, %v1525
    %v1584 = vpack.c.b16 %v1528, %v1527
    %v1585 = vpack.c.b16 %v1530, %v1529
    %v1586 = vpack.c.b16 %v1532, %v1531
    %v1587 = vpack.c.b16 %v1534, %v1533
    %v1588 = vpack.c.b16 %v1536, %v1535
    %v1589 = vpack.c.b16 %v1538, %v1537
    %v1590 = vpack.c.b16 %v1540, %v1539
    %v1591 = vpack.c.b16 %v1542, %v1541
    %v1592 = vpack.c.b16 %v1544, %v1543
    %v1593 = vpack.c.b16 %v1546, %v1545
    %v1594 = vpack.c.b16 %v1548, %v1547
    %v1595 = vpack.c.b16 %v1550, %v1549
    %v1596 = vpack.c.b16 %v1552, %v1551
    %v1597 = vpack.c.b16 %v1554, %v1553
    %v1598 = vpack.c.b16 %v1556, %v1555
    %v1599 = vpack.c.b16 %v1558, %v1557
    %v1600 = vpack.c.b16 %v1560, %v1559
    %v1601 = vpack.c.b16 %v1562, %v1561
    %v1602 = vpack.c.b16 %v1564, %v1563
    %v1603 = vpack.c.b16 %v1566, %v1565
    %v1604 = vpack.c.b16 %v1568, %v1567
    %v1605 = vpack.c.b16 %v1570, %v1569
    %v1606 = vpack.c.b16 %v1572, %v1571
    %v1607 = vpack.c.b16 %v1574, %v1573
    %v1608 = vpack.c.b16 %v1576, %v1575
    %1641 = vmatprep.subr.bf16.mxu0 0
    %1642 = vmatpush1.bf16.msra.mxu0 %v1584
    %1643 = vmatprep.subr.bf16.mxu0 0
    %1644 = vmatpush1.bf16.msra.mxu0 %v1583
    %1645 = vmatprep.subr.bf16.mxu0 0
    %1646 = vmatpush1.bf16.msra.mxu0 %v1582
    %1647 = vmatprep.subr.bf16.mxu0 0
    %1648 = vmatpush1.bf16.msra.mxu0 %v1581
    %1649 = vmatprep.subr.bf16.mxu0 0
    %1650 = vmatpush1.bf16.msra.mxu0 %v1580
    %1651 = vmatprep.subr.bf16.mxu0 0
    %1652 = vmatpush1.bf16.msra.mxu0 %v1579
    %1653 = vmatprep.subr.bf16.mxu0 0
    %1654 = vmatpush1.bf16.msra.mxu0 %v1578
    %1655 = vmatprep.subr.bf16.mxu0 0
    %1656 = vmatpush1.bf16.msra.mxu0 %v1577
    %1657 = vmatprep.subr.bf16.mxu0 0
    %1658 = vmatpush2.bf16.msra.mxu0 %v1592
    %1659 = vmatprep.subr.bf16.mxu0 0
    %1660 = vmatpush2.bf16.msra.mxu0 %v1591
    %1661 = vmatprep.subr.bf16.mxu0 0
    %1662 = vmatpush2.bf16.msra.mxu0 %v1590
    %1663 = vmatprep.subr.bf16.mxu0 0
    %1664 = vmatpush2.bf16.msra.mxu0 %v1589
    %1665 = vmatprep.subr.bf16.mxu0 0
    %1666 = vmatpush2.bf16.msra.mxu0 %v1588
    %1667 = vmatprep.subr.bf16.mxu0 0
    %1668 = vmatpush2.bf16.msra.mxu0 %v1587
    %1669 = vmatprep.subr.bf16.mxu0 0
    %1670 = vmatpush2.bf16.msra.mxu0 %v1586
    %1671 = vmatprep.subr.bf16.mxu0 0
    %1672 = vmatpush2.bf16.msra.mxu0 %v1585
    %1673 = vmatprep.mubr.bf16.mxu0 %v257
    %1674 = vmatmul.mubr.bf16.gmra.mxu0 %v249
    %v1675 = vpop.f32.mrf.mxu0
    %v1676 = vadd.f32 0.0, %v1675
    %v1677 = vpop.f32.mrf.mxu0
    %v1678 = vpop.f32.mrf.mxu0
    %v1679 = vpop.f32.mrf.mxu0
    %1680 = vdwg.mxu0
    %1681 = vmatprep.subr.bf16.mxu0 0
    %1682 = vmatpush1.bf16.msra.mxu0 %v1600
    %1683 = vmatprep.subr.bf16.mxu0 0
    %1684 = vmatpush1.bf16.msra.mxu0 %v1599
    %1685 = vmatprep.subr.bf16.mxu0 0
    %1686 = vmatpush1.bf16.msra.mxu0 %v1598
    %1687 = vmatprep.subr.bf16.mxu0 0
    %1688 = vmatpush1.bf16.msra.mxu0 %v1597
    %1689 = vmatprep.subr.bf16.mxu0 0
    %1690 = vmatpush1.bf16.msra.mxu0 %v1596
    %1691 = vmatprep.subr.bf16.mxu0 0
    %1692 = vmatpush1.bf16.msra.mxu0 %v1595
    %1693 = vmatprep.subr.bf16.mxu0 0
    %1694 = vmatpush1.bf16.msra.mxu0 %v1594
    %1695 = vmatprep.subr.bf16.mxu0 0
    %1696 = vmatpush1.bf16.msra.mxu0 %v1593
    %1697 = vmatprep.subr.bf16.mxu0 0
    %1698 = vmatpush2.bf16.msra.mxu0 %v1608
    %1699 = vmatprep.subr.bf16.mxu0 0
    %1700 = vmatpush2.bf16.msra.mxu0 %v1607
    %1701 = vmatprep.subr.bf16.mxu0 0
    %1702 = vmatpush2.bf16.msra.mxu0 %v1606
    %1703 = vmatprep.subr.bf16.mxu0 0
    %1704 = vmatpush2.bf16.msra.mxu0 %v1605
    %1705 = vmatprep.subr.bf16.mxu0 0
    %1706 = vmatpush2.bf16.msra.mxu0 %v1604
    %1707 = vmatprep.subr.bf16.mxu0 0
    %1708 = vmatpush2.bf16.msra.mxu0 %v1603
    %1709 = vmatprep.subr.bf16.mxu0 0
    %1710 = vmatpush2.bf16.msra.mxu0 %v1602
    %1711 = vmatprep.subr.bf16.mxu0 0
    %1712 = vmatpush2.bf16.msra.mxu0 %v1601
    %1713 = vmatprep.mubr.bf16.mxu0 %v258
    %1714 = vmatmul.mubr.bf16.gmra.mxu0 %v256
    %v1715 = vpop.f32.mrf.mxu0
    %v1716 = vadd.f32 %v1676, %v1715
    %v1717 = vpop.f32.mrf.mxu0
    %v1718 = vpop.f32.mrf.mxu0
    %v1719 = vpop.f32.mrf.mxu0
    %1720 = vdwg.mxu0
    %v1721 = vpack.c.bf16 %v1716, %v1716
    %v1724 = vunpack.c.l.b16 %v1447
    %v1725 = vunpack.c.l.b16 %v1448
    %v1726 = vpack.c.b16 %v1725, %v1724
    %v1728 = vsel %vm882, %v1726, 0
    %v1731 = vand.u32 %v1721, %v889
    %1733 = vmatprep.subr.bf16.mxu0 0
    %1734 = vmatpush1.bf16.msra.mxu0 0
    %1735 = vmatprep.subr.bf16.mxu0 0
    %1736 = vmatpush1.bf16.msra.mxu0 0
    %1737 = vmatprep.subr.bf16.mxu0 0
    %1738 = vmatpush1.bf16.msra.mxu0 0
    %1739 = vmatprep.subr.bf16.mxu0 0
    %1740 = vmatpush1.bf16.msra.mxu0 0
    %1741 = vmatprep.subr.bf16.mxu0 0
    %1742 = vmatpush1.bf16.msra.mxu0 0
    %1743 = vmatprep.subr.bf16.mxu0 0
    %1744 = vmatpush1.bf16.msra.mxu0 0
    %1745 = vmatprep.subr.bf16.mxu0 0
    %1746 = vmatpush1.bf16.msra.mxu0 0
    %1747 = vmatprep.subr.bf16.mxu0 0
    %1748 = vmatpush1.bf16.msra.mxu0 %v1731
    %1749 = vmatprep.subr.bf16.mxu0 0
    %1750 = vmatpush2.bf16.msra.mxu0 0
    %1751 = vmatprep.subr.bf16.mxu0 0
    %1752 = vmatpush2.bf16.msra.mxu0 0
    %1753 = vmatprep.subr.bf16.mxu0 0
    %1754 = vmatpush2.bf16.msra.mxu0 0
    %1755 = vmatprep.subr.bf16.mxu0 0
    %1756 = vmatpush2.bf16.msra.mxu0 0
    %1757 = vmatprep.subr.bf16.mxu0 0
    %1758 = vmatpush2.bf16.msra.mxu0 0
    %1759 = vmatprep.subr.bf16.mxu0 0
    %1760 = vmatpush2.bf16.msra.mxu0 0
    %1761 = vmatprep.subr.bf16.mxu0 0
    %1762 = vmatpush2.bf16.msra.mxu0 0
    %1763 = vmatprep.subr.bf16.mxu0 0
    %1764 = vmatpush2.bf16.msra.mxu0 0
    %1765 = vmatprep.mubr.bf16.mxu0 0
    %1766 = vmatmul.mubr.bf16.gmra.mxu0 %v1728
    %v1767 = vpop.f32.mrf.mxu0
    %v1768 = vadd.f32 0.0, %v1767
    %v1769 = vpop.f32.mrf.mxu0
    %v1770 = vpop.f32.mrf.mxu0
    %v1771 = vadd.f32 0.0, %v1770
    %v1772 = vpop.f32.mrf.mxu0
    %1773 = vdwg.mxu0
    %v1774 = vadd.f32 %v1379, %v1768
    %v1775 = vadd.f32 %v1380, %v1771
    %s1776 = scalar_lea.vmem [#allocation2], 1024
    %v1777 = vld [vmem:[%s1776] sm:$0xf]
    %v1778 = vld [vmem:[%s1776 + $0x4] sm:$0xf]
    %v1779 = vld [vmem:[%s1776 + $0x8] sm:$0xf]
    %v1780 = vld [vmem:[%s1776 + $0xc] sm:$0xf]
    %v1781 = vld [vmem:[%s1776 + $0x10] sm:$0xf]
    %v1782 = vld [vmem:[%s1776 + $0x14] sm:$0xf]
    %v1783 = vld [vmem:[%s1776 + $0x18] sm:$0xf]
    %v1784 = vld [vmem:[%s1776 + $0x1c] sm:$0xf]
    %v1785 = vld [vmem:[%s1776 + $0x20] sm:$0xf]
    %v1786 = vld [vmem:[%s1776 + $0x24] sm:$0xf]
    %v1787 = vld [vmem:[%s1776 + $0x28] sm:$0xf]
    %v1788 = vld [vmem:[%s1776 + $0x2c] sm:$0xf]
    %v1789 = vld [vmem:[%s1776 + $0x30] sm:$0xf]
    %v1790 = vld [vmem:[%s1776 + $0x34] sm:$0xf]
    %v1791 = vld [vmem:[%s1776 + $0x38] sm:$0xf]
    %v1792 = vld [vmem:[%s1776 + $0x3c] sm:$0xf]
    %v1793 = vld [vmem:[%s1776 + $0x40] sm:$0xf]
    %v1794 = vld [vmem:[%s1776 + $0x44] sm:$0xf]
    %v1795 = vld [vmem:[%s1776 + $0x48] sm:$0xf]
    %v1796 = vld [vmem:[%s1776 + $0x4c] sm:$0xf]
    %v1797 = vld [vmem:[%s1776 + $0x50] sm:$0xf]
    %v1798 = vld [vmem:[%s1776 + $0x54] sm:$0xf]
    %v1799 = vld [vmem:[%s1776 + $0x58] sm:$0xf]
    %v1800 = vld [vmem:[%s1776 + $0x5c] sm:$0xf]
    %v1801 = vld [vmem:[%s1776 + $0x60] sm:$0xf]
    %v1802 = vld [vmem:[%s1776 + $0x64] sm:$0xf]
    %v1803 = vld [vmem:[%s1776 + $0x68] sm:$0xf]
    %v1804 = vld [vmem:[%s1776 + $0x6c] sm:$0xf]
    %v1805 = vld [vmem:[%s1776 + $0x70] sm:$0xf]
    %v1806 = vld [vmem:[%s1776 + $0x74] sm:$0xf]
    %v1807 = vld [vmem:[%s1776 + $0x78] sm:$0xf]
    %v1808 = vld [vmem:[%s1776 + $0x7c] sm:$0xf]
    %v1809 = vld [vmem:[%s1776 + $0x80] sm:$0xf]
    %v1810 = vld [vmem:[%s1776 + $0x84] sm:$0xf]
    %v1811 = vld [vmem:[%s1776 + $0x88] sm:$0xf]
    %v1812 = vld [vmem:[%s1776 + $0x8c] sm:$0xf]
    %v1813 = vld [vmem:[%s1776 + $0x90] sm:$0xf]
    %v1814 = vld [vmem:[%s1776 + $0x94] sm:$0xf]
    %v1815 = vld [vmem:[%s1776 + $0x98] sm:$0xf]
    %v1816 = vld [vmem:[%s1776 + $0x9c] sm:$0xf]
    %v1817 = vld [vmem:[%s1776 + $0xa0] sm:$0xf]
    %v1818 = vld [vmem:[%s1776 + $0xa4] sm:$0xf]
    %v1819 = vld [vmem:[%s1776 + $0xa8] sm:$0xf]
    %v1820 = vld [vmem:[%s1776 + $0xac] sm:$0xf]
    %v1821 = vld [vmem:[%s1776 + $0xb0] sm:$0xf]
    %v1822 = vld [vmem:[%s1776 + $0xb4] sm:$0xf]
    %v1823 = vld [vmem:[%s1776 + $0xb8] sm:$0xf]
    %v1824 = vld [vmem:[%s1776 + $0xbc] sm:$0xf]
    %v1825 = vld [vmem:[%s1776 + $0xc0] sm:$0xf]
    %v1826 = vld [vmem:[%s1776 + $0xc4] sm:$0xf]
    %v1827 = vld [vmem:[%s1776 + $0xc8] sm:$0xf]
    %v1828 = vld [vmem:[%s1776 + $0xcc] sm:$0xf]
    %v1829 = vld [vmem:[%s1776 + $0xd0] sm:$0xf]
    %v1830 = vld [vmem:[%s1776 + $0xd4] sm:$0xf]
    %v1831 = vld [vmem:[%s1776 + $0xd8] sm:$0xf]
    %v1832 = vld [vmem:[%s1776 + $0xdc] sm:$0xf]
    %v1833 = vld [vmem:[%s1776 + $0xe0] sm:$0xf]
    %v1834 = vld [vmem:[%s1776 + $0xe4] sm:$0xf]
    %v1835 = vld [vmem:[%s1776 + $0xe8] sm:$0xf]
    %v1836 = vld [vmem:[%s1776 + $0xec] sm:$0xf]
    %v1837 = vld [vmem:[%s1776 + $0xf0] sm:$0xf]
    %v1838 = vld [vmem:[%s1776 + $0xf4] sm:$0xf]
    %v1839 = vld [vmem:[%s1776 + $0xf8] sm:$0xf]
    %v1840 = vld [vmem:[%s1776 + $0xfc] sm:$0xf]
    %s1841 = scalar_lea.vmem %s2, 32
    %v1842 = vld [vmem:[%s1841] sm:$0xf]
    %v1843 = vld [vmem:[%s1841 + $0x4] sm:$0xf]
    %v1908 = vunpack.c.l.b16 %v1777
    %v1909 = vunpack.c.l.b16 %v1778
    %v1910 = vunpack.c.l.b16 %v1779
    %v1911 = vunpack.c.l.b16 %v1780
    %v1912 = vunpack.c.l.b16 %v1781
    %v1913 = vunpack.c.l.b16 %v1782
    %v1914 = vunpack.c.l.b16 %v1783
    %v1915 = vunpack.c.l.b16 %v1784
    %v1916 = vunpack.c.l.b16 %v1785
    %v1917 = vunpack.c.l.b16 %v1786
    %v1918 = vunpack.c.l.b16 %v1787
    %v1919 = vunpack.c.l.b16 %v1788
    %v1920 = vunpack.c.l.b16 %v1789
    %v1921 = vunpack.c.l.b16 %v1790
    %v1922 = vunpack.c.l.b16 %v1791
    %v1923 = vunpack.c.l.b16 %v1792
    %v1924 = vunpack.c.l.b16 %v1793
    %v1925 = vunpack.c.l.b16 %v1794
    %v1926 = vunpack.c.l.b16 %v1795
    %v1927 = vunpack.c.l.b16 %v1796
    %v1928 = vunpack.c.l.b16 %v1797
    %v1929 = vunpack.c.l.b16 %v1798
    %v1930 = vunpack.c.l.b16 %v1799
    %v1931 = vunpack.c.l.b16 %v1800
    %v1932 = vunpack.c.l.b16 %v1801
    %v1933 = vunpack.c.l.b16 %v1802
    %v1934 = vunpack.c.l.b16 %v1803
    %v1935 = vunpack.c.l.b16 %v1804
    %v1936 = vunpack.c.l.b16 %v1805
    %v1937 = vunpack.c.l.b16 %v1806
    %v1938 = vunpack.c.l.b16 %v1807
    %v1939 = vunpack.c.l.b16 %v1808
    %v1940 = vunpack.c.l.b16 %v1809
    %v1941 = vunpack.c.l.b16 %v1810
    %v1942 = vunpack.c.l.b16 %v1811
    %v1943 = vunpack.c.l.b16 %v1812
    %v1944 = vunpack.c.l.b16 %v1813
    %v1945 = vunpack.c.l.b16 %v1814
    %v1946 = vunpack.c.l.b16 %v1815
    %v1947 = vunpack.c.l.b16 %v1816
    %v1948 = vunpack.c.l.b16 %v1817
    %v1949 = vunpack.c.l.b16 %v1818
    %v1950 = vunpack.c.l.b16 %v1819
    %v1951 = vunpack.c.l.b16 %v1820
    %v1952 = vunpack.c.l.b16 %v1821
    %v1953 = vunpack.c.l.b16 %v1822
    %v1954 = vunpack.c.l.b16 %v1823
    %v1955 = vunpack.c.l.b16 %v1824
    %v1956 = vunpack.c.l.b16 %v1825
    %v1957 = vunpack.c.l.b16 %v1826
    %v1958 = vunpack.c.l.b16 %v1827
    %v1959 = vunpack.c.l.b16 %v1828
    %v1960 = vunpack.c.l.b16 %v1829
    %v1961 = vunpack.c.l.b16 %v1830
    %v1962 = vunpack.c.l.b16 %v1831
    %v1963 = vunpack.c.l.b16 %v1832
    %v1964 = vunpack.c.l.b16 %v1833
    %v1965 = vunpack.c.l.b16 %v1834
    %v1966 = vunpack.c.l.b16 %v1835
    %v1967 = vunpack.c.l.b16 %v1836
    %v1968 = vunpack.c.l.b16 %v1837
    %v1969 = vunpack.c.l.b16 %v1838
    %v1970 = vunpack.c.l.b16 %v1839
    %v1971 = vunpack.c.l.b16 %v1840
    %v1972 = vpack.c.b16 %v1909, %v1908
    %v1973 = vpack.c.b16 %v1911, %v1910
    %v1974 = vpack.c.b16 %v1913, %v1912
    %v1975 = vpack.c.b16 %v1915, %v1914
    %v1976 = vpack.c.b16 %v1917, %v1916
    %v1977 = vpack.c.b16 %v1919, %v1918
    %v1978 = vpack.c.b16 %v1921, %v1920
    %v1979 = vpack.c.b16 %v1923, %v1922
    %v1980 = vpack.c.b16 %v1925, %v1924
    %v1981 = vpack.c.b16 %v1927, %v1926
    %v1982 = vpack.c.b16 %v1929, %v1928
    %v1983 = vpack.c.b16 %v1931, %v1930
    %v1984 = vpack.c.b16 %v1933, %v1932
    %v1985 = vpack.c.b16 %v1935, %v1934
    %v1986 = vpack.c.b16 %v1937, %v1936
    %v1987 = vpack.c.b16 %v1939, %v1938
    %v1988 = vpack.c.b16 %v1941, %v1940
    %v1989 = vpack.c.b16 %v1943, %v1942
    %v1990 = vpack.c.b16 %v1945, %v1944
    %v1991 = vpack.c.b16 %v1947, %v1946
    %v1992 = vpack.c.b16 %v1949, %v1948
    %v1993 = vpack.c.b16 %v1951, %v1950
    %v1994 = vpack.c.b16 %v1953, %v1952
    %v1995 = vpack.c.b16 %v1955, %v1954
    %v1996 = vpack.c.b16 %v1957, %v1956
    %v1997 = vpack.c.b16 %v1959, %v1958
    %v1998 = vpack.c.b16 %v1961, %v1960
    %v1999 = vpack.c.b16 %v1963, %v1962
    %v2000 = vpack.c.b16 %v1965, %v1964
    %v2001 = vpack.c.b16 %v1967, %v1966
    %v2002 = vpack.c.b16 %v1969, %v1968
    %v2003 = vpack.c.b16 %v1971, %v1970
    %2036 = vmatprep.subr.bf16.mxu0 0
    %2037 = vmatpush1.bf16.msra.mxu0 %v1979
    %2038 = vmatprep.subr.bf16.mxu0 0
    %2039 = vmatpush1.bf16.msra.mxu0 %v1978
    %2040 = vmatprep.subr.bf16.mxu0 0
    %2041 = vmatpush1.bf16.msra.mxu0 %v1977
    %2042 = vmatprep.subr.bf16.mxu0 0
    %2043 = vmatpush1.bf16.msra.mxu0 %v1976
    %2044 = vmatprep.subr.bf16.mxu0 0
    %2045 = vmatpush1.bf16.msra.mxu0 %v1975
    %2046 = vmatprep.subr.bf16.mxu0 0
    %2047 = vmatpush1.bf16.msra.mxu0 %v1974
    %2048 = vmatprep.subr.bf16.mxu0 0
    %2049 = vmatpush1.bf16.msra.mxu0 %v1973
    %2050 = vmatprep.subr.bf16.mxu0 0
    %2051 = vmatpush1.bf16.msra.mxu0 %v1972
    %2052 = vmatprep.subr.bf16.mxu0 0
    %2053 = vmatpush2.bf16.msra.mxu0 %v1987
    %2054 = vmatprep.subr.bf16.mxu0 0
    %2055 = vmatpush2.bf16.msra.mxu0 %v1986
    %2056 = vmatprep.subr.bf16.mxu0 0
    %2057 = vmatpush2.bf16.msra.mxu0 %v1985
    %2058 = vmatprep.subr.bf16.mxu0 0
    %2059 = vmatpush2.bf16.msra.mxu0 %v1984
    %2060 = vmatprep.subr.bf16.mxu0 0
    %2061 = vmatpush2.bf16.msra.mxu0 %v1983
    %2062 = vmatprep.subr.bf16.mxu0 0
    %2063 = vmatpush2.bf16.msra.mxu0 %v1982
    %2064 = vmatprep.subr.bf16.mxu0 0
    %2065 = vmatpush2.bf16.msra.mxu0 %v1981
    %2066 = vmatprep.subr.bf16.mxu0 0
    %2067 = vmatpush2.bf16.msra.mxu0 %v1980
    %2068 = vmatprep.mubr.bf16.mxu0 %v257
    %2069 = vmatmul.mubr.bf16.gmra.mxu0 %v249
    %v2070 = vpop.f32.mrf.mxu0
    %v2071 = vadd.f32 0.0, %v2070
    %v2072 = vpop.f32.mrf.mxu0
    %v2073 = vpop.f32.mrf.mxu0
    %v2074 = vpop.f32.mrf.mxu0
    %2075 = vdwg.mxu0
    %2076 = vmatprep.subr.bf16.mxu0 0
    %2077 = vmatpush1.bf16.msra.mxu0 %v1995
    %2078 = vmatprep.subr.bf16.mxu0 0
    %2079 = vmatpush1.bf16.msra.mxu0 %v1994
    %2080 = vmatprep.subr.bf16.mxu0 0
    %2081 = vmatpush1.bf16.msra.mxu0 %v1993
    %2082 = vmatprep.subr.bf16.mxu0 0
    %2083 = vmatpush1.bf16.msra.mxu0 %v1992
    %2084 = vmatprep.subr.bf16.mxu0 0
    %2085 = vmatpush1.bf16.msra.mxu0 %v1991
    %2086 = vmatprep.subr.bf16.mxu0 0
    %2087 = vmatpush1.bf16.msra.mxu0 %v1990
    %2088 = vmatprep.subr.bf16.mxu0 0
    %2089 = vmatpush1.bf16.msra.mxu0 %v1989
    %2090 = vmatprep.subr.bf16.mxu0 0
    %2091 = vmatpush1.bf16.msra.mxu0 %v1988
    %2092 = vmatprep.subr.bf16.mxu0 0
    %2093 = vmatpush2.bf16.msra.mxu0 %v2003
    %2094 = vmatprep.subr.bf16.mxu0 0
    %2095 = vmatpush2.bf16.msra.mxu0 %v2002
    %2096 = vmatprep.subr.bf16.mxu0 0
    %2097 = vmatpush2.bf16.msra.mxu0 %v2001
    %2098 = vmatprep.subr.bf16.mxu0 0
    %2099 = vmatpush2.bf16.msra.mxu0 %v2000
    %2100 = vmatprep.subr.bf16.mxu0 0
    %2101 = vmatpush2.bf16.msra.mxu0 %v1999
    %2102 = vmatprep.subr.bf16.mxu0 0
    %2103 = vmatpush2.bf16.msra.mxu0 %v1998
    %2104 = vmatprep.subr.bf16.mxu0 0
    %2105 = vmatpush2.bf16.msra.mxu0 %v1997
    %2106 = vmatprep.subr.bf16.mxu0 0
    %2107 = vmatpush2.bf16.msra.mxu0 %v1996
    %2108 = vmatprep.mubr.bf16.mxu0 %v258
    %2109 = vmatmul.mubr.bf16.gmra.mxu0 %v256
    %v2110 = vpop.f32.mrf.mxu0
    %v2111 = vadd.f32 %v2071, %v2110
    %v2112 = vpop.f32.mrf.mxu0
    %v2113 = vpop.f32.mrf.mxu0
    %v2114 = vpop.f32.mrf.mxu0
    %2115 = vdwg.mxu0
    %v2116 = vpack.c.bf16 %v2111, %v2111
    %v2119 = vunpack.c.l.b16 %v1842
    %v2120 = vunpack.c.l.b16 %v1843
    %v2121 = vpack.c.b16 %v2120, %v2119
    %v2123 = vsel %vm882, %v2121, 0
    %v2126 = vand.u32 %v2116, %v889
    %2128 = vmatprep.subr.bf16.mxu0 0
    %2129 = vmatpush1.bf16.msra.mxu0 0
    %2130 = vmatprep.subr.bf16.mxu0 0
    %2131 = vmatpush1.bf16.msra.mxu0 0
    %2132 = vmatprep.subr.bf16.mxu0 0
    %2133 = vmatpush1.bf16.msra.mxu0 0
    %2134 = vmatprep.subr.bf16.mxu0 0
    %2135 = vmatpush1.bf16.msra.mxu0 0
    %2136 = vmatprep.subr.bf16.mxu0 0
    %2137 = vmatpush1.bf16.msra.mxu0 0
    %2138 = vmatprep.subr.bf16.mxu0 0
    %2139 = vmatpush1.bf16.msra.mxu0 0
    %2140 = vmatprep.subr.bf16.mxu0 0
    %2141 = vmatpush1.bf16.msra.mxu0 0
    %2142 = vmatprep.subr.bf16.mxu0 0
    %2143 = vmatpush1.bf16.msra.mxu0 %v2126
    %2144 = vmatprep.subr.bf16.mxu0 0
    %2145 = vmatpush2.bf16.msra.mxu0 0
    %2146 = vmatprep.subr.bf16.mxu0 0
    %2147 = vmatpush2.bf16.msra.mxu0 0
    %2148 = vmatprep.subr.bf16.mxu0 0
    %2149 = vmatpush2.bf16.msra.mxu0 0
    %2150 = vmatprep.subr.bf16.mxu0 0
    %2151 = vmatpush2.bf16.msra.mxu0 0
    %2152 = vmatprep.subr.bf16.mxu0 0
    %2153 = vmatpush2.bf16.msra.mxu0 0
    %2154 = vmatprep.subr.bf16.mxu0 0
    %2155 = vmatpush2.bf16.msra.mxu0 0
    %2156 = vmatprep.subr.bf16.mxu0 0
    %2157 = vmatpush2.bf16.msra.mxu0 0
    %2158 = vmatprep.subr.bf16.mxu0 0
    %2159 = vmatpush2.bf16.msra.mxu0 0
    %2160 = vmatprep.mubr.bf16.mxu0 0
    %2161 = vmatmul.mubr.bf16.gmra.mxu0 %v2123
    %v2162 = vpop.f32.mrf.mxu0
    %v2163 = vadd.f32 0.0, %v2162
    %v2164 = vpop.f32.mrf.mxu0
    %v2165 = vpop.f32.mrf.mxu0
    %v2166 = vadd.f32 0.0, %v2165
    %v2167 = vpop.f32.mrf.mxu0
    %2168 = vdwg.mxu0
    %v2169 = vadd.f32 %v1774, %v2163
    %v2170 = vadd.f32 %v1775, %v2166
    %s2171 = scalar_lea.vmem [#allocation2], 1280
    %v2172 = vld [vmem:[%s2171] sm:$0xf]
    %v2173 = vld [vmem:[%s2171 + $0x4] sm:$0xf]
    %v2174 = vld [vmem:[%s2171 + $0x8] sm:$0xf]
    %v2175 = vld [vmem:[%s2171 + $0xc] sm:$0xf]
    %v2176 = vld [vmem:[%s2171 + $0x10] sm:$0xf]
    %v2177 = vld [vmem:[%s2171 + $0x14] sm:$0xf]
    %v2178 = vld [vmem:[%s2171 + $0x18] sm:$0xf]
    %v2179 = vld [vmem:[%s2171 + $0x1c] sm:$0xf]
    %v2180 = vld [vmem:[%s2171 + $0x20] sm:$0xf]
    %v2181 = vld [vmem:[%s2171 + $0x24] sm:$0xf]
    %v2182 = vld [vmem:[%s2171 + $0x28] sm:$0xf]
    %v2183 = vld [vmem:[%s2171 + $0x2c] sm:$0xf]
    %v2184 = vld [vmem:[%s2171 + $0x30] sm:$0xf]
    %v2185 = vld [vmem:[%s2171 + $0x34] sm:$0xf]
    %v2186 = vld [vmem:[%s2171 + $0x38] sm:$0xf]
    %v2187 = vld [vmem:[%s2171 + $0x3c] sm:$0xf]
    %v2188 = vld [vmem:[%s2171 + $0x40] sm:$0xf]
    %v2189 = vld [vmem:[%s2171 + $0x44] sm:$0xf]
    %v2190 = vld [vmem:[%s2171 + $0x48] sm:$0xf]
    %v2191 = vld [vmem:[%s2171 + $0x4c] sm:$0xf]
    %v2192 = vld [vmem:[%s2171 + $0x50] sm:$0xf]
    %v2193 = vld [vmem:[%s2171 + $0x54] sm:$0xf]
    %v2194 = vld [vmem:[%s2171 + $0x58] sm:$0xf]
    %v2195 = vld [vmem:[%s2171 + $0x5c] sm:$0xf]
    %v2196 = vld [vmem:[%s2171 + $0x60] sm:$0xf]
    %v2197 = vld [vmem:[%s2171 + $0x64] sm:$0xf]
    %v2198 = vld [vmem:[%s2171 + $0x68] sm:$0xf]
    %v2199 = vld [vmem:[%s2171 + $0x6c] sm:$0xf]
    %v2200 = vld [vmem:[%s2171 + $0x70] sm:$0xf]
    %v2201 = vld [vmem:[%s2171 + $0x74] sm:$0xf]
    %v2202 = vld [vmem:[%s2171 + $0x78] sm:$0xf]
    %v2203 = vld [vmem:[%s2171 + $0x7c] sm:$0xf]
    %v2204 = vld [vmem:[%s2171 + $0x80] sm:$0xf]
    %v2205 = vld [vmem:[%s2171 + $0x84] sm:$0xf]
    %v2206 = vld [vmem:[%s2171 + $0x88] sm:$0xf]
    %v2207 = vld [vmem:[%s2171 + $0x8c] sm:$0xf]
    %v2208 = vld [vmem:[%s2171 + $0x90] sm:$0xf]
    %v2209 = vld [vmem:[%s2171 + $0x94] sm:$0xf]
    %v2210 = vld [vmem:[%s2171 + $0x98] sm:$0xf]
    %v2211 = vld [vmem:[%s2171 + $0x9c] sm:$0xf]
    %v2212 = vld [vmem:[%s2171 + $0xa0] sm:$0xf]
    %v2213 = vld [vmem:[%s2171 + $0xa4] sm:$0xf]
    %v2214 = vld [vmem:[%s2171 + $0xa8] sm:$0xf]
    %v2215 = vld [vmem:[%s2171 + $0xac] sm:$0xf]
    %v2216 = vld [vmem:[%s2171 + $0xb0] sm:$0xf]
    %v2217 = vld [vmem:[%s2171 + $0xb4] sm:$0xf]
    %v2218 = vld [vmem:[%s2171 + $0xb8] sm:$0xf]
    %v2219 = vld [vmem:[%s2171 + $0xbc] sm:$0xf]
    %v2220 = vld [vmem:[%s2171 + $0xc0] sm:$0xf]
    %v2221 = vld [vmem:[%s2171 + $0xc4] sm:$0xf]
    %v2222 = vld [vmem:[%s2171 + $0xc8] sm:$0xf]
    %v2223 = vld [vmem:[%s2171 + $0xcc] sm:$0xf]
    %v2224 = vld [vmem:[%s2171 + $0xd0] sm:$0xf]
    %v2225 = vld [vmem:[%s2171 + $0xd4] sm:$0xf]
    %v2226 = vld [vmem:[%s2171 + $0xd8] sm:$0xf]
    %v2227 = vld [vmem:[%s2171 + $0xdc] sm:$0xf]
    %v2228 = vld [vmem:[%s2171 + $0xe0] sm:$0xf]
    %v2229 = vld [vmem:[%s2171 + $0xe4] sm:$0xf]
    %v2230 = vld [vmem:[%s2171 + $0xe8] sm:$0xf]
    %v2231 = vld [vmem:[%s2171 + $0xec] sm:$0xf]
    %v2232 = vld [vmem:[%s2171 + $0xf0] sm:$0xf]
    %v2233 = vld [vmem:[%s2171 + $0xf4] sm:$0xf]
    %v2234 = vld [vmem:[%s2171 + $0xf8] sm:$0xf]
    %v2235 = vld [vmem:[%s2171 + $0xfc] sm:$0xf]
    %s2236 = scalar_lea.vmem %s2, 40
    %v2237 = vld [vmem:[%s2236] sm:$0xf]
    %v2238 = vld [vmem:[%s2236 + $0x4] sm:$0xf]
    %v2303 = vunpack.c.l.b16 %v2172
    %v2304 = vunpack.c.l.b16 %v2173
    %v2305 = vunpack.c.l.b16 %v2174
    %v2306 = vunpack.c.l.b16 %v2175
    %v2307 = vunpack.c.l.b16 %v2176
    %v2308 = vunpack.c.l.b16 %v2177
    %v2309 = vunpack.c.l.b16 %v2178
    %v2310 = vunpack.c.l.b16 %v2179
    %v2311 = vunpack.c.l.b16 %v2180
    %v2312 = vunpack.c.l.b16 %v2181
    %v2313 = vunpack.c.l.b16 %v2182
    %v2314 = vunpack.c.l.b16 %v2183
    %v2315 = vunpack.c.l.b16 %v2184
    %v2316 = vunpack.c.l.b16 %v2185
    %v2317 = vunpack.c.l.b16 %v2186
    %v2318 = vunpack.c.l.b16 %v2187
    %v2319 = vunpack.c.l.b16 %v2188
    %v2320 = vunpack.c.l.b16 %v2189
    %v2321 = vunpack.c.l.b16 %v2190
    %v2322 = vunpack.c.l.b16 %v2191
    %v2323 = vunpack.c.l.b16 %v2192
    %v2324 = vunpack.c.l.b16 %v2193
    %v2325 = vunpack.c.l.b16 %v2194
    %v2326 = vunpack.c.l.b16 %v2195
    %v2327 = vunpack.c.l.b16 %v2196
    %v2328 = vunpack.c.l.b16 %v2197
    %v2329 = vunpack.c.l.b16 %v2198
    %v2330 = vunpack.c.l.b16 %v2199
    %v2331 = vunpack.c.l.b16 %v2200
    %v2332 = vunpack.c.l.b16 %v2201
    %v2333 = vunpack.c.l.b16 %v2202
    %v2334 = vunpack.c.l.b16 %v2203
    %v2335 = vunpack.c.l.b16 %v2204
    %v2336 = vunpack.c.l.b16 %v2205
    %v2337 = vunpack.c.l.b16 %v2206
    %v2338 = vunpack.c.l.b16 %v2207
    %v2339 = vunpack.c.l.b16 %v2208
    %v2340 = vunpack.c.l.b16 %v2209
    %v2341 = vunpack.c.l.b16 %v2210
    %v2342 = vunpack.c.l.b16 %v2211
    %v2343 = vunpack.c.l.b16 %v2212
    %v2344 = vunpack.c.l.b16 %v2213
    %v2345 = vunpack.c.l.b16 %v2214
    %v2346 = vunpack.c.l.b16 %v2215
    %v2347 = vunpack.c.l.b16 %v2216
    %v2348 = vunpack.c.l.b16 %v2217
    %v2349 = vunpack.c.l.b16 %v2218
    %v2350 = vunpack.c.l.b16 %v2219
    %v2351 = vunpack.c.l.b16 %v2220
    %v2352 = vunpack.c.l.b16 %v2221
    %v2353 = vunpack.c.l.b16 %v2222
    %v2354 = vunpack.c.l.b16 %v2223
    %v2355 = vunpack.c.l.b16 %v2224
    %v2356 = vunpack.c.l.b16 %v2225
    %v2357 = vunpack.c.l.b16 %v2226
    %v2358 = vunpack.c.l.b16 %v2227
    %v2359 = vunpack.c.l.b16 %v2228
    %v2360 = vunpack.c.l.b16 %v2229
    %v2361 = vunpack.c.l.b16 %v2230
    %v2362 = vunpack.c.l.b16 %v2231
    %v2363 = vunpack.c.l.b16 %v2232
    %v2364 = vunpack.c.l.b16 %v2233
    %v2365 = vunpack.c.l.b16 %v2234
    %v2366 = vunpack.c.l.b16 %v2235
    %v2367 = vpack.c.b16 %v2304, %v2303
    %v2368 = vpack.c.b16 %v2306, %v2305
    %v2369 = vpack.c.b16 %v2308, %v2307
    %v2370 = vpack.c.b16 %v2310, %v2309
    %v2371 = vpack.c.b16 %v2312, %v2311
    %v2372 = vpack.c.b16 %v2314, %v2313
    %v2373 = vpack.c.b16 %v2316, %v2315
    %v2374 = vpack.c.b16 %v2318, %v2317
    %v2375 = vpack.c.b16 %v2320, %v2319
    %v2376 = vpack.c.b16 %v2322, %v2321
    %v2377 = vpack.c.b16 %v2324, %v2323
    %v2378 = vpack.c.b16 %v2326, %v2325
    %v2379 = vpack.c.b16 %v2328, %v2327
    %v2380 = vpack.c.b16 %v2330, %v2329
    %v2381 = vpack.c.b16 %v2332, %v2331
    %v2382 = vpack.c.b16 %v2334, %v2333
    %v2383 = vpack.c.b16 %v2336, %v2335
    %v2384 = vpack.c.b16 %v2338, %v2337
    %v2385 = vpack.c.b16 %v2340, %v2339
    %v2386 = vpack.c.b16 %v2342, %v2341
    %v2387 = vpack.c.b16 %v2344, %v2343
    %v2388 = vpack.c.b16 %v2346, %v2345
    %v2389 = vpack.c.b16 %v2348, %v2347
    %v2390 = vpack.c.b16 %v2350, %v2349
    %v2391 = vpack.c.b16 %v2352, %v2351
    %v2392 = vpack.c.b16 %v2354, %v2353
    %v2393 = vpack.c.b16 %v2356, %v2355
    %v2394 = vpack.c.b16 %v2358, %v2357
    %v2395 = vpack.c.b16 %v2360, %v2359
    %v2396 = vpack.c.b16 %v2362, %v2361
    %v2397 = vpack.c.b16 %v2364, %v2363
    %v2398 = vpack.c.b16 %v2366, %v2365
    %2431 = vmatprep.subr.bf16.mxu0 0
    %2432 = vmatpush1.bf16.msra.mxu0 %v2374
    %2433 = vmatprep.subr.bf16.mxu0 0
    %2434 = vmatpush1.bf16.msra.mxu0 %v2373
    %2435 = vmatprep.subr.bf16.mxu0 0
    %2436 = vmatpush1.bf16.msra.mxu0 %v2372
    %2437 = vmatprep.subr.bf16.mxu0 0
    %2438 = vmatpush1.bf16.msra.mxu0 %v2371
    %2439 = vmatprep.subr.bf16.mxu0 0
    %2440 = vmatpush1.bf16.msra.mxu0 %v2370
    %2441 = vmatprep.subr.bf16.mxu0 0
    %2442 = vmatpush1.bf16.msra.mxu0 %v2369
    %2443 = vmatprep.subr.bf16.mxu0 0
    %2444 = vmatpush1.bf16.msra.mxu0 %v2368
    %2445 = vmatprep.subr.bf16.mxu0 0
    %2446 = vmatpush1.bf16.msra.mxu0 %v2367
    %2447 = vmatprep.subr.bf16.mxu0 0
    %2448 = vmatpush2.bf16.msra.mxu0 %v2382
    %2449 = vmatprep.subr.bf16.mxu0 0
    %2450 = vmatpush2.bf16.msra.mxu0 %v2381
    %2451 = vmatprep.subr.bf16.mxu0 0
    %2452 = vmatpush2.bf16.msra.mxu0 %v2380
    %2453 = vmatprep.subr.bf16.mxu0 0
    %2454 = vmatpush2.bf16.msra.mxu0 %v2379
    %2455 = vmatprep.subr.bf16.mxu0 0
    %2456 = vmatpush2.bf16.msra.mxu0 %v2378
    %2457 = vmatprep.subr.bf16.mxu0 0
    %2458 = vmatpush2.bf16.msra.mxu0 %v2377
    %2459 = vmatprep.subr.bf16.mxu0 0
    %2460 = vmatpush2.bf16.msra.mxu0 %v2376
    %2461 = vmatprep.subr.bf16.mxu0 0
    %2462 = vmatpush2.bf16.msra.mxu0 %v2375
    %2463 = vmatprep.mubr.bf16.mxu0 %v257
    %2464 = vmatmul.mubr.bf16.gmra.mxu0 %v249
    %v2465 = vpop.f32.mrf.mxu0
    %v2466 = vadd.f32 0.0, %v2465
    %v2467 = vpop.f32.mrf.mxu0
    %v2468 = vpop.f32.mrf.mxu0
    %v2469 = vpop.f32.mrf.mxu0
    %2470 = vdwg.mxu0
    %2471 = vmatprep.subr.bf16.mxu0 0
    %2472 = vmatpush1.bf16.msra.mxu0 %v2390
    %2473 = vmatprep.subr.bf16.mxu0 0
    %2474 = vmatpush1.bf16.msra.mxu0 %v2389
    %2475 = vmatprep.subr.bf16.mxu0 0
    %2476 = vmatpush1.bf16.msra.mxu0 %v2388
    %2477 = vmatprep.subr.bf16.mxu0 0
    %2478 = vmatpush1.bf16.msra.mxu0 %v2387
    %2479 = vmatprep.subr.bf16.mxu0 0
    %2480 = vmatpush1.bf16.msra.mxu0 %v2386
    %2481 = vmatprep.subr.bf16.mxu0 0
    %2482 = vmatpush1.bf16.msra.mxu0 %v2385
    %2483 = vmatprep.subr.bf16.mxu0 0
    %2484 = vmatpush1.bf16.msra.mxu0 %v2384
    %2485 = vmatprep.subr.bf16.mxu0 0
    %2486 = vmatpush1.bf16.msra.mxu0 %v2383
    %2487 = vmatprep.subr.bf16.mxu0 0
    %2488 = vmatpush2.bf16.msra.mxu0 %v2398
    %2489 = vmatprep.subr.bf16.mxu0 0
    %2490 = vmatpush2.bf16.msra.mxu0 %v2397
    %2491 = vmatprep.subr.bf16.mxu0 0
    %2492 = vmatpush2.bf16.msra.mxu0 %v2396
    %2493 = vmatprep.subr.bf16.mxu0 0
    %2494 = vmatpush2.bf16.msra.mxu0 %v2395
    %2495 = vmatprep.subr.bf16.mxu0 0
    %2496 = vmatpush2.bf16.msra.mxu0 %v2394
    %2497 = vmatprep.subr.bf16.mxu0 0
    %2498 = vmatpush2.bf16.msra.mxu0 %v2393
    %2499 = vmatprep.subr.bf16.mxu0 0
    %2500 = vmatpush2.bf16.msra.mxu0 %v2392
    %2501 = vmatprep.subr.bf16.mxu0 0
    %2502 = vmatpush2.bf16.msra.mxu0 %v2391
    %2503 = vmatprep.mubr.bf16.mxu0 %v258
    %2504 = vmatmul.mubr.bf16.gmra.mxu0 %v256
    %v2505 = vpop.f32.mrf.mxu0
    %v2506 = vadd.f32 %v2466, %v2505
    %v2507 = vpop.f32.mrf.mxu0
    %v2508 = vpop.f32.mrf.mxu0
    %v2509 = vpop.f32.mrf.mxu0
    %2510 = vdwg.mxu0
    %v2511 = vpack.c.bf16 %v2506, %v2506
    %v2514 = vunpack.c.l.b16 %v2237
    %v2515 = vunpack.c.l.b16 %v2238
    %v2516 = vpack.c.b16 %v2515, %v2514
    %v2518 = vsel %vm882, %v2516, 0
    %v2521 = vand.u32 %v2511, %v889
    %2523 = vmatprep.subr.bf16.mxu0 0
    %2524 = vmatpush1.bf16.msra.mxu0 0
    %2525 = vmatprep.subr.bf16.mxu0 0
    %2526 = vmatpush1.bf16.msra.mxu0 0
    %2527 = vmatprep.subr.bf16.mxu0 0
    %2528 = vmatpush1.bf16.msra.mxu0 0
    %2529 = vmatprep.subr.bf16.mxu0 0
    %2530 = vmatpush1.bf16.msra.mxu0 0
    %2531 = vmatprep.subr.bf16.mxu0 0
    %2532 = vmatpush1.bf16.msra.mxu0 0
    %2533 = vmatprep.subr.bf16.mxu0 0
    %2534 = vmatpush1.bf16.msra.mxu0 0
    %2535 = vmatprep.subr.bf16.mxu0 0
    %2536 = vmatpush1.bf16.msra.mxu0 0
    %2537 = vmatprep.subr.bf16.mxu0 0
    %2538 = vmatpush1.bf16.msra.mxu0 %v2521
    %2539 = vmatprep.subr.bf16.mxu0 0
    %2540 = vmatpush2.bf16.msra.mxu0 0
    %2541 = vmatprep.subr.bf16.mxu0 0
    %2542 = vmatpush2.bf16.msra.mxu0 0
    %2543 = vmatprep.subr.bf16.mxu0 0
    %2544 = vmatpush2.bf16.msra.mxu0 0
    %2545 = vmatprep.subr.bf16.mxu0 0
    %2546 = vmatpush2.bf16.msra.mxu0 0
    %2547 = vmatprep.subr.bf16.mxu0 0
    %2548 = vmatpush2.bf16.msra.mxu0 0
    %2549 = vmatprep.subr.bf16.mxu0 0
    %2550 = vmatpush2.bf16.msra.mxu0 0
    %2551 = vmatprep.subr.bf16.mxu0 0
    %2552 = vmatpush2.bf16.msra.mxu0 0
    %2553 = vmatprep.subr.bf16.mxu0 0
    %2554 = vmatpush2.bf16.msra.mxu0 0
    %2555 = vmatprep.mubr.bf16.mxu0 0
    %2556 = vmatmul.mubr.bf16.gmra.mxu0 %v2518
    %v2557 = vpop.f32.mrf.mxu0
    %v2558 = vadd.f32 0.0, %v2557
    %v2559 = vpop.f32.mrf.mxu0
    %v2560 = vpop.f32.mrf.mxu0
    %v2561 = vadd.f32 0.0, %v2560
    %v2562 = vpop.f32.mrf.mxu0
    %2563 = vdwg.mxu0
    %v2564 = vadd.f32 %v2169, %v2558
    %v2565 = vadd.f32 %v2170, %v2561
    %s2566 = scalar_lea.vmem [#allocation2], 1536
    %v2567 = vld [vmem:[%s2566] sm:$0xf]
    %v2568 = vld [vmem:[%s2566 + $0x4] sm:$0xf]
    %v2569 = vld [vmem:[%s2566 + $0x8] sm:$0xf]
    %v2570 = vld [vmem:[%s2566 + $0xc] sm:$0xf]
    %v2571 = vld [vmem:[%s2566 + $0x10] sm:$0xf]
    %v2572 = vld [vmem:[%s2566 + $0x14] sm:$0xf]
    %v2573 = vld [vmem:[%s2566 + $0x18] sm:$0xf]
    %v2574 = vld [vmem:[%s2566 + $0x1c] sm:$0xf]
    %v2575 = vld [vmem:[%s2566 + $0x20] sm:$0xf]
    %v2576 = vld [vmem:[%s2566 + $0x24] sm:$0xf]
    %v2577 = vld [vmem:[%s2566 + $0x28] sm:$0xf]
    %v2578 = vld [vmem:[%s2566 + $0x2c] sm:$0xf]
    %v2579 = vld [vmem:[%s2566 + $0x30] sm:$0xf]
    %v2580 = vld [vmem:[%s2566 + $0x34] sm:$0xf]
    %v2581 = vld [vmem:[%s2566 + $0x38] sm:$0xf]
    %v2582 = vld [vmem:[%s2566 + $0x3c] sm:$0xf]
    %v2583 = vld [vmem:[%s2566 + $0x40] sm:$0xf]
    %v2584 = vld [vmem:[%s2566 + $0x44] sm:$0xf]
    %v2585 = vld [vmem:[%s2566 + $0x48] sm:$0xf]
    %v2586 = vld [vmem:[%s2566 + $0x4c] sm:$0xf]
    %v2587 = vld [vmem:[%s2566 + $0x50] sm:$0xf]
    %v2588 = vld [vmem:[%s2566 + $0x54] sm:$0xf]
    %v2589 = vld [vmem:[%s2566 + $0x58] sm:$0xf]
    %v2590 = vld [vmem:[%s2566 + $0x5c] sm:$0xf]
    %v2591 = vld [vmem:[%s2566 + $0x60] sm:$0xf]
    %v2592 = vld [vmem:[%s2566 + $0x64] sm:$0xf]
    %v2593 = vld [vmem:[%s2566 + $0x68] sm:$0xf]
    %v2594 = vld [vmem:[%s2566 + $0x6c] sm:$0xf]
    %v2595 = vld [vmem:[%s2566 + $0x70] sm:$0xf]
    %v2596 = vld [vmem:[%s2566 + $0x74] sm:$0xf]
    %v2597 = vld [vmem:[%s2566 + $0x78] sm:$0xf]
    %v2598 = vld [vmem:[%s2566 + $0x7c] sm:$0xf]
    %v2599 = vld [vmem:[%s2566 + $0x80] sm:$0xf]
    %v2600 = vld [vmem:[%s2566 + $0x84] sm:$0xf]
    %v2601 = vld [vmem:[%s2566 + $0x88] sm:$0xf]
    %v2602 = vld [vmem:[%s2566 + $0x8c] sm:$0xf]
    %v2603 = vld [vmem:[%s2566 + $0x90] sm:$0xf]
    %v2604 = vld [vmem:[%s2566 + $0x94] sm:$0xf]
    %v2605 = vld [vmem:[%s2566 + $0x98] sm:$0xf]
    %v2606 = vld [vmem:[%s2566 + $0x9c] sm:$0xf]
    %v2607 = vld [vmem:[%s2566 + $0xa0] sm:$0xf]
    %v2608 = vld [vmem:[%s2566 + $0xa4] sm:$0xf]
    %v2609 = vld [vmem:[%s2566 + $0xa8] sm:$0xf]
    %v2610 = vld [vmem:[%s2566 + $0xac] sm:$0xf]
    %v2611 = vld [vmem:[%s2566 + $0xb0] sm:$0xf]
    %v2612 = vld [vmem:[%s2566 + $0xb4] sm:$0xf]
    %v2613 = vld [vmem:[%s2566 + $0xb8] sm:$0xf]
    %v2614 = vld [vmem:[%s2566 + $0xbc] sm:$0xf]
    %v2615 = vld [vmem:[%s2566 + $0xc0] sm:$0xf]
    %v2616 = vld [vmem:[%s2566 + $0xc4] sm:$0xf]
    %v2617 = vld [vmem:[%s2566 + $0xc8] sm:$0xf]
    %v2618 = vld [vmem:[%s2566 + $0xcc] sm:$0xf]
    %v2619 = vld [vmem:[%s2566 + $0xd0] sm:$0xf]
    %v2620 = vld [vmem:[%s2566 + $0xd4] sm:$0xf]
    %v2621 = vld [vmem:[%s2566 + $0xd8] sm:$0xf]
    %v2622 = vld [vmem:[%s2566 + $0xdc] sm:$0xf]
    %v2623 = vld [vmem:[%s2566 + $0xe0] sm:$0xf]
    %v2624 = vld [vmem:[%s2566 + $0xe4] sm:$0xf]
    %v2625 = vld [vmem:[%s2566 + $0xe8] sm:$0xf]
    %v2626 = vld [vmem:[%s2566 + $0xec] sm:$0xf]
    %v2627 = vld [vmem:[%s2566 + $0xf0] sm:$0xf]
    %v2628 = vld [vmem:[%s2566 + $0xf4] sm:$0xf]
    %v2629 = vld [vmem:[%s2566 + $0xf8] sm:$0xf]
    %v2630 = vld [vmem:[%s2566 + $0xfc] sm:$0xf]
    %s2631 = scalar_lea.vmem %s2, 48
    %v2632 = vld [vmem:[%s2631] sm:$0xf]
    %v2633 = vld [vmem:[%s2631 + $0x4] sm:$0xf]
    %v2698 = vunpack.c.l.b16 %v2567
    %v2699 = vunpack.c.l.b16 %v2568
    %v2700 = vunpack.c.l.b16 %v2569
    %v2701 = vunpack.c.l.b16 %v2570
    %v2702 = vunpack.c.l.b16 %v2571
    %v2703 = vunpack.c.l.b16 %v2572
    %v2704 = vunpack.c.l.b16 %v2573
    %v2705 = vunpack.c.l.b16 %v2574
    %v2706 = vunpack.c.l.b16 %v2575
    %v2707 = vunpack.c.l.b16 %v2576
    %v2708 = vunpack.c.l.b16 %v2577
    %v2709 = vunpack.c.l.b16 %v2578
    %v2710 = vunpack.c.l.b16 %v2579
    %v2711 = vunpack.c.l.b16 %v2580
    %v2712 = vunpack.c.l.b16 %v2581
    %v2713 = vunpack.c.l.b16 %v2582
    %v2714 = vunpack.c.l.b16 %v2583
    %v2715 = vunpack.c.l.b16 %v2584
    %v2716 = vunpack.c.l.b16 %v2585
    %v2717 = vunpack.c.l.b16 %v2586
    %v2718 = vunpack.c.l.b16 %v2587
    %v2719 = vunpack.c.l.b16 %v2588
    %v2720 = vunpack.c.l.b16 %v2589
    %v2721 = vunpack.c.l.b16 %v2590
    %v2722 = vunpack.c.l.b16 %v2591
    %v2723 = vunpack.c.l.b16 %v2592
    %v2724 = vunpack.c.l.b16 %v2593
    %v2725 = vunpack.c.l.b16 %v2594
    %v2726 = vunpack.c.l.b16 %v2595
    %v2727 = vunpack.c.l.b16 %v2596
    %v2728 = vunpack.c.l.b16 %v2597
    %v2729 = vunpack.c.l.b16 %v2598
    %v2730 = vunpack.c.l.b16 %v2599
    %v2731 = vunpack.c.l.b16 %v2600
    %v2732 = vunpack.c.l.b16 %v2601
    %v2733 = vunpack.c.l.b16 %v2602
    %v2734 = vunpack.c.l.b16 %v2603
    %v2735 = vunpack.c.l.b16 %v2604
    %v2736 = vunpack.c.l.b16 %v2605
    %v2737 = vunpack.c.l.b16 %v2606
    %v2738 = vunpack.c.l.b16 %v2607
    %v2739 = vunpack.c.l.b16 %v2608
    %v2740 = vunpack.c.l.b16 %v2609
    %v2741 = vunpack.c.l.b16 %v2610
    %v2742 = vunpack.c.l.b16 %v2611
    %v2743 = vunpack.c.l.b16 %v2612
    %v2744 = vunpack.c.l.b16 %v2613
    %v2745 = vunpack.c.l.b16 %v2614
    %v2746 = vunpack.c.l.b16 %v2615
    %v2747 = vunpack.c.l.b16 %v2616
    %v2748 = vunpack.c.l.b16 %v2617
    %v2749 = vunpack.c.l.b16 %v2618
    %v2750 = vunpack.c.l.b16 %v2619
    %v2751 = vunpack.c.l.b16 %v2620
    %v2752 = vunpack.c.l.b16 %v2621
    %v2753 = vunpack.c.l.b16 %v2622
    %v2754 = vunpack.c.l.b16 %v2623
    %v2755 = vunpack.c.l.b16 %v2624
    %v2756 = vunpack.c.l.b16 %v2625
    %v2757 = vunpack.c.l.b16 %v2626
    %v2758 = vunpack.c.l.b16 %v2627
    %v2759 = vunpack.c.l.b16 %v2628
    %v2760 = vunpack.c.l.b16 %v2629
    %v2761 = vunpack.c.l.b16 %v2630
    %v2762 = vpack.c.b16 %v2699, %v2698
    %v2763 = vpack.c.b16 %v2701, %v2700
    %v2764 = vpack.c.b16 %v2703, %v2702
    %v2765 = vpack.c.b16 %v2705, %v2704
    %v2766 = vpack.c.b16 %v2707, %v2706
    %v2767 = vpack.c.b16 %v2709, %v2708
    %v2768 = vpack.c.b16 %v2711, %v2710
    %v2769 = vpack.c.b16 %v2713, %v2712
    %v2770 = vpack.c.b16 %v2715, %v2714
    %v2771 = vpack.c.b16 %v2717, %v2716
    %v2772 = vpack.c.b16 %v2719, %v2718
    %v2773 = vpack.c.b16 %v2721, %v2720
    %v2774 = vpack.c.b16 %v2723, %v2722
    %v2775 = vpack.c.b16 %v2725, %v2724
    %v2776 = vpack.c.b16 %v2727, %v2726
    %v2777 = vpack.c.b16 %v2729, %v2728
    %v2778 = vpack.c.b16 %v2731, %v2730
    %v2779 = vpack.c.b16 %v2733, %v2732
    %v2780 = vpack.c.b16 %v2735, %v2734
    %v2781 = vpack.c.b16 %v2737, %v2736
    %v2782 = vpack.c.b16 %v2739, %v2738
    %v2783 = vpack.c.b16 %v2741, %v2740
    %v2784 = vpack.c.b16 %v2743, %v2742
    %v2785 = vpack.c.b16 %v2745, %v2744
    %v2786 = vpack.c.b16 %v2747, %v2746
    %v2787 = vpack.c.b16 %v2749, %v2748
    %v2788 = vpack.c.b16 %v2751, %v2750
    %v2789 = vpack.c.b16 %v2753, %v2752
    %v2790 = vpack.c.b16 %v2755, %v2754
    %v2791 = vpack.c.b16 %v2757, %v2756
    %v2792 = vpack.c.b16 %v2759, %v2758
    %v2793 = vpack.c.b16 %v2761, %v2760
    %2826 = vmatprep.subr.bf16.mxu0 0
    %2827 = vmatpush1.bf16.msra.mxu0 %v2769
    %2828 = vmatprep.subr.bf16.mxu0 0
    %2829 = vmatpush1.bf16.msra.mxu0 %v2768
    %2830 = vmatprep.subr.bf16.mxu0 0
    %2831 = vmatpush1.bf16.msra.mxu0 %v2767
    %2832 = vmatprep.subr.bf16.mxu0 0
    %2833 = vmatpush1.bf16.msra.mxu0 %v2766
    %2834 = vmatprep.subr.bf16.mxu0 0
    %2835 = vmatpush1.bf16.msra.mxu0 %v2765
    %2836 = vmatprep.subr.bf16.mxu0 0
    %2837 = vmatpush1.bf16.msra.mxu0 %v2764
    %2838 = vmatprep.subr.bf16.mxu0 0
    %2839 = vmatpush1.bf16.msra.mxu0 %v2763
    %2840 = vmatprep.subr.bf16.mxu0 0
    %2841 = vmatpush1.bf16.msra.mxu0 %v2762
    %2842 = vmatprep.subr.bf16.mxu0 0
    %2843 = vmatpush2.bf16.msra.mxu0 %v2777
    %2844 = vmatprep.subr.bf16.mxu0 0
    %2845 = vmatpush2.bf16.msra.mxu0 %v2776
    %2846 = vmatprep.subr.bf16.mxu0 0
    %2847 = vmatpush2.bf16.msra.mxu0 %v2775
    %2848 = vmatprep.subr.bf16.mxu0 0
    %2849 = vmatpush2.bf16.msra.mxu0 %v2774
    %2850 = vmatprep.subr.bf16.mxu0 0
    %2851 = vmatpush2.bf16.msra.mxu0 %v2773
    %2852 = vmatprep.subr.bf16.mxu0 0
    %2853 = vmatpush2.bf16.msra.mxu0 %v2772
    %2854 = vmatprep.subr.bf16.mxu0 0
    %2855 = vmatpush2.bf16.msra.mxu0 %v2771
    %2856 = vmatprep.subr.bf16.mxu0 0
    %2857 = vmatpush2.bf16.msra.mxu0 %v2770
    %2858 = vmatprep.mubr.bf16.mxu0 %v257
    %2859 = vmatmul.mubr.bf16.gmra.mxu0 %v249
    %v2860 = vpop.f32.mrf.mxu0
    %v2861 = vadd.f32 0.0, %v2860
    %v2862 = vpop.f32.mrf.mxu0
    %v2863 = vpop.f32.mrf.mxu0
    %v2864 = vpop.f32.mrf.mxu0
    %2865 = vdwg.mxu0
    %2866 = vmatprep.subr.bf16.mxu0 0
    %2867 = vmatpush1.bf16.msra.mxu0 %v2785
    %2868 = vmatprep.subr.bf16.mxu0 0
    %2869 = vmatpush1.bf16.msra.mxu0 %v2784
    %2870 = vmatprep.subr.bf16.mxu0 0
    %2871 = vmatpush1.bf16.msra.mxu0 %v2783
    %2872 = vmatprep.subr.bf16.mxu0 0
    %2873 = vmatpush1.bf16.msra.mxu0 %v2782
    %2874 = vmatprep.subr.bf16.mxu0 0
    %2875 = vmatpush1.bf16.msra.mxu0 %v2781
    %2876 = vmatprep.subr.bf16.mxu0 0
    %2877 = vmatpush1.bf16.msra.mxu0 %v2780
    %2878 = vmatprep.subr.bf16.mxu0 0
    %2879 = vmatpush1.bf16.msra.mxu0 %v2779
    %2880 = vmatprep.subr.bf16.mxu0 0
    %2881 = vmatpush1.bf16.msra.mxu0 %v2778
    %2882 = vmatprep.subr.bf16.mxu0 0
    %2883 = vmatpush2.bf16.msra.mxu0 %v2793
    %2884 = vmatprep.subr.bf16.mxu0 0
    %2885 = vmatpush2.bf16.msra.mxu0 %v2792
    %2886 = vmatprep.subr.bf16.mxu0 0
    %2887 = vmatpush2.bf16.msra.mxu0 %v2791
    %2888 = vmatprep.subr.bf16.mxu0 0
    %2889 = vmatpush2.bf16.msra.mxu0 %v2790
    %2890 = vmatprep.subr.bf16.mxu0 0
    %2891 = vmatpush2.bf16.msra.mxu0 %v2789
    %2892 = vmatprep.subr.bf16.mxu0 0
    %2893 = vmatpush2.bf16.msra.mxu0 %v2788
    %2894 = vmatprep.subr.bf16.mxu0 0
    %2895 = vmatpush2.bf16.msra.mxu0 %v2787
    %2896 = vmatprep.subr.bf16.mxu0 0
    %2897 = vmatpush2.bf16.msra.mxu0 %v2786
    %2898 = vmatprep.mubr.bf16.mxu0 %v258
    %2899 = vmatmul.mubr.bf16.gmra.mxu0 %v256
    %v2900 = vpop.f32.mrf.mxu0
    %v2901 = vadd.f32 %v2861, %v2900
    %v2902 = vpop.f32.mrf.mxu0
    %v2903 = vpop.f32.mrf.mxu0
    %v2904 = vpop.f32.mrf.mxu0
    %2905 = vdwg.mxu0
    %v2906 = vpack.c.bf16 %v2901, %v2901
    %v2909 = vunpack.c.l.b16 %v2632
    %v2910 = vunpack.c.l.b16 %v2633
    %v2911 = vpack.c.b16 %v2910, %v2909
    %v2913 = vsel %vm882, %v2911, 0
    %v2916 = vand.u32 %v2906, %v889
    %2918 = vmatprep.subr.bf16.mxu0 0
    %2919 = vmatpush1.bf16.msra.mxu0 0
    %2920 = vmatprep.subr.bf16.mxu0 0
    %2921 = vmatpush1.bf16.msra.mxu0 0
    %2922 = vmatprep.subr.bf16.mxu0 0
    %2923 = vmatpush1.bf16.msra.mxu0 0
    %2924 = vmatprep.subr.bf16.mxu0 0
    %2925 = vmatpush1.bf16.msra.mxu0 0
    %2926 = vmatprep.subr.bf16.mxu0 0
    %2927 = vmatpush1.bf16.msra.mxu0 0
    %2928 = vmatprep.subr.bf16.mxu0 0
    %2929 = vmatpush1.bf16.msra.mxu0 0
    %2930 = vmatprep.subr.bf16.mxu0 0
    %2931 = vmatpush1.bf16.msra.mxu0 0
    %2932 = vmatprep.subr.bf16.mxu0 0
    %2933 = vmatpush1.bf16.msra.mxu0 %v2916
    %2934 = vmatprep.subr.bf16.mxu0 0
    %2935 = vmatpush2.bf16.msra.mxu0 0
    %2936 = vmatprep.subr.bf16.mxu0 0
    %2937 = vmatpush2.bf16.msra.mxu0 0
    %2938 = vmatprep.subr.bf16.mxu0 0
    %2939 = vmatpush2.bf16.msra.mxu0 0
    %2940 = vmatprep.subr.bf16.mxu0 0
    %2941 = vmatpush2.bf16.msra.mxu0 0
    %2942 = vmatprep.subr.bf16.mxu0 0
    %2943 = vmatpush2.bf16.msra.mxu0 0
    %2944 = vmatprep.subr.bf16.mxu0 0
    %2945 = vmatpush2.bf16.msra.mxu0 0
    %2946 = vmatprep.subr.bf16.mxu0 0
    %2947 = vmatpush2.bf16.msra.mxu0 0
    %2948 = vmatprep.subr.bf16.mxu0 0
    %2949 = vmatpush2.bf16.msra.mxu0 0
    %2950 = vmatprep.mubr.bf16.mxu0 0
    %2951 = vmatmul.mubr.bf16.gmra.mxu0 %v2913
    %v2952 = vpop.f32.mrf.mxu0
    %v2953 = vadd.f32 0.0, %v2952
    %v2954 = vpop.f32.mrf.mxu0
    %v2955 = vpop.f32.mrf.mxu0
    %v2956 = vadd.f32 0.0, %v2955
    %v2957 = vpop.f32.mrf.mxu0
    %2958 = vdwg.mxu0
    %v2959 = vadd.f32 %v2564, %v2953
    %v2960 = vadd.f32 %v2565, %v2956
    %s2961 = scalar_lea.vmem [#allocation2], 1792
    %v2962 = vld [vmem:[%s2961] sm:$0xf]
    %v2963 = vld [vmem:[%s2961 + $0x4] sm:$0xf]
    %v2964 = vld [vmem:[%s2961 + $0x8] sm:$0xf]
    %v2965 = vld [vmem:[%s2961 + $0xc] sm:$0xf]
    %v2966 = vld [vmem:[%s2961 + $0x10] sm:$0xf]
    %v2967 = vld [vmem:[%s2961 + $0x14] sm:$0xf]
    %v2968 = vld [vmem:[%s2961 + $0x18] sm:$0xf]
    %v2969 = vld [vmem:[%s2961 + $0x1c] sm:$0xf]
    %v2970 = vld [vmem:[%s2961 + $0x20] sm:$0xf]
    %v2971 = vld [vmem:[%s2961 + $0x24] sm:$0xf]
    %v2972 = vld [vmem:[%s2961 + $0x28] sm:$0xf]
    %v2973 = vld [vmem:[%s2961 + $0x2c] sm:$0xf]
    %v2974 = vld [vmem:[%s2961 + $0x30] sm:$0xf]
    %v2975 = vld [vmem:[%s2961 + $0x34] sm:$0xf]
    %v2976 = vld [vmem:[%s2961 + $0x38] sm:$0xf]
    %v2977 = vld [vmem:[%s2961 + $0x3c] sm:$0xf]
    %v2978 = vld [vmem:[%s2961 + $0x40] sm:$0xf]
    %v2979 = vld [vmem:[%s2961 + $0x44] sm:$0xf]
    %v2980 = vld [vmem:[%s2961 + $0x48] sm:$0xf]
    %v2981 = vld [vmem:[%s2961 + $0x4c] sm:$0xf]
    %v2982 = vld [vmem:[%s2961 + $0x50] sm:$0xf]
    %v2983 = vld [vmem:[%s2961 + $0x54] sm:$0xf]
    %v2984 = vld [vmem:[%s2961 + $0x58] sm:$0xf]
    %v2985 = vld [vmem:[%s2961 + $0x5c] sm:$0xf]
    %v2986 = vld [vmem:[%s2961 + $0x60] sm:$0xf]
    %v2987 = vld [vmem:[%s2961 + $0x64] sm:$0xf]
    %v2988 = vld [vmem:[%s2961 + $0x68] sm:$0xf]
    %v2989 = vld [vmem:[%s2961 + $0x6c] sm:$0xf]
    %v2990 = vld [vmem:[%s2961 + $0x70] sm:$0xf]
    %v2991 = vld [vmem:[%s2961 + $0x74] sm:$0xf]
    %v2992 = vld [vmem:[%s2961 + $0x78] sm:$0xf]
    %v2993 = vld [vmem:[%s2961 + $0x7c] sm:$0xf]
    %v2994 = vld [vmem:[%s2961 + $0x80] sm:$0xf]
    %v2995 = vld [vmem:[%s2961 + $0x84] sm:$0xf]
    %v2996 = vld [vmem:[%s2961 + $0x88] sm:$0xf]
    %v2997 = vld [vmem:[%s2961 + $0x8c] sm:$0xf]
    %v2998 = vld [vmem:[%s2961 + $0x90] sm:$0xf]
    %v2999 = vld [vmem:[%s2961 + $0x94] sm:$0xf]
    %v3000 = vld [vmem:[%s2961 + $0x98] sm:$0xf]
    %v3001 = vld [vmem:[%s2961 + $0x9c] sm:$0xf]
    %v3002 = vld [vmem:[%s2961 + $0xa0] sm:$0xf]
    %v3003 = vld [vmem:[%s2961 + $0xa4] sm:$0xf]
    %v3004 = vld [vmem:[%s2961 + $0xa8] sm:$0xf]
    %v3005 = vld [vmem:[%s2961 + $0xac] sm:$0xf]
    %v3006 = vld [vmem:[%s2961 + $0xb0] sm:$0xf]
    %v3007 = vld [vmem:[%s2961 + $0xb4] sm:$0xf]
    %v3008 = vld [vmem:[%s2961 + $0xb8] sm:$0xf]
    %v3009 = vld [vmem:[%s2961 + $0xbc] sm:$0xf]
    %v3010 = vld [vmem:[%s2961 + $0xc0] sm:$0xf]
    %v3011 = vld [vmem:[%s2961 + $0xc4] sm:$0xf]
    %v3012 = vld [vmem:[%s2961 + $0xc8] sm:$0xf]
    %v3013 = vld [vmem:[%s2961 + $0xcc] sm:$0xf]
    %v3014 = vld [vmem:[%s2961 + $0xd0] sm:$0xf]
    %v3015 = vld [vmem:[%s2961 + $0xd4] sm:$0xf]
    %v3016 = vld [vmem:[%s2961 + $0xd8] sm:$0xf]
    %v3017 = vld [vmem:[%s2961 + $0xdc] sm:$0xf]
    %v3018 = vld [vmem:[%s2961 + $0xe0] sm:$0xf]
    %v3019 = vld [vmem:[%s2961 + $0xe4] sm:$0xf]
    %v3020 = vld [vmem:[%s2961 + $0xe8] sm:$0xf]
    %v3021 = vld [vmem:[%s2961 + $0xec] sm:$0xf]
    %v3022 = vld [vmem:[%s2961 + $0xf0] sm:$0xf]
    %v3023 = vld [vmem:[%s2961 + $0xf4] sm:$0xf]
    %v3024 = vld [vmem:[%s2961 + $0xf8] sm:$0xf]
    %v3025 = vld [vmem:[%s2961 + $0xfc] sm:$0xf]
    %s3026 = scalar_lea.vmem %s2, 56
    %v3027 = vld [vmem:[%s3026] sm:$0xf]
    %v3028 = vld [vmem:[%s3026 + $0x4] sm:$0xf]
    %v3093 = vunpack.c.l.b16 %v2962
    %v3094 = vunpack.c.l.b16 %v2963
    %v3095 = vunpack.c.l.b16 %v2964
    %v3096 = vunpack.c.l.b16 %v2965
    %v3097 = vunpack.c.l.b16 %v2966
    %v3098 = vunpack.c.l.b16 %v2967
    %v3099 = vunpack.c.l.b16 %v2968
    %v3100 = vunpack.c.l.b16 %v2969
    %v3101 = vunpack.c.l.b16 %v2970
    %v3102 = vunpack.c.l.b16 %v2971
    %v3103 = vunpack.c.l.b16 %v2972
    %v3104 = vunpack.c.l.b16 %v2973
    %v3105 = vunpack.c.l.b16 %v2974
    %v3106 = vunpack.c.l.b16 %v2975
    %v3107 = vunpack.c.l.b16 %v2976
    %v3108 = vunpack.c.l.b16 %v2977
    %v3109 = vunpack.c.l.b16 %v2978
    %v3110 = vunpack.c.l.b16 %v2979
    %v3111 = vunpack.c.l.b16 %v2980
    %v3112 = vunpack.c.l.b16 %v2981
    %v3113 = vunpack.c.l.b16 %v2982
    %v3114 = vunpack.c.l.b16 %v2983
    %v3115 = vunpack.c.l.b16 %v2984
    %v3116 = vunpack.c.l.b16 %v2985
    %v3117 = vunpack.c.l.b16 %v2986
    %v3118 = vunpack.c.l.b16 %v2987
    %v3119 = vunpack.c.l.b16 %v2988
    %v3120 = vunpack.c.l.b16 %v2989
    %v3121 = vunpack.c.l.b16 %v2990
    %v3122 = vunpack.c.l.b16 %v2991
    %v3123 = vunpack.c.l.b16 %v2992
    %v3124 = vunpack.c.l.b16 %v2993
    %v3125 = vunpack.c.l.b16 %v2994
    %v3126 = vunpack.c.l.b16 %v2995
    %v3127 = vunpack.c.l.b16 %v2996
    %v3128 = vunpack.c.l.b16 %v2997
    %v3129 = vunpack.c.l.b16 %v2998
    %v3130 = vunpack.c.l.b16 %v2999
    %v3131 = vunpack.c.l.b16 %v3000
    %v3132 = vunpack.c.l.b16 %v3001
    %v3133 = vunpack.c.l.b16 %v3002
    %v3134 = vunpack.c.l.b16 %v3003
    %v3135 = vunpack.c.l.b16 %v3004
    %v3136 = vunpack.c.l.b16 %v3005
    %v3137 = vunpack.c.l.b16 %v3006
    %v3138 = vunpack.c.l.b16 %v3007
    %v3139 = vunpack.c.l.b16 %v3008
    %v3140 = vunpack.c.l.b16 %v3009
    %v3141 = vunpack.c.l.b16 %v3010
    %v3142 = vunpack.c.l.b16 %v3011
    %v3143 = vunpack.c.l.b16 %v3012
    %v3144 = vunpack.c.l.b16 %v3013
    %v3145 = vunpack.c.l.b16 %v3014
    %v3146 = vunpack.c.l.b16 %v3015
    %v3147 = vunpack.c.l.b16 %v3016
    %v3148 = vunpack.c.l.b16 %v3017
    %v3149 = vunpack.c.l.b16 %v3018
    %v3150 = vunpack.c.l.b16 %v3019
    %v3151 = vunpack.c.l.b16 %v3020
    %v3152 = vunpack.c.l.b16 %v3021
    %v3153 = vunpack.c.l.b16 %v3022
    %v3154 = vunpack.c.l.b16 %v3023
    %v3155 = vunpack.c.l.b16 %v3024
    %v3156 = vunpack.c.l.b16 %v3025
    %v3157 = vpack.c.b16 %v3094, %v3093
    %v3158 = vpack.c.b16 %v3096, %v3095
    %v3159 = vpack.c.b16 %v3098, %v3097
    %v3160 = vpack.c.b16 %v3100, %v3099
    %v3161 = vpack.c.b16 %v3102, %v3101
    %v3162 = vpack.c.b16 %v3104, %v3103
    %v3163 = vpack.c.b16 %v3106, %v3105
    %v3164 = vpack.c.b16 %v3108, %v3107
    %v3165 = vpack.c.b16 %v3110, %v3109
    %v3166 = vpack.c.b16 %v3112, %v3111
    %v3167 = vpack.c.b16 %v3114, %v3113
    %v3168 = vpack.c.b16 %v3116, %v3115
    %v3169 = vpack.c.b16 %v3118, %v3117
    %v3170 = vpack.c.b16 %v3120, %v3119
    %v3171 = vpack.c.b16 %v3122, %v3121
    %v3172 = vpack.c.b16 %v3124, %v3123
    %v3173 = vpack.c.b16 %v3126, %v3125
    %v3174 = vpack.c.b16 %v3128, %v3127
    %v3175 = vpack.c.b16 %v3130, %v3129
    %v3176 = vpack.c.b16 %v3132, %v3131
    %v3177 = vpack.c.b16 %v3134, %v3133
    %v3178 = vpack.c.b16 %v3136, %v3135
    %v3179 = vpack.c.b16 %v3138, %v3137
    %v3180 = vpack.c.b16 %v3140, %v3139
    %v3181 = vpack.c.b16 %v3142, %v3141
    %v3182 = vpack.c.b16 %v3144, %v3143
    %v3183 = vpack.c.b16 %v3146, %v3145
    %v3184 = vpack.c.b16 %v3148, %v3147
    %v3185 = vpack.c.b16 %v3150, %v3149
    %v3186 = vpack.c.b16 %v3152, %v3151
    %v3187 = vpack.c.b16 %v3154, %v3153
    %v3188 = vpack.c.b16 %v3156, %v3155
    %3221 = vmatprep.subr.bf16.mxu0 0
    %3222 = vmatpush1.bf16.msra.mxu0 %v3164
    %3223 = vmatprep.subr.bf16.mxu0 0
    %3224 = vmatpush1.bf16.msra.mxu0 %v3163
    %3225 = vmatprep.subr.bf16.mxu0 0
    %3226 = vmatpush1.bf16.msra.mxu0 %v3162
    %3227 = vmatprep.subr.bf16.mxu0 0
    %3228 = vmatpush1.bf16.msra.mxu0 %v3161
    %3229 = vmatprep.subr.bf16.mxu0 0
    %3230 = vmatpush1.bf16.msra.mxu0 %v3160
    %3231 = vmatprep.subr.bf16.mxu0 0
    %3232 = vmatpush1.bf16.msra.mxu0 %v3159
    %3233 = vmatprep.subr.bf16.mxu0 0
    %3234 = vmatpush1.bf16.msra.mxu0 %v3158
    %3235 = vmatprep.subr.bf16.mxu0 0
    %3236 = vmatpush1.bf16.msra.mxu0 %v3157
    %3237 = vmatprep.subr.bf16.mxu0 0
    %3238 = vmatpush2.bf16.msra.mxu0 %v3172
    %3239 = vmatprep.subr.bf16.mxu0 0
    %3240 = vmatpush2.bf16.msra.mxu0 %v3171
    %3241 = vmatprep.subr.bf16.mxu0 0
    %3242 = vmatpush2.bf16.msra.mxu0 %v3170
    %3243 = vmatprep.subr.bf16.mxu0 0
    %3244 = vmatpush2.bf16.msra.mxu0 %v3169
    %3245 = vmatprep.subr.bf16.mxu0 0
    %3246 = vmatpush2.bf16.msra.mxu0 %v3168
    %3247 = vmatprep.subr.bf16.mxu0 0
    %3248 = vmatpush2.bf16.msra.mxu0 %v3167
    %3249 = vmatprep.subr.bf16.mxu0 0
    %3250 = vmatpush2.bf16.msra.mxu0 %v3166
    %3251 = vmatprep.subr.bf16.mxu0 0
    %3252 = vmatpush2.bf16.msra.mxu0 %v3165
    %3253 = vmatprep.mubr.bf16.mxu0 %v257
    %3254 = vmatmul.mubr.bf16.gmra.mxu0 %v249
    %v3255 = vpop.f32.mrf.mxu0
    %v3256 = vadd.f32 0.0, %v3255
    %v3257 = vpop.f32.mrf.mxu0
    %v3258 = vpop.f32.mrf.mxu0
    %v3259 = vpop.f32.mrf.mxu0
    %3260 = vdwg.mxu0
    %3261 = vmatprep.subr.bf16.mxu0 0
    %3262 = vmatpush1.bf16.msra.mxu0 %v3180
    %3263 = vmatprep.subr.bf16.mxu0 0
    %3264 = vmatpush1.bf16.msra.mxu0 %v3179
    %3265 = vmatprep.subr.bf16.mxu0 0
    %3266 = vmatpush1.bf16.msra.mxu0 %v3178
    %3267 = vmatprep.subr.bf16.mxu0 0
    %3268 = vmatpush1.bf16.msra.mxu0 %v3177
    %3269 = vmatprep.subr.bf16.mxu0 0
    %3270 = vmatpush1.bf16.msra.mxu0 %v3176
    %3271 = vmatprep.subr.bf16.mxu0 0
    %3272 = vmatpush1.bf16.msra.mxu0 %v3175
    %3273 = vmatprep.subr.bf16.mxu0 0
    %3274 = vmatpush1.bf16.msra.mxu0 %v3174
    %3275 = vmatprep.subr.bf16.mxu0 0
    %3276 = vmatpush1.bf16.msra.mxu0 %v3173
    %3277 = vmatprep.subr.bf16.mxu0 0
    %3278 = vmatpush2.bf16.msra.mxu0 %v3188
    %3279 = vmatprep.subr.bf16.mxu0 0
    %3280 = vmatpush2.bf16.msra.mxu0 %v3187
    %3281 = vmatprep.subr.bf16.mxu0 0
    %3282 = vmatpush2.bf16.msra.mxu0 %v3186
    %3283 = vmatprep.subr.bf16.mxu0 0
    %3284 = vmatpush2.bf16.msra.mxu0 %v3185
    %3285 = vmatprep.subr.bf16.mxu0 0
    %3286 = vmatpush2.bf16.msra.mxu0 %v3184
    %3287 = vmatprep.subr.bf16.mxu0 0
    %3288 = vmatpush2.bf16.msra.mxu0 %v3183
    %3289 = vmatprep.subr.bf16.mxu0 0
    %3290 = vmatpush2.bf16.msra.mxu0 %v3182
    %3291 = vmatprep.subr.bf16.mxu0 0
    %3292 = vmatpush2.bf16.msra.mxu0 %v3181
    %3293 = vmatprep.mubr.bf16.mxu0 %v258
    %3294 = vmatmul.mubr.bf16.gmra.mxu0 %v256
    %v3295 = vpop.f32.mrf.mxu0
    %v3296 = vadd.f32 %v3256, %v3295
    %v3297 = vpop.f32.mrf.mxu0
    %v3298 = vpop.f32.mrf.mxu0
    %v3299 = vpop.f32.mrf.mxu0
    %3300 = vdwg.mxu0
    %v3301 = vpack.c.bf16 %v3296, %v3296
    %v3304 = vunpack.c.l.b16 %v3027
    %v3305 = vunpack.c.l.b16 %v3028
    %v3306 = vpack.c.b16 %v3305, %v3304
    %v3308 = vsel %vm882, %v3306, 0
    %v3311 = vand.u32 %v3301, %v889
    %3313 = vmatprep.subr.bf16.mxu0 0
    %3314 = vmatpush1.bf16.msra.mxu0 0
    %3315 = vmatprep.subr.bf16.mxu0 0
    %3316 = vmatpush1.bf16.msra.mxu0 0
    %3317 = vmatprep.subr.bf16.mxu0 0
    %3318 = vmatpush1.bf16.msra.mxu0 0
    %3319 = vmatprep.subr.bf16.mxu0 0
    %3320 = vmatpush1.bf16.msra.mxu0 0
    %3321 = vmatprep.subr.bf16.mxu0 0
    %3322 = vmatpush1.bf16.msra.mxu0 0
    %3323 = vmatprep.subr.bf16.mxu0 0
    %3324 = vmatpush1.bf16.msra.mxu0 0
    %3325 = vmatprep.subr.bf16.mxu0 0
    %3326 = vmatpush1.bf16.msra.mxu0 0
    %3327 = vmatprep.subr.bf16.mxu0 0
    %3328 = vmatpush1.bf16.msra.mxu0 %v3311
    %3329 = vmatprep.subr.bf16.mxu0 0
    %3330 = vmatpush2.bf16.msra.mxu0 0
    %3331 = vmatprep.subr.bf16.mxu0 0
    %3332 = vmatpush2.bf16.msra.mxu0 0
    %3333 = vmatprep.subr.bf16.mxu0 0
    %3334 = vmatpush2.bf16.msra.mxu0 0
    %3335 = vmatprep.subr.bf16.mxu0 0
    %3336 = vmatpush2.bf16.msra.mxu0 0
    %3337 = vmatprep.subr.bf16.mxu0 0
    %3338 = vmatpush2.bf16.msra.mxu0 0
    %3339 = vmatprep.subr.bf16.mxu0 0
    %3340 = vmatpush2.bf16.msra.mxu0 0
    %3341 = vmatprep.subr.bf16.mxu0 0
    %3342 = vmatpush2.bf16.msra.mxu0 0
    %3343 = vmatprep.subr.bf16.mxu0 0
    %3344 = vmatpush2.bf16.msra.mxu0 0
    %3345 = vmatprep.mubr.bf16.mxu0 0
    %3346 = vmatmul.mubr.bf16.gmra.mxu0 %v3308
    %v3347 = vpop.f32.mrf.mxu0
    %v3348 = vadd.f32 0.0, %v3347
    %v3349 = vpop.f32.mrf.mxu0
    %v3350 = vpop.f32.mrf.mxu0
    %v3351 = vadd.f32 0.0, %v3350
    %v3352 = vpop.f32.mrf.mxu0
    %3353 = vdwg.mxu0
    %v3354 = vadd.f32 %v2959, %v3348
    %v3355 = vadd.f32 %v2960, %v3351
    %s3356 = scalar_lea.vmem [#allocation2], 2048
    %v3357 = vld [vmem:[%s3356] sm:$0xf]
    %v3358 = vld [vmem:[%s3356 + $0x4] sm:$0xf]
    %v3359 = vld [vmem:[%s3356 + $0x8] sm:$0xf]
    %v3360 = vld [vmem:[%s3356 + $0xc] sm:$0xf]
    %v3361 = vld [vmem:[%s3356 + $0x10] sm:$0xf]
    %v3362 = vld [vmem:[%s3356 + $0x14] sm:$0xf]
    %v3363 = vld [vmem:[%s3356 + $0x18] sm:$0xf]
    %v3364 = vld [vmem:[%s3356 + $0x1c] sm:$0xf]
    %v3365 = vld [vmem:[%s3356 + $0x20] sm:$0xf]
    %v3366 = vld [vmem:[%s3356 + $0x24] sm:$0xf]
    %v3367 = vld [vmem:[%s3356 + $0x28] sm:$0xf]
    %v3368 = vld [vmem:[%s3356 + $0x2c] sm:$0xf]
    %v3369 = vld [vmem:[%s3356 + $0x30] sm:$0xf]
    %v3370 = vld [vmem:[%s3356 + $0x34] sm:$0xf]
    %v3371 = vld [vmem:[%s3356 + $0x38] sm:$0xf]
    %v3372 = vld [vmem:[%s3356 + $0x3c] sm:$0xf]
    %v3373 = vld [vmem:[%s3356 + $0x40] sm:$0xf]
    %v3374 = vld [vmem:[%s3356 + $0x44] sm:$0xf]
    %v3375 = vld [vmem:[%s3356 + $0x48] sm:$0xf]
    %v3376 = vld [vmem:[%s3356 + $0x4c] sm:$0xf]
    %v3377 = vld [vmem:[%s3356 + $0x50] sm:$0xf]
    %v3378 = vld [vmem:[%s3356 + $0x54] sm:$0xf]
    %v3379 = vld [vmem:[%s3356 + $0x58] sm:$0xf]
    %v3380 = vld [vmem:[%s3356 + $0x5c] sm:$0xf]
    %v3381 = vld [vmem:[%s3356 + $0x60] sm:$0xf]
    %v3382 = vld [vmem:[%s3356 + $0x64] sm:$0xf]
    %v3383 = vld [vmem:[%s3356 + $0x68] sm:$0xf]
    %v3384 = vld [vmem:[%s3356 + $0x6c] sm:$0xf]
    %v3385 = vld [vmem:[%s3356 + $0x70] sm:$0xf]
    %v3386 = vld [vmem:[%s3356 + $0x74] sm:$0xf]
    %v3387 = vld [vmem:[%s3356 + $0x78] sm:$0xf]
    %v3388 = vld [vmem:[%s3356 + $0x7c] sm:$0xf]
    %v3389 = vld [vmem:[%s3356 + $0x80] sm:$0xf]
    %v3390 = vld [vmem:[%s3356 + $0x84] sm:$0xf]
    %v3391 = vld [vmem:[%s3356 + $0x88] sm:$0xf]
    %v3392 = vld [vmem:[%s3356 + $0x8c] sm:$0xf]
    %v3393 = vld [vmem:[%s3356 + $0x90] sm:$0xf]
    %v3394 = vld [vmem:[%s3356 + $0x94] sm:$0xf]
    %v3395 = vld [vmem:[%s3356 + $0x98] sm:$0xf]
    %v3396 = vld [vmem:[%s3356 + $0x9c] sm:$0xf]
    %v3397 = vld [vmem:[%s3356 + $0xa0] sm:$0xf]
    %v3398 = vld [vmem:[%s3356 + $0xa4] sm:$0xf]
    %v3399 = vld [vmem:[%s3356 + $0xa8] sm:$0xf]
    %v3400 = vld [vmem:[%s3356 + $0xac] sm:$0xf]
    %v3401 = vld [vmem:[%s3356 + $0xb0] sm:$0xf]
    %v3402 = vld [vmem:[%s3356 + $0xb4] sm:$0xf]
    %v3403 = vld [vmem:[%s3356 + $0xb8] sm:$0xf]
    %v3404 = vld [vmem:[%s3356 + $0xbc] sm:$0xf]
    %v3405 = vld [vmem:[%s3356 + $0xc0] sm:$0xf]
    %v3406 = vld [vmem:[%s3356 + $0xc4] sm:$0xf]
    %v3407 = vld [vmem:[%s3356 + $0xc8] sm:$0xf]
    %v3408 = vld [vmem:[%s3356 + $0xcc] sm:$0xf]
    %v3409 = vld [vmem:[%s3356 + $0xd0] sm:$0xf]
    %v3410 = vld [vmem:[%s3356 + $0xd4] sm:$0xf]
    %v3411 = vld [vmem:[%s3356 + $0xd8] sm:$0xf]
    %v3412 = vld [vmem:[%s3356 + $0xdc] sm:$0xf]
    %v3413 = vld [vmem:[%s3356 + $0xe0] sm:$0xf]
    %v3414 = vld [vmem:[%s3356 + $0xe4] sm:$0xf]
    %v3415 = vld [vmem:[%s3356 + $0xe8] sm:$0xf]
    %v3416 = vld [vmem:[%s3356 + $0xec] sm:$0xf]
    %v3417 = vld [vmem:[%s3356 + $0xf0] sm:$0xf]
    %v3418 = vld [vmem:[%s3356 + $0xf4] sm:$0xf]
    %v3419 = vld [vmem:[%s3356 + $0xf8] sm:$0xf]
    %v3420 = vld [vmem:[%s3356 + $0xfc] sm:$0xf]
    %s3421 = scalar_lea.vmem %s2, 64
    %v3422 = vld [vmem:[%s3421] sm:$0xf]
    %v3423 = vld [vmem:[%s3421 + $0x4] sm:$0xf]
    %v3488 = vunpack.c.l.b16 %v3357
    %v3489 = vunpack.c.l.b16 %v3358
    %v3490 = vunpack.c.l.b16 %v3359
    %v3491 = vunpack.c.l.b16 %v3360
    %v3492 = vunpack.c.l.b16 %v3361
    %v3493 = vunpack.c.l.b16 %v3362
    %v3494 = vunpack.c.l.b16 %v3363
    %v3495 = vunpack.c.l.b16 %v3364
    %v3496 = vunpack.c.l.b16 %v3365
    %v3497 = vunpack.c.l.b16 %v3366
    %v3498 = vunpack.c.l.b16 %v3367
    %v3499 = vunpack.c.l.b16 %v3368
    %v3500 = vunpack.c.l.b16 %v3369
    %v3501 = vunpack.c.l.b16 %v3370
    %v3502 = vunpack.c.l.b16 %v3371
    %v3503 = vunpack.c.l.b16 %v3372
    %v3504 = vunpack.c.l.b16 %v3373
    %v3505 = vunpack.c.l.b16 %v3374
    %v3506 = vunpack.c.l.b16 %v3375
    %v3507 = vunpack.c.l.b16 %v3376
    %v3508 = vunpack.c.l.b16 %v3377
    %v3509 = vunpack.c.l.b16 %v3378
    %v3510 = vunpack.c.l.b16 %v3379
    %v3511 = vunpack.c.l.b16 %v3380
    %v3512 = vunpack.c.l.b16 %v3381
    %v3513 = vunpack.c.l.b16 %v3382
    %v3514 = vunpack.c.l.b16 %v3383
    %v3515 = vunpack.c.l.b16 %v3384
    %v3516 = vunpack.c.l.b16 %v3385
    %v3517 = vunpack.c.l.b16 %v3386
    %v3518 = vunpack.c.l.b16 %v3387
    %v3519 = vunpack.c.l.b16 %v3388
    %v3520 = vunpack.c.l.b16 %v3389
    %v3521 = vunpack.c.l.b16 %v3390
    %v3522 = vunpack.c.l.b16 %v3391
    %v3523 = vunpack.c.l.b16 %v3392
    %v3524 = vunpack.c.l.b16 %v3393
    %v3525 = vunpack.c.l.b16 %v3394
    %v3526 = vunpack.c.l.b16 %v3395
    %v3527 = vunpack.c.l.b16 %v3396
    %v3528 = vunpack.c.l.b16 %v3397
    %v3529 = vunpack.c.l.b16 %v3398
    %v3530 = vunpack.c.l.b16 %v3399
    %v3531 = vunpack.c.l.b16 %v3400
    %v3532 = vunpack.c.l.b16 %v3401
    %v3533 = vunpack.c.l.b16 %v3402
    %v3534 = vunpack.c.l.b16 %v3403
    %v3535 = vunpack.c.l.b16 %v3404
    %v3536 = vunpack.c.l.b16 %v3405
    %v3537 = vunpack.c.l.b16 %v3406
    %v3538 = vunpack.c.l.b16 %v3407
    %v3539 = vunpack.c.l.b16 %v3408
    %v3540 = vunpack.c.l.b16 %v3409
    %v3541 = vunpack.c.l.b16 %v3410
    %v3542 = vunpack.c.l.b16 %v3411
    %v3543 = vunpack.c.l.b16 %v3412
    %v3544 = vunpack.c.l.b16 %v3413
    %v3545 = vunpack.c.l.b16 %v3414
    %v3546 = vunpack.c.l.b16 %v3415
    %v3547 = vunpack.c.l.b16 %v3416
    %v3548 = vunpack.c.l.b16 %v3417
    %v3549 = vunpack.c.l.b16 %v3418
    %v3550 = vunpack.c.l.b16 %v3419
    %v3551 = vunpack.c.l.b16 %v3420
    %v3552 = vpack.c.b16 %v3489, %v3488
    %v3553 = vpack.c.b16 %v3491, %v3490
    %v3554 = vpack.c.b16 %v3493, %v3492
    %v3555 = vpack.c.b16 %v3495, %v3494
    %v3556 = vpack.c.b16 %v3497, %v3496
    %v3557 = vpack.c.b16 %v3499, %v3498
    %v3558 = vpack.c.b16 %v3501, %v3500
    %v3559 = vpack.c.b16 %v3503, %v3502
    %v3560 = vpack.c.b16 %v3505, %v3504
    %v3561 = vpack.c.b16 %v3507, %v3506
    %v3562 = vpack.c.b16 %v3509, %v3508
    %v3563 = vpack.c.b16 %v3511, %v3510
    %v3564 = vpack.c.b16 %v3513, %v3512
    %v3565 = vpack.c.b16 %v3515, %v3514
    %v3566 = vpack.c.b16 %v3517, %v3516
    %v3567 = vpack.c.b16 %v3519, %v3518
    %v3568 = vpack.c.b16 %v3521, %v3520
    %v3569 = vpack.c.b16 %v3523, %v3522
    %v3570 = vpack.c.b16 %v3525, %v3524
    %v3571 = vpack.c.b16 %v3527, %v3526
    %v3572 = vpack.c.b16 %v3529, %v3528
    %v3573 = vpack.c.b16 %v3531, %v3530
    %v3574 = vpack.c.b16 %v3533, %v3532
    %v3575 = vpack.c.b16 %v3535, %v3534
    %v3576 = vpack.c.b16 %v3537, %v3536
    %v3577 = vpack.c.b16 %v3539, %v3538
    %v3578 = vpack.c.b16 %v3541, %v3540
    %v3579 = vpack.c.b16 %v3543, %v3542
    %v3580 = vpack.c.b16 %v3545, %v3544
    %v3581 = vpack.c.b16 %v3547, %v3546
    %v3582 = vpack.c.b16 %v3549, %v3548
    %v3583 = vpack.c.b16 %v3551, %v3550
    %3616 = vmatprep.subr.bf16.mxu0 0
    %3617 = vmatpush1.bf16.msra.mxu0 %v3559
    %3618 = vmatprep.subr.bf16.mxu0 0
    %3619 = vmatpush1.bf16.msra.mxu0 %v3558
    %3620 = vmatprep.subr.bf16.mxu0 0
    %3621 = vmatpush1.bf16.msra.mxu0 %v3557
    %3622 = vmatprep.subr.bf16.mxu0 0
    %3623 = vmatpush1.bf16.msra.mxu0 %v3556
    %3624 = vmatprep.subr.bf16.mxu0 0
    %3625 = vmatpush1.bf16.msra.mxu0 %v3555
    %3626 = vmatprep.subr.bf16.mxu0 0
    %3627 = vmatpush1.bf16.msra.mxu0 %v3554
    %3628 = vmatprep.subr.bf16.mxu0 0
    %3629 = vmatpush1.bf16.msra.mxu0 %v3553
    %3630 = vmatprep.subr.bf16.mxu0 0
    %3631 = vmatpush1.bf16.msra.mxu0 %v3552
    %3632 = vmatprep.subr.bf16.mxu0 0
    %3633 = vmatpush2.bf16.msra.mxu0 %v3567
    %3634 = vmatprep.subr.bf16.mxu0 0
    %3635 = vmatpush2.bf16.msra.mxu0 %v3566
    %3636 = vmatprep.subr.bf16.mxu0 0
    %3637 = vmatpush2.bf16.msra.mxu0 %v3565
    %3638 = vmatprep.subr.bf16.mxu0 0
    %3639 = vmatpush2.bf16.msra.mxu0 %v3564
    %3640 = vmatprep.subr.bf16.mxu0 0
    %3641 = vmatpush2.bf16.msra.mxu0 %v3563
    %3642 = vmatprep.subr.bf16.mxu0 0
    %3643 = vmatpush2.bf16.msra.mxu0 %v3562
    %3644 = vmatprep.subr.bf16.mxu0 0
    %3645 = vmatpush2.bf16.msra.mxu0 %v3561
    %3646 = vmatprep.subr.bf16.mxu0 0
    %3647 = vmatpush2.bf16.msra.mxu0 %v3560
    %3648 = vmatprep.mubr.bf16.mxu0 %v257
    %3649 = vmatmul.mubr.bf16.gmra.mxu0 %v249
    %v3650 = vpop.f32.mrf.mxu0
    %v3651 = vadd.f32 0.0, %v3650
    %v3652 = vpop.f32.mrf.mxu0
    %v3653 = vpop.f32.mrf.mxu0
    %v3654 = vpop.f32.mrf.mxu0
    %3655 = vdwg.mxu0
    %3656 = vmatprep.subr.bf16.mxu0 0
    %3657 = vmatpush1.bf16.msra.mxu0 %v3575
    %3658 = vmatprep.subr.bf16.mxu0 0
    %3659 = vmatpush1.bf16.msra.mxu0 %v3574
    %3660 = vmatprep.subr.bf16.mxu0 0
    %3661 = vmatpush1.bf16.msra.mxu0 %v3573
    %3662 = vmatprep.subr.bf16.mxu0 0
    %3663 = vmatpush1.bf16.msra.mxu0 %v3572
    %3664 = vmatprep.subr.bf16.mxu0 0
    %3665 = vmatpush1.bf16.msra.mxu0 %v3571
    %3666 = vmatprep.subr.bf16.mxu0 0
    %3667 = vmatpush1.bf16.msra.mxu0 %v3570
    %3668 = vmatprep.subr.bf16.mxu0 0
    %3669 = vmatpush1.bf16.msra.mxu0 %v3569
    %3670 = vmatprep.subr.bf16.mxu0 0
    %3671 = vmatpush1.bf16.msra.mxu0 %v3568
    %3672 = vmatprep.subr.bf16.mxu0 0
    %3673 = vmatpush2.bf16.msra.mxu0 %v3583
    %3674 = vmatprep.subr.bf16.mxu0 0
    %3675 = vmatpush2.bf16.msra.mxu0 %v3582
    %3676 = vmatprep.subr.bf16.mxu0 0
    %3677 = vmatpush2.bf16.msra.mxu0 %v3581
    %3678 = vmatprep.subr.bf16.mxu0 0
    %3679 = vmatpush2.bf16.msra.mxu0 %v3580
    %3680 = vmatprep.subr.bf16.mxu0 0
    %3681 = vmatpush2.bf16.msra.mxu0 %v3579
    %3682 = vmatprep.subr.bf16.mxu0 0
    %3683 = vmatpush2.bf16.msra.mxu0 %v3578
    %3684 = vmatprep.subr.bf16.mxu0 0
    %3685 = vmatpush2.bf16.msra.mxu0 %v3577
    %3686 = vmatprep.subr.bf16.mxu0 0
    %3687 = vmatpush2.bf16.msra.mxu0 %v3576
    %3688 = vmatprep.mubr.bf16.mxu0 %v258
    %3689 = vmatmul.mubr.bf16.gmra.mxu0 %v256
    %v3690 = vpop.f32.mrf.mxu0
    %v3691 = vadd.f32 %v3651, %v3690
    %v3692 = vpop.f32.mrf.mxu0
    %v3693 = vpop.f32.mrf.mxu0
    %v3694 = vpop.f32.mrf.mxu0
    %3695 = vdwg.mxu0
    %v3696 = vpack.c.bf16 %v3691, %v3691
    %v3699 = vunpack.c.l.b16 %v3422
    %v3700 = vunpack.c.l.b16 %v3423
    %v3701 = vpack.c.b16 %v3700, %v3699
    %v3703 = vsel %vm882, %v3701, 0
    %v3706 = vand.u32 %v3696, %v889
    %3708 = vmatprep.subr.bf16.mxu0 0
    %3709 = vmatpush1.bf16.msra.mxu0 0
    %3710 = vmatprep.subr.bf16.mxu0 0
    %3711 = vmatpush1.bf16.msra.mxu0 0
    %3712 = vmatprep.subr.bf16.mxu0 0
    %3713 = vmatpush1.bf16.msra.mxu0 0
    %3714 = vmatprep.subr.bf16.mxu0 0
    %3715 = vmatpush1.bf16.msra.mxu0 0
    %3716 = vmatprep.subr.bf16.mxu0 0
    %3717 = vmatpush1.bf16.msra.mxu0 0
    %3718 = vmatprep.subr.bf16.mxu0 0
    %3719 = vmatpush1.bf16.msra.mxu0 0
    %3720 = vmatprep.subr.bf16.mxu0 0
    %3721 = vmatpush1.bf16.msra.mxu0 0
    %3722 = vmatprep.subr.bf16.mxu0 0
    %3723 = vmatpush1.bf16.msra.mxu0 %v3706
    %3724 = vmatprep.subr.bf16.mxu0 0
    %3725 = vmatpush2.bf16.msra.mxu0 0
    %3726 = vmatprep.subr.bf16.mxu0 0
    %3727 = vmatpush2.bf16.msra.mxu0 0
    %3728 = vmatprep.subr.bf16.mxu0 0
    %3729 = vmatpush2.bf16.msra.mxu0 0
    %3730 = vmatprep.subr.bf16.mxu0 0
    %3731 = vmatpush2.bf16.msra.mxu0 0
    %3732 = vmatprep.subr.bf16.mxu0 0
    %3733 = vmatpush2.bf16.msra.mxu0 0
    %3734 = vmatprep.subr.bf16.mxu0 0
    %3735 = vmatpush2.bf16.msra.mxu0 0
    %3736 = vmatprep.subr.bf16.mxu0 0
    %3737 = vmatpush2.bf16.msra.mxu0 0
    %3738 = vmatprep.subr.bf16.mxu0 0
    %3739 = vmatpush2.bf16.msra.mxu0 0
    %3740 = vmatprep.mubr.bf16.mxu0 0
    %3741 = vmatmul.mubr.bf16.gmra.mxu0 %v3703
    %v3742 = vpop.f32.mrf.mxu0
    %v3743 = vadd.f32 0.0, %v3742
    %v3744 = vpop.f32.mrf.mxu0
    %v3745 = vpop.f32.mrf.mxu0
    %v3746 = vadd.f32 0.0, %v3745
    %v3747 = vpop.f32.mrf.mxu0
    %3748 = vdwg.mxu0
    %v3749 = vadd.f32 %v3354, %v3743
    %v3750 = vadd.f32 %v3355, %v3746
    %v3751 = vld [vmem:[%s3] sm:$0xff]
    %v3752 = vld [vmem:[%s3 + $0x8] sm:$0xff]
    %3754 = vset.pattern.permute.xlu0 0
    %3755 = vperm.xlu0 %3754, %v3751
    %v3756 = vpop.permute.xlu0 %3755
    %3759 = vset.pattern.permute.xlu0 0
    %3760 = vperm.xlu0 %3759, %v3752
    %v3761 = vpop.permute.xlu0 %3760
    %v3763 = vadd.f32 %v3749, %v3756
    %v3764 = vadd.f32 %v3750, %v3761
    %vm3765 = vcmp.ge.f32.partialorder %v3763, 0.0
    %vm3766 = vcmp.ge.f32.partialorder %v3764, 0.0
    %v3767 = vmul.f32 %v3763, 0.2
    %v3768 = vmul.f32 %v3764, 0.2
    %v3769 = vsel %vm3765, %v3763, %v3767
    %v3770 = vsel %vm3766, %v3764, %v3768
    %v3771 = vpack.c.bf16 %v3770, %v3769
    %v3772 = vld [vmem:[%s4] sm:$0xf]
    %v3773 = vld [vmem:[%s4 + $0x4] sm:$0xf]
    %v3774 = vld [vmem:[%s4 + $0x8] sm:$0xf]
    %v3775 = vld [vmem:[%s4 + $0xc] sm:$0xf]
    %v3776 = vld [vmem:[%s4 + $0x10] sm:$0xf]
    %v3777 = vld [vmem:[%s4 + $0x14] sm:$0xf]
    %v3778 = vld [vmem:[%s4 + $0x18] sm:$0xf]
    %v3779 = vld [vmem:[%s4 + $0x1c] sm:$0xf]
    %v3780 = vld [vmem:[%s4 + $0x20] sm:$0xf]
    %v3781 = vld [vmem:[%s4 + $0x24] sm:$0xf]
    %v3782 = vld [vmem:[%s4 + $0x28] sm:$0xf]
    %v3783 = vld [vmem:[%s4 + $0x2c] sm:$0xf]
    %v3784 = vld [vmem:[%s4 + $0x30] sm:$0xf]
    %v3785 = vld [vmem:[%s4 + $0x34] sm:$0xf]
    %v3786 = vld [vmem:[%s4 + $0x38] sm:$0xf]
    %v3787 = vld [vmem:[%s4 + $0x3c] sm:$0xf]
    %v3788 = vld [vmem:[%s5] sm:$0xf]
    %v3789 = vld [vmem:[%s5 + $0x4] sm:$0xf]
    %v3790 = vld [vmem:[%s5 + $0x8] sm:$0xf]
    %v3791 = vld [vmem:[%s5 + $0xc] sm:$0xf]
    %v3808 = vunpack.c.l.b16 %v3772
    %v3809 = vunpack.c.l.b16 %v3773
    %v3810 = vunpack.c.l.b16 %v3774
    %v3811 = vunpack.c.l.b16 %v3775
    %v3812 = vunpack.c.l.b16 %v3776
    %v3813 = vunpack.c.l.b16 %v3777
    %v3814 = vunpack.c.l.b16 %v3778
    %v3815 = vunpack.c.l.b16 %v3779
    %v3816 = vunpack.c.l.b16 %v3780
    %v3817 = vunpack.c.l.b16 %v3781
    %v3818 = vunpack.c.l.b16 %v3782
    %v3819 = vunpack.c.l.b16 %v3783
    %v3820 = vunpack.c.l.b16 %v3784
    %v3821 = vunpack.c.l.b16 %v3785
    %v3822 = vunpack.c.l.b16 %v3786
    %v3823 = vunpack.c.l.b16 %v3787
    %v3824 = vpack.c.b16 %v3809, %v3808
    %v3825 = vpack.c.b16 %v3811, %v3810
    %v3826 = vpack.c.b16 %v3813, %v3812
    %v3827 = vpack.c.b16 %v3815, %v3814
    %v3828 = vpack.c.b16 %v3817, %v3816
    %v3829 = vpack.c.b16 %v3819, %v3818
    %v3830 = vpack.c.b16 %v3821, %v3820
    %v3831 = vpack.c.b16 %v3823, %v3822
    %3840 = vmatprep.subr.bf16.mxu0 0
    %3841 = vmatpush1.bf16.msra.mxu0 %v3831
    %3842 = vmatprep.subr.bf16.mxu0 0
    %3843 = vmatpush1.bf16.msra.mxu0 %v3830
    %3844 = vmatprep.subr.bf16.mxu0 0
    %3845 = vmatpush1.bf16.msra.mxu0 %v3829
    %3846 = vmatprep.subr.bf16.mxu0 0
    %3847 = vmatpush1.bf16.msra.mxu0 %v3828
    %3848 = vmatprep.subr.bf16.mxu0 0
    %3849 = vmatpush1.bf16.msra.mxu0 %v3827
    %3850 = vmatprep.subr.bf16.mxu0 0
    %3851 = vmatpush1.bf16.msra.mxu0 %v3826
    %3852 = vmatprep.subr.bf16.mxu0 0
    %3853 = vmatpush1.bf16.msra.mxu0 %v3825
    %3854 = vmatprep.subr.bf16.mxu0 0
    %3855 = vmatpush1.bf16.msra.mxu0 %v3824
    %3856 = vmatprep.subr.bf16.mxu0 0
    %3857 = vmatpush2.bf16.msra.mxu0 0
    %3858 = vmatprep.subr.bf16.mxu0 0
    %3859 = vmatpush2.bf16.msra.mxu0 0
    %3860 = vmatprep.subr.bf16.mxu0 0
    %3861 = vmatpush2.bf16.msra.mxu0 0
    %3862 = vmatprep.subr.bf16.mxu0 0
    %3863 = vmatpush2.bf16.msra.mxu0 0
    %3864 = vmatprep.subr.bf16.mxu0 0
    %3865 = vmatpush2.bf16.msra.mxu0 0
    %3866 = vmatprep.subr.bf16.mxu0 0
    %3867 = vmatpush2.bf16.msra.mxu0 0
    %3868 = vmatprep.subr.bf16.mxu0 0
    %3869 = vmatpush2.bf16.msra.mxu0 0
    %3870 = vmatprep.subr.bf16.mxu0 0
    %3871 = vmatpush2.bf16.msra.mxu0 0
    %3872 = vmatprep.mubr.bf16.mxu0 0
    %3873 = vmatmul.mubr.bf16.gmra.mxu0 %v3771
    %v3874 = vpop.f32.mrf.mxu0
    %v3875 = vadd.f32 0.0, %v3874
    %v3876 = vpop.f32.mrf.mxu0
    %v3877 = vpop.f32.mrf.mxu0
    %v3878 = vadd.f32 0.0, %v3877
    %v3879 = vpop.f32.mrf.mxu0
    %3880 = vdwg.mxu0
    %v3881 = vpack.c.bf16 %v3878, %v3875
    %s3882 = scalar_lea.vmem %s4, 64
    %v3883 = vld [vmem:[%s3882] sm:$0xf]
    %v3884 = vld [vmem:[%s3882 + $0x4] sm:$0xf]
    %v3885 = vld [vmem:[%s3882 + $0x8] sm:$0xf]
    %v3886 = vld [vmem:[%s3882 + $0xc] sm:$0xf]
    %v3887 = vld [vmem:[%s3882 + $0x10] sm:$0xf]
    %v3888 = vld [vmem:[%s3882 + $0x14] sm:$0xf]
    %v3889 = vld [vmem:[%s3882 + $0x18] sm:$0xf]
    %v3890 = vld [vmem:[%s3882 + $0x1c] sm:$0xf]
    %v3891 = vld [vmem:[%s3882 + $0x20] sm:$0xf]
    %v3892 = vld [vmem:[%s3882 + $0x24] sm:$0xf]
    %v3893 = vld [vmem:[%s3882 + $0x28] sm:$0xf]
    %v3894 = vld [vmem:[%s3882 + $0x2c] sm:$0xf]
    %v3895 = vld [vmem:[%s3882 + $0x30] sm:$0xf]
    %v3896 = vld [vmem:[%s3882 + $0x34] sm:$0xf]
    %v3897 = vld [vmem:[%s3882 + $0x38] sm:$0xf]
    %v3898 = vld [vmem:[%s3882 + $0x3c] sm:$0xf]
    %s3899 = scalar_lea.vmem %s5, 16
    %v3900 = vld [vmem:[%s3899] sm:$0xf]
    %v3901 = vld [vmem:[%s3899 + $0x4] sm:$0xf]
    %v3902 = vld [vmem:[%s3899 + $0x8] sm:$0xf]
    %v3903 = vld [vmem:[%s3899 + $0xc] sm:$0xf]
    %v3920 = vunpack.c.l.b16 %v3883
    %v3921 = vunpack.c.l.b16 %v3884
    %v3922 = vunpack.c.l.b16 %v3885
    %v3923 = vunpack.c.l.b16 %v3886
    %v3924 = vunpack.c.l.b16 %v3887
    %v3925 = vunpack.c.l.b16 %v3888
    %v3926 = vunpack.c.l.b16 %v3889
    %v3927 = vunpack.c.l.b16 %v3890
    %v3928 = vunpack.c.l.b16 %v3891
    %v3929 = vunpack.c.l.b16 %v3892
    %v3930 = vunpack.c.l.b16 %v3893
    %v3931 = vunpack.c.l.b16 %v3894
    %v3932 = vunpack.c.l.b16 %v3895
    %v3933 = vunpack.c.l.b16 %v3896
    %v3934 = vunpack.c.l.b16 %v3897
    %v3935 = vunpack.c.l.b16 %v3898
    %v3936 = vpack.c.b16 %v3921, %v3920
    %v3937 = vpack.c.b16 %v3923, %v3922
    %v3938 = vpack.c.b16 %v3925, %v3924
    %v3939 = vpack.c.b16 %v3927, %v3926
    %v3940 = vpack.c.b16 %v3929, %v3928
    %v3941 = vpack.c.b16 %v3931, %v3930
    %v3942 = vpack.c.b16 %v3933, %v3932
    %v3943 = vpack.c.b16 %v3935, %v3934
    %3952 = vmatprep.subr.bf16.mxu0 0
    %3953 = vmatpush1.bf16.msra.mxu0 %v3943
    %3954 = vmatprep.subr.bf16.mxu0 0
    %3955 = vmatpush1.bf16.msra.mxu0 %v3942
    %3956 = vmatprep.subr.bf16.mxu0 0
    %3957 = vmatpush1.bf16.msra.mxu0 %v3941
    %3958 = vmatprep.subr.bf16.mxu0 0
    %3959 = vmatpush1.bf16.msra.mxu0 %v3940
    %3960 = vmatprep.subr.bf16.mxu0 0
    %3961 = vmatpush1.bf16.msra.mxu0 %v3939
    %3962 = vmatprep.subr.bf16.mxu0 0
    %3963 = vmatpush1.bf16.msra.mxu0 %v3938
    %3964 = vmatprep.subr.bf16.mxu0 0
    %3965 = vmatpush1.bf16.msra.mxu0 %v3937
    %3966 = vmatprep.subr.bf16.mxu0 0
    %3967 = vmatpush1.bf16.msra.mxu0 %v3936
    %3968 = vmatprep.subr.bf16.mxu0 0
    %3969 = vmatpush2.bf16.msra.mxu0 0
    %3970 = vmatprep.subr.bf16.mxu0 0
    %3971 = vmatpush2.bf16.msra.mxu0 0
    %3972 = vmatprep.subr.bf16.mxu0 0
    %3973 = vmatpush2.bf16.msra.mxu0 0
    %3974 = vmatprep.subr.bf16.mxu0 0
    %3975 = vmatpush2.bf16.msra.mxu0 0
    %3976 = vmatprep.subr.bf16.mxu0 0
    %3977 = vmatpush2.bf16.msra.mxu0 0
    %3978 = vmatprep.subr.bf16.mxu0 0
    %3979 = vmatpush2.bf16.msra.mxu0 0
    %3980 = vmatprep.subr.bf16.mxu0 0
    %3981 = vmatpush2.bf16.msra.mxu0 0
    %3982 = vmatprep.subr.bf16.mxu0 0
    %3983 = vmatpush2.bf16.msra.mxu0 0
    %3984 = vmatprep.mubr.bf16.mxu0 0
    %3985 = vmatmul.mubr.bf16.gmra.mxu0 %v3771
    %v3986 = vpop.f32.mrf.mxu0
    %v3987 = vadd.f32 0.0, %v3986
    %v3988 = vpop.f32.mrf.mxu0
    %v3989 = vpop.f32.mrf.mxu0
    %v3990 = vadd.f32 0.0, %v3989
    %v3991 = vpop.f32.mrf.mxu0
    %3992 = vdwg.mxu0
    %v3993 = vpack.c.bf16 %v3990, %v3987
    %v3998 = vunpack.c.l.b16 %v3900
    %v3999 = vunpack.c.l.b16 %v3901
    %v4000 = vunpack.c.l.b16 %v3902
    %v4001 = vunpack.c.l.b16 %v3903
    %v4002 = vpack.c.b16 %v3999, %v3998
    %v4003 = vpack.c.b16 %v4001, %v4000
    %vm4004 = vcmask 130048
    %v4006 = vsel %vm4004, %v4002, 0
    %v4009 = vsel %vm4004, %v4003, 0
    %4011 = vmatprep.subr.bf16.mxu0 0
    %4012 = vmatpush1.bf16.msra.mxu0 0
    %4013 = vmatprep.subr.bf16.mxu0 0
    %4014 = vmatpush1.bf16.msra.mxu0 0
    %4015 = vmatprep.subr.bf16.mxu0 0
    %4016 = vmatpush1.bf16.msra.mxu0 0
    %4017 = vmatprep.subr.bf16.mxu0 0
    %4018 = vmatpush1.bf16.msra.mxu0 0
    %4019 = vmatprep.subr.bf16.mxu0 0
    %4020 = vmatpush1.bf16.msra.mxu0 0
    %4021 = vmatprep.subr.bf16.mxu0 0
    %4022 = vmatpush1.bf16.msra.mxu0 0
    %4023 = vmatprep.subr.bf16.mxu0 0
    %4024 = vmatpush1.bf16.msra.mxu0 0
    %4025 = vmatprep.subr.bf16.mxu0 0
    %4026 = vmatpush1.bf16.msra.mxu0 %v3993
    %4027 = vmatprep.subr.bf16.mxu0 0
    %4028 = vmatpush2.bf16.msra.mxu0 0
    %4029 = vmatprep.subr.bf16.mxu0 0
    %4030 = vmatpush2.bf16.msra.mxu0 0
    %4031 = vmatprep.subr.bf16.mxu0 0
    %4032 = vmatpush2.bf16.msra.mxu0 0
    %4033 = vmatprep.subr.bf16.mxu0 0
    %4034 = vmatpush2.bf16.msra.mxu0 0
    %4035 = vmatprep.subr.bf16.mxu0 0
    %4036 = vmatpush2.bf16.msra.mxu0 0
    %4037 = vmatprep.subr.bf16.mxu0 0
    %4038 = vmatpush2.bf16.msra.mxu0 0
    %4039 = vmatprep.subr.bf16.mxu0 0
    %4040 = vmatpush2.bf16.msra.mxu0 0
    %4041 = vmatprep.subr.bf16.mxu0 0
    %4042 = vmatpush2.bf16.msra.mxu0 0
    %4043 = vmatprep.mubr.bf16.mxu0 0
    %4044 = vmatmul.mubr.bf16.gmra.mxu0 %v4006
    %v4045 = vpop.f32.mrf.mxu0
    %v4046 = vadd.f32 0.0, %v4045
    %v4047 = vpop.f32.mrf.mxu0
    %v4048 = vpop.f32.mrf.mxu0
    %v4049 = vadd.f32 0.0, %v4048
    %v4050 = vpop.f32.mrf.mxu0
    %4051 = vmatprep.mubr.bf16.mxu0 0
    %4052 = vmatmul.mubr.bf16.gmra.mxu0 %v4009
    %v4053 = vpop.f32.mrf.mxu0
    %v4054 = vadd.f32 0.0, %v4053
    %v4055 = vpop.f32.mrf.mxu0
    %v4056 = vpop.f32.mrf.mxu0
    %v4057 = vadd.f32 0.0, %v4056
    %v4058 = vpop.f32.mrf.mxu0
    %4059 = vdwg.mxu0
    %v4064 = vunpack.c.l.b16 %v3788
    %v4065 = vunpack.c.l.b16 %v3789
    %v4066 = vunpack.c.l.b16 %v3790
    %v4067 = vunpack.c.l.b16 %v3791
    %v4068 = vpack.c.b16 %v4065, %v4064
    %v4069 = vpack.c.b16 %v4067, %v4066
    %v4071 = vsel %vm4004, %v4068, 0
    %v4074 = vsel %vm4004, %v4069, 0
    %4076 = vmatprep.subr.bf16.mxu0 0
    %4077 = vmatpush1.bf16.msra.mxu0 0
    %4078 = vmatprep.subr.bf16.mxu0 0
    %4079 = vmatpush1.bf16.msra.mxu0 0
    %4080 = vmatprep.subr.bf16.mxu0 0
    %4081 = vmatpush1.bf16.msra.mxu0 0
    %4082 = vmatprep.subr.bf16.mxu0 0
    %4083 = vmatpush1.bf16.msra.mxu0 0
    %4084 = vmatprep.subr.bf16.mxu0 0
    %4085 = vmatpush1.bf16.msra.mxu0 0
    %4086 = vmatprep.subr.bf16.mxu0 0
    %4087 = vmatpush1.bf16.msra.mxu0 0
    %4088 = vmatprep.subr.bf16.mxu0 0
    %4089 = vmatpush1.bf16.msra.mxu0 0
    %4090 = vmatprep.subr.bf16.mxu0 0
    %4091 = vmatpush1.bf16.msra.mxu0 %v3881
    %4092 = vmatprep.subr.bf16.mxu0 0
    %4093 = vmatpush2.bf16.msra.mxu0 0
    %4094 = vmatprep.subr.bf16.mxu0 0
    %4095 = vmatpush2.bf16.msra.mxu0 0
    %4096 = vmatprep.subr.bf16.mxu0 0
    %4097 = vmatpush2.bf16.msra.mxu0 0
    %4098 = vmatprep.subr.bf16.mxu0 0
    %4099 = vmatpush2.bf16.msra.mxu0 0
    %4100 = vmatprep.subr.bf16.mxu0 0
    %4101 = vmatpush2.bf16.msra.mxu0 0
    %4102 = vmatprep.subr.bf16.mxu0 0
    %4103 = vmatpush2.bf16.msra.mxu0 0
    %4104 = vmatprep.subr.bf16.mxu0 0
    %4105 = vmatpush2.bf16.msra.mxu0 0
    %4106 = vmatprep.subr.bf16.mxu0 0
    %4107 = vmatpush2.bf16.msra.mxu0 0
    %4108 = vmatprep.mubr.bf16.mxu0 0
    %4109 = vmatmul.mubr.bf16.gmra.mxu0 %v4071
    %v4110 = vpop.f32.mrf.mxu0
    %v4111 = vadd.f32 %v4046, %v4110
    %v4112 = vpop.f32.mrf.mxu0
    %v4113 = vpop.f32.mrf.mxu0
    %v4114 = vadd.f32 %v4049, %v4113
    %v4115 = vpop.f32.mrf.mxu0
    %4116 = vmatprep.mubr.bf16.mxu0 0
    %4117 = vmatmul.mubr.bf16.gmra.mxu0 %v4074
    %v4118 = vpop.f32.mrf.mxu0
    %v4119 = vadd.f32 %v4054, %v4118
    %v4120 = vpop.f32.mrf.mxu0
    %v4121 = vpop.f32.mrf.mxu0
    %v4122 = vadd.f32 %v4057, %v4121
    %v4123 = vpop.f32.mrf.mxu0
    %4124 = vdwg.mxu0
    %s4125 = scalar_lea.vmem %s4, 128
    %v4126 = vld [vmem:[%s4125] sm:$0xf]
    %v4127 = vld [vmem:[%s4125 + $0x4] sm:$0xf]
    %v4128 = vld [vmem:[%s4125 + $0x8] sm:$0xf]
    %v4129 = vld [vmem:[%s4125 + $0xc] sm:$0xf]
    %v4130 = vld [vmem:[%s4125 + $0x10] sm:$0xf]
    %v4131 = vld [vmem:[%s4125 + $0x14] sm:$0xf]
    %v4132 = vld [vmem:[%s4125 + $0x18] sm:$0xf]
    %v4133 = vld [vmem:[%s4125 + $0x1c] sm:$0xf]
    %v4134 = vld [vmem:[%s4125 + $0x20] sm:$0xf]
    %v4135 = vld [vmem:[%s4125 + $0x24] sm:$0xf]
    %v4136 = vld [vmem:[%s4125 + $0x28] sm:$0xf]
    %v4137 = vld [vmem:[%s4125 + $0x2c] sm:$0xf]
    %v4138 = vld [vmem:[%s4125 + $0x30] sm:$0xf]
    %v4139 = vld [vmem:[%s4125 + $0x34] sm:$0xf]
    %v4140 = vld [vmem:[%s4125 + $0x38] sm:$0xf]
    %v4141 = vld [vmem:[%s4125 + $0x3c] sm:$0xf]
    %s4142 = scalar_lea.vmem %s5, 32
    %v4143 = vld [vmem:[%s4142] sm:$0xf]
    %v4144 = vld [vmem:[%s4142 + $0x4] sm:$0xf]
    %v4145 = vld [vmem:[%s4142 + $0x8] sm:$0xf]
    %v4146 = vld [vmem:[%s4142 + $0xc] sm:$0xf]
    %v4163 = vunpack.c.l.b16 %v4126
    %v4164 = vunpack.c.l.b16 %v4127
    %v4165 = vunpack.c.l.b16 %v4128
    %v4166 = vunpack.c.l.b16 %v4129
    %v4167 = vunpack.c.l.b16 %v4130
    %v4168 = vunpack.c.l.b16 %v4131
    %v4169 = vunpack.c.l.b16 %v4132
    %v4170 = vunpack.c.l.b16 %v4133
    %v4171 = vunpack.c.l.b16 %v4134
    %v4172 = vunpack.c.l.b16 %v4135
    %v4173 = vunpack.c.l.b16 %v4136
    %v4174 = vunpack.c.l.b16 %v4137
    %v4175 = vunpack.c.l.b16 %v4138
    %v4176 = vunpack.c.l.b16 %v4139
    %v4177 = vunpack.c.l.b16 %v4140
    %v4178 = vunpack.c.l.b16 %v4141
    %v4179 = vpack.c.b16 %v4164, %v4163
    %v4180 = vpack.c.b16 %v4166, %v4165
    %v4181 = vpack.c.b16 %v4168, %v4167
    %v4182 = vpack.c.b16 %v4170, %v4169
    %v4183 = vpack.c.b16 %v4172, %v4171
    %v4184 = vpack.c.b16 %v4174, %v4173
    %v4185 = vpack.c.b16 %v4176, %v4175
    %v4186 = vpack.c.b16 %v4178, %v4177
    %4195 = vmatprep.subr.bf16.mxu0 0
    %4196 = vmatpush1.bf16.msra.mxu0 %v4186
    %4197 = vmatprep.subr.bf16.mxu0 0
    %4198 = vmatpush1.bf16.msra.mxu0 %v4185
    %4199 = vmatprep.subr.bf16.mxu0 0
    %4200 = vmatpush1.bf16.msra.mxu0 %v4184
    %4201 = vmatprep.subr.bf16.mxu0 0
    %4202 = vmatpush1.bf16.msra.mxu0 %v4183
    %4203 = vmatprep.subr.bf16.mxu0 0
    %4204 = vmatpush1.bf16.msra.mxu0 %v4182
    %4205 = vmatprep.subr.bf16.mxu0 0
    %4206 = vmatpush1.bf16.msra.mxu0 %v4181
    %4207 = vmatprep.subr.bf16.mxu0 0
    %4208 = vmatpush1.bf16.msra.mxu0 %v4180
    %4209 = vmatprep.subr.bf16.mxu0 0
    %4210 = vmatpush1.bf16.msra.mxu0 %v4179
    %4211 = vmatprep.subr.bf16.mxu0 0
    %4212 = vmatpush2.bf16.msra.mxu0 0
    %4213 = vmatprep.subr.bf16.mxu0 0
    %4214 = vmatpush2.bf16.msra.mxu0 0
    %4215 = vmatprep.subr.bf16.mxu0 0
    %4216 = vmatpush2.bf16.msra.mxu0 0
    %4217 = vmatprep.subr.bf16.mxu0 0
    %4218 = vmatpush2.bf16.msra.mxu0 0
    %4219 = vmatprep.subr.bf16.mxu0 0
    %4220 = vmatpush2.bf16.msra.mxu0 0
    %4221 = vmatprep.subr.bf16.mxu0 0
    %4222 = vmatpush2.bf16.msra.mxu0 0
    %4223 = vmatprep.subr.bf16.mxu0 0
    %4224 = vmatpush2.bf16.msra.mxu0 0
    %4225 = vmatprep.subr.bf16.mxu0 0
    %4226 = vmatpush2.bf16.msra.mxu0 0
    %4227 = vmatprep.mubr.bf16.mxu0 0
    %4228 = vmatmul.mubr.bf16.gmra.mxu0 %v3771
    %v4229 = vpop.f32.mrf.mxu0
    %v4230 = vadd.f32 0.0, %v4229
    %v4231 = vpop.f32.mrf.mxu0
    %v4232 = vpop.f32.mrf.mxu0
    %v4233 = vadd.f32 0.0, %v4232
    %v4234 = vpop.f32.mrf.mxu0
    %4235 = vdwg.mxu0
    %v4236 = vpack.c.bf16 %v4233, %v4230
    %v4241 = vunpack.c.l.b16 %v4143
    %v4242 = vunpack.c.l.b16 %v4144
    %v4243 = vunpack.c.l.b16 %v4145
    %v4244 = vunpack.c.l.b16 %v4146
    %v4245 = vpack.c.b16 %v4242, %v4241
    %v4246 = vpack.c.b16 %v4244, %v4243
    %v4248 = vsel %vm4004, %v4245, 0
    %v4251 = vsel %vm4004, %v4246, 0
    %4253 = vmatprep.subr.bf16.mxu0 0
    %4254 = vmatpush1.bf16.msra.mxu0 0
    %4255 = vmatprep.subr.bf16.mxu0 0
    %4256 = vmatpush1.bf16.msra.mxu0 0
    %4257 = vmatprep.subr.bf16.mxu0 0
    %4258 = vmatpush1.bf16.msra.mxu0 0
    %4259 = vmatprep.subr.bf16.mxu0 0
    %4260 = vmatpush1.bf16.msra.mxu0 0
    %4261 = vmatprep.subr.bf16.mxu0 0
    %4262 = vmatpush1.bf16.msra.mxu0 0
    %4263 = vmatprep.subr.bf16.mxu0 0
    %4264 = vmatpush1.bf16.msra.mxu0 0
    %4265 = vmatprep.subr.bf16.mxu0 0
    %4266 = vmatpush1.bf16.msra.mxu0 0
    %4267 = vmatprep.subr.bf16.mxu0 0
    %4268 = vmatpush1.bf16.msra.mxu0 %v4236
    %4269 = vmatprep.subr.bf16.mxu0 0
    %4270 = vmatpush2.bf16.msra.mxu0 0
    %4271 = vmatprep.subr.bf16.mxu0 0
    %4272 = vmatpush2.bf16.msra.mxu0 0
    %4273 = vmatprep.subr.bf16.mxu0 0
    %4274 = vmatpush2.bf16.msra.mxu0 0
    %4275 = vmatprep.subr.bf16.mxu0 0
    %4276 = vmatpush2.bf16.msra.mxu0 0
    %4277 = vmatprep.subr.bf16.mxu0 0
    %4278 = vmatpush2.bf16.msra.mxu0 0
    %4279 = vmatprep.subr.bf16.mxu0 0
    %4280 = vmatpush2.bf16.msra.mxu0 0
    %4281 = vmatprep.subr.bf16.mxu0 0
    %4282 = vmatpush2.bf16.msra.mxu0 0
    %4283 = vmatprep.subr.bf16.mxu0 0
    %4284 = vmatpush2.bf16.msra.mxu0 0
    %4285 = vmatprep.mubr.bf16.mxu0 0
    %4286 = vmatmul.mubr.bf16.gmra.mxu0 %v4248
    %v4287 = vpop.f32.mrf.mxu0
    %v4288 = vadd.f32 0.0, %v4287
    %v4289 = vpop.f32.mrf.mxu0
    %v4290 = vpop.f32.mrf.mxu0
    %v4291 = vadd.f32 0.0, %v4290
    %v4292 = vpop.f32.mrf.mxu0
    %4293 = vmatprep.mubr.bf16.mxu0 0
    %4294 = vmatmul.mubr.bf16.gmra.mxu0 %v4251
    %v4295 = vpop.f32.mrf.mxu0
    %v4296 = vadd.f32 0.0, %v4295
    %v4297 = vpop.f32.mrf.mxu0
    %v4298 = vpop.f32.mrf.mxu0
    %v4299 = vadd.f32 0.0, %v4298
    %v4300 = vpop.f32.mrf.mxu0
    %4301 = vdwg.mxu0
    %v4302 = vadd.f32 %v4111, %v4288
    %v4303 = vadd.f32 %v4114, %v4291
    %v4304 = vadd.f32 %v4119, %v4296
    %v4305 = vadd.f32 %v4122, %v4299
    %s4306 = scalar_lea.vmem %s4, 192
    %v4307 = vld [vmem:[%s4306] sm:$0xf]
    %v4308 = vld [vmem:[%s4306 + $0x4] sm:$0xf]
    %v4309 = vld [vmem:[%s4306 + $0x8] sm:$0xf]
    %v4310 = vld [vmem:[%s4306 + $0xc] sm:$0xf]
    %v4311 = vld [vmem:[%s4306 + $0x10] sm:$0xf]
    %v4312 = vld [vmem:[%s4306 + $0x14] sm:$0xf]
    %v4313 = vld [vmem:[%s4306 + $0x18] sm:$0xf]
    %v4314 = vld [vmem:[%s4306 + $0x1c] sm:$0xf]
    %v4315 = vld [vmem:[%s4306 + $0x20] sm:$0xf]
    %v4316 = vld [vmem:[%s4306 + $0x24] sm:$0xf]
    %v4317 = vld [vmem:[%s4306 + $0x28] sm:$0xf]
    %v4318 = vld [vmem:[%s4306 + $0x2c] sm:$0xf]
    %v4319 = vld [vmem:[%s4306 + $0x30] sm:$0xf]
    %v4320 = vld [vmem:[%s4306 + $0x34] sm:$0xf]
    %v4321 = vld [vmem:[%s4306 + $0x38] sm:$0xf]
    %v4322 = vld [vmem:[%s4306 + $0x3c] sm:$0xf]
    %s4323 = scalar_lea.vmem %s5, 48
    %v4324 = vld [vmem:[%s4323] sm:$0xf]
    %v4325 = vld [vmem:[%s4323 + $0x4] sm:$0xf]
    %v4326 = vld [vmem:[%s4323 + $0x8] sm:$0xf]
    %v4327 = vld [vmem:[%s4323 + $0xc] sm:$0xf]
    %v4344 = vunpack.c.l.b16 %v4307
    %v4345 = vunpack.c.l.b16 %v4308
    %v4346 = vunpack.c.l.b16 %v4309
    %v4347 = vunpack.c.l.b16 %v4310
    %v4348 = vunpack.c.l.b16 %v4311
    %v4349 = vunpack.c.l.b16 %v4312
    %v4350 = vunpack.c.l.b16 %v4313
    %v4351 = vunpack.c.l.b16 %v4314
    %v4352 = vunpack.c.l.b16 %v4315
    %v4353 = vunpack.c.l.b16 %v4316
    %v4354 = vunpack.c.l.b16 %v4317
    %v4355 = vunpack.c.l.b16 %v4318
    %v4356 = vunpack.c.l.b16 %v4319
    %v4357 = vunpack.c.l.b16 %v4320
    %v4358 = vunpack.c.l.b16 %v4321
    %v4359 = vunpack.c.l.b16 %v4322
    %v4360 = vpack.c.b16 %v4345, %v4344
    %v4361 = vpack.c.b16 %v4347, %v4346
    %v4362 = vpack.c.b16 %v4349, %v4348
    %v4363 = vpack.c.b16 %v4351, %v4350
    %v4364 = vpack.c.b16 %v4353, %v4352
    %v4365 = vpack.c.b16 %v4355, %v4354
    %v4366 = vpack.c.b16 %v4357, %v4356
    %v4367 = vpack.c.b16 %v4359, %v4358
    %4376 = vmatprep.subr.bf16.mxu0 0
    %4377 = vmatpush1.bf16.msra.mxu0 %v4367
    %4378 = vmatprep.subr.bf16.mxu0 0
    %4379 = vmatpush1.bf16.msra.mxu0 %v4366
    %4380 = vmatprep.subr.bf16.mxu0 0
    %4381 = vmatpush1.bf16.msra.mxu0 %v4365
    %4382 = vmatprep.subr.bf16.mxu0 0
    %4383 = vmatpush1.bf16.msra.mxu0 %v4364
    %4384 = vmatprep.subr.bf16.mxu0 0
    %4385 = vmatpush1.bf16.msra.mxu0 %v4363
    %4386 = vmatprep.subr.bf16.mxu0 0
    %4387 = vmatpush1.bf16.msra.mxu0 %v4362
    %4388 = vmatprep.subr.bf16.mxu0 0
    %4389 = vmatpush1.bf16.msra.mxu0 %v4361
    %4390 = vmatprep.subr.bf16.mxu0 0
    %4391 = vmatpush1.bf16.msra.mxu0 %v4360
    %4392 = vmatprep.subr.bf16.mxu0 0
    %4393 = vmatpush2.bf16.msra.mxu0 0
    %4394 = vmatprep.subr.bf16.mxu0 0
    %4395 = vmatpush2.bf16.msra.mxu0 0
    %4396 = vmatprep.subr.bf16.mxu0 0
    %4397 = vmatpush2.bf16.msra.mxu0 0
    %4398 = vmatprep.subr.bf16.mxu0 0
    %4399 = vmatpush2.bf16.msra.mxu0 0
    %4400 = vmatprep.subr.bf16.mxu0 0
    %4401 = vmatpush2.bf16.msra.mxu0 0
    %4402 = vmatprep.subr.bf16.mxu0 0
    %4403 = vmatpush2.bf16.msra.mxu0 0
    %4404 = vmatprep.subr.bf16.mxu0 0
    %4405 = vmatpush2.bf16.msra.mxu0 0
    %4406 = vmatprep.subr.bf16.mxu0 0
    %4407 = vmatpush2.bf16.msra.mxu0 0
    %4408 = vmatprep.mubr.bf16.mxu0 0
    %4409 = vmatmul.mubr.bf16.gmra.mxu0 %v3771
    %v4410 = vpop.f32.mrf.mxu0
    %v4411 = vadd.f32 0.0, %v4410
    %v4412 = vpop.f32.mrf.mxu0
    %v4413 = vpop.f32.mrf.mxu0
    %v4414 = vadd.f32 0.0, %v4413
    %v4415 = vpop.f32.mrf.mxu0
    %4416 = vdwg.mxu0
    %v4417 = vpack.c.bf16 %v4414, %v4411
    %v4422 = vunpack.c.l.b16 %v4324
    %v4423 = vunpack.c.l.b16 %v4325
    %v4424 = vunpack.c.l.b16 %v4326
    %v4425 = vunpack.c.l.b16 %v4327
    %v4426 = vpack.c.b16 %v4423, %v4422
    %v4427 = vpack.c.b16 %v4425, %v4424
    %v4429 = vsel %vm4004, %v4426, 0
    %v4432 = vsel %vm4004, %v4427, 0
    %4434 = vmatprep.subr.bf16.mxu0 0
    %4435 = vmatpush1.bf16.msra.mxu0 0
    %4436 = vmatprep.subr.bf16.mxu0 0
    %4437 = vmatpush1.bf16.msra.mxu0 0
    %4438 = vmatprep.subr.bf16.mxu0 0
    %4439 = vmatpush1.bf16.msra.mxu0 0
    %4440 = vmatprep.subr.bf16.mxu0 0
    %4441 = vmatpush1.bf16.msra.mxu0 0
    %4442 = vmatprep.subr.bf16.mxu0 0
    %4443 = vmatpush1.bf16.msra.mxu0 0
    %4444 = vmatprep.subr.bf16.mxu0 0
    %4445 = vmatpush1.bf16.msra.mxu0 0
    %4446 = vmatprep.subr.bf16.mxu0 0
    %4447 = vmatpush1.bf16.msra.mxu0 0
    %4448 = vmatprep.subr.bf16.mxu0 0
    %4449 = vmatpush1.bf16.msra.mxu0 %v4417
    %4450 = vmatprep.subr.bf16.mxu0 0
    %4451 = vmatpush2.bf16.msra.mxu0 0
    %4452 = vmatprep.subr.bf16.mxu0 0
    %4453 = vmatpush2.bf16.msra.mxu0 0
    %4454 = vmatprep.subr.bf16.mxu0 0
    %4455 = vmatpush2.bf16.msra.mxu0 0
    %4456 = vmatprep.subr.bf16.mxu0 0
    %4457 = vmatpush2.bf16.msra.mxu0 0
    %4458 = vmatprep.subr.bf16.mxu0 0
    %4459 = vmatpush2.bf16.msra.mxu0 0
    %4460 = vmatprep.subr.bf16.mxu0 0
    %4461 = vmatpush2.bf16.msra.mxu0 0
    %4462 = vmatprep.subr.bf16.mxu0 0
    %4463 = vmatpush2.bf16.msra.mxu0 0
    %4464 = vmatprep.subr.bf16.mxu0 0
    %4465 = vmatpush2.bf16.msra.mxu0 0
    %4466 = vmatprep.mubr.bf16.mxu0 0
    %4467 = vmatmul.mubr.bf16.gmra.mxu0 %v4429
    %v4468 = vpop.f32.mrf.mxu0
    %v4469 = vadd.f32 0.0, %v4468
    %v4470 = vpop.f32.mrf.mxu0
    %v4471 = vpop.f32.mrf.mxu0
    %v4472 = vadd.f32 0.0, %v4471
    %v4473 = vpop.f32.mrf.mxu0
    %4474 = vmatprep.mubr.bf16.mxu0 0
    %4475 = vmatmul.mubr.bf16.gmra.mxu0 %v4432
    %v4476 = vpop.f32.mrf.mxu0
    %v4477 = vadd.f32 0.0, %v4476
    %v4478 = vpop.f32.mrf.mxu0
    %v4479 = vpop.f32.mrf.mxu0
    %v4480 = vadd.f32 0.0, %v4479
    %v4481 = vpop.f32.mrf.mxu0
    %4482 = vdwg.mxu0
    %v4483 = vadd.f32 %v4302, %v4469
    %v4484 = vadd.f32 %v4303, %v4472
    %v4485 = vadd.f32 %v4304, %v4477
    %v4486 = vadd.f32 %v4305, %v4480
    %s4487 = scalar_lea.vmem %s4, 256
    %v4488 = vld [vmem:[%s4487] sm:$0xf]
    %v4489 = vld [vmem:[%s4487 + $0x4] sm:$0xf]
    %v4490 = vld [vmem:[%s4487 + $0x8] sm:$0xf]
    %v4491 = vld [vmem:[%s4487 + $0xc] sm:$0xf]
    %v4492 = vld [vmem:[%s4487 + $0x10] sm:$0xf]
    %v4493 = vld [vmem:[%s4487 + $0x14] sm:$0xf]
    %v4494 = vld [vmem:[%s4487 + $0x18] sm:$0xf]
    %v4495 = vld [vmem:[%s4487 + $0x1c] sm:$0xf]
    %v4496 = vld [vmem:[%s4487 + $0x20] sm:$0xf]
    %v4497 = vld [vmem:[%s4487 + $0x24] sm:$0xf]
    %v4498 = vld [vmem:[%s4487 + $0x28] sm:$0xf]
    %v4499 = vld [vmem:[%s4487 + $0x2c] sm:$0xf]
    %v4500 = vld [vmem:[%s4487 + $0x30] sm:$0xf]
    %v4501 = vld [vmem:[%s4487 + $0x34] sm:$0xf]
    %v4502 = vld [vmem:[%s4487 + $0x38] sm:$0xf]
    %v4503 = vld [vmem:[%s4487 + $0x3c] sm:$0xf]
    %s4504 = scalar_lea.vmem %s5, 64
    %v4505 = vld [vmem:[%s4504] sm:$0xf]
    %v4506 = vld [vmem:[%s4504 + $0x4] sm:$0xf]
    %v4507 = vld [vmem:[%s4504 + $0x8] sm:$0xf]
    %v4508 = vld [vmem:[%s4504 + $0xc] sm:$0xf]
    %v4525 = vunpack.c.l.b16 %v4488
    %v4526 = vunpack.c.l.b16 %v4489
    %v4527 = vunpack.c.l.b16 %v4490
    %v4528 = vunpack.c.l.b16 %v4491
    %v4529 = vunpack.c.l.b16 %v4492
    %v4530 = vunpack.c.l.b16 %v4493
    %v4531 = vunpack.c.l.b16 %v4494
    %v4532 = vunpack.c.l.b16 %v4495
    %v4533 = vunpack.c.l.b16 %v4496
    %v4534 = vunpack.c.l.b16 %v4497
    %v4535 = vunpack.c.l.b16 %v4498
    %v4536 = vunpack.c.l.b16 %v4499
    %v4537 = vunpack.c.l.b16 %v4500
    %v4538 = vunpack.c.l.b16 %v4501
    %v4539 = vunpack.c.l.b16 %v4502
    %v4540 = vunpack.c.l.b16 %v4503
    %v4541 = vpack.c.b16 %v4526, %v4525
    %v4542 = vpack.c.b16 %v4528, %v4527
    %v4543 = vpack.c.b16 %v4530, %v4529
    %v4544 = vpack.c.b16 %v4532, %v4531
    %v4545 = vpack.c.b16 %v4534, %v4533
    %v4546 = vpack.c.b16 %v4536, %v4535
    %v4547 = vpack.c.b16 %v4538, %v4537
    %v4548 = vpack.c.b16 %v4540, %v4539
    %4557 = vmatprep.subr.bf16.mxu0 0
    %4558 = vmatpush1.bf16.msra.mxu0 %v4548
    %4559 = vmatprep.subr.bf16.mxu0 0
    %4560 = vmatpush1.bf16.msra.mxu0 %v4547
    %4561 = vmatprep.subr.bf16.mxu0 0
    %4562 = vmatpush1.bf16.msra.mxu0 %v4546
    %4563 = vmatprep.subr.bf16.mxu0 0
    %4564 = vmatpush1.bf16.msra.mxu0 %v4545
    %4565 = vmatprep.subr.bf16.mxu0 0
    %4566 = vmatpush1.bf16.msra.mxu0 %v4544
    %4567 = vmatprep.subr.bf16.mxu0 0
    %4568 = vmatpush1.bf16.msra.mxu0 %v4543
    %4569 = vmatprep.subr.bf16.mxu0 0
    %4570 = vmatpush1.bf16.msra.mxu0 %v4542
    %4571 = vmatprep.subr.bf16.mxu0 0
    %4572 = vmatpush1.bf16.msra.mxu0 %v4541
    %4573 = vmatprep.subr.bf16.mxu0 0
    %4574 = vmatpush2.bf16.msra.mxu0 0
    %4575 = vmatprep.subr.bf16.mxu0 0
    %4576 = vmatpush2.bf16.msra.mxu0 0
    %4577 = vmatprep.subr.bf16.mxu0 0
    %4578 = vmatpush2.bf16.msra.mxu0 0
    %4579 = vmatprep.subr.bf16.mxu0 0
    %4580 = vmatpush2.bf16.msra.mxu0 0
    %4581 = vmatprep.subr.bf16.mxu0 0
    %4582 = vmatpush2.bf16.msra.mxu0 0
    %4583 = vmatprep.subr.bf16.mxu0 0
    %4584 = vmatpush2.bf16.msra.mxu0 0
    %4585 = vmatprep.subr.bf16.mxu0 0
    %4586 = vmatpush2.bf16.msra.mxu0 0
    %4587 = vmatprep.subr.bf16.mxu0 0
    %4588 = vmatpush2.bf16.msra.mxu0 0
    %4589 = vmatprep.mubr.bf16.mxu0 0
    %4590 = vmatmul.mubr.bf16.gmra.mxu0 %v3771
    %v4591 = vpop.f32.mrf.mxu0
    %v4592 = vadd.f32 0.0, %v4591
    %v4593 = vpop.f32.mrf.mxu0
    %v4594 = vpop.f32.mrf.mxu0
    %v4595 = vadd.f32 0.0, %v4594
    %v4596 = vpop.f32.mrf.mxu0
    %4597 = vdwg.mxu0
    %v4598 = vpack.c.bf16 %v4595, %v4592
    %v4603 = vunpack.c.l.b16 %v4505
    %v4604 = vunpack.c.l.b16 %v4506
    %v4605 = vunpack.c.l.b16 %v4507
    %v4606 = vunpack.c.l.b16 %v4508
    %v4607 = vpack.c.b16 %v4604, %v4603
    %v4608 = vpack.c.b16 %v4606, %v4605
    %v4610 = vsel %vm4004, %v4607, 0
    %v4613 = vsel %vm4004, %v4608, 0
    %4615 = vmatprep.subr.bf16.mxu0 0
    %4616 = vmatpush1.bf16.msra.mxu0 0
    %4617 = vmatprep.subr.bf16.mxu0 0
    %4618 = vmatpush1.bf16.msra.mxu0 0
    %4619 = vmatprep.subr.bf16.mxu0 0
    %4620 = vmatpush1.bf16.msra.mxu0 0
    %4621 = vmatprep.subr.bf16.mxu0 0
    %4622 = vmatpush1.bf16.msra.mxu0 0
    %4623 = vmatprep.subr.bf16.mxu0 0
    %4624 = vmatpush1.bf16.msra.mxu0 0
    %4625 = vmatprep.subr.bf16.mxu0 0
    %4626 = vmatpush1.bf16.msra.mxu0 0
    %4627 = vmatprep.subr.bf16.mxu0 0
    %4628 = vmatpush1.bf16.msra.mxu0 0
    %4629 = vmatprep.subr.bf16.mxu0 0
    %4630 = vmatpush1.bf16.msra.mxu0 %v4598
    %4631 = vmatprep.subr.bf16.mxu0 0
    %4632 = vmatpush2.bf16.msra.mxu0 0
    %4633 = vmatprep.subr.bf16.mxu0 0
    %4634 = vmatpush2.bf16.msra.mxu0 0
    %4635 = vmatprep.subr.bf16.mxu0 0
    %4636 = vmatpush2.bf16.msra.mxu0 0
    %4637 = vmatprep.subr.bf16.mxu0 0
    %4638 = vmatpush2.bf16.msra.mxu0 0
    %4639 = vmatprep.subr.bf16.mxu0 0
    %4640 = vmatpush2.bf16.msra.mxu0 0
    %4641 = vmatprep.subr.bf16.mxu0 0
    %4642 = vmatpush2.bf16.msra.mxu0 0
    %4643 = vmatprep.subr.bf16.mxu0 0
    %4644 = vmatpush2.bf16.msra.mxu0 0
    %4645 = vmatprep.subr.bf16.mxu0 0
    %4646 = vmatpush2.bf16.msra.mxu0 0
    %4647 = vmatprep.mubr.bf16.mxu0 0
    %4648 = vmatmul.mubr.bf16.gmra.mxu0 %v4610
    %v4649 = vpop.f32.mrf.mxu0
    %v4650 = vadd.f32 0.0, %v4649
    %v4651 = vpop.f32.mrf.mxu0
    %v4652 = vpop.f32.mrf.mxu0
    %v4653 = vadd.f32 0.0, %v4652
    %v4654 = vpop.f32.mrf.mxu0
    %4655 = vmatprep.mubr.bf16.mxu0 0
    %4656 = vmatmul.mubr.bf16.gmra.mxu0 %v4613
    %v4657 = vpop.f32.mrf.mxu0
    %v4658 = vadd.f32 0.0, %v4657
    %v4659 = vpop.f32.mrf.mxu0
    %v4660 = vpop.f32.mrf.mxu0
    %v4661 = vadd.f32 0.0, %v4660
    %v4662 = vpop.f32.mrf.mxu0
    %4663 = vdwg.mxu0
    %v4664 = vadd.f32 %v4483, %v4650
    %v4665 = vadd.f32 %v4484, %v4653
    %v4666 = vadd.f32 %v4485, %v4658
    %v4667 = vadd.f32 %v4486, %v4661
    %s4668 = scalar_lea.vmem %s4, 320
    %v4669 = vld [vmem:[%s4668] sm:$0xf]
    %v4670 = vld [vmem:[%s4668 + $0x4] sm:$0xf]
    %v4671 = vld [vmem:[%s4668 + $0x8] sm:$0xf]
    %v4672 = vld [vmem:[%s4668 + $0xc] sm:$0xf]
    %v4673 = vld [vmem:[%s4668 + $0x10] sm:$0xf]
    %v4674 = vld [vmem:[%s4668 + $0x14] sm:$0xf]
    %v4675 = vld [vmem:[%s4668 + $0x18] sm:$0xf]
    %v4676 = vld [vmem:[%s4668 + $0x1c] sm:$0xf]
    %v4677 = vld [vmem:[%s4668 + $0x20] sm:$0xf]
    %v4678 = vld [vmem:[%s4668 + $0x24] sm:$0xf]
    %v4679 = vld [vmem:[%s4668 + $0x28] sm:$0xf]
    %v4680 = vld [vmem:[%s4668 + $0x2c] sm:$0xf]
    %v4681 = vld [vmem:[%s4668 + $0x30] sm:$0xf]
    %v4682 = vld [vmem:[%s4668 + $0x34] sm:$0xf]
    %v4683 = vld [vmem:[%s4668 + $0x38] sm:$0xf]
    %v4684 = vld [vmem:[%s4668 + $0x3c] sm:$0xf]
    %s4685 = scalar_lea.vmem %s5, 80
    %v4686 = vld [vmem:[%s4685] sm:$0xf]
    %v4687 = vld [vmem:[%s4685 + $0x4] sm:$0xf]
    %v4688 = vld [vmem:[%s4685 + $0x8] sm:$0xf]
    %v4689 = vld [vmem:[%s4685 + $0xc] sm:$0xf]
    %v4706 = vunpack.c.l.b16 %v4669
    %v4707 = vunpack.c.l.b16 %v4670
    %v4708 = vunpack.c.l.b16 %v4671
    %v4709 = vunpack.c.l.b16 %v4672
    %v4710 = vunpack.c.l.b16 %v4673
    %v4711 = vunpack.c.l.b16 %v4674
    %v4712 = vunpack.c.l.b16 %v4675
    %v4713 = vunpack.c.l.b16 %v4676
    %v4714 = vunpack.c.l.b16 %v4677
    %v4715 = vunpack.c.l.b16 %v4678
    %v4716 = vunpack.c.l.b16 %v4679
    %v4717 = vunpack.c.l.b16 %v4680
    %v4718 = vunpack.c.l.b16 %v4681
    %v4719 = vunpack.c.l.b16 %v4682
    %v4720 = vunpack.c.l.b16 %v4683
    %v4721 = vunpack.c.l.b16 %v4684
    %v4722 = vpack.c.b16 %v4707, %v4706
    %v4723 = vpack.c.b16 %v4709, %v4708
    %v4724 = vpack.c.b16 %v4711, %v4710
    %v4725 = vpack.c.b16 %v4713, %v4712
    %v4726 = vpack.c.b16 %v4715, %v4714
    %v4727 = vpack.c.b16 %v4717, %v4716
    %v4728 = vpack.c.b16 %v4719, %v4718
    %v4729 = vpack.c.b16 %v4721, %v4720
    %4738 = vmatprep.subr.bf16.mxu0 0
    %4739 = vmatpush1.bf16.msra.mxu0 %v4729
    %4740 = vmatprep.subr.bf16.mxu0 0
    %4741 = vmatpush1.bf16.msra.mxu0 %v4728
    %4742 = vmatprep.subr.bf16.mxu0 0
    %4743 = vmatpush1.bf16.msra.mxu0 %v4727
    %4744 = vmatprep.subr.bf16.mxu0 0
    %4745 = vmatpush1.bf16.msra.mxu0 %v4726
    %4746 = vmatprep.subr.bf16.mxu0 0
    %4747 = vmatpush1.bf16.msra.mxu0 %v4725
    %4748 = vmatprep.subr.bf16.mxu0 0
    %4749 = vmatpush1.bf16.msra.mxu0 %v4724
    %4750 = vmatprep.subr.bf16.mxu0 0
    %4751 = vmatpush1.bf16.msra.mxu0 %v4723
    %4752 = vmatprep.subr.bf16.mxu0 0
    %4753 = vmatpush1.bf16.msra.mxu0 %v4722
    %4754 = vmatprep.subr.bf16.mxu0 0
    %4755 = vmatpush2.bf16.msra.mxu0 0
    %4756 = vmatprep.subr.bf16.mxu0 0
    %4757 = vmatpush2.bf16.msra.mxu0 0
    %4758 = vmatprep.subr.bf16.mxu0 0
    %4759 = vmatpush2.bf16.msra.mxu0 0
    %4760 = vmatprep.subr.bf16.mxu0 0
    %4761 = vmatpush2.bf16.msra.mxu0 0
    %4762 = vmatprep.subr.bf16.mxu0 0
    %4763 = vmatpush2.bf16.msra.mxu0 0
    %4764 = vmatprep.subr.bf16.mxu0 0
    %4765 = vmatpush2.bf16.msra.mxu0 0
    %4766 = vmatprep.subr.bf16.mxu0 0
    %4767 = vmatpush2.bf16.msra.mxu0 0
    %4768 = vmatprep.subr.bf16.mxu0 0
    %4769 = vmatpush2.bf16.msra.mxu0 0
    %4770 = vmatprep.mubr.bf16.mxu0 0
    %4771 = vmatmul.mubr.bf16.gmra.mxu0 %v3771
    %v4772 = vpop.f32.mrf.mxu0
    %v4773 = vadd.f32 0.0, %v4772
    %v4774 = vpop.f32.mrf.mxu0
    %v4775 = vpop.f32.mrf.mxu0
    %v4776 = vadd.f32 0.0, %v4775
    %v4777 = vpop.f32.mrf.mxu0
    %4778 = vdwg.mxu0
    %v4779 = vpack.c.bf16 %v4776, %v4773
    %v4784 = vunpack.c.l.b16 %v4686
    %v4785 = vunpack.c.l.b16 %v4687
    %v4786 = vunpack.c.l.b16 %v4688
    %v4787 = vunpack.c.l.b16 %v4689
    %v4788 = vpack.c.b16 %v4785, %v4784
    %v4789 = vpack.c.b16 %v4787, %v4786
    %v4791 = vsel %vm4004, %v4788, 0
    %v4794 = vsel %vm4004, %v4789, 0
    %4796 = vmatprep.subr.bf16.mxu0 0
    %4797 = vmatpush1.bf16.msra.mxu0 0
    %4798 = vmatprep.subr.bf16.mxu0 0
    %4799 = vmatpush1.bf16.msra.mxu0 0
    %4800 = vmatprep.subr.bf16.mxu0 0
    %4801 = vmatpush1.bf16.msra.mxu0 0
    %4802 = vmatprep.subr.bf16.mxu0 0
    %4803 = vmatpush1.bf16.msra.mxu0 0
    %4804 = vmatprep.subr.bf16.mxu0 0
    %4805 = vmatpush1.bf16.msra.mxu0 0
    %4806 = vmatprep.subr.bf16.mxu0 0
    %4807 = vmatpush1.bf16.msra.mxu0 0
    %4808 = vmatprep.subr.bf16.mxu0 0
    %4809 = vmatpush1.bf16.msra.mxu0 0
    %4810 = vmatprep.subr.bf16.mxu0 0
    %4811 = vmatpush1.bf16.msra.mxu0 %v4779
    %4812 = vmatprep.subr.bf16.mxu0 0
    %4813 = vmatpush2.bf16.msra.mxu0 0
    %4814 = vmatprep.subr.bf16.mxu0 0
    %4815 = vmatpush2.bf16.msra.mxu0 0
    %4816 = vmatprep.subr.bf16.mxu0 0
    %4817 = vmatpush2.bf16.msra.mxu0 0
    %4818 = vmatprep.subr.bf16.mxu0 0
    %4819 = vmatpush2.bf16.msra.mxu0 0
    %4820 = vmatprep.subr.bf16.mxu0 0
    %4821 = vmatpush2.bf16.msra.mxu0 0
    %4822 = vmatprep.subr.bf16.mxu0 0
    %4823 = vmatpush2.bf16.msra.mxu0 0
    %4824 = vmatprep.subr.bf16.mxu0 0
    %4825 = vmatpush2.bf16.msra.mxu0 0
    %4826 = vmatprep.subr.bf16.mxu0 0
    %4827 = vmatpush2.bf16.msra.mxu0 0
    %4828 = vmatprep.mubr.bf16.mxu0 0
    %4829 = vmatmul.mubr.bf16.gmra.mxu0 %v4791
    %v4830 = vpop.f32.mrf.mxu0
    %v4831 = vadd.f32 0.0, %v4830
    %v4832 = vpop.f32.mrf.mxu0
    %v4833 = vpop.f32.mrf.mxu0
    %v4834 = vadd.f32 0.0, %v4833
    %v4835 = vpop.f32.mrf.mxu0
    %4836 = vmatprep.mubr.bf16.mxu0 0
    %4837 = vmatmul.mubr.bf16.gmra.mxu0 %v4794
    %v4838 = vpop.f32.mrf.mxu0
    %v4839 = vadd.f32 0.0, %v4838
    %v4840 = vpop.f32.mrf.mxu0
    %v4841 = vpop.f32.mrf.mxu0
    %v4842 = vadd.f32 0.0, %v4841
    %v4843 = vpop.f32.mrf.mxu0
    %4844 = vdwg.mxu0
    %v4845 = vadd.f32 %v4664, %v4831
    %v4846 = vadd.f32 %v4665, %v4834
    %v4847 = vadd.f32 %v4666, %v4839
    %v4848 = vadd.f32 %v4667, %v4842
    %s4849 = scalar_lea.vmem %s4, 384
    %v4850 = vld [vmem:[%s4849] sm:$0xf]
    %v4851 = vld [vmem:[%s4849 + $0x4] sm:$0xf]
    %v4852 = vld [vmem:[%s4849 + $0x8] sm:$0xf]
    %v4853 = vld [vmem:[%s4849 + $0xc] sm:$0xf]
    %v4854 = vld [vmem:[%s4849 + $0x10] sm:$0xf]
    %v4855 = vld [vmem:[%s4849 + $0x14] sm:$0xf]
    %v4856 = vld [vmem:[%s4849 + $0x18] sm:$0xf]
    %v4857 = vld [vmem:[%s4849 + $0x1c] sm:$0xf]
    %v4858 = vld [vmem:[%s4849 + $0x20] sm:$0xf]
    %v4859 = vld [vmem:[%s4849 + $0x24] sm:$0xf]
    %v4860 = vld [vmem:[%s4849 + $0x28] sm:$0xf]
    %v4861 = vld [vmem:[%s4849 + $0x2c] sm:$0xf]
    %v4862 = vld [vmem:[%s4849 + $0x30] sm:$0xf]
    %v4863 = vld [vmem:[%s4849 + $0x34] sm:$0xf]
    %v4864 = vld [vmem:[%s4849 + $0x38] sm:$0xf]
    %v4865 = vld [vmem:[%s4849 + $0x3c] sm:$0xf]
    %s4866 = scalar_lea.vmem %s5, 96
    %v4867 = vld [vmem:[%s4866] sm:$0xf]
    %v4868 = vld [vmem:[%s4866 + $0x4] sm:$0xf]
    %v4869 = vld [vmem:[%s4866 + $0x8] sm:$0xf]
    %v4870 = vld [vmem:[%s4866 + $0xc] sm:$0xf]
    %v4887 = vunpack.c.l.b16 %v4850
    %v4888 = vunpack.c.l.b16 %v4851
    %v4889 = vunpack.c.l.b16 %v4852
    %v4890 = vunpack.c.l.b16 %v4853
    %v4891 = vunpack.c.l.b16 %v4854
    %v4892 = vunpack.c.l.b16 %v4855
    %v4893 = vunpack.c.l.b16 %v4856
    %v4894 = vunpack.c.l.b16 %v4857
    %v4895 = vunpack.c.l.b16 %v4858
    %v4896 = vunpack.c.l.b16 %v4859
    %v4897 = vunpack.c.l.b16 %v4860
    %v4898 = vunpack.c.l.b16 %v4861
    %v4899 = vunpack.c.l.b16 %v4862
    %v4900 = vunpack.c.l.b16 %v4863
    %v4901 = vunpack.c.l.b16 %v4864
    %v4902 = vunpack.c.l.b16 %v4865
    %v4903 = vpack.c.b16 %v4888, %v4887
    %v4904 = vpack.c.b16 %v4890, %v4889
    %v4905 = vpack.c.b16 %v4892, %v4891
    %v4906 = vpack.c.b16 %v4894, %v4893
    %v4907 = vpack.c.b16 %v4896, %v4895
    %v4908 = vpack.c.b16 %v4898, %v4897
    %v4909 = vpack.c.b16 %v4900, %v4899
    %v4910 = vpack.c.b16 %v4902, %v4901
    %4919 = vmatprep.subr.bf16.mxu0 0
    %4920 = vmatpush1.bf16.msra.mxu0 %v4910
    %4921 = vmatprep.subr.bf16.mxu0 0
    %4922 = vmatpush1.bf16.msra.mxu0 %v4909
    %4923 = vmatprep.subr.bf16.mxu0 0
    %4924 = vmatpush1.bf16.msra.mxu0 %v4908
    %4925 = vmatprep.subr.bf16.mxu0 0
    %4926 = vmatpush1.bf16.msra.mxu0 %v4907
    %4927 = vmatprep.subr.bf16.mxu0 0
    %4928 = vmatpush1.bf16.msra.mxu0 %v4906
    %4929 = vmatprep.subr.bf16.mxu0 0
    %4930 = vmatpush1.bf16.msra.mxu0 %v4905
    %4931 = vmatprep.subr.bf16.mxu0 0
    %4932 = vmatpush1.bf16.msra.mxu0 %v4904
    %4933 = vmatprep.subr.bf16.mxu0 0
    %4934 = vmatpush1.bf16.msra.mxu0 %v4903
    %4935 = vmatprep.subr.bf16.mxu0 0
    %4936 = vmatpush2.bf16.msra.mxu0 0
    %4937 = vmatprep.subr.bf16.mxu0 0
    %4938 = vmatpush2.bf16.msra.mxu0 0
    %4939 = vmatprep.subr.bf16.mxu0 0
    %4940 = vmatpush2.bf16.msra.mxu0 0
    %4941 = vmatprep.subr.bf16.mxu0 0
    %4942 = vmatpush2.bf16.msra.mxu0 0
    %4943 = vmatprep.subr.bf16.mxu0 0
    %4944 = vmatpush2.bf16.msra.mxu0 0
    %4945 = vmatprep.subr.bf16.mxu0 0
    %4946 = vmatpush2.bf16.msra.mxu0 0
    %4947 = vmatprep.subr.bf16.mxu0 0
    %4948 = vmatpush2.bf16.msra.mxu0 0
    %4949 = vmatprep.subr.bf16.mxu0 0
    %4950 = vmatpush2.bf16.msra.mxu0 0
    %4951 = vmatprep.mubr.bf16.mxu0 0
    %4952 = vmatmul.mubr.bf16.gmra.mxu0 %v3771
    %v4953 = vpop.f32.mrf.mxu0
    %v4954 = vadd.f32 0.0, %v4953
    %v4955 = vpop.f32.mrf.mxu0
    %v4956 = vpop.f32.mrf.mxu0
    %v4957 = vadd.f32 0.0, %v4956
    %v4958 = vpop.f32.mrf.mxu0
    %4959 = vdwg.mxu0
    %v4960 = vpack.c.bf16 %v4957, %v4954
    %v4965 = vunpack.c.l.b16 %v4867
    %v4966 = vunpack.c.l.b16 %v4868
    %v4967 = vunpack.c.l.b16 %v4869
    %v4968 = vunpack.c.l.b16 %v4870
    %v4969 = vpack.c.b16 %v4966, %v4965
    %v4970 = vpack.c.b16 %v4968, %v4967
    %v4972 = vsel %vm4004, %v4969, 0
    %v4975 = vsel %vm4004, %v4970, 0
    %4977 = vmatprep.subr.bf16.mxu0 0
    %4978 = vmatpush1.bf16.msra.mxu0 0
    %4979 = vmatprep.subr.bf16.mxu0 0
    %4980 = vmatpush1.bf16.msra.mxu0 0
    %4981 = vmatprep.subr.bf16.mxu0 0
    %4982 = vmatpush1.bf16.msra.mxu0 0
    %4983 = vmatprep.subr.bf16.mxu0 0
    %4984 = vmatpush1.bf16.msra.mxu0 0
    %4985 = vmatprep.subr.bf16.mxu0 0
    %4986 = vmatpush1.bf16.msra.mxu0 0
    %4987 = vmatprep.subr.bf16.mxu0 0
    %4988 = vmatpush1.bf16.msra.mxu0 0
    %4989 = vmatprep.subr.bf16.mxu0 0
    %4990 = vmatpush1.bf16.msra.mxu0 0
    %4991 = vmatprep.subr.bf16.mxu0 0
    %4992 = vmatpush1.bf16.msra.mxu0 %v4960
    %4993 = vmatprep.subr.bf16.mxu0 0
    %4994 = vmatpush2.bf16.msra.mxu0 0
    %4995 = vmatprep.subr.bf16.mxu0 0
    %4996 = vmatpush2.bf16.msra.mxu0 0
    %4997 = vmatprep.subr.bf16.mxu0 0
    %4998 = vmatpush2.bf16.msra.mxu0 0
    %4999 = vmatprep.subr.bf16.mxu0 0
    %5000 = vmatpush2.bf16.msra.mxu0 0
    %5001 = vmatprep.subr.bf16.mxu0 0
    %5002 = vmatpush2.bf16.msra.mxu0 0
    %5003 = vmatprep.subr.bf16.mxu0 0
    %5004 = vmatpush2.bf16.msra.mxu0 0
    %5005 = vmatprep.subr.bf16.mxu0 0
    %5006 = vmatpush2.bf16.msra.mxu0 0
    %5007 = vmatprep.subr.bf16.mxu0 0
    %5008 = vmatpush2.bf16.msra.mxu0 0
    %5009 = vmatprep.mubr.bf16.mxu0 0
    %5010 = vmatmul.mubr.bf16.gmra.mxu0 %v4972
    %v5011 = vpop.f32.mrf.mxu0
    %v5012 = vadd.f32 0.0, %v5011
    %v5013 = vpop.f32.mrf.mxu0
    %v5014 = vpop.f32.mrf.mxu0
    %v5015 = vadd.f32 0.0, %v5014
    %v5016 = vpop.f32.mrf.mxu0
    %5017 = vmatprep.mubr.bf16.mxu0 0
    %5018 = vmatmul.mubr.bf16.gmra.mxu0 %v4975
    %v5019 = vpop.f32.mrf.mxu0
    %v5020 = vadd.f32 0.0, %v5019
    %v5021 = vpop.f32.mrf.mxu0
    %v5022 = vpop.f32.mrf.mxu0
    %v5023 = vadd.f32 0.0, %v5022
    %v5024 = vpop.f32.mrf.mxu0
    %5025 = vdwg.mxu0
    %v5026 = vadd.f32 %v4845, %v5012
    %v5027 = vadd.f32 %v4846, %v5015
    %v5028 = vadd.f32 %v4847, %v5020
    %v5029 = vadd.f32 %v4848, %v5023
    %s5030 = scalar_lea.vmem %s4, 448
    %v5031 = vld [vmem:[%s5030] sm:$0xf]
    %v5032 = vld [vmem:[%s5030 + $0x4] sm:$0xf]
    %v5033 = vld [vmem:[%s5030 + $0x8] sm:$0xf]
    %v5034 = vld [vmem:[%s5030 + $0xc] sm:$0xf]
    %v5035 = vld [vmem:[%s5030 + $0x10] sm:$0xf]
    %v5036 = vld [vmem:[%s5030 + $0x14] sm:$0xf]
    %v5037 = vld [vmem:[%s5030 + $0x18] sm:$0xf]
    %v5038 = vld [vmem:[%s5030 + $0x1c] sm:$0xf]
    %v5039 = vld [vmem:[%s5030 + $0x20] sm:$0xf]
    %v5040 = vld [vmem:[%s5030 + $0x24] sm:$0xf]
    %v5041 = vld [vmem:[%s5030 + $0x28] sm:$0xf]
    %v5042 = vld [vmem:[%s5030 + $0x2c] sm:$0xf]
    %v5043 = vld [vmem:[%s5030 + $0x30] sm:$0xf]
    %v5044 = vld [vmem:[%s5030 + $0x34] sm:$0xf]
    %v5045 = vld [vmem:[%s5030 + $0x38] sm:$0xf]
    %v5046 = vld [vmem:[%s5030 + $0x3c] sm:$0xf]
    %s5047 = scalar_lea.vmem %s5, 112
    %v5048 = vld [vmem:[%s5047] sm:$0xf]
    %v5049 = vld [vmem:[%s5047 + $0x4] sm:$0xf]
    %v5050 = vld [vmem:[%s5047 + $0x8] sm:$0xf]
    %v5051 = vld [vmem:[%s5047 + $0xc] sm:$0xf]
    %v5068 = vunpack.c.l.b16 %v5031
    %v5069 = vunpack.c.l.b16 %v5032
    %v5070 = vunpack.c.l.b16 %v5033
    %v5071 = vunpack.c.l.b16 %v5034
    %v5072 = vunpack.c.l.b16 %v5035
    %v5073 = vunpack.c.l.b16 %v5036
    %v5074 = vunpack.c.l.b16 %v5037
    %v5075 = vunpack.c.l.b16 %v5038
    %v5076 = vunpack.c.l.b16 %v5039
    %v5077 = vunpack.c.l.b16 %v5040
    %v5078 = vunpack.c.l.b16 %v5041
    %v5079 = vunpack.c.l.b16 %v5042
    %v5080 = vunpack.c.l.b16 %v5043
    %v5081 = vunpack.c.l.b16 %v5044
    %v5082 = vunpack.c.l.b16 %v5045
    %v5083 = vunpack.c.l.b16 %v5046
    %v5084 = vpack.c.b16 %v5069, %v5068
    %v5085 = vpack.c.b16 %v5071, %v5070
    %v5086 = vpack.c.b16 %v5073, %v5072
    %v5087 = vpack.c.b16 %v5075, %v5074
    %v5088 = vpack.c.b16 %v5077, %v5076
    %v5089 = vpack.c.b16 %v5079, %v5078
    %v5090 = vpack.c.b16 %v5081, %v5080
    %v5091 = vpack.c.b16 %v5083, %v5082
    %5100 = vmatprep.subr.bf16.mxu0 0
    %5101 = vmatpush1.bf16.msra.mxu0 %v5091
    %5102 = vmatprep.subr.bf16.mxu0 0
    %5103 = vmatpush1.bf16.msra.mxu0 %v5090
    %5104 = vmatprep.subr.bf16.mxu0 0
    %5105 = vmatpush1.bf16.msra.mxu0 %v5089
    %5106 = vmatprep.subr.bf16.mxu0 0
    %5107 = vmatpush1.bf16.msra.mxu0 %v5088
    %5108 = vmatprep.subr.bf16.mxu0 0
    %5109 = vmatpush1.bf16.msra.mxu0 %v5087
    %5110 = vmatprep.subr.bf16.mxu0 0
    %5111 = vmatpush1.bf16.msra.mxu0 %v5086
    %5112 = vmatprep.subr.bf16.mxu0 0
    %5113 = vmatpush1.bf16.msra.mxu0 %v5085
    %5114 = vmatprep.subr.bf16.mxu0 0
    %5115 = vmatpush1.bf16.msra.mxu0 %v5084
    %5116 = vmatprep.subr.bf16.mxu0 0
    %5117 = vmatpush2.bf16.msra.mxu0 0
    %5118 = vmatprep.subr.bf16.mxu0 0
    %5119 = vmatpush2.bf16.msra.mxu0 0
    %5120 = vmatprep.subr.bf16.mxu0 0
    %5121 = vmatpush2.bf16.msra.mxu0 0
    %5122 = vmatprep.subr.bf16.mxu0 0
    %5123 = vmatpush2.bf16.msra.mxu0 0
    %5124 = vmatprep.subr.bf16.mxu0 0
    %5125 = vmatpush2.bf16.msra.mxu0 0
    %5126 = vmatprep.subr.bf16.mxu0 0
    %5127 = vmatpush2.bf16.msra.mxu0 0
    %5128 = vmatprep.subr.bf16.mxu0 0
    %5129 = vmatpush2.bf16.msra.mxu0 0
    %5130 = vmatprep.subr.bf16.mxu0 0
    %5131 = vmatpush2.bf16.msra.mxu0 0
    %5132 = vmatprep.mubr.bf16.mxu0 0
    %5133 = vmatmul.mubr.bf16.gmra.mxu0 %v3771
    %v5134 = vpop.f32.mrf.mxu0
    %v5135 = vadd.f32 0.0, %v5134
    %v5136 = vpop.f32.mrf.mxu0
    %v5137 = vpop.f32.mrf.mxu0
    %v5138 = vadd.f32 0.0, %v5137
    %v5139 = vpop.f32.mrf.mxu0
    %5140 = vdwg.mxu0
    %v5141 = vpack.c.bf16 %v5138, %v5135
    %v5146 = vunpack.c.l.b16 %v5048
    %v5147 = vunpack.c.l.b16 %v5049
    %v5148 = vunpack.c.l.b16 %v5050
    %v5149 = vunpack.c.l.b16 %v5051
    %v5150 = vpack.c.b16 %v5147, %v5146
    %v5151 = vpack.c.b16 %v5149, %v5148
    %v5153 = vsel %vm4004, %v5150, 0
    %v5156 = vsel %vm4004, %v5151, 0
    %5158 = vmatprep.subr.bf16.mxu0 0
    %5159 = vmatpush1.bf16.msra.mxu0 0
    %5160 = vmatprep.subr.bf16.mxu0 0
    %5161 = vmatpush1.bf16.msra.mxu0 0
    %5162 = vmatprep.subr.bf16.mxu0 0
    %5163 = vmatpush1.bf16.msra.mxu0 0
    %5164 = vmatprep.subr.bf16.mxu0 0
    %5165 = vmatpush1.bf16.msra.mxu0 0
    %5166 = vmatprep.subr.bf16.mxu0 0
    %5167 = vmatpush1.bf16.msra.mxu0 0
    %5168 = vmatprep.subr.bf16.mxu0 0
    %5169 = vmatpush1.bf16.msra.mxu0 0
    %5170 = vmatprep.subr.bf16.mxu0 0
    %5171 = vmatpush1.bf16.msra.mxu0 0
    %5172 = vmatprep.subr.bf16.mxu0 0
    %5173 = vmatpush1.bf16.msra.mxu0 %v5141
    %5174 = vmatprep.subr.bf16.mxu0 0
    %5175 = vmatpush2.bf16.msra.mxu0 0
    %5176 = vmatprep.subr.bf16.mxu0 0
    %5177 = vmatpush2.bf16.msra.mxu0 0
    %5178 = vmatprep.subr.bf16.mxu0 0
    %5179 = vmatpush2.bf16.msra.mxu0 0
    %5180 = vmatprep.subr.bf16.mxu0 0
    %5181 = vmatpush2.bf16.msra.mxu0 0
    %5182 = vmatprep.subr.bf16.mxu0 0
    %5183 = vmatpush2.bf16.msra.mxu0 0
    %5184 = vmatprep.subr.bf16.mxu0 0
    %5185 = vmatpush2.bf16.msra.mxu0 0
    %5186 = vmatprep.subr.bf16.mxu0 0
    %5187 = vmatpush2.bf16.msra.mxu0 0
    %5188 = vmatprep.subr.bf16.mxu0 0
    %5189 = vmatpush2.bf16.msra.mxu0 0
    %5190 = vmatprep.mubr.bf16.mxu0 0
    %5191 = vmatmul.mubr.bf16.gmra.mxu0 %v5153
    %v5192 = vpop.f32.mrf.mxu0
    %v5193 = vadd.f32 0.0, %v5192
    %v5194 = vpop.f32.mrf.mxu0
    %v5195 = vpop.f32.mrf.mxu0
    %v5196 = vadd.f32 0.0, %v5195
    %v5197 = vpop.f32.mrf.mxu0
    %5198 = vmatprep.mubr.bf16.mxu0 0
    %5199 = vmatmul.mubr.bf16.gmra.mxu0 %v5156
    %v5200 = vpop.f32.mrf.mxu0
    %v5201 = vadd.f32 0.0, %v5200
    %v5202 = vpop.f32.mrf.mxu0
    %v5203 = vpop.f32.mrf.mxu0
    %v5204 = vadd.f32 0.0, %v5203
    %v5205 = vpop.f32.mrf.mxu0
    %5206 = vdwg.mxu0
    %v5207 = vadd.f32 %v5026, %v5193
    %v5208 = vadd.f32 %v5027, %v5196
    %v5209 = vadd.f32 %v5028, %v5201
    %v5210 = vadd.f32 %v5029, %v5204
    %s5211 = scalar_lea.vmem %s4, 512
    %v5212 = vld [vmem:[%s5211] sm:$0xf]
    %v5213 = vld [vmem:[%s5211 + $0x4] sm:$0xf]
    %v5214 = vld [vmem:[%s5211 + $0x8] sm:$0xf]
    %v5215 = vld [vmem:[%s5211 + $0xc] sm:$0xf]
    %v5216 = vld [vmem:[%s5211 + $0x10] sm:$0xf]
    %v5217 = vld [vmem:[%s5211 + $0x14] sm:$0xf]
    %v5218 = vld [vmem:[%s5211 + $0x18] sm:$0xf]
    %v5219 = vld [vmem:[%s5211 + $0x1c] sm:$0xf]
    %v5220 = vld [vmem:[%s5211 + $0x20] sm:$0xf]
    %v5221 = vld [vmem:[%s5211 + $0x24] sm:$0xf]
    %v5222 = vld [vmem:[%s5211 + $0x28] sm:$0xf]
    %v5223 = vld [vmem:[%s5211 + $0x2c] sm:$0xf]
    %v5224 = vld [vmem:[%s5211 + $0x30] sm:$0xf]
    %v5225 = vld [vmem:[%s5211 + $0x34] sm:$0xf]
    %v5226 = vld [vmem:[%s5211 + $0x38] sm:$0xf]
    %v5227 = vld [vmem:[%s5211 + $0x3c] sm:$0xf]
    %s5228 = scalar_lea.vmem %s5, 128
    %v5229 = vld [vmem:[%s5228] sm:$0xf]
    %v5230 = vld [vmem:[%s5228 + $0x4] sm:$0xf]
    %v5231 = vld [vmem:[%s5228 + $0x8] sm:$0xf]
    %v5232 = vld [vmem:[%s5228 + $0xc] sm:$0xf]
    %v5249 = vunpack.c.l.b16 %v5212
    %v5250 = vunpack.c.l.b16 %v5213
    %v5251 = vunpack.c.l.b16 %v5214
    %v5252 = vunpack.c.l.b16 %v5215
    %v5253 = vunpack.c.l.b16 %v5216
    %v5254 = vunpack.c.l.b16 %v5217
    %v5255 = vunpack.c.l.b16 %v5218
    %v5256 = vunpack.c.l.b16 %v5219
    %v5257 = vunpack.c.l.b16 %v5220
    %v5258 = vunpack.c.l.b16 %v5221
    %v5259 = vunpack.c.l.b16 %v5222
    %v5260 = vunpack.c.l.b16 %v5223
    %v5261 = vunpack.c.l.b16 %v5224
    %v5262 = vunpack.c.l.b16 %v5225
    %v5263 = vunpack.c.l.b16 %v5226
    %v5264 = vunpack.c.l.b16 %v5227
    %v5265 = vpack.c.b16 %v5250, %v5249
    %v5266 = vpack.c.b16 %v5252, %v5251
    %v5267 = vpack.c.b16 %v5254, %v5253
    %v5268 = vpack.c.b16 %v5256, %v5255
    %v5269 = vpack.c.b16 %v5258, %v5257
    %v5270 = vpack.c.b16 %v5260, %v5259
    %v5271 = vpack.c.b16 %v5262, %v5261
    %v5272 = vpack.c.b16 %v5264, %v5263
    %5281 = vmatprep.subr.bf16.mxu0 0
    %5282 = vmatpush1.bf16.msra.mxu0 %v5272
    %5283 = vmatprep.subr.bf16.mxu0 0
    %5284 = vmatpush1.bf16.msra.mxu0 %v5271
    %5285 = vmatprep.subr.bf16.mxu0 0
    %5286 = vmatpush1.bf16.msra.mxu0 %v5270
    %5287 = vmatprep.subr.bf16.mxu0 0
    %5288 = vmatpush1.bf16.msra.mxu0 %v5269
    %5289 = vmatprep.subr.bf16.mxu0 0
    %5290 = vmatpush1.bf16.msra.mxu0 %v5268
    %5291 = vmatprep.subr.bf16.mxu0 0
    %5292 = vmatpush1.bf16.msra.mxu0 %v5267
    %5293 = vmatprep.subr.bf16.mxu0 0
    %5294 = vmatpush1.bf16.msra.mxu0 %v5266
    %5295 = vmatprep.subr.bf16.mxu0 0
    %5296 = vmatpush1.bf16.msra.mxu0 %v5265
    %5297 = vmatprep.subr.bf16.mxu0 0
    %5298 = vmatpush2.bf16.msra.mxu0 0
    %5299 = vmatprep.subr.bf16.mxu0 0
    %5300 = vmatpush2.bf16.msra.mxu0 0
    %5301 = vmatprep.subr.bf16.mxu0 0
    %5302 = vmatpush2.bf16.msra.mxu0 0
    %5303 = vmatprep.subr.bf16.mxu0 0
    %5304 = vmatpush2.bf16.msra.mxu0 0
    %5305 = vmatprep.subr.bf16.mxu0 0
    %5306 = vmatpush2.bf16.msra.mxu0 0
    %5307 = vmatprep.subr.bf16.mxu0 0
    %5308 = vmatpush2.bf16.msra.mxu0 0
    %5309 = vmatprep.subr.bf16.mxu0 0
    %5310 = vmatpush2.bf16.msra.mxu0 0
    %5311 = vmatprep.subr.bf16.mxu0 0
    %5312 = vmatpush2.bf16.msra.mxu0 0
    %5313 = vmatprep.mubr.bf16.mxu0 0
    %5314 = vmatmul.mubr.bf16.gmra.mxu0 %v3771
    %v5315 = vpop.f32.mrf.mxu0
    %v5316 = vadd.f32 0.0, %v5315
    %v5317 = vpop.f32.mrf.mxu0
    %v5318 = vpop.f32.mrf.mxu0
    %v5319 = vadd.f32 0.0, %v5318
    %v5320 = vpop.f32.mrf.mxu0
    %5321 = vdwg.mxu0
    %v5322 = vpack.c.bf16 %v5319, %v5316
    %v5327 = vunpack.c.l.b16 %v5229
    %v5328 = vunpack.c.l.b16 %v5230
    %v5329 = vunpack.c.l.b16 %v5231
    %v5330 = vunpack.c.l.b16 %v5232
    %v5331 = vpack.c.b16 %v5328, %v5327
    %v5332 = vpack.c.b16 %v5330, %v5329
    %v5334 = vsel %vm4004, %v5331, 0
    %v5337 = vsel %vm4004, %v5332, 0
    %5339 = vmatprep.subr.bf16.mxu0 0
    %5340 = vmatpush1.bf16.msra.mxu0 0
    %5341 = vmatprep.subr.bf16.mxu0 0
    %5342 = vmatpush1.bf16.msra.mxu0 0
    %5343 = vmatprep.subr.bf16.mxu0 0
    %5344 = vmatpush1.bf16.msra.mxu0 0
    %5345 = vmatprep.subr.bf16.mxu0 0
    %5346 = vmatpush1.bf16.msra.mxu0 0
    %5347 = vmatprep.subr.bf16.mxu0 0
    %5348 = vmatpush1.bf16.msra.mxu0 0
    %5349 = vmatprep.subr.bf16.mxu0 0
    %5350 = vmatpush1.bf16.msra.mxu0 0
    %5351 = vmatprep.subr.bf16.mxu0 0
    %5352 = vmatpush1.bf16.msra.mxu0 0
    %5353 = vmatprep.subr.bf16.mxu0 0
    %5354 = vmatpush1.bf16.msra.mxu0 %v5322
    %5355 = vmatprep.subr.bf16.mxu0 0
    %5356 = vmatpush2.bf16.msra.mxu0 0
    %5357 = vmatprep.subr.bf16.mxu0 0
    %5358 = vmatpush2.bf16.msra.mxu0 0
    %5359 = vmatprep.subr.bf16.mxu0 0
    %5360 = vmatpush2.bf16.msra.mxu0 0
    %5361 = vmatprep.subr.bf16.mxu0 0
    %5362 = vmatpush2.bf16.msra.mxu0 0
    %5363 = vmatprep.subr.bf16.mxu0 0
    %5364 = vmatpush2.bf16.msra.mxu0 0
    %5365 = vmatprep.subr.bf16.mxu0 0
    %5366 = vmatpush2.bf16.msra.mxu0 0
    %5367 = vmatprep.subr.bf16.mxu0 0
    %5368 = vmatpush2.bf16.msra.mxu0 0
    %5369 = vmatprep.subr.bf16.mxu0 0
    %5370 = vmatpush2.bf16.msra.mxu0 0
    %5371 = vmatprep.mubr.bf16.mxu0 0
    %5372 = vmatmul.mubr.bf16.gmra.mxu0 %v5334
    %v5373 = vpop.f32.mrf.mxu0
    %v5374 = vadd.f32 0.0, %v5373
    %v5375 = vpop.f32.mrf.mxu0
    %v5376 = vpop.f32.mrf.mxu0
    %v5377 = vadd.f32 0.0, %v5376
    %v5378 = vpop.f32.mrf.mxu0
    %5379 = vmatprep.mubr.bf16.mxu0 0
    %5380 = vmatmul.mubr.bf16.gmra.mxu0 %v5337
    %v5381 = vpop.f32.mrf.mxu0
    %v5382 = vadd.f32 0.0, %v5381
    %v5383 = vpop.f32.mrf.mxu0
    %v5384 = vpop.f32.mrf.mxu0
    %v5385 = vadd.f32 0.0, %v5384
    %v5386 = vpop.f32.mrf.mxu0
    %5387 = vdwg.mxu0
    %v5388 = vadd.f32 %v5207, %v5374
    %v5389 = vadd.f32 %v5208, %v5377
    %v5390 = vadd.f32 %v5209, %v5382
    %v5391 = vadd.f32 %v5210, %v5385
    %v5392 = vld [vmem:[%s6] sm:$0xff]
    %v5393 = vld [vmem:[%s6 + $0x8] sm:$0xff]
    %v5394 = vld [vmem:[%s6 + $0x10] sm:$0xff]
    %v5395 = vld [vmem:[%s6 + $0x18] sm:$0xff]
    %5397 = vset.pattern.permute.xlu0 0
    %5398 = vperm.xlu0 %5397, %v5392
    %v5399 = vpop.permute.xlu0 %5398
    %5402 = vset.pattern.permute.xlu0 0
    %5403 = vperm.xlu0 %5402, %v5393
    %v5404 = vpop.permute.xlu0 %5403
    %5407 = vset.pattern.permute.xlu0 0
    %5408 = vperm.xlu0 %5407, %v5394
    %v5409 = vpop.permute.xlu0 %5408
    %5412 = vset.pattern.permute.xlu0 0
    %5413 = vperm.xlu0 %5412, %v5395
    %v5414 = vpop.permute.xlu0 %5413
    %v5416 = vadd.f32 %v5388, %v5399
    %v5417 = vadd.f32 %v5389, %v5404
    %v5418 = vadd.f32 %v5390, %v5409
    %v5419 = vadd.f32 %v5391, %v5414
    %vm5420 = vcmp.ge.f32.partialorder %v5416, 0.0
    %vm5421 = vcmp.ge.f32.partialorder %v5417, 0.0
    %vm5422 = vcmp.ge.f32.partialorder %v5418, 0.0
    %vm5423 = vcmp.ge.f32.partialorder %v5419, 0.0
    %v5424 = vmul.f32 %v5416, 0.2
    %v5425 = vmul.f32 %v5417, 0.2
    %v5426 = vmul.f32 %v5418, 0.2
    %v5427 = vmul.f32 %v5419, 0.2
    %v5428 = vsel %vm5420, %v5416, %v5424
    %v5429 = vsel %vm5421, %v5417, %v5425
    %v5430 = vsel %vm5422, %v5418, %v5426
    %v5431 = vsel %vm5423, %v5419, %v5427
    %v5432 = vpack.c.bf16 %v5429, %v5428
    %v5433 = vpack.c.bf16 %v5431, %v5430
    %v5434 = vld [vmem:[%s7] sm:$0xf]
    %v5435 = vld [vmem:[%s7 + $0x4] sm:$0xf]
    %v5436 = vld [vmem:[%s7 + $0x8] sm:$0xf]
    %v5437 = vld [vmem:[%s7 + $0xc] sm:$0xf]
    %v5438 = vld [vmem:[#allocation4] sm:$0xf]
    %v5439 = vld [vmem:[#allocation4 + $0x4] sm:$0xf]
    %v5440 = vld [vmem:[#allocation4 + $0x8] sm:$0xf]
    %v5441 = vld [vmem:[#allocation4 + $0xc] sm:$0xf]
    %v5446 = vunpack.c.l.b16 %v5434
    %v5447 = vunpack.c.l.b16 %v5435
    %v5448 = vunpack.c.l.b16 %v5436
    %v5449 = vunpack.c.l.b16 %v5437
    %v5450 = vpack.c.b16 %v5447, %v5446
    %v5451 = vpack.c.b16 %v5449, %v5448
    %vm5454 = vcmask 261120
    %v5456 = vsel %vm5454, %v5432, 0
    %v5459 = vsel %vm5454, %v5433, 0
    %5461 = vmatprep.subr.bf16.mxu0 0
    %5462 = vmatpush1.bf16.msra.mxu0 0
    %5463 = vmatprep.subr.bf16.mxu0 0
    %5464 = vmatpush1.bf16.msra.mxu0 0
    %5465 = vmatprep.subr.bf16.mxu0 0
    %5466 = vmatpush1.bf16.msra.mxu0 0
    %5467 = vmatprep.subr.bf16.mxu0 0
    %5468 = vmatpush1.bf16.msra.mxu0 0
    %5469 = vmatprep.subr.bf16.mxu0 0
    %5470 = vmatpush1.bf16.msra.mxu0 0
    %5471 = vmatprep.subr.bf16.mxu0 0
    %5472 = vmatpush1.bf16.msra.mxu0 0
    %5473 = vmatprep.subr.bf16.mxu0 0
    %5474 = vmatpush1.bf16.msra.mxu0 %v5451
    %5475 = vmatprep.subr.bf16.mxu0 0
    %5476 = vmatpush1.bf16.msra.mxu0 %v5450
    %5477 = vmatprep.subr.bf16.mxu0 0
    %5478 = vmatpush2.bf16.msra.mxu0 0
    %5479 = vmatprep.subr.bf16.mxu0 0
    %5480 = vmatpush2.bf16.msra.mxu0 0
    %5481 = vmatprep.subr.bf16.mxu0 0
    %5482 = vmatpush2.bf16.msra.mxu0 0
    %5483 = vmatprep.subr.bf16.mxu0 0
    %5484 = vmatpush2.bf16.msra.mxu0 0
    %5485 = vmatprep.subr.bf16.mxu0 0
    %5486 = vmatpush2.bf16.msra.mxu0 0
    %5487 = vmatprep.subr.bf16.mxu0 0
    %5488 = vmatpush2.bf16.msra.mxu0 0
    %5489 = vmatprep.subr.bf16.mxu0 0
    %5490 = vmatpush2.bf16.msra.mxu0 0
    %5491 = vmatprep.subr.bf16.mxu0 0
    %5492 = vmatpush2.bf16.msra.mxu0 0
    %5493 = vmatprep.mubr.bf16.mxu0 0
    %5494 = vmatmul.mubr.bf16.gmra.mxu0 %v5456
    %v5495 = vpop.f32.mrf.mxu0
    %v5496 = vadd.f32 0.0, %v5495
    %v5497 = vpop.f32.mrf.mxu0
    %v5498 = vpop.f32.mrf.mxu0
    %v5499 = vadd.f32 0.0, %v5498
    %v5500 = vpop.f32.mrf.mxu0
    %5501 = vmatprep.mubr.bf16.mxu0 0
    %5502 = vmatmul.mubr.bf16.gmra.mxu0 %v5459
    %v5503 = vpop.f32.mrf.mxu0
    %v5504 = vadd.f32 0.0, %v5503
    %v5505 = vpop.f32.mrf.mxu0
    %v5506 = vpop.f32.mrf.mxu0
    %v5507 = vadd.f32 0.0, %v5506
    %v5508 = vpop.f32.mrf.mxu0
    %5509 = vdwg.mxu0
    %v5510 = vpack.c.bf16 %v5499, %v5496
    %v5511 = vpack.c.bf16 %v5507, %v5504
    %s5512 = scalar_lea.vmem %s7, 16
    %v5513 = vld [vmem:[%s5512] sm:$0xf]
    %v5514 = vld [vmem:[%s5512 + $0x4] sm:$0xf]
    %v5515 = vld [vmem:[%s5512 + $0x8] sm:$0xf]
    %v5516 = vld [vmem:[%s5512 + $0xc] sm:$0xf]
    %s5517 = scalar_lea.vmem [#allocation4], 16
    %v5518 = vld [vmem:[%s5517] sm:$0xf]
    %v5519 = vld [vmem:[%s5517 + $0x4] sm:$0xf]
    %v5520 = vld [vmem:[%s5517 + $0x8] sm:$0xf]
    %v5521 = vld [vmem:[%s5517 + $0xc] sm:$0xf]
    %v5526 = vunpack.c.l.b16 %v5513
    %v5527 = vunpack.c.l.b16 %v5514
    %v5528 = vunpack.c.l.b16 %v5515
    %v5529 = vunpack.c.l.b16 %v5516
    %v5530 = vpack.c.b16 %v5527, %v5526
    %v5531 = vpack.c.b16 %v5529, %v5528
    %5534 = vmatprep.subr.bf16.mxu0 0
    %5535 = vmatpush1.bf16.msra.mxu0 0
    %5536 = vmatprep.subr.bf16.mxu0 0
    %5537 = vmatpush1.bf16.msra.mxu0 0
    %5538 = vmatprep.subr.bf16.mxu0 0
    %5539 = vmatpush1.bf16.msra.mxu0 0
    %5540 = vmatprep.subr.bf16.mxu0 0
    %5541 = vmatpush1.bf16.msra.mxu0 0
    %5542 = vmatprep.subr.bf16.mxu0 0
    %5543 = vmatpush1.bf16.msra.mxu0 0
    %5544 = vmatprep.subr.bf16.mxu0 0
    %5545 = vmatpush1.bf16.msra.mxu0 0
    %5546 = vmatprep.subr.bf16.mxu0 0
    %5547 = vmatpush1.bf16.msra.mxu0 %v5531
    %5548 = vmatprep.subr.bf16.mxu0 0
    %5549 = vmatpush1.bf16.msra.mxu0 %v5530
    %5550 = vmatprep.subr.bf16.mxu0 0
    %5551 = vmatpush2.bf16.msra.mxu0 0
    %5552 = vmatprep.subr.bf16.mxu0 0
    %5553 = vmatpush2.bf16.msra.mxu0 0
    %5554 = vmatprep.subr.bf16.mxu0 0
    %5555 = vmatpush2.bf16.msra.mxu0 0
    %5556 = vmatprep.subr.bf16.mxu0 0
    %5557 = vmatpush2.bf16.msra.mxu0 0
    %5558 = vmatprep.subr.bf16.mxu0 0
    %5559 = vmatpush2.bf16.msra.mxu0 0
    %5560 = vmatprep.subr.bf16.mxu0 0
    %5561 = vmatpush2.bf16.msra.mxu0 0
    %5562 = vmatprep.subr.bf16.mxu0 0
    %5563 = vmatpush2.bf16.msra.mxu0 0
    %5564 = vmatprep.subr.bf16.mxu0 0
    %5565 = vmatpush2.bf16.msra.mxu0 0
    %5566 = vmatprep.mubr.bf16.mxu0 0
    %5567 = vmatmul.mubr.bf16.gmra.mxu0 %v5456
    %v5568 = vpop.f32.mrf.mxu0
    %v5569 = vadd.f32 0.0, %v5568
    %v5570 = vpop.f32.mrf.mxu0
    %v5571 = vpop.f32.mrf.mxu0
    %v5572 = vadd.f32 0.0, %v5571
    %v5573 = vpop.f32.mrf.mxu0
    %5574 = vmatprep.mubr.bf16.mxu0 0
    %5575 = vmatmul.mubr.bf16.gmra.mxu0 %v5459
    %v5576 = vpop.f32.mrf.mxu0
    %v5577 = vadd.f32 0.0, %v5576
    %v5578 = vpop.f32.mrf.mxu0
    %v5579 = vpop.f32.mrf.mxu0
    %v5580 = vadd.f32 0.0, %v5579
    %v5581 = vpop.f32.mrf.mxu0
    %5582 = vdwg.mxu0
    %v5583 = vpack.c.bf16 %v5572, %v5569
    %v5584 = vpack.c.bf16 %v5580, %v5577
    %v5589 = vunpack.c.l.b16 %v5518
    %v5590 = vunpack.c.l.b16 %v5519
    %v5591 = vunpack.c.l.b16 %v5520
    %v5592 = vunpack.c.l.b16 %v5521
    %v5593 = vpack.c.b16 %v5590, %v5589
    %v5594 = vpack.c.b16 %v5592, %v5591
    %v5596 = vsel %vm5454, %v5593, 0
    %v5599 = vsel %vm5454, %v5594, 0
    %5601 = vmatprep.subr.bf16.mxu0 0
    %5602 = vmatpush1.bf16.msra.mxu0 0
    %5603 = vmatprep.subr.bf16.mxu0 0
    %5604 = vmatpush1.bf16.msra.mxu0 0
    %5605 = vmatprep.subr.bf16.mxu0 0
    %5606 = vmatpush1.bf16.msra.mxu0 0
    %5607 = vmatprep.subr.bf16.mxu0 0
    %5608 = vmatpush1.bf16.msra.mxu0 0
    %5609 = vmatprep.subr.bf16.mxu0 0
    %5610 = vmatpush1.bf16.msra.mxu0 0
    %5611 = vmatprep.subr.bf16.mxu0 0
    %5612 = vmatpush1.bf16.msra.mxu0 0
    %5613 = vmatprep.subr.bf16.mxu0 0
    %5614 = vmatpush1.bf16.msra.mxu0 %v5584
    %5615 = vmatprep.subr.bf16.mxu0 0
    %5616 = vmatpush1.bf16.msra.mxu0 %v5583
    %5617 = vmatprep.subr.bf16.mxu0 0
    %5618 = vmatpush2.bf16.msra.mxu0 0
    %5619 = vmatprep.subr.bf16.mxu0 0
    %5620 = vmatpush2.bf16.msra.mxu0 0
    %5621 = vmatprep.subr.bf16.mxu0 0
    %5622 = vmatpush2.bf16.msra.mxu0 0
    %5623 = vmatprep.subr.bf16.mxu0 0
    %5624 = vmatpush2.bf16.msra.mxu0 0
    %5625 = vmatprep.subr.bf16.mxu0 0
    %5626 = vmatpush2.bf16.msra.mxu0 0
    %5627 = vmatprep.subr.bf16.mxu0 0
    %5628 = vmatpush2.bf16.msra.mxu0 0
    %5629 = vmatprep.subr.bf16.mxu0 0
    %5630 = vmatpush2.bf16.msra.mxu0 0
    %5631 = vmatprep.subr.bf16.mxu0 0
    %5632 = vmatpush2.bf16.msra.mxu0 0
    %5633 = vmatprep.mubr.bf16.mxu0 0
    %5634 = vmatmul.mubr.bf16.gmra.mxu0 %v5596
    %v5635 = vpop.f32.mrf.mxu0
    %v5636 = vadd.f32 0.0, %v5635
    %v5637 = vpop.f32.mrf.mxu0
    %v5638 = vpop.f32.mrf.mxu0
    %v5639 = vadd.f32 0.0, %v5638
    %v5640 = vpop.f32.mrf.mxu0
    %5641 = vmatprep.mubr.bf16.mxu0 0
    %5642 = vmatmul.mubr.bf16.gmra.mxu0 %v5599
    %v5643 = vpop.f32.mrf.mxu0
    %v5644 = vadd.f32 0.0, %v5643
    %v5645 = vpop.f32.mrf.mxu0
    %v5646 = vpop.f32.mrf.mxu0
    %v5647 = vadd.f32 0.0, %v5646
    %v5648 = vpop.f32.mrf.mxu0
    %5649 = vdwg.mxu0
    %v5654 = vunpack.c.l.b16 %v5438
    %v5655 = vunpack.c.l.b16 %v5439
    %v5656 = vunpack.c.l.b16 %v5440
    %v5657 = vunpack.c.l.b16 %v5441
    %v5658 = vpack.c.b16 %v5655, %v5654
    %v5659 = vpack.c.b16 %v5657, %v5656
    %v5661 = vsel %vm5454, %v5658, 0
    %v5664 = vsel %vm5454, %v5659, 0
    %5666 = vmatprep.subr.bf16.mxu0 0
    %5667 = vmatpush1.bf16.msra.mxu0 0
    %5668 = vmatprep.subr.bf16.mxu0 0
    %5669 = vmatpush1.bf16.msra.mxu0 0
    %5670 = vmatprep.subr.bf16.mxu0 0
    %5671 = vmatpush1.bf16.msra.mxu0 0
    %5672 = vmatprep.subr.bf16.mxu0 0
    %5673 = vmatpush1.bf16.msra.mxu0 0
    %5674 = vmatprep.subr.bf16.mxu0 0
    %5675 = vmatpush1.bf16.msra.mxu0 0
    %5676 = vmatprep.subr.bf16.mxu0 0
    %5677 = vmatpush1.bf16.msra.mxu0 0
    %5678 = vmatprep.subr.bf16.mxu0 0
    %5679 = vmatpush1.bf16.msra.mxu0 %v5511
    %5680 = vmatprep.subr.bf16.mxu0 0
    %5681 = vmatpush1.bf16.msra.mxu0 %v5510
    %5682 = vmatprep.subr.bf16.mxu0 0
    %5683 = vmatpush2.bf16.msra.mxu0 0
    %5684 = vmatprep.subr.bf16.mxu0 0
    %5685 = vmatpush2.bf16.msra.mxu0 0
    %5686 = vmatprep.subr.bf16.mxu0 0
    %5687 = vmatpush2.bf16.msra.mxu0 0
    %5688 = vmatprep.subr.bf16.mxu0 0
    %5689 = vmatpush2.bf16.msra.mxu0 0
    %5690 = vmatprep.subr.bf16.mxu0 0
    %5691 = vmatpush2.bf16.msra.mxu0 0
    %5692 = vmatprep.subr.bf16.mxu0 0
    %5693 = vmatpush2.bf16.msra.mxu0 0
    %5694 = vmatprep.subr.bf16.mxu0 0
    %5695 = vmatpush2.bf16.msra.mxu0 0
    %5696 = vmatprep.subr.bf16.mxu0 0
    %5697 = vmatpush2.bf16.msra.mxu0 0
    %5698 = vmatprep.mubr.bf16.mxu0 0
    %5699 = vmatmul.mubr.bf16.gmra.mxu0 %v5661
    %v5700 = vpop.f32.mrf.mxu0
    %v5701 = vadd.f32 %v5636, %v5700
    %v5702 = vpop.f32.mrf.mxu0
    %v5703 = vpop.f32.mrf.mxu0
    %v5704 = vadd.f32 %v5639, %v5703
    %v5705 = vpop.f32.mrf.mxu0
    %5706 = vmatprep.mubr.bf16.mxu0 0
    %5707 = vmatmul.mubr.bf16.gmra.mxu0 %v5664
    %v5708 = vpop.f32.mrf.mxu0
    %v5709 = vadd.f32 %v5644, %v5708
    %v5710 = vpop.f32.mrf.mxu0
    %v5711 = vpop.f32.mrf.mxu0
    %v5712 = vadd.f32 %v5647, %v5711
    %v5713 = vpop.f32.mrf.mxu0
    %5714 = vdwg.mxu0
    %s5715 = scalar_lea.vmem %s7, 32
    %v5716 = vld [vmem:[%s5715] sm:$0xf]
    %v5717 = vld [vmem:[%s5715 + $0x4] sm:$0xf]
    %v5718 = vld [vmem:[%s5715 + $0x8] sm:$0xf]
    %v5719 = vld [vmem:[%s5715 + $0xc] sm:$0xf]
    %s5720 = scalar_lea.vmem [#allocation4], 32
    %v5721 = vld [vmem:[%s5720] sm:$0xf]
    %v5722 = vld [vmem:[%s5720 + $0x4] sm:$0xf]
    %v5723 = vld [vmem:[%s5720 + $0x8] sm:$0xf]
    %v5724 = vld [vmem:[%s5720 + $0xc] sm:$0xf]
    %v5729 = vunpack.c.l.b16 %v5716
    %v5730 = vunpack.c.l.b16 %v5717
    %v5731 = vunpack.c.l.b16 %v5718
    %v5732 = vunpack.c.l.b16 %v5719
    %v5733 = vpack.c.b16 %v5730, %v5729
    %v5734 = vpack.c.b16 %v5732, %v5731
    %5737 = vmatprep.subr.bf16.mxu0 0
    %5738 = vmatpush1.bf16.msra.mxu0 0
    %5739 = vmatprep.subr.bf16.mxu0 0
    %5740 = vmatpush1.bf16.msra.mxu0 0
    %5741 = vmatprep.subr.bf16.mxu0 0
    %5742 = vmatpush1.bf16.msra.mxu0 0
    %5743 = vmatprep.subr.bf16.mxu0 0
    %5744 = vmatpush1.bf16.msra.mxu0 0
    %5745 = vmatprep.subr.bf16.mxu0 0
    %5746 = vmatpush1.bf16.msra.mxu0 0
    %5747 = vmatprep.subr.bf16.mxu0 0
    %5748 = vmatpush1.bf16.msra.mxu0 0
    %5749 = vmatprep.subr.bf16.mxu0 0
    %5750 = vmatpush1.bf16.msra.mxu0 %v5734
    %5751 = vmatprep.subr.bf16.mxu0 0
    %5752 = vmatpush1.bf16.msra.mxu0 %v5733
    %5753 = vmatprep.subr.bf16.mxu0 0
    %5754 = vmatpush2.bf16.msra.mxu0 0
    %5755 = vmatprep.subr.bf16.mxu0 0
    %5756 = vmatpush2.bf16.msra.mxu0 0
    %5757 = vmatprep.subr.bf16.mxu0 0
    %5758 = vmatpush2.bf16.msra.mxu0 0
    %5759 = vmatprep.subr.bf16.mxu0 0
    %5760 = vmatpush2.bf16.msra.mxu0 0
    %5761 = vmatprep.subr.bf16.mxu0 0
    %5762 = vmatpush2.bf16.msra.mxu0 0
    %5763 = vmatprep.subr.bf16.mxu0 0
    %5764 = vmatpush2.bf16.msra.mxu0 0
    %5765 = vmatprep.subr.bf16.mxu0 0
    %5766 = vmatpush2.bf16.msra.mxu0 0
    %5767 = vmatprep.subr.bf16.mxu0 0
    %5768 = vmatpush2.bf16.msra.mxu0 0
    %5769 = vmatprep.mubr.bf16.mxu0 0
    %5770 = vmatmul.mubr.bf16.gmra.mxu0 %v5456
    %v5771 = vpop.f32.mrf.mxu0
    %v5772 = vadd.f32 0.0, %v5771
    %v5773 = vpop.f32.mrf.mxu0
    %v5774 = vpop.f32.mrf.mxu0
    %v5775 = vadd.f32 0.0, %v5774
    %v5776 = vpop.f32.mrf.mxu0
    %5777 = vmatprep.mubr.bf16.mxu0 0
    %5778 = vmatmul.mubr.bf16.gmra.mxu0 %v5459
    %v5779 = vpop.f32.mrf.mxu0
    %v5780 = vadd.f32 0.0, %v5779
    %v5781 = vpop.f32.mrf.mxu0
    %v5782 = vpop.f32.mrf.mxu0
    %v5783 = vadd.f32 0.0, %v5782
    %v5784 = vpop.f32.mrf.mxu0
    %5785 = vdwg.mxu0
    %v5786 = vpack.c.bf16 %v5775, %v5772
    %v5787 = vpack.c.bf16 %v5783, %v5780
    %v5792 = vunpack.c.l.b16 %v5721
    %v5793 = vunpack.c.l.b16 %v5722
    %v5794 = vunpack.c.l.b16 %v5723
    %v5795 = vunpack.c.l.b16 %v5724
    %v5796 = vpack.c.b16 %v5793, %v5792
    %v5797 = vpack.c.b16 %v5795, %v5794
    %v5799 = vsel %vm5454, %v5796, 0
    %v5802 = vsel %vm5454, %v5797, 0
    %5804 = vmatprep.subr.bf16.mxu0 0
    %5805 = vmatpush1.bf16.msra.mxu0 0
    %5806 = vmatprep.subr.bf16.mxu0 0
    %5807 = vmatpush1.bf16.msra.mxu0 0
    %5808 = vmatprep.subr.bf16.mxu0 0
    %5809 = vmatpush1.bf16.msra.mxu0 0
    %5810 = vmatprep.subr.bf16.mxu0 0
    %5811 = vmatpush1.bf16.msra.mxu0 0
    %5812 = vmatprep.subr.bf16.mxu0 0
    %5813 = vmatpush1.bf16.msra.mxu0 0
    %5814 = vmatprep.subr.bf16.mxu0 0
    %5815 = vmatpush1.bf16.msra.mxu0 0
    %5816 = vmatprep.subr.bf16.mxu0 0
    %5817 = vmatpush1.bf16.msra.mxu0 %v5787
    %5818 = vmatprep.subr.bf16.mxu0 0
    %5819 = vmatpush1.bf16.msra.mxu0 %v5786
    %5820 = vmatprep.subr.bf16.mxu0 0
    %5821 = vmatpush2.bf16.msra.mxu0 0
    %5822 = vmatprep.subr.bf16.mxu0 0
    %5823 = vmatpush2.bf16.msra.mxu0 0
    %5824 = vmatprep.subr.bf16.mxu0 0
    %5825 = vmatpush2.bf16.msra.mxu0 0
    %5826 = vmatprep.subr.bf16.mxu0 0
    %5827 = vmatpush2.bf16.msra.mxu0 0
    %5828 = vmatprep.subr.bf16.mxu0 0
    %5829 = vmatpush2.bf16.msra.mxu0 0
    %5830 = vmatprep.subr.bf16.mxu0 0
    %5831 = vmatpush2.bf16.msra.mxu0 0
    %5832 = vmatprep.subr.bf16.mxu0 0
    %5833 = vmatpush2.bf16.msra.mxu0 0
    %5834 = vmatprep.subr.bf16.mxu0 0
    %5835 = vmatpush2.bf16.msra.mxu0 0
    %5836 = vmatprep.mubr.bf16.mxu0 0
    %5837 = vmatmul.mubr.bf16.gmra.mxu0 %v5799
    %v5838 = vpop.f32.mrf.mxu0
    %v5839 = vadd.f32 0.0, %v5838
    %v5840 = vpop.f32.mrf.mxu0
    %v5841 = vpop.f32.mrf.mxu0
    %v5842 = vadd.f32 0.0, %v5841
    %v5843 = vpop.f32.mrf.mxu0
    %5844 = vmatprep.mubr.bf16.mxu0 0
    %5845 = vmatmul.mubr.bf16.gmra.mxu0 %v5802
    %v5846 = vpop.f32.mrf.mxu0
    %v5847 = vadd.f32 0.0, %v5846
    %v5848 = vpop.f32.mrf.mxu0
    %v5849 = vpop.f32.mrf.mxu0
    %v5850 = vadd.f32 0.0, %v5849
    %v5851 = vpop.f32.mrf.mxu0
    %5852 = vdwg.mxu0
    %v5853 = vadd.f32 %v5701, %v5839
    %v5854 = vadd.f32 %v5704, %v5842
    %v5855 = vadd.f32 %v5709, %v5847
    %v5856 = vadd.f32 %v5712, %v5850
    %s5857 = scalar_lea.vmem %s7, 48
    %v5858 = vld [vmem:[%s5857] sm:$0xf]
    %v5859 = vld [vmem:[%s5857 + $0x4] sm:$0xf]
    %v5860 = vld [vmem:[%s5857 + $0x8] sm:$0xf]
    %v5861 = vld [vmem:[%s5857 + $0xc] sm:$0xf]
    %s5862 = scalar_lea.vmem [#allocation4], 48
    %v5863 = vld [vmem:[%s5862] sm:$0xf]
    %v5864 = vld [vmem:[%s5862 + $0x4] sm:$0xf]
    %v5865 = vld [vmem:[%s5862 + $0x8] sm:$0xf]
    %v5866 = vld [vmem:[%s5862 + $0xc] sm:$0xf]
    %v5871 = vunpack.c.l.b16 %v5858
    %v5872 = vunpack.c.l.b16 %v5859
    %v5873 = vunpack.c.l.b16 %v5860
    %v5874 = vunpack.c.l.b16 %v5861
    %v5875 = vpack.c.b16 %v5872, %v5871
    %v5876 = vpack.c.b16 %v5874, %v5873
    %5879 = vmatprep.subr.bf16.mxu0 0
    %5880 = vmatpush1.bf16.msra.mxu0 0
    %5881 = vmatprep.subr.bf16.mxu0 0
    %5882 = vmatpush1.bf16.msra.mxu0 0
    %5883 = vmatprep.subr.bf16.mxu0 0
    %5884 = vmatpush1.bf16.msra.mxu0 0
    %5885 = vmatprep.subr.bf16.mxu0 0
    %5886 = vmatpush1.bf16.msra.mxu0 0
    %5887 = vmatprep.subr.bf16.mxu0 0
    %5888 = vmatpush1.bf16.msra.mxu0 0
    %5889 = vmatprep.subr.bf16.mxu0 0
    %5890 = vmatpush1.bf16.msra.mxu0 0
    %5891 = vmatprep.subr.bf16.mxu0 0
    %5892 = vmatpush1.bf16.msra.mxu0 %v5876
    %5893 = vmatprep.subr.bf16.mxu0 0
    %5894 = vmatpush1.bf16.msra.mxu0 %v5875
    %5895 = vmatprep.subr.bf16.mxu0 0
    %5896 = vmatpush2.bf16.msra.mxu0 0
    %5897 = vmatprep.subr.bf16.mxu0 0
    %5898 = vmatpush2.bf16.msra.mxu0 0
    %5899 = vmatprep.subr.bf16.mxu0 0
    %5900 = vmatpush2.bf16.msra.mxu0 0
    %5901 = vmatprep.subr.bf16.mxu0 0
    %5902 = vmatpush2.bf16.msra.mxu0 0
    %5903 = vmatprep.subr.bf16.mxu0 0
    %5904 = vmatpush2.bf16.msra.mxu0 0
    %5905 = vmatprep.subr.bf16.mxu0 0
    %5906 = vmatpush2.bf16.msra.mxu0 0
    %5907 = vmatprep.subr.bf16.mxu0 0
    %5908 = vmatpush2.bf16.msra.mxu0 0
    %5909 = vmatprep.subr.bf16.mxu0 0
    %5910 = vmatpush2.bf16.msra.mxu0 0
    %5911 = vmatprep.mubr.bf16.mxu0 0
    %5912 = vmatmul.mubr.bf16.gmra.mxu0 %v5456
    %v5913 = vpop.f32.mrf.mxu0
    %v5914 = vadd.f32 0.0, %v5913
    %v5915 = vpop.f32.mrf.mxu0
    %v5916 = vpop.f32.mrf.mxu0
    %v5917 = vadd.f32 0.0, %v5916
    %v5918 = vpop.f32.mrf.mxu0
    %5919 = vmatprep.mubr.bf16.mxu0 0
    %5920 = vmatmul.mubr.bf16.gmra.mxu0 %v5459
    %v5921 = vpop.f32.mrf.mxu0
    %v5922 = vadd.f32 0.0, %v5921
    %v5923 = vpop.f32.mrf.mxu0
    %v5924 = vpop.f32.mrf.mxu0
    %v5925 = vadd.f32 0.0, %v5924
    %v5926 = vpop.f32.mrf.mxu0
    %5927 = vdwg.mxu0
    %v5928 = vpack.c.bf16 %v5917, %v5914
    %v5929 = vpack.c.bf16 %v5925, %v5922
    %v5934 = vunpack.c.l.b16 %v5863
    %v5935 = vunpack.c.l.b16 %v5864
    %v5936 = vunpack.c.l.b16 %v5865
    %v5937 = vunpack.c.l.b16 %v5866
    %v5938 = vpack.c.b16 %v5935, %v5934
    %v5939 = vpack.c.b16 %v5937, %v5936
    %v5941 = vsel %vm5454, %v5938, 0
    %v5944 = vsel %vm5454, %v5939, 0
    %5946 = vmatprep.subr.bf16.mxu0 0
    %5947 = vmatpush1.bf16.msra.mxu0 0
    %5948 = vmatprep.subr.bf16.mxu0 0
    %5949 = vmatpush1.bf16.msra.mxu0 0
    %5950 = vmatprep.subr.bf16.mxu0 0
    %5951 = vmatpush1.bf16.msra.mxu0 0
    %5952 = vmatprep.subr.bf16.mxu0 0
    %5953 = vmatpush1.bf16.msra.mxu0 0
    %5954 = vmatprep.subr.bf16.mxu0 0
    %5955 = vmatpush1.bf16.msra.mxu0 0
    %5956 = vmatprep.subr.bf16.mxu0 0
    %5957 = vmatpush1.bf16.msra.mxu0 0
    %5958 = vmatprep.subr.bf16.mxu0 0
    %5959 = vmatpush1.bf16.msra.mxu0 %v5929
    %5960 = vmatprep.subr.bf16.mxu0 0
    %5961 = vmatpush1.bf16.msra.mxu0 %v5928
    %5962 = vmatprep.subr.bf16.mxu0 0
    %5963 = vmatpush2.bf16.msra.mxu0 0
    %5964 = vmatprep.subr.bf16.mxu0 0
    %5965 = vmatpush2.bf16.msra.mxu0 0
    %5966 = vmatprep.subr.bf16.mxu0 0
    %5967 = vmatpush2.bf16.msra.mxu0 0
    %5968 = vmatprep.subr.bf16.mxu0 0
    %5969 = vmatpush2.bf16.msra.mxu0 0
    %5970 = vmatprep.subr.bf16.mxu0 0
    %5971 = vmatpush2.bf16.msra.mxu0 0
    %5972 = vmatprep.subr.bf16.mxu0 0
    %5973 = vmatpush2.bf16.msra.mxu0 0
    %5974 = vmatprep.subr.bf16.mxu0 0
    %5975 = vmatpush2.bf16.msra.mxu0 0
    %5976 = vmatprep.subr.bf16.mxu0 0
    %5977 = vmatpush2.bf16.msra.mxu0 0
    %5978 = vmatprep.mubr.bf16.mxu0 0
    %5979 = vmatmul.mubr.bf16.gmra.mxu0 %v5941
    %v5980 = vpop.f32.mrf.mxu0
    %v5981 = vadd.f32 0.0, %v5980
    %v5982 = vpop.f32.mrf.mxu0
    %v5983 = vpop.f32.mrf.mxu0
    %v5984 = vadd.f32 0.0, %v5983
    %v5985 = vpop.f32.mrf.mxu0
    %5986 = vmatprep.mubr.bf16.mxu0 0
    %5987 = vmatmul.mubr.bf16.gmra.mxu0 %v5944
    %v5988 = vpop.f32.mrf.mxu0
    %v5989 = vadd.f32 0.0, %v5988
    %v5990 = vpop.f32.mrf.mxu0
    %v5991 = vpop.f32.mrf.mxu0
    %v5992 = vadd.f32 0.0, %v5991
    %v5993 = vpop.f32.mrf.mxu0
    %5994 = vdwg.mxu0
    %v5995 = vadd.f32 %v5853, %v5981
    %v5996 = vadd.f32 %v5854, %v5984
    %v5997 = vadd.f32 %v5855, %v5989
    %v5998 = vadd.f32 %v5856, %v5992
    %s5999 = scalar_lea.vmem %s7, 64
    %v6000 = vld [vmem:[%s5999] sm:$0xf]
    %v6001 = vld [vmem:[%s5999 + $0x4] sm:$0xf]
    %v6002 = vld [vmem:[%s5999 + $0x8] sm:$0xf]
    %v6003 = vld [vmem:[%s5999 + $0xc] sm:$0xf]
    %s6004 = scalar_lea.vmem [#allocation4], 64
    %v6005 = vld [vmem:[%s6004] sm:$0xf]
    %v6006 = vld [vmem:[%s6004 + $0x4] sm:$0xf]
    %v6007 = vld [vmem:[%s6004 + $0x8] sm:$0xf]
    %v6008 = vld [vmem:[%s6004 + $0xc] sm:$0xf]
    %v6013 = vunpack.c.l.b16 %v6000
    %v6014 = vunpack.c.l.b16 %v6001
    %v6015 = vunpack.c.l.b16 %v6002
    %v6016 = vunpack.c.l.b16 %v6003
    %v6017 = vpack.c.b16 %v6014, %v6013
    %v6018 = vpack.c.b16 %v6016, %v6015
    %6021 = vmatprep.subr.bf16.mxu0 0
    %6022 = vmatpush1.bf16.msra.mxu0 0
    %6023 = vmatprep.subr.bf16.mxu0 0
    %6024 = vmatpush1.bf16.msra.mxu0 0
    %6025 = vmatprep.subr.bf16.mxu0 0
    %6026 = vmatpush1.bf16.msra.mxu0 0
    %6027 = vmatprep.subr.bf16.mxu0 0
    %6028 = vmatpush1.bf16.msra.mxu0 0
    %6029 = vmatprep.subr.bf16.mxu0 0
    %6030 = vmatpush1.bf16.msra.mxu0 0
    %6031 = vmatprep.subr.bf16.mxu0 0
    %6032 = vmatpush1.bf16.msra.mxu0 0
    %6033 = vmatprep.subr.bf16.mxu0 0
    %6034 = vmatpush1.bf16.msra.mxu0 %v6018
    %6035 = vmatprep.subr.bf16.mxu0 0
    %6036 = vmatpush1.bf16.msra.mxu0 %v6017
    %6037 = vmatprep.subr.bf16.mxu0 0
    %6038 = vmatpush2.bf16.msra.mxu0 0
    %6039 = vmatprep.subr.bf16.mxu0 0
    %6040 = vmatpush2.bf16.msra.mxu0 0
    %6041 = vmatprep.subr.bf16.mxu0 0
    %6042 = vmatpush2.bf16.msra.mxu0 0
    %6043 = vmatprep.subr.bf16.mxu0 0
    %6044 = vmatpush2.bf16.msra.mxu0 0
    %6045 = vmatprep.subr.bf16.mxu0 0
    %6046 = vmatpush2.bf16.msra.mxu0 0
    %6047 = vmatprep.subr.bf16.mxu0 0
    %6048 = vmatpush2.bf16.msra.mxu0 0
    %6049 = vmatprep.subr.bf16.mxu0 0
    %6050 = vmatpush2.bf16.msra.mxu0 0
    %6051 = vmatprep.subr.bf16.mxu0 0
    %6052 = vmatpush2.bf16.msra.mxu0 0
    %6053 = vmatprep.mubr.bf16.mxu0 0
    %6054 = vmatmul.mubr.bf16.gmra.mxu0 %v5456
    %v6055 = vpop.f32.mrf.mxu0
    %v6056 = vadd.f32 0.0, %v6055
    %v6057 = vpop.f32.mrf.mxu0
    %v6058 = vpop.f32.mrf.mxu0
    %v6059 = vadd.f32 0.0, %v6058
    %v6060 = vpop.f32.mrf.mxu0
    %6061 = vmatprep.mubr.bf16.mxu0 0
    %6062 = vmatmul.mubr.bf16.gmra.mxu0 %v5459
    %v6063 = vpop.f32.mrf.mxu0
    %v6064 = vadd.f32 0.0, %v6063
    %v6065 = vpop.f32.mrf.mxu0
    %v6066 = vpop.f32.mrf.mxu0
    %v6067 = vadd.f32 0.0, %v6066
    %v6068 = vpop.f32.mrf.mxu0
    %6069 = vdwg.mxu0
    %v6070 = vpack.c.bf16 %v6059, %v6056
    %v6071 = vpack.c.bf16 %v6067, %v6064
    %v6076 = vunpack.c.l.b16 %v6005
    %v6077 = vunpack.c.l.b16 %v6006
    %v6078 = vunpack.c.l.b16 %v6007
    %v6079 = vunpack.c.l.b16 %v6008
    %v6080 = vpack.c.b16 %v6077, %v6076
    %v6081 = vpack.c.b16 %v6079, %v6078
    %v6083 = vsel %vm5454, %v6080, 0
    %v6086 = vsel %vm5454, %v6081, 0
    %6088 = vmatprep.subr.bf16.mxu0 0
    %6089 = vmatpush1.bf16.msra.mxu0 0
    %6090 = vmatprep.subr.bf16.mxu0 0
    %6091 = vmatpush1.bf16.msra.mxu0 0
    %6092 = vmatprep.subr.bf16.mxu0 0
    %6093 = vmatpush1.bf16.msra.mxu0 0
    %6094 = vmatprep.subr.bf16.mxu0 0
    %6095 = vmatpush1.bf16.msra.mxu0 0
    %6096 = vmatprep.subr.bf16.mxu0 0
    %6097 = vmatpush1.bf16.msra.mxu0 0
    %6098 = vmatprep.subr.bf16.mxu0 0
    %6099 = vmatpush1.bf16.msra.mxu0 0
    %6100 = vmatprep.subr.bf16.mxu0 0
    %6101 = vmatpush1.bf16.msra.mxu0 %v6071
    %6102 = vmatprep.subr.bf16.mxu0 0
    %6103 = vmatpush1.bf16.msra.mxu0 %v6070
    %6104 = vmatprep.subr.bf16.mxu0 0
    %6105 = vmatpush2.bf16.msra.mxu0 0
    %6106 = vmatprep.subr.bf16.mxu0 0
    %6107 = vmatpush2.bf16.msra.mxu0 0
    %6108 = vmatprep.subr.bf16.mxu0 0
    %6109 = vmatpush2.bf16.msra.mxu0 0
    %6110 = vmatprep.subr.bf16.mxu0 0
    %6111 = vmatpush2.bf16.msra.mxu0 0
    %6112 = vmatprep.subr.bf16.mxu0 0
    %6113 = vmatpush2.bf16.msra.mxu0 0
    %6114 = vmatprep.subr.bf16.mxu0 0
    %6115 = vmatpush2.bf16.msra.mxu0 0
    %6116 = vmatprep.subr.bf16.mxu0 0
    %6117 = vmatpush2.bf16.msra.mxu0 0
    %6118 = vmatprep.subr.bf16.mxu0 0
    %6119 = vmatpush2.bf16.msra.mxu0 0
    %6120 = vmatprep.mubr.bf16.mxu0 0
    %6121 = vmatmul.mubr.bf16.gmra.mxu0 %v6083
    %v6122 = vpop.f32.mrf.mxu0
    %v6123 = vadd.f32 0.0, %v6122
    %v6124 = vpop.f32.mrf.mxu0
    %v6125 = vpop.f32.mrf.mxu0
    %v6126 = vadd.f32 0.0, %v6125
    %v6127 = vpop.f32.mrf.mxu0
    %6128 = vmatprep.mubr.bf16.mxu0 0
    %6129 = vmatmul.mubr.bf16.gmra.mxu0 %v6086
    %v6130 = vpop.f32.mrf.mxu0
    %v6131 = vadd.f32 0.0, %v6130
    %v6132 = vpop.f32.mrf.mxu0
    %v6133 = vpop.f32.mrf.mxu0
    %v6134 = vadd.f32 0.0, %v6133
    %v6135 = vpop.f32.mrf.mxu0
    %6136 = vdwg.mxu0
    %v6137 = vadd.f32 %v5995, %v6123
    %v6138 = vadd.f32 %v5996, %v6126
    %v6139 = vadd.f32 %v5997, %v6131
    %v6140 = vadd.f32 %v5998, %v6134
    %s6141 = scalar_lea.vmem %s7, 80
    %v6142 = vld [vmem:[%s6141] sm:$0xf]
    %v6143 = vld [vmem:[%s6141 + $0x4] sm:$0xf]
    %v6144 = vld [vmem:[%s6141 + $0x8] sm:$0xf]
    %v6145 = vld [vmem:[%s6141 + $0xc] sm:$0xf]
    %s6146 = scalar_lea.vmem [#allocation4], 80
    %v6147 = vld [vmem:[%s6146] sm:$0xf]
    %v6148 = vld [vmem:[%s6146 + $0x4] sm:$0xf]
    %v6149 = vld [vmem:[%s6146 + $0x8] sm:$0xf]
    %v6150 = vld [vmem:[%s6146 + $0xc] sm:$0xf]
    %v6155 = vunpack.c.l.b16 %v6142
    %v6156 = vunpack.c.l.b16 %v6143
    %v6157 = vunpack.c.l.b16 %v6144
    %v6158 = vunpack.c.l.b16 %v6145
    %v6159 = vpack.c.b16 %v6156, %v6155
    %v6160 = vpack.c.b16 %v6158, %v6157
    %6163 = vmatprep.subr.bf16.mxu0 0
    %6164 = vmatpush1.bf16.msra.mxu0 0
    %6165 = vmatprep.subr.bf16.mxu0 0
    %6166 = vmatpush1.bf16.msra.mxu0 0
    %6167 = vmatprep.subr.bf16.mxu0 0
    %6168 = vmatpush1.bf16.msra.mxu0 0
    %6169 = vmatprep.subr.bf16.mxu0 0
    %6170 = vmatpush1.bf16.msra.mxu0 0
    %6171 = vmatprep.subr.bf16.mxu0 0
    %6172 = vmatpush1.bf16.msra.mxu0 0
    %6173 = vmatprep.subr.bf16.mxu0 0
    %6174 = vmatpush1.bf16.msra.mxu0 0
    %6175 = vmatprep.subr.bf16.mxu0 0
    %6176 = vmatpush1.bf16.msra.mxu0 %v6160
    %6177 = vmatprep.subr.bf16.mxu0 0
    %6178 = vmatpush1.bf16.msra.mxu0 %v6159
    %6179 = vmatprep.subr.bf16.mxu0 0
    %6180 = vmatpush2.bf16.msra.mxu0 0
    %6181 = vmatprep.subr.bf16.mxu0 0
    %6182 = vmatpush2.bf16.msra.mxu0 0
    %6183 = vmatprep.subr.bf16.mxu0 0
    %6184 = vmatpush2.bf16.msra.mxu0 0
    %6185 = vmatprep.subr.bf16.mxu0 0
    %6186 = vmatpush2.bf16.msra.mxu0 0
    %6187 = vmatprep.subr.bf16.mxu0 0
    %6188 = vmatpush2.bf16.msra.mxu0 0
    %6189 = vmatprep.subr.bf16.mxu0 0
    %6190 = vmatpush2.bf16.msra.mxu0 0
    %6191 = vmatprep.subr.bf16.mxu0 0
    %6192 = vmatpush2.bf16.msra.mxu0 0
    %6193 = vmatprep.subr.bf16.mxu0 0
    %6194 = vmatpush2.bf16.msra.mxu0 0
    %6195 = vmatprep.mubr.bf16.mxu0 0
    %6196 = vmatmul.mubr.bf16.gmra.mxu0 %v5456
    %v6197 = vpop.f32.mrf.mxu0
    %v6198 = vadd.f32 0.0, %v6197
    %v6199 = vpop.f32.mrf.mxu0
    %v6200 = vpop.f32.mrf.mxu0
    %v6201 = vadd.f32 0.0, %v6200
    %v6202 = vpop.f32.mrf.mxu0
    %6203 = vmatprep.mubr.bf16.mxu0 0
    %6204 = vmatmul.mubr.bf16.gmra.mxu0 %v5459
    %v6205 = vpop.f32.mrf.mxu0
    %v6206 = vadd.f32 0.0, %v6205
    %v6207 = vpop.f32.mrf.mxu0
    %v6208 = vpop.f32.mrf.mxu0
    %v6209 = vadd.f32 0.0, %v6208
    %v6210 = vpop.f32.mrf.mxu0
    %6211 = vdwg.mxu0
    %v6212 = vpack.c.bf16 %v6201, %v6198
    %v6213 = vpack.c.bf16 %v6209, %v6206
    %v6218 = vunpack.c.l.b16 %v6147
    %v6219 = vunpack.c.l.b16 %v6148
    %v6220 = vunpack.c.l.b16 %v6149
    %v6221 = vunpack.c.l.b16 %v6150
    %v6222 = vpack.c.b16 %v6219, %v6218
    %v6223 = vpack.c.b16 %v6221, %v6220
    %v6225 = vsel %vm5454, %v6222, 0
    %v6228 = vsel %vm5454, %v6223, 0
    %6230 = vmatprep.subr.bf16.mxu0 0
    %6231 = vmatpush1.bf16.msra.mxu0 0
    %6232 = vmatprep.subr.bf16.mxu0 0
    %6233 = vmatpush1.bf16.msra.mxu0 0
    %6234 = vmatprep.subr.bf16.mxu0 0
    %6235 = vmatpush1.bf16.msra.mxu0 0
    %6236 = vmatprep.subr.bf16.mxu0 0
    %6237 = vmatpush1.bf16.msra.mxu0 0
    %6238 = vmatprep.subr.bf16.mxu0 0
    %6239 = vmatpush1.bf16.msra.mxu0 0
    %6240 = vmatprep.subr.bf16.mxu0 0
    %6241 = vmatpush1.bf16.msra.mxu0 0
    %6242 = vmatprep.subr.bf16.mxu0 0
    %6243 = vmatpush1.bf16.msra.mxu0 %v6213
    %6244 = vmatprep.subr.bf16.mxu0 0
    %6245 = vmatpush1.bf16.msra.mxu0 %v6212
    %6246 = vmatprep.subr.bf16.mxu0 0
    %6247 = vmatpush2.bf16.msra.mxu0 0
    %6248 = vmatprep.subr.bf16.mxu0 0
    %6249 = vmatpush2.bf16.msra.mxu0 0
    %6250 = vmatprep.subr.bf16.mxu0 0
    %6251 = vmatpush2.bf16.msra.mxu0 0
    %6252 = vmatprep.subr.bf16.mxu0 0
    %6253 = vmatpush2.bf16.msra.mxu0 0
    %6254 = vmatprep.subr.bf16.mxu0 0
    %6255 = vmatpush2.bf16.msra.mxu0 0
    %6256 = vmatprep.subr.bf16.mxu0 0
    %6257 = vmatpush2.bf16.msra.mxu0 0
    %6258 = vmatprep.subr.bf16.mxu0 0
    %6259 = vmatpush2.bf16.msra.mxu0 0
    %6260 = vmatprep.subr.bf16.mxu0 0
    %6261 = vmatpush2.bf16.msra.mxu0 0
    %6262 = vmatprep.mubr.bf16.mxu0 0
    %6263 = vmatmul.mubr.bf16.gmra.mxu0 %v6225
    %v6264 = vpop.f32.mrf.mxu0
    %v6265 = vadd.f32 0.0, %v6264
    %v6266 = vpop.f32.mrf.mxu0
    %v6267 = vpop.f32.mrf.mxu0
    %v6268 = vadd.f32 0.0, %v6267
    %v6269 = vpop.f32.mrf.mxu0
    %6270 = vmatprep.mubr.bf16.mxu0 0
    %6271 = vmatmul.mubr.bf16.gmra.mxu0 %v6228
    %v6272 = vpop.f32.mrf.mxu0
    %v6273 = vadd.f32 0.0, %v6272
    %v6274 = vpop.f32.mrf.mxu0
    %v6275 = vpop.f32.mrf.mxu0
    %v6276 = vadd.f32 0.0, %v6275
    %v6277 = vpop.f32.mrf.mxu0
    %6278 = vdwg.mxu0
    %v6279 = vadd.f32 %v6137, %v6265
    %v6280 = vadd.f32 %v6138, %v6268
    %v6281 = vadd.f32 %v6139, %v6273
    %v6282 = vadd.f32 %v6140, %v6276
    %s6283 = scalar_lea.vmem %s7, 96
    %v6284 = vld [vmem:[%s6283] sm:$0xf]
    %v6285 = vld [vmem:[%s6283 + $0x4] sm:$0xf]
    %v6286 = vld [vmem:[%s6283 + $0x8] sm:$0xf]
    %v6287 = vld [vmem:[%s6283 + $0xc] sm:$0xf]
    %s6288 = scalar_lea.vmem [#allocation4], 96
    %v6289 = vld [vmem:[%s6288] sm:$0xf]
    %v6290 = vld [vmem:[%s6288 + $0x4] sm:$0xf]
    %v6291 = vld [vmem:[%s6288 + $0x8] sm:$0xf]
    %v6292 = vld [vmem:[%s6288 + $0xc] sm:$0xf]
    %v6297 = vunpack.c.l.b16 %v6284
    %v6298 = vunpack.c.l.b16 %v6285
    %v6299 = vunpack.c.l.b16 %v6286
    %v6300 = vunpack.c.l.b16 %v6287
    %v6301 = vpack.c.b16 %v6298, %v6297
    %v6302 = vpack.c.b16 %v6300, %v6299
    %6305 = vmatprep.subr.bf16.mxu0 0
    %6306 = vmatpush1.bf16.msra.mxu0 0
    %6307 = vmatprep.subr.bf16.mxu0 0
    %6308 = vmatpush1.bf16.msra.mxu0 0
    %6309 = vmatprep.subr.bf16.mxu0 0
    %6310 = vmatpush1.bf16.msra.mxu0 0
    %6311 = vmatprep.subr.bf16.mxu0 0
    %6312 = vmatpush1.bf16.msra.mxu0 0
    %6313 = vmatprep.subr.bf16.mxu0 0
    %6314 = vmatpush1.bf16.msra.mxu0 0
    %6315 = vmatprep.subr.bf16.mxu0 0
    %6316 = vmatpush1.bf16.msra.mxu0 0
    %6317 = vmatprep.subr.bf16.mxu0 0
    %6318 = vmatpush1.bf16.msra.mxu0 %v6302
    %6319 = vmatprep.subr.bf16.mxu0 0
    %6320 = vmatpush1.bf16.msra.mxu0 %v6301
    %6321 = vmatprep.subr.bf16.mxu0 0
    %6322 = vmatpush2.bf16.msra.mxu0 0
    %6323 = vmatprep.subr.bf16.mxu0 0
    %6324 = vmatpush2.bf16.msra.mxu0 0
    %6325 = vmatprep.subr.bf16.mxu0 0
    %6326 = vmatpush2.bf16.msra.mxu0 0
    %6327 = vmatprep.subr.bf16.mxu0 0
    %6328 = vmatpush2.bf16.msra.mxu0 0
    %6329 = vmatprep.subr.bf16.mxu0 0
    %6330 = vmatpush2.bf16.msra.mxu0 0
    %6331 = vmatprep.subr.bf16.mxu0 0
    %6332 = vmatpush2.bf16.msra.mxu0 0
    %6333 = vmatprep.subr.bf16.mxu0 0
    %6334 = vmatpush2.bf16.msra.mxu0 0
    %6335 = vmatprep.subr.bf16.mxu0 0
    %6336 = vmatpush2.bf16.msra.mxu0 0
    %6337 = vmatprep.mubr.bf16.mxu0 0
    %6338 = vmatmul.mubr.bf16.gmra.mxu0 %v5456
    %v6339 = vpop.f32.mrf.mxu0
    %v6340 = vadd.f32 0.0, %v6339
    %v6341 = vpop.f32.mrf.mxu0
    %v6342 = vpop.f32.mrf.mxu0
    %v6343 = vadd.f32 0.0, %v6342
    %v6344 = vpop.f32.mrf.mxu0
    %6345 = vmatprep.mubr.bf16.mxu0 0
    %6346 = vmatmul.mubr.bf16.gmra.mxu0 %v5459
    %v6347 = vpop.f32.mrf.mxu0
    %v6348 = vadd.f32 0.0, %v6347
    %v6349 = vpop.f32.mrf.mxu0
    %v6350 = vpop.f32.mrf.mxu0
    %v6351 = vadd.f32 0.0, %v6350
    %v6352 = vpop.f32.mrf.mxu0
    %6353 = vdwg.mxu0
    %v6354 = vpack.c.bf16 %v6343, %v6340
    %v6355 = vpack.c.bf16 %v6351, %v6348
    %v6360 = vunpack.c.l.b16 %v6289
    %v6361 = vunpack.c.l.b16 %v6290
    %v6362 = vunpack.c.l.b16 %v6291
    %v6363 = vunpack.c.l.b16 %v6292
    %v6364 = vpack.c.b16 %v6361, %v6360
    %v6365 = vpack.c.b16 %v6363, %v6362
    %v6367 = vsel %vm5454, %v6364, 0
    %v6370 = vsel %vm5454, %v6365, 0
    %6372 = vmatprep.subr.bf16.mxu0 0
    %6373 = vmatpush1.bf16.msra.mxu0 0
    %6374 = vmatprep.subr.bf16.mxu0 0
    %6375 = vmatpush1.bf16.msra.mxu0 0
    %6376 = vmatprep.subr.bf16.mxu0 0
    %6377 = vmatpush1.bf16.msra.mxu0 0
    %6378 = vmatprep.subr.bf16.mxu0 0
    %6379 = vmatpush1.bf16.msra.mxu0 0
    %6380 = vmatprep.subr.bf16.mxu0 0
    %6381 = vmatpush1.bf16.msra.mxu0 0
    %6382 = vmatprep.subr.bf16.mxu0 0
    %6383 = vmatpush1.bf16.msra.mxu0 0
    %6384 = vmatprep.subr.bf16.mxu0 0
    %6385 = vmatpush1.bf16.msra.mxu0 %v6355
    %6386 = vmatprep.subr.bf16.mxu0 0
    %6387 = vmatpush1.bf16.msra.mxu0 %v6354
    %6388 = vmatprep.subr.bf16.mxu0 0
    %6389 = vmatpush2.bf16.msra.mxu0 0
    %6390 = vmatprep.subr.bf16.mxu0 0
    %6391 = vmatpush2.bf16.msra.mxu0 0
    %6392 = vmatprep.subr.bf16.mxu0 0
    %6393 = vmatpush2.bf16.msra.mxu0 0
    %6394 = vmatprep.subr.bf16.mxu0 0
    %6395 = vmatpush2.bf16.msra.mxu0 0
    %6396 = vmatprep.subr.bf16.mxu0 0
    %6397 = vmatpush2.bf16.msra.mxu0 0
    %6398 = vmatprep.subr.bf16.mxu0 0
    %6399 = vmatpush2.bf16.msra.mxu0 0
    %6400 = vmatprep.subr.bf16.mxu0 0
    %6401 = vmatpush2.bf16.msra.mxu0 0
    %6402 = vmatprep.subr.bf16.mxu0 0
    %6403 = vmatpush2.bf16.msra.mxu0 0
    %6404 = vmatprep.mubr.bf16.mxu0 0
    %6405 = vmatmul.mubr.bf16.gmra.mxu0 %v6367
    %v6406 = vpop.f32.mrf.mxu0
    %v6407 = vadd.f32 0.0, %v6406
    %v6408 = vpop.f32.mrf.mxu0
    %v6409 = vpop.f32.mrf.mxu0
    %v6410 = vadd.f32 0.0, %v6409
    %v6411 = vpop.f32.mrf.mxu0
    %6412 = vmatprep.mubr.bf16.mxu0 0
    %6413 = vmatmul.mubr.bf16.gmra.mxu0 %v6370
    %v6414 = vpop.f32.mrf.mxu0
    %v6415 = vadd.f32 0.0, %v6414
    %v6416 = vpop.f32.mrf.mxu0
    %v6417 = vpop.f32.mrf.mxu0
    %v6418 = vadd.f32 0.0, %v6417
    %v6419 = vpop.f32.mrf.mxu0
    %6420 = vdwg.mxu0
    %v6421 = vadd.f32 %v6279, %v6407
    %v6422 = vadd.f32 %v6280, %v6410
    %v6423 = vadd.f32 %v6281, %v6415
    %v6424 = vadd.f32 %v6282, %v6418
    %s6425 = scalar_lea.vmem %s7, 112
    %v6426 = vld [vmem:[%s6425] sm:$0xf]
    %v6427 = vld [vmem:[%s6425 + $0x4] sm:$0xf]
    %v6428 = vld [vmem:[%s6425 + $0x8] sm:$0xf]
    %v6429 = vld [vmem:[%s6425 + $0xc] sm:$0xf]
    %s6430 = scalar_lea.vmem [#allocation4], 112
    %v6431 = vld [vmem:[%s6430] sm:$0xf]
    %v6432 = vld [vmem:[%s6430 + $0x4] sm:$0xf]
    %v6433 = vld [vmem:[%s6430 + $0x8] sm:$0xf]
    %v6434 = vld [vmem:[%s6430 + $0xc] sm:$0xf]
    %v6439 = vunpack.c.l.b16 %v6426
    %v6440 = vunpack.c.l.b16 %v6427
    %v6441 = vunpack.c.l.b16 %v6428
    %v6442 = vunpack.c.l.b16 %v6429
    %v6443 = vpack.c.b16 %v6440, %v6439
    %v6444 = vpack.c.b16 %v6442, %v6441
    %6447 = vmatprep.subr.bf16.mxu0 0
    %6448 = vmatpush1.bf16.msra.mxu0 0
    %6449 = vmatprep.subr.bf16.mxu0 0
    %6450 = vmatpush1.bf16.msra.mxu0 0
    %6451 = vmatprep.subr.bf16.mxu0 0
    %6452 = vmatpush1.bf16.msra.mxu0 0
    %6453 = vmatprep.subr.bf16.mxu0 0
    %6454 = vmatpush1.bf16.msra.mxu0 0
    %6455 = vmatprep.subr.bf16.mxu0 0
    %6456 = vmatpush1.bf16.msra.mxu0 0
    %6457 = vmatprep.subr.bf16.mxu0 0
    %6458 = vmatpush1.bf16.msra.mxu0 0
    %6459 = vmatprep.subr.bf16.mxu0 0
    %6460 = vmatpush1.bf16.msra.mxu0 %v6444
    %6461 = vmatprep.subr.bf16.mxu0 0
    %6462 = vmatpush1.bf16.msra.mxu0 %v6443
    %6463 = vmatprep.subr.bf16.mxu0 0
    %6464 = vmatpush2.bf16.msra.mxu0 0
    %6465 = vmatprep.subr.bf16.mxu0 0
    %6466 = vmatpush2.bf16.msra.mxu0 0
    %6467 = vmatprep.subr.bf16.mxu0 0
    %6468 = vmatpush2.bf16.msra.mxu0 0
    %6469 = vmatprep.subr.bf16.mxu0 0
    %6470 = vmatpush2.bf16.msra.mxu0 0
    %6471 = vmatprep.subr.bf16.mxu0 0
    %6472 = vmatpush2.bf16.msra.mxu0 0
    %6473 = vmatprep.subr.bf16.mxu0 0
    %6474 = vmatpush2.bf16.msra.mxu0 0
    %6475 = vmatprep.subr.bf16.mxu0 0
    %6476 = vmatpush2.bf16.msra.mxu0 0
    %6477 = vmatprep.subr.bf16.mxu0 0
    %6478 = vmatpush2.bf16.msra.mxu0 0
    %6479 = vmatprep.mubr.bf16.mxu0 0
    %6480 = vmatmul.mubr.bf16.gmra.mxu0 %v5456
    %v6481 = vpop.f32.mrf.mxu0
    %v6482 = vadd.f32 0.0, %v6481
    %v6483 = vpop.f32.mrf.mxu0
    %v6484 = vpop.f32.mrf.mxu0
    %v6485 = vadd.f32 0.0, %v6484
    %v6486 = vpop.f32.mrf.mxu0
    %6487 = vmatprep.mubr.bf16.mxu0 0
    %6488 = vmatmul.mubr.bf16.gmra.mxu0 %v5459
    %v6489 = vpop.f32.mrf.mxu0
    %v6490 = vadd.f32 0.0, %v6489
    %v6491 = vpop.f32.mrf.mxu0
    %v6492 = vpop.f32.mrf.mxu0
    %v6493 = vadd.f32 0.0, %v6492
    %v6494 = vpop.f32.mrf.mxu0
    %6495 = vdwg.mxu0
    %v6496 = vpack.c.bf16 %v6485, %v6482
    %v6497 = vpack.c.bf16 %v6493, %v6490
    %v6502 = vunpack.c.l.b16 %v6431
    %v6503 = vunpack.c.l.b16 %v6432
    %v6504 = vunpack.c.l.b16 %v6433
    %v6505 = vunpack.c.l.b16 %v6434
    %v6506 = vpack.c.b16 %v6503, %v6502
    %v6507 = vpack.c.b16 %v6505, %v6504
    %v6509 = vsel %vm5454, %v6506, 0
    %v6512 = vsel %vm5454, %v6507, 0
    %6514 = vmatprep.subr.bf16.mxu0 0
    %6515 = vmatpush1.bf16.msra.mxu0 0
    %6516 = vmatprep.subr.bf16.mxu0 0
    %6517 = vmatpush1.bf16.msra.mxu0 0
    %6518 = vmatprep.subr.bf16.mxu0 0
    %6519 = vmatpush1.bf16.msra.mxu0 0
    %6520 = vmatprep.subr.bf16.mxu0 0
    %6521 = vmatpush1.bf16.msra.mxu0 0
    %6522 = vmatprep.subr.bf16.mxu0 0
    %6523 = vmatpush1.bf16.msra.mxu0 0
    %6524 = vmatprep.subr.bf16.mxu0 0
    %6525 = vmatpush1.bf16.msra.mxu0 0
    %6526 = vmatprep.subr.bf16.mxu0 0
    %6527 = vmatpush1.bf16.msra.mxu0 %v6497
    %6528 = vmatprep.subr.bf16.mxu0 0
    %6529 = vmatpush1.bf16.msra.mxu0 %v6496
    %6530 = vmatprep.subr.bf16.mxu0 0
    %6531 = vmatpush2.bf16.msra.mxu0 0
    %6532 = vmatprep.subr.bf16.mxu0 0
    %6533 = vmatpush2.bf16.msra.mxu0 0
    %6534 = vmatprep.subr.bf16.mxu0 0
    %6535 = vmatpush2.bf16.msra.mxu0 0
    %6536 = vmatprep.subr.bf16.mxu0 0
    %6537 = vmatpush2.bf16.msra.mxu0 0
    %6538 = vmatprep.subr.bf16.mxu0 0
    %6539 = vmatpush2.bf16.msra.mxu0 0
    %6540 = vmatprep.subr.bf16.mxu0 0
    %6541 = vmatpush2.bf16.msra.mxu0 0
    %6542 = vmatprep.subr.bf16.mxu0 0
    %6543 = vmatpush2.bf16.msra.mxu0 0
    %6544 = vmatprep.subr.bf16.mxu0 0
    %6545 = vmatpush2.bf16.msra.mxu0 0
    %6546 = vmatprep.mubr.bf16.mxu0 0
    %6547 = vmatmul.mubr.bf16.gmra.mxu0 %v6509
    %v6548 = vpop.f32.mrf.mxu0
    %v6549 = vadd.f32 0.0, %v6548
    %v6550 = vpop.f32.mrf.mxu0
    %v6551 = vpop.f32.mrf.mxu0
    %v6552 = vadd.f32 0.0, %v6551
    %v6553 = vpop.f32.mrf.mxu0
    %6554 = vmatprep.mubr.bf16.mxu0 0
    %6555 = vmatmul.mubr.bf16.gmra.mxu0 %v6512
    %v6556 = vpop.f32.mrf.mxu0
    %v6557 = vadd.f32 0.0, %v6556
    %v6558 = vpop.f32.mrf.mxu0
    %v6559 = vpop.f32.mrf.mxu0
    %v6560 = vadd.f32 0.0, %v6559
    %v6561 = vpop.f32.mrf.mxu0
    %6562 = vdwg.mxu0
    %v6563 = vadd.f32 %v6421, %v6549
    %v6564 = vadd.f32 %v6422, %v6552
    %v6565 = vadd.f32 %v6423, %v6557
    %v6566 = vadd.f32 %v6424, %v6560
    %s6567 = scalar_lea.vmem %s7, 128
    %v6568 = vld [vmem:[%s6567] sm:$0xf]
    %v6569 = vld [vmem:[%s6567 + $0x4] sm:$0xf]
    %v6570 = vld [vmem:[%s6567 + $0x8] sm:$0xf]
    %v6571 = vld [vmem:[%s6567 + $0xc] sm:$0xf]
    %s6572 = scalar_lea.vmem [#allocation4], 128
    %v6573 = vld [vmem:[%s6572] sm:$0xf]
    %v6574 = vld [vmem:[%s6572 + $0x4] sm:$0xf]
    %v6575 = vld [vmem:[%s6572 + $0x8] sm:$0xf]
    %v6576 = vld [vmem:[%s6572 + $0xc] sm:$0xf]
    %v6581 = vunpack.c.l.b16 %v6568
    %v6582 = vunpack.c.l.b16 %v6569
    %v6583 = vunpack.c.l.b16 %v6570
    %v6584 = vunpack.c.l.b16 %v6571
    %v6585 = vpack.c.b16 %v6582, %v6581
    %v6586 = vpack.c.b16 %v6584, %v6583
    %6589 = vmatprep.subr.bf16.mxu0 0
    %6590 = vmatpush1.bf16.msra.mxu0 0
    %6591 = vmatprep.subr.bf16.mxu0 0
    %6592 = vmatpush1.bf16.msra.mxu0 0
    %6593 = vmatprep.subr.bf16.mxu0 0
    %6594 = vmatpush1.bf16.msra.mxu0 0
    %6595 = vmatprep.subr.bf16.mxu0 0
    %6596 = vmatpush1.bf16.msra.mxu0 0
    %6597 = vmatprep.subr.bf16.mxu0 0
    %6598 = vmatpush1.bf16.msra.mxu0 0
    %6599 = vmatprep.subr.bf16.mxu0 0
    %6600 = vmatpush1.bf16.msra.mxu0 0
    %6601 = vmatprep.subr.bf16.mxu0 0
    %6602 = vmatpush1.bf16.msra.mxu0 %v6586
    %6603 = vmatprep.subr.bf16.mxu0 0
    %6604 = vmatpush1.bf16.msra.mxu0 %v6585
    %6605 = vmatprep.subr.bf16.mxu0 0
    %6606 = vmatpush2.bf16.msra.mxu0 0
    %6607 = vmatprep.subr.bf16.mxu0 0
    %6608 = vmatpush2.bf16.msra.mxu0 0
    %6609 = vmatprep.subr.bf16.mxu0 0
    %6610 = vmatpush2.bf16.msra.mxu0 0
    %6611 = vmatprep.subr.bf16.mxu0 0
    %6612 = vmatpush2.bf16.msra.mxu0 0
    %6613 = vmatprep.subr.bf16.mxu0 0
    %6614 = vmatpush2.bf16.msra.mxu0 0
    %6615 = vmatprep.subr.bf16.mxu0 0
    %6616 = vmatpush2.bf16.msra.mxu0 0
    %6617 = vmatprep.subr.bf16.mxu0 0
    %6618 = vmatpush2.bf16.msra.mxu0 0
    %6619 = vmatprep.subr.bf16.mxu0 0
    %6620 = vmatpush2.bf16.msra.mxu0 0
    %6621 = vmatprep.mubr.bf16.mxu0 0
    %6622 = vmatmul.mubr.bf16.gmra.mxu0 %v5456
    %v6623 = vpop.f32.mrf.mxu0
    %v6624 = vadd.f32 0.0, %v6623
    %v6625 = vpop.f32.mrf.mxu0
    %v6626 = vpop.f32.mrf.mxu0
    %v6627 = vadd.f32 0.0, %v6626
    %v6628 = vpop.f32.mrf.mxu0
    %6629 = vmatprep.mubr.bf16.mxu0 0
    %6630 = vmatmul.mubr.bf16.gmra.mxu0 %v5459
    %v6631 = vpop.f32.mrf.mxu0
    %v6632 = vadd.f32 0.0, %v6631
    %v6633 = vpop.f32.mrf.mxu0
    %v6634 = vpop.f32.mrf.mxu0
    %v6635 = vadd.f32 0.0, %v6634
    %v6636 = vpop.f32.mrf.mxu0
    %6637 = vdwg.mxu0
    %v6638 = vpack.c.bf16 %v6627, %v6624
    %v6639 = vpack.c.bf16 %v6635, %v6632
    %v6644 = vunpack.c.l.b16 %v6573
    %v6645 = vunpack.c.l.b16 %v6574
    %v6646 = vunpack.c.l.b16 %v6575
    %v6647 = vunpack.c.l.b16 %v6576
    %v6648 = vpack.c.b16 %v6645, %v6644
    %v6649 = vpack.c.b16 %v6647, %v6646
    %v6651 = vsel %vm5454, %v6648, 0
    %v6654 = vsel %vm5454, %v6649, 0
    %6656 = vmatprep.subr.bf16.mxu0 0
    %6657 = vmatpush1.bf16.msra.mxu0 0
    %6658 = vmatprep.subr.bf16.mxu0 0
    %6659 = vmatpush1.bf16.msra.mxu0 0
    %6660 = vmatprep.subr.bf16.mxu0 0
    %6661 = vmatpush1.bf16.msra.mxu0 0
    %6662 = vmatprep.subr.bf16.mxu0 0
    %6663 = vmatpush1.bf16.msra.mxu0 0
    %6664 = vmatprep.subr.bf16.mxu0 0
    %6665 = vmatpush1.bf16.msra.mxu0 0
    %6666 = vmatprep.subr.bf16.mxu0 0
    %6667 = vmatpush1.bf16.msra.mxu0 0
    %6668 = vmatprep.subr.bf16.mxu0 0
    %6669 = vmatpush1.bf16.msra.mxu0 %v6639
    %6670 = vmatprep.subr.bf16.mxu0 0
    %6671 = vmatpush1.bf16.msra.mxu0 %v6638
    %6672 = vmatprep.subr.bf16.mxu0 0
    %6673 = vmatpush2.bf16.msra.mxu0 0
    %6674 = vmatprep.subr.bf16.mxu0 0
    %6675 = vmatpush2.bf16.msra.mxu0 0
    %6676 = vmatprep.subr.bf16.mxu0 0
    %6677 = vmatpush2.bf16.msra.mxu0 0
    %6678 = vmatprep.subr.bf16.mxu0 0
    %6679 = vmatpush2.bf16.msra.mxu0 0
    %6680 = vmatprep.subr.bf16.mxu0 0
    %6681 = vmatpush2.bf16.msra.mxu0 0
    %6682 = vmatprep.subr.bf16.mxu0 0
    %6683 = vmatpush2.bf16.msra.mxu0 0
    %6684 = vmatprep.subr.bf16.mxu0 0
    %6685 = vmatpush2.bf16.msra.mxu0 0
    %6686 = vmatprep.subr.bf16.mxu0 0
    %6687 = vmatpush2.bf16.msra.mxu0 0
    %6688 = vmatprep.mubr.bf16.mxu0 0
    %6689 = vmatmul.mubr.bf16.gmra.mxu0 %v6651
    %v6690 = vpop.f32.mrf.mxu0
    %v6691 = vadd.f32 0.0, %v6690
    %v6692 = vpop.f32.mrf.mxu0
    %v6693 = vpop.f32.mrf.mxu0
    %v6694 = vadd.f32 0.0, %v6693
    %v6695 = vpop.f32.mrf.mxu0
    %6696 = vmatprep.mubr.bf16.mxu0 0
    %6697 = vmatmul.mubr.bf16.gmra.mxu0 %v6654
    %v6698 = vpop.f32.mrf.mxu0
    %v6699 = vadd.f32 0.0, %v6698
    %v6700 = vpop.f32.mrf.mxu0
    %v6701 = vpop.f32.mrf.mxu0
    %v6702 = vadd.f32 0.0, %v6701
    %v6703 = vpop.f32.mrf.mxu0
    %6704 = vdwg.mxu0
    %v6705 = vadd.f32 %v6563, %v6691
    %v6706 = vadd.f32 %v6564, %v6694
    %v6707 = vadd.f32 %v6565, %v6699
    %v6708 = vadd.f32 %v6566, %v6702
    %v6709 = vld [vmem:[%s9] sm:$0xff]
    %v6710 = vld [vmem:[%s9 + $0x8] sm:$0xff]
    %v6711 = vld [vmem:[%s9 + $0x10] sm:$0xff]
    %v6712 = vld [vmem:[%s9 + $0x18] sm:$0xff]
    %6714 = vset.pattern.permute.xlu0 0
    %6715 = vperm.xlu0 %6714, %v6709
    %v6716 = vpop.permute.xlu0 %6715
    %6719 = vset.pattern.permute.xlu0 0
    %6720 = vperm.xlu0 %6719, %v6710
    %v6721 = vpop.permute.xlu0 %6720
    %6724 = vset.pattern.permute.xlu0 0
    %6725 = vperm.xlu0 %6724, %v6711
    %v6726 = vpop.permute.xlu0 %6725
    %6729 = vset.pattern.permute.xlu0 0
    %6730 = vperm.xlu0 %6729, %v6712
    %v6731 = vpop.permute.xlu0 %6730
    %v6733 = vadd.f32 %v6705, %v6716
    %v6734 = vadd.f32 %v6706, %v6721
    %v6735 = vadd.f32 %v6707, %v6726
    %v6736 = vadd.f32 %v6708, %v6731
    %vm6737 = vcmp.ge.f32.partialorder %v6733, 0.0
    %vm6738 = vcmp.ge.f32.partialorder %v6734, 0.0
    %vm6739 = vcmp.ge.f32.partialorder %v6735, 0.0
    %vm6740 = vcmp.ge.f32.partialorder %v6736, 0.0
    %v6741 = vmul.f32 %v6733, 0.2
    %v6742 = vmul.f32 %v6734, 0.2
    %v6743 = vmul.f32 %v6735, 0.2
    %v6744 = vmul.f32 %v6736, 0.2
    %v6745 = vsel %vm6737, %v6733, %v6741
    %v6746 = vsel %vm6738, %v6734, %v6742
    %v6747 = vsel %vm6739, %v6735, %v6743
    %v6748 = vsel %vm6740, %v6736, %v6744
    %vm6749 = vcmask 64512
    %6750 = vst.msk [vmem:[%s19] sm:$0xff] %vm6749, %v6745
    %6751 = vst.msk [vmem:[%s19 + $0x8] sm:$0xff] %vm6749, %v6746
    %6752 = vst.msk [vmem:[%s19 + $0x10] sm:$0xff] %vm6749, %v6747
    %6753 = vst.msk [vmem:[%s19 + $0x18] sm:$0xff] %vm6749, %v6748
    %v6754 = vpack.c.bf16 %v6746, %v6745
    %v6755 = vpack.c.bf16 %v6748, %v6747
    %v6756 = vld [vmem:[#allocation6] sm:$0xf]
    %v6757 = vld [vmem:[#allocation7] sm:$0xf]
    %v6758 = vld [vmem:[#allocation7 + $0x4] sm:$0xf]
    %v6759 = vld [vmem:[#allocation7 + $0x8] sm:$0xf]
    %v6760 = vld [vmem:[#allocation7 + $0xc] sm:$0xf]
    %v6765 = vunpack.c.l.b16 %v6757
    %v6766 = vunpack.c.l.b16 %v6758
    %v6767 = vunpack.c.l.b16 %v6759
    %v6768 = vunpack.c.l.b16 %v6760
    %v6769 = vpack.c.b16 %v6766, %v6765
    %v6770 = vpack.c.b16 %v6768, %v6767
    %v6772 = vsel %vm5454, %v6769, 0
    %v6775 = vsel %vm5454, %v6770, 0
    %6777 = vmatprep.subr.bf16.mxu0 0
    %6778 = vmatpush1.bf16.msra.mxu0 0
    %6779 = vmatprep.subr.bf16.mxu0 0
    %6780 = vmatpush1.bf16.msra.mxu0 0
    %6781 = vmatprep.subr.bf16.mxu0 0
    %6782 = vmatpush1.bf16.msra.mxu0 0
    %6783 = vmatprep.subr.bf16.mxu0 0
    %6784 = vmatpush1.bf16.msra.mxu0 0
    %6785 = vmatprep.subr.bf16.mxu0 0
    %6786 = vmatpush1.bf16.msra.mxu0 0
    %6787 = vmatprep.subr.bf16.mxu0 0
    %6788 = vmatpush1.bf16.msra.mxu0 0
    %6789 = vmatprep.subr.bf16.mxu0 0
    %6790 = vmatpush1.bf16.msra.mxu0 %v6755
    %6791 = vmatprep.subr.bf16.mxu0 0
    %6792 = vmatpush1.bf16.msra.mxu0 %v6754
    %6793 = vmatprep.subr.bf16.mxu0 0
    %6794 = vmatpush2.bf16.msra.mxu0 0
    %6795 = vmatprep.subr.bf16.mxu0 0
    %6796 = vmatpush2.bf16.msra.mxu0 0
    %6797 = vmatprep.subr.bf16.mxu0 0
    %6798 = vmatpush2.bf16.msra.mxu0 0
    %6799 = vmatprep.subr.bf16.mxu0 0
    %6800 = vmatpush2.bf16.msra.mxu0 0
    %6801 = vmatprep.subr.bf16.mxu0 0
    %6802 = vmatpush2.bf16.msra.mxu0 0
    %6803 = vmatprep.subr.bf16.mxu0 0
    %6804 = vmatpush2.bf16.msra.mxu0 0
    %6805 = vmatprep.subr.bf16.mxu0 0
    %6806 = vmatpush2.bf16.msra.mxu0 0
    %6807 = vmatprep.subr.bf16.mxu0 0
    %6808 = vmatpush2.bf16.msra.mxu0 0
    %6809 = vmatprep.mubr.bf16.mxu0 0
    %6810 = vmatmul.mubr.bf16.gmra.mxu0 %v6772
    %v6811 = vpop.f32.mrf.mxu0
    %v6812 = vadd.f32 0.0, %v6811
    %v6813 = vpop.f32.mrf.mxu0
    %v6814 = vpop.f32.mrf.mxu0
    %v6815 = vadd.f32 0.0, %v6814
    %v6816 = vpop.f32.mrf.mxu0
    %6817 = vmatprep.mubr.bf16.mxu0 0
    %6818 = vmatmul.mubr.bf16.gmra.mxu0 %v6775
    %v6819 = vpop.f32.mrf.mxu0
    %v6820 = vadd.f32 0.0, %v6819
    %v6821 = vpop.f32.mrf.mxu0
    %v6822 = vpop.f32.mrf.mxu0
    %v6823 = vadd.f32 0.0, %v6822
    %v6824 = vpop.f32.mrf.mxu0
    %6825 = vdwg.mxu0
    %v6826 = vpack.c.bf16 %v6815, %v6812
    %v6827 = vpack.c.bf16 %v6823, %v6820
    %s6828 = scalar_lea.vmem [#allocation6], 4
    %v6829 = vld [vmem:[%s6828] sm:$0xf]
    %s6830 = scalar_lea.vmem [#allocation7], 16
    %v6831 = vld [vmem:[%s6830] sm:$0xf]
    %v6832 = vld [vmem:[%s6830 + $0x4] sm:$0xf]
    %v6833 = vld [vmem:[%s6830 + $0x8] sm:$0xf]
    %v6834 = vld [vmem:[%s6830 + $0xc] sm:$0xf]
    %v6839 = vunpack.c.l.b16 %v6831
    %v6840 = vunpack.c.l.b16 %v6832
    %v6841 = vunpack.c.l.b16 %v6833
    %v6842 = vunpack.c.l.b16 %v6834
    %v6843 = vpack.c.b16 %v6840, %v6839
    %v6844 = vpack.c.b16 %v6842, %v6841
    %v6846 = vsel %vm5454, %v6843, 0
    %v6849 = vsel %vm5454, %v6844, 0
    %6851 = vmatprep.subr.bf16.mxu0 0
    %6852 = vmatpush1.bf16.msra.mxu0 0
    %6853 = vmatprep.subr.bf16.mxu0 0
    %6854 = vmatpush1.bf16.msra.mxu0 0
    %6855 = vmatprep.subr.bf16.mxu0 0
    %6856 = vmatpush1.bf16.msra.mxu0 0
    %6857 = vmatprep.subr.bf16.mxu0 0
    %6858 = vmatpush1.bf16.msra.mxu0 0
    %6859 = vmatprep.subr.bf16.mxu0 0
    %6860 = vmatpush1.bf16.msra.mxu0 0
    %6861 = vmatprep.subr.bf16.mxu0 0
    %6862 = vmatpush1.bf16.msra.mxu0 0
    %6863 = vmatprep.subr.bf16.mxu0 0
    %6864 = vmatpush1.bf16.msra.mxu0 %v6755
    %6865 = vmatprep.subr.bf16.mxu0 0
    %6866 = vmatpush1.bf16.msra.mxu0 %v6754
    %6867 = vmatprep.subr.bf16.mxu0 0
    %6868 = vmatpush2.bf16.msra.mxu0 0
    %6869 = vmatprep.subr.bf16.mxu0 0
    %6870 = vmatpush2.bf16.msra.mxu0 0
    %6871 = vmatprep.subr.bf16.mxu0 0
    %6872 = vmatpush2.bf16.msra.mxu0 0
    %6873 = vmatprep.subr.bf16.mxu0 0
    %6874 = vmatpush2.bf16.msra.mxu0 0
    %6875 = vmatprep.subr.bf16.mxu0 0
    %6876 = vmatpush2.bf16.msra.mxu0 0
    %6877 = vmatprep.subr.bf16.mxu0 0
    %6878 = vmatpush2.bf16.msra.mxu0 0
    %6879 = vmatprep.subr.bf16.mxu0 0
    %6880 = vmatpush2.bf16.msra.mxu0 0
    %6881 = vmatprep.subr.bf16.mxu0 0
    %6882 = vmatpush2.bf16.msra.mxu0 0
    %6883 = vmatprep.mubr.bf16.mxu0 0
    %6884 = vmatmul.mubr.bf16.gmra.mxu0 %v6846
    %v6885 = vpop.f32.mrf.mxu0
    %v6886 = vadd.f32 0.0, %v6885
    %v6887 = vpop.f32.mrf.mxu0
    %v6888 = vpop.f32.mrf.mxu0
    %v6889 = vadd.f32 0.0, %v6888
    %v6890 = vpop.f32.mrf.mxu0
    %6891 = vmatprep.mubr.bf16.mxu0 0
    %6892 = vmatmul.mubr.bf16.gmra.mxu0 %v6849
    %v6893 = vpop.f32.mrf.mxu0
    %v6894 = vadd.f32 0.0, %v6893
    %v6895 = vpop.f32.mrf.mxu0
    %v6896 = vpop.f32.mrf.mxu0
    %v6897 = vadd.f32 0.0, %v6896
    %v6898 = vpop.f32.mrf.mxu0
    %6899 = vdwg.mxu0
    %v6900 = vpack.c.bf16 %v6889, %v6886
    %v6901 = vpack.c.bf16 %v6897, %v6894
    %v6903 = vsel %vm6749, %v6900, 0
    %v6906 = vsel %vm6749, %v6901, 0
    %vm6908 = vcmask 1043456
    %v6910 = vsel %vm6908, %v6829, 0
    %6912 = vmatprep.subr.bf16.mxu0 0
    %6913 = vmatpush1.bf16.msra.mxu0 0
    %6914 = vmatprep.subr.bf16.mxu0 0
    %6915 = vmatpush1.bf16.msra.mxu0 0
    %6916 = vmatprep.subr.bf16.mxu0 0
    %6917 = vmatpush1.bf16.msra.mxu0 0
    %6918 = vmatprep.subr.bf16.mxu0 0
    %6919 = vmatpush1.bf16.msra.mxu0 0
    %6920 = vmatprep.subr.bf16.mxu0 0
    %6921 = vmatpush1.bf16.msra.mxu0 0
    %6922 = vmatprep.subr.bf16.mxu0 0
    %6923 = vmatpush1.bf16.msra.mxu0 0
    %6924 = vmatprep.subr.bf16.mxu0 0
    %6925 = vmatpush1.bf16.msra.mxu0 0
    %6926 = vmatprep.subr.bf16.mxu0 0
    %6927 = vmatpush1.bf16.msra.mxu0 %v6910
    %6928 = vmatprep.subr.bf16.mxu0 0
    %6929 = vmatpush2.bf16.msra.mxu0 0
    %6930 = vmatprep.subr.bf16.mxu0 0
    %6931 = vmatpush2.bf16.msra.mxu0 0
    %6932 = vmatprep.subr.bf16.mxu0 0
    %6933 = vmatpush2.bf16.msra.mxu0 0
    %6934 = vmatprep.subr.bf16.mxu0 0
    %6935 = vmatpush2.bf16.msra.mxu0 0
    %6936 = vmatprep.subr.bf16.mxu0 0
    %6937 = vmatpush2.bf16.msra.mxu0 0
    %6938 = vmatprep.subr.bf16.mxu0 0
    %6939 = vmatpush2.bf16.msra.mxu0 0
    %6940 = vmatprep.subr.bf16.mxu0 0
    %6941 = vmatpush2.bf16.msra.mxu0 0
    %6942 = vmatprep.subr.bf16.mxu0 0
    %6943 = vmatpush2.bf16.msra.mxu0 0
    %6944 = vmatprep.mubr.bf16.mxu0 0
    %6945 = vmatmul.mubr.bf16.gmra.mxu0 %v6903
    %v6946 = vpop.f32.mrf.mxu0
    %v6947 = vadd.f32 0.0, %v6946
    %v6948 = vpop.f32.mrf.mxu0
    %v6949 = vpop.f32.mrf.mxu0
    %v6950 = vadd.f32 0.0, %v6949
    %v6951 = vpop.f32.mrf.mxu0
    %6952 = vmatprep.mubr.bf16.mxu0 0
    %6953 = vmatmul.mubr.bf16.gmra.mxu0 %v6906
    %v6954 = vpop.f32.mrf.mxu0
    %v6955 = vadd.f32 0.0, %v6954
    %v6956 = vpop.f32.mrf.mxu0
    %v6957 = vpop.f32.mrf.mxu0
    %v6958 = vadd.f32 0.0, %v6957
    %v6959 = vpop.f32.mrf.mxu0
    %6960 = vdwg.mxu0
    %v6962 = vsel %vm6749, %v6826, 0
    %v6965 = vsel %vm6749, %v6827, 0
    %v6968 = vsel %vm6908, %v6756, 0
    %6970 = vmatprep.subr.bf16.mxu0 0
    %6971 = vmatpush1.bf16.msra.mxu0 0
    %6972 = vmatprep.subr.bf16.mxu0 0
    %6973 = vmatpush1.bf16.msra.mxu0 0
    %6974 = vmatprep.subr.bf16.mxu0 0
    %6975 = vmatpush1.bf16.msra.mxu0 0
    %6976 = vmatprep.subr.bf16.mxu0 0
    %6977 = vmatpush1.bf16.msra.mxu0 0
    %6978 = vmatprep.subr.bf16.mxu0 0
    %6979 = vmatpush1.bf16.msra.mxu0 0
    %6980 = vmatprep.subr.bf16.mxu0 0
    %6981 = vmatpush1.bf16.msra.mxu0 0
    %6982 = vmatprep.subr.bf16.mxu0 0
    %6983 = vmatpush1.bf16.msra.mxu0 0
    %6984 = vmatprep.subr.bf16.mxu0 0
    %6985 = vmatpush1.bf16.msra.mxu0 %v6968
    %6986 = vmatprep.subr.bf16.mxu0 0
    %6987 = vmatpush2.bf16.msra.mxu0 0
    %6988 = vmatprep.subr.bf16.mxu0 0
    %6989 = vmatpush2.bf16.msra.mxu0 0
    %6990 = vmatprep.subr.bf16.mxu0 0
    %6991 = vmatpush2.bf16.msra.mxu0 0
    %6992 = vmatprep.subr.bf16.mxu0 0
    %6993 = vmatpush2.bf16.msra.mxu0 0
    %6994 = vmatprep.subr.bf16.mxu0 0
    %6995 = vmatpush2.bf16.msra.mxu0 0
    %6996 = vmatprep.subr.bf16.mxu0 0
    %6997 = vmatpush2.bf16.msra.mxu0 0
    %6998 = vmatprep.subr.bf16.mxu0 0
    %6999 = vmatpush2.bf16.msra.mxu0 0
    %7000 = vmatprep.subr.bf16.mxu0 0
    %7001 = vmatpush2.bf16.msra.mxu0 0
    %7002 = vmatprep.mubr.bf16.mxu0 0
    %7003 = vmatmul.mubr.bf16.gmra.mxu0 %v6962
    %v7004 = vpop.f32.mrf.mxu0
    %v7005 = vadd.f32 %v6947, %v7004
    %v7006 = vpop.f32.mrf.mxu0
    %v7007 = vpop.f32.mrf.mxu0
    %v7008 = vadd.f32 %v6950, %v7007
    %v7009 = vpop.f32.mrf.mxu0
    %7010 = vmatprep.mubr.bf16.mxu0 0
    %7011 = vmatmul.mubr.bf16.gmra.mxu0 %v6965
    %v7012 = vpop.f32.mrf.mxu0
    %v7013 = vadd.f32 %v6955, %v7012
    %v7014 = vpop.f32.mrf.mxu0
    %v7015 = vpop.f32.mrf.mxu0
    %v7016 = vadd.f32 %v6958, %v7015
    %v7017 = vpop.f32.mrf.mxu0
    %7018 = vdwg.mxu0
    %s7019 = scalar_lea.vmem [#allocation6], 8
    %v7020 = vld [vmem:[%s7019] sm:$0xf]
    %s7021 = scalar_lea.vmem [#allocation7], 32
    %v7022 = vld [vmem:[%s7021] sm:$0xf]
    %v7023 = vld [vmem:[%s7021 + $0x4] sm:$0xf]
    %v7024 = vld [vmem:[%s7021 + $0x8] sm:$0xf]
    %v7025 = vld [vmem:[%s7021 + $0xc] sm:$0xf]
    %v7030 = vunpack.c.l.b16 %v7022
    %v7031 = vunpack.c.l.b16 %v7023
    %v7032 = vunpack.c.l.b16 %v7024
    %v7033 = vunpack.c.l.b16 %v7025
    %v7034 = vpack.c.b16 %v7031, %v7030
    %v7035 = vpack.c.b16 %v7033, %v7032
    %v7037 = vsel %vm5454, %v7034, 0
    %v7040 = vsel %vm5454, %v7035, 0
    %7042 = vmatprep.subr.bf16.mxu0 0
    %7043 = vmatpush1.bf16.msra.mxu0 0
    %7044 = vmatprep.subr.bf16.mxu0 0
    %7045 = vmatpush1.bf16.msra.mxu0 0
    %7046 = vmatprep.subr.bf16.mxu0 0
    %7047 = vmatpush1.bf16.msra.mxu0 0
    %7048 = vmatprep.subr.bf16.mxu0 0
    %7049 = vmatpush1.bf16.msra.mxu0 0
    %7050 = vmatprep.subr.bf16.mxu0 0
    %7051 = vmatpush1.bf16.msra.mxu0 0
    %7052 = vmatprep.subr.bf16.mxu0 0
    %7053 = vmatpush1.bf16.msra.mxu0 0
    %7054 = vmatprep.subr.bf16.mxu0 0
    %7055 = vmatpush1.bf16.msra.mxu0 %v6755
    %7056 = vmatprep.subr.bf16.mxu0 0
    %7057 = vmatpush1.bf16.msra.mxu0 %v6754
    %7058 = vmatprep.subr.bf16.mxu0 0
    %7059 = vmatpush2.bf16.msra.mxu0 0
    %7060 = vmatprep.subr.bf16.mxu0 0
    %7061 = vmatpush2.bf16.msra.mxu0 0
    %7062 = vmatprep.subr.bf16.mxu0 0
    %7063 = vmatpush2.bf16.msra.mxu0 0
    %7064 = vmatprep.subr.bf16.mxu0 0
    %7065 = vmatpush2.bf16.msra.mxu0 0
    %7066 = vmatprep.subr.bf16.mxu0 0
    %7067 = vmatpush2.bf16.msra.mxu0 0
    %7068 = vmatprep.subr.bf16.mxu0 0
    %7069 = vmatpush2.bf16.msra.mxu0 0
    %7070 = vmatprep.subr.bf16.mxu0 0
    %7071 = vmatpush2.bf16.msra.mxu0 0
    %7072 = vmatprep.subr.bf16.mxu0 0
    %7073 = vmatpush2.bf16.msra.mxu0 0
    %7074 = vmatprep.mubr.bf16.mxu0 0
    %7075 = vmatmul.mubr.bf16.gmra.mxu0 %v7037
    %v7076 = vpop.f32.mrf.mxu0
    %v7077 = vadd.f32 0.0, %v7076
    %v7078 = vpop.f32.mrf.mxu0
    %v7079 = vpop.f32.mrf.mxu0
    %v7080 = vadd.f32 0.0, %v7079
    %v7081 = vpop.f32.mrf.mxu0
    %7082 = vmatprep.mubr.bf16.mxu0 0
    %7083 = vmatmul.mubr.bf16.gmra.mxu0 %v7040
    %v7084 = vpop.f32.mrf.mxu0
    %v7085 = vadd.f32 0.0, %v7084
    %v7086 = vpop.f32.mrf.mxu0
    %v7087 = vpop.f32.mrf.mxu0
    %v7088 = vadd.f32 0.0, %v7087
    %v7089 = vpop.f32.mrf.mxu0
    %7090 = vdwg.mxu0
    %v7091 = vpack.c.bf16 %v7080, %v7077
    %v7092 = vpack.c.bf16 %v7088, %v7085
    %v7094 = vsel %vm6749, %v7091, 0
    %v7097 = vsel %vm6749, %v7092, 0
    %v7100 = vsel %vm6908, %v7020, 0
    %7102 = vmatprep.subr.bf16.mxu0 0
    %7103 = vmatpush1.bf16.msra.mxu0 0
    %7104 = vmatprep.subr.bf16.mxu0 0
    %7105 = vmatpush1.bf16.msra.mxu0 0
    %7106 = vmatprep.subr.bf16.mxu0 0
    %7107 = vmatpush1.bf16.msra.mxu0 0
    %7108 = vmatprep.subr.bf16.mxu0 0
    %7109 = vmatpush1.bf16.msra.mxu0 0
    %7110 = vmatprep.subr.bf16.mxu0 0
    %7111 = vmatpush1.bf16.msra.mxu0 0
    %7112 = vmatprep.subr.bf16.mxu0 0
    %7113 = vmatpush1.bf16.msra.mxu0 0
    %7114 = vmatprep.subr.bf16.mxu0 0
    %7115 = vmatpush1.bf16.msra.mxu0 0
    %7116 = vmatprep.subr.bf16.mxu0 0
    %7117 = vmatpush1.bf16.msra.mxu0 %v7100
    %7118 = vmatprep.subr.bf16.mxu0 0
    %7119 = vmatpush2.bf16.msra.mxu0 0
    %7120 = vmatprep.subr.bf16.mxu0 0
    %7121 = vmatpush2.bf16.msra.mxu0 0
    %7122 = vmatprep.subr.bf16.mxu0 0
    %7123 = vmatpush2.bf16.msra.mxu0 0
    %7124 = vmatprep.subr.bf16.mxu0 0
    %7125 = vmatpush2.bf16.msra.mxu0 0
    %7126 = vmatprep.subr.bf16.mxu0 0
    %7127 = vmatpush2.bf16.msra.mxu0 0
    %7128 = vmatprep.subr.bf16.mxu0 0
    %7129 = vmatpush2.bf16.msra.mxu0 0
    %7130 = vmatprep.subr.bf16.mxu0 0
    %7131 = vmatpush2.bf16.msra.mxu0 0
    %7132 = vmatprep.subr.bf16.mxu0 0
    %7133 = vmatpush2.bf16.msra.mxu0 0
    %7134 = vmatprep.mubr.bf16.mxu0 0
    %7135 = vmatmul.mubr.bf16.gmra.mxu0 %v7094
    %v7136 = vpop.f32.mrf.mxu0
    %v7137 = vadd.f32 0.0, %v7136
    %v7138 = vpop.f32.mrf.mxu0
    %v7139 = vpop.f32.mrf.mxu0
    %v7140 = vadd.f32 0.0, %v7139
    %v7141 = vpop.f32.mrf.mxu0
    %7142 = vmatprep.mubr.bf16.mxu0 0
    %7143 = vmatmul.mubr.bf16.gmra.mxu0 %v7097
    %v7144 = vpop.f32.mrf.mxu0
    %v7145 = vadd.f32 0.0, %v7144
    %v7146 = vpop.f32.mrf.mxu0
    %v7147 = vpop.f32.mrf.mxu0
    %v7148 = vadd.f32 0.0, %v7147
    %v7149 = vpop.f32.mrf.mxu0
    %7150 = vdwg.mxu0
    %v7151 = vadd.f32 %v7005, %v7137
    %v7152 = vadd.f32 %v7008, %v7140
    %v7153 = vadd.f32 %v7013, %v7145
    %v7154 = vadd.f32 %v7016, %v7148
    %s7155 = scalar_lea.vmem [#allocation6], 12
    %v7156 = vld [vmem:[%s7155] sm:$0xf]
    %s7157 = scalar_lea.vmem [#allocation7], 48
    %v7158 = vld [vmem:[%s7157] sm:$0xf]
    %v7159 = vld [vmem:[%s7157 + $0x4] sm:$0xf]
    %v7160 = vld [vmem:[%s7157 + $0x8] sm:$0xf]
    %v7161 = vld [vmem:[%s7157 + $0xc] sm:$0xf]
    %v7166 = vunpack.c.l.b16 %v7158
    %v7167 = vunpack.c.l.b16 %v7159
    %v7168 = vunpack.c.l.b16 %v7160
    %v7169 = vunpack.c.l.b16 %v7161
    %v7170 = vpack.c.b16 %v7167, %v7166
    %v7171 = vpack.c.b16 %v7169, %v7168
    %v7173 = vsel %vm5454, %v7170, 0
    %v7176 = vsel %vm5454, %v7171, 0
    %7178 = vmatprep.subr.bf16.mxu0 0
    %7179 = vmatpush1.bf16.msra.mxu0 0
    %7180 = vmatprep.subr.bf16.mxu0 0
    %7181 = vmatpush1.bf16.msra.mxu0 0
    %7182 = vmatprep.subr.bf16.mxu0 0
    %7183 = vmatpush1.bf16.msra.mxu0 0
    %7184 = vmatprep.subr.bf16.mxu0 0
    %7185 = vmatpush1.bf16.msra.mxu0 0
    %7186 = vmatprep.subr.bf16.mxu0 0
    %7187 = vmatpush1.bf16.msra.mxu0 0
    %7188 = vmatprep.subr.bf16.mxu0 0
    %7189 = vmatpush1.bf16.msra.mxu0 0
    %7190 = vmatprep.subr.bf16.mxu0 0
    %7191 = vmatpush1.bf16.msra.mxu0 %v6755
    %7192 = vmatprep.subr.bf16.mxu0 0
    %7193 = vmatpush1.bf16.msra.mxu0 %v6754
    %7194 = vmatprep.subr.bf16.mxu0 0
    %7195 = vmatpush2.bf16.msra.mxu0 0
    %7196 = vmatprep.subr.bf16.mxu0 0
    %7197 = vmatpush2.bf16.msra.mxu0 0
    %7198 = vmatprep.subr.bf16.mxu0 0
    %7199 = vmatpush2.bf16.msra.mxu0 0
    %7200 = vmatprep.subr.bf16.mxu0 0
    %7201 = vmatpush2.bf16.msra.mxu0 0
    %7202 = vmatprep.subr.bf16.mxu0 0
    %7203 = vmatpush2.bf16.msra.mxu0 0
    %7204 = vmatprep.subr.bf16.mxu0 0
    %7205 = vmatpush2.bf16.msra.mxu0 0
    %7206 = vmatprep.subr.bf16.mxu0 0
    %7207 = vmatpush2.bf16.msra.mxu0 0
    %7208 = vmatprep.subr.bf16.mxu0 0
    %7209 = vmatpush2.bf16.msra.mxu0 0
    %7210 = vmatprep.mubr.bf16.mxu0 0
    %7211 = vmatmul.mubr.bf16.gmra.mxu0 %v7173
    %v7212 = vpop.f32.mrf.mxu0
    %v7213 = vadd.f32 0.0, %v7212
    %v7214 = vpop.f32.mrf.mxu0
    %v7215 = vpop.f32.mrf.mxu0
    %v7216 = vadd.f32 0.0, %v7215
    %v7217 = vpop.f32.mrf.mxu0
    %7218 = vmatprep.mubr.bf16.mxu0 0
    %7219 = vmatmul.mubr.bf16.gmra.mxu0 %v7176
    %v7220 = vpop.f32.mrf.mxu0
    %v7221 = vadd.f32 0.0, %v7220
    %v7222 = vpop.f32.mrf.mxu0
    %v7223 = vpop.f32.mrf.mxu0
    %v7224 = vadd.f32 0.0, %v7223
    %v7225 = vpop.f32.mrf.mxu0
    %7226 = vdwg.mxu0
    %v7227 = vpack.c.bf16 %v7216, %v7213
    %v7228 = vpack.c.bf16 %v7224, %v7221
    %v7230 = vsel %vm6749, %v7227, 0
    %v7233 = vsel %vm6749, %v7228, 0
    %v7236 = vsel %vm6908, %v7156, 0
    %7238 = vmatprep.subr.bf16.mxu0 0
    %7239 = vmatpush1.bf16.msra.mxu0 0
    %7240 = vmatprep.subr.bf16.mxu0 0
    %7241 = vmatpush1.bf16.msra.mxu0 0
    %7242 = vmatprep.subr.bf16.mxu0 0
    %7243 = vmatpush1.bf16.msra.mxu0 0
    %7244 = vmatprep.subr.bf16.mxu0 0
    %7245 = vmatpush1.bf16.msra.mxu0 0
    %7246 = vmatprep.subr.bf16.mxu0 0
    %7247 = vmatpush1.bf16.msra.mxu0 0
    %7248 = vmatprep.subr.bf16.mxu0 0
    %7249 = vmatpush1.bf16.msra.mxu0 0
    %7250 = vmatprep.subr.bf16.mxu0 0
    %7251 = vmatpush1.bf16.msra.mxu0 0
    %7252 = vmatprep.subr.bf16.mxu0 0
    %7253 = vmatpush1.bf16.msra.mxu0 %v7236
    %7254 = vmatprep.subr.bf16.mxu0 0
    %7255 = vmatpush2.bf16.msra.mxu0 0
    %7256 = vmatprep.subr.bf16.mxu0 0
    %7257 = vmatpush2.bf16.msra.mxu0 0
    %7258 = vmatprep.subr.bf16.mxu0 0
    %7259 = vmatpush2.bf16.msra.mxu0 0
    %7260 = vmatprep.subr.bf16.mxu0 0
    %7261 = vmatpush2.bf16.msra.mxu0 0
    %7262 = vmatprep.subr.bf16.mxu0 0
    %7263 = vmatpush2.bf16.msra.mxu0 0
    %7264 = vmatprep.subr.bf16.mxu0 0
    %7265 = vmatpush2.bf16.msra.mxu0 0
    %7266 = vmatprep.subr.bf16.mxu0 0
    %7267 = vmatpush2.bf16.msra.mxu0 0
    %7268 = vmatprep.subr.bf16.mxu0 0
    %7269 = vmatpush2.bf16.msra.mxu0 0
    %7270 = vmatprep.mubr.bf16.mxu0 0
    %7271 = vmatmul.mubr.bf16.gmra.mxu0 %v7230
    %v7272 = vpop.f32.mrf.mxu0
    %v7273 = vadd.f32 0.0, %v7272
    %v7274 = vpop.f32.mrf.mxu0
    %v7275 = vpop.f32.mrf.mxu0
    %v7276 = vadd.f32 0.0, %v7275
    %v7277 = vpop.f32.mrf.mxu0
    %7278 = vmatprep.mubr.bf16.mxu0 0
    %7279 = vmatmul.mubr.bf16.gmra.mxu0 %v7233
    %v7280 = vpop.f32.mrf.mxu0
    %v7281 = vadd.f32 0.0, %v7280
    %v7282 = vpop.f32.mrf.mxu0
    %v7283 = vpop.f32.mrf.mxu0
    %v7284 = vadd.f32 0.0, %v7283
    %v7285 = vpop.f32.mrf.mxu0
    %7286 = vdwg.mxu0
    %v7287 = vadd.f32 %v7151, %v7273
    %v7288 = vadd.f32 %v7152, %v7276
    %v7289 = vadd.f32 %v7153, %v7281
    %v7290 = vadd.f32 %v7154, %v7284
    %s7291 = scalar_lea.vmem [#allocation6], 16
    %v7292 = vld [vmem:[%s7291] sm:$0xf]
    %s7293 = scalar_lea.vmem [#allocation7], 64
    %v7294 = vld [vmem:[%s7293] sm:$0xf]
    %v7295 = vld [vmem:[%s7293 + $0x4] sm:$0xf]
    %v7296 = vld [vmem:[%s7293 + $0x8] sm:$0xf]
    %v7297 = vld [vmem:[%s7293 + $0xc] sm:$0xf]
    %v7302 = vunpack.c.l.b16 %v7294
    %v7303 = vunpack.c.l.b16 %v7295
    %v7304 = vunpack.c.l.b16 %v7296
    %v7305 = vunpack.c.l.b16 %v7297
    %v7306 = vpack.c.b16 %v7303, %v7302
    %v7307 = vpack.c.b16 %v7305, %v7304
    %v7309 = vsel %vm5454, %v7306, 0
    %v7312 = vsel %vm5454, %v7307, 0
    %7314 = vmatprep.subr.bf16.mxu0 0
    %7315 = vmatpush1.bf16.msra.mxu0 0
    %7316 = vmatprep.subr.bf16.mxu0 0
    %7317 = vmatpush1.bf16.msra.mxu0 0
    %7318 = vmatprep.subr.bf16.mxu0 0
    %7319 = vmatpush1.bf16.msra.mxu0 0
    %7320 = vmatprep.subr.bf16.mxu0 0
    %7321 = vmatpush1.bf16.msra.mxu0 0
    %7322 = vmatprep.subr.bf16.mxu0 0
    %7323 = vmatpush1.bf16.msra.mxu0 0
    %7324 = vmatprep.subr.bf16.mxu0 0
    %7325 = vmatpush1.bf16.msra.mxu0 0
    %7326 = vmatprep.subr.bf16.mxu0 0
    %7327 = vmatpush1.bf16.msra.mxu0 %v6755
    %7328 = vmatprep.subr.bf16.mxu0 0
    %7329 = vmatpush1.bf16.msra.mxu0 %v6754
    %7330 = vmatprep.subr.bf16.mxu0 0
    %7331 = vmatpush2.bf16.msra.mxu0 0
    %7332 = vmatprep.subr.bf16.mxu0 0
    %7333 = vmatpush2.bf16.msra.mxu0 0
    %7334 = vmatprep.subr.bf16.mxu0 0
    %7335 = vmatpush2.bf16.msra.mxu0 0
    %7336 = vmatprep.subr.bf16.mxu0 0
    %7337 = vmatpush2.bf16.msra.mxu0 0
    %7338 = vmatprep.subr.bf16.mxu0 0
    %7339 = vmatpush2.bf16.msra.mxu0 0
    %7340 = vmatprep.subr.bf16.mxu0 0
    %7341 = vmatpush2.bf16.msra.mxu0 0
    %7342 = vmatprep.subr.bf16.mxu0 0
    %7343 = vmatpush2.bf16.msra.mxu0 0
    %7344 = vmatprep.subr.bf16.mxu0 0
    %7345 = vmatpush2.bf16.msra.mxu0 0
    %7346 = vmatprep.mubr.bf16.mxu0 0
    %7347 = vmatmul.mubr.bf16.gmra.mxu0 %v7309
    %v7348 = vpop.f32.mrf.mxu0
    %v7349 = vadd.f32 0.0, %v7348
    %v7350 = vpop.f32.mrf.mxu0
    %v7351 = vpop.f32.mrf.mxu0
    %v7352 = vadd.f32 0.0, %v7351
    %v7353 = vpop.f32.mrf.mxu0
    %7354 = vmatprep.mubr.bf16.mxu0 0
    %7355 = vmatmul.mubr.bf16.gmra.mxu0 %v7312
    %v7356 = vpop.f32.mrf.mxu0
    %v7357 = vadd.f32 0.0, %v7356
    %v7358 = vpop.f32.mrf.mxu0
    %v7359 = vpop.f32.mrf.mxu0
    %v7360 = vadd.f32 0.0, %v7359
    %v7361 = vpop.f32.mrf.mxu0
    %7362 = vdwg.mxu0
    %v7363 = vpack.c.bf16 %v7352, %v7349
    %v7364 = vpack.c.bf16 %v7360, %v7357
    %v7366 = vsel %vm6749, %v7363, 0
    %v7369 = vsel %vm6749, %v7364, 0
    %v7372 = vsel %vm6908, %v7292, 0
    %7374 = vmatprep.subr.bf16.mxu0 0
    %7375 = vmatpush1.bf16.msra.mxu0 0
    %7376 = vmatprep.subr.bf16.mxu0 0
    %7377 = vmatpush1.bf16.msra.mxu0 0
    %7378 = vmatprep.subr.bf16.mxu0 0
    %7379 = vmatpush1.bf16.msra.mxu0 0
    %7380 = vmatprep.subr.bf16.mxu0 0
    %7381 = vmatpush1.bf16.msra.mxu0 0
    %7382 = vmatprep.subr.bf16.mxu0 0
    %7383 = vmatpush1.bf16.msra.mxu0 0
    %7384 = vmatprep.subr.bf16.mxu0 0
    %7385 = vmatpush1.bf16.msra.mxu0 0
    %7386 = vmatprep.subr.bf16.mxu0 0
    %7387 = vmatpush1.bf16.msra.mxu0 0
    %7388 = vmatprep.subr.bf16.mxu0 0
    %7389 = vmatpush1.bf16.msra.mxu0 %v7372
    %7390 = vmatprep.subr.bf16.mxu0 0
    %7391 = vmatpush2.bf16.msra.mxu0 0
    %7392 = vmatprep.subr.bf16.mxu0 0
    %7393 = vmatpush2.bf16.msra.mxu0 0
    %7394 = vmatprep.subr.bf16.mxu0 0
    %7395 = vmatpush2.bf16.msra.mxu0 0
    %7396 = vmatprep.subr.bf16.mxu0 0
    %7397 = vmatpush2.bf16.msra.mxu0 0
    %7398 = vmatprep.subr.bf16.mxu0 0
    %7399 = vmatpush2.bf16.msra.mxu0 0
    %7400 = vmatprep.subr.bf16.mxu0 0
    %7401 = vmatpush2.bf16.msra.mxu0 0
    %7402 = vmatprep.subr.bf16.mxu0 0
    %7403 = vmatpush2.bf16.msra.mxu0 0
    %7404 = vmatprep.subr.bf16.mxu0 0
    %7405 = vmatpush2.bf16.msra.mxu0 0
    %7406 = vmatprep.mubr.bf16.mxu0 0
    %7407 = vmatmul.mubr.bf16.gmra.mxu0 %v7366
    %v7408 = vpop.f32.mrf.mxu0
    %v7409 = vadd.f32 0.0, %v7408
    %v7410 = vpop.f32.mrf.mxu0
    %v7411 = vpop.f32.mrf.mxu0
    %v7412 = vadd.f32 0.0, %v7411
    %v7413 = vpop.f32.mrf.mxu0
    %7414 = vmatprep.mubr.bf16.mxu0 0
    %7415 = vmatmul.mubr.bf16.gmra.mxu0 %v7369
    %v7416 = vpop.f32.mrf.mxu0
    %v7417 = vadd.f32 0.0, %v7416
    %v7418 = vpop.f32.mrf.mxu0
    %v7419 = vpop.f32.mrf.mxu0
    %v7420 = vadd.f32 0.0, %v7419
    %v7421 = vpop.f32.mrf.mxu0
    %7422 = vdwg.mxu0
    %v7423 = vadd.f32 %v7287, %v7409
    %v7424 = vadd.f32 %v7288, %v7412
    %v7425 = vadd.f32 %v7289, %v7417
    %v7426 = vadd.f32 %v7290, %v7420
    %s7427 = scalar_lea.vmem [#allocation6], 20
    %v7428 = vld [vmem:[%s7427] sm:$0xf]
    %s7429 = scalar_lea.vmem [#allocation7], 80
    %v7430 = vld [vmem:[%s7429] sm:$0xf]
    %v7431 = vld [vmem:[%s7429 + $0x4] sm:$0xf]
    %v7432 = vld [vmem:[%s7429 + $0x8] sm:$0xf]
    %v7433 = vld [vmem:[%s7429 + $0xc] sm:$0xf]
    %v7438 = vunpack.c.l.b16 %v7430
    %v7439 = vunpack.c.l.b16 %v7431
    %v7440 = vunpack.c.l.b16 %v7432
    %v7441 = vunpack.c.l.b16 %v7433
    %v7442 = vpack.c.b16 %v7439, %v7438
    %v7443 = vpack.c.b16 %v7441, %v7440
    %v7445 = vsel %vm5454, %v7442, 0
    %v7448 = vsel %vm5454, %v7443, 0
    %7450 = vmatprep.subr.bf16.mxu0 0
    %7451 = vmatpush1.bf16.msra.mxu0 0
    %7452 = vmatprep.subr.bf16.mxu0 0
    %7453 = vmatpush1.bf16.msra.mxu0 0
    %7454 = vmatprep.subr.bf16.mxu0 0
    %7455 = vmatpush1.bf16.msra.mxu0 0
    %7456 = vmatprep.subr.bf16.mxu0 0
    %7457 = vmatpush1.bf16.msra.mxu0 0
    %7458 = vmatprep.subr.bf16.mxu0 0
    %7459 = vmatpush1.bf16.msra.mxu0 0
    %7460 = vmatprep.subr.bf16.mxu0 0
    %7461 = vmatpush1.bf16.msra.mxu0 0
    %7462 = vmatprep.subr.bf16.mxu0 0
    %7463 = vmatpush1.bf16.msra.mxu0 %v6755
    %7464 = vmatprep.subr.bf16.mxu0 0
    %7465 = vmatpush1.bf16.msra.mxu0 %v6754
    %7466 = vmatprep.subr.bf16.mxu0 0
    %7467 = vmatpush2.bf16.msra.mxu0 0
    %7468 = vmatprep.subr.bf16.mxu0 0
    %7469 = vmatpush2.bf16.msra.mxu0 0
    %7470 = vmatprep.subr.bf16.mxu0 0
    %7471 = vmatpush2.bf16.msra.mxu0 0
    %7472 = vmatprep.subr.bf16.mxu0 0
    %7473 = vmatpush2.bf16.msra.mxu0 0
    %7474 = vmatprep.subr.bf16.mxu0 0
    %7475 = vmatpush2.bf16.msra.mxu0 0
    %7476 = vmatprep.subr.bf16.mxu0 0
    %7477 = vmatpush2.bf16.msra.mxu0 0
    %7478 = vmatprep.subr.bf16.mxu0 0
    %7479 = vmatpush2.bf16.msra.mxu0 0
    %7480 = vmatprep.subr.bf16.mxu0 0
    %7481 = vmatpush2.bf16.msra.mxu0 0
    %7482 = vmatprep.mubr.bf16.mxu0 0
    %7483 = vmatmul.mubr.bf16.gmra.mxu0 %v7445
    %v7484 = vpop.f32.mrf.mxu0
    %v7485 = vadd.f32 0.0, %v7484
    %v7486 = vpop.f32.mrf.mxu0
    %v7487 = vpop.f32.mrf.mxu0
    %v7488 = vadd.f32 0.0, %v7487
    %v7489 = vpop.f32.mrf.mxu0
    %7490 = vmatprep.mubr.bf16.mxu0 0
    %7491 = vmatmul.mubr.bf16.gmra.mxu0 %v7448
    %v7492 = vpop.f32.mrf.mxu0
    %v7493 = vadd.f32 0.0, %v7492
    %v7494 = vpop.f32.mrf.mxu0
    %v7495 = vpop.f32.mrf.mxu0
    %v7496 = vadd.f32 0.0, %v7495
    %v7497 = vpop.f32.mrf.mxu0
    %7498 = vdwg.mxu0
    %v7499 = vpack.c.bf16 %v7488, %v7485
    %v7500 = vpack.c.bf16 %v7496, %v7493
    %v7502 = vsel %vm6749, %v7499, 0
    %v7505 = vsel %vm6749, %v7500, 0
    %v7508 = vsel %vm6908, %v7428, 0
    %7510 = vmatprep.subr.bf16.mxu0 0
    %7511 = vmatpush1.bf16.msra.mxu0 0
    %7512 = vmatprep.subr.bf16.mxu0 0
    %7513 = vmatpush1.bf16.msra.mxu0 0
    %7514 = vmatprep.subr.bf16.mxu0 0
    %7515 = vmatpush1.bf16.msra.mxu0 0
    %7516 = vmatprep.subr.bf16.mxu0 0
    %7517 = vmatpush1.bf16.msra.mxu0 0
    %7518 = vmatprep.subr.bf16.mxu0 0
    %7519 = vmatpush1.bf16.msra.mxu0 0
    %7520 = vmatprep.subr.bf16.mxu0 0
    %7521 = vmatpush1.bf16.msra.mxu0 0
    %7522 = vmatprep.subr.bf16.mxu0 0
    %7523 = vmatpush1.bf16.msra.mxu0 0
    %7524 = vmatprep.subr.bf16.mxu0 0
    %7525 = vmatpush1.bf16.msra.mxu0 %v7508
    %7526 = vmatprep.subr.bf16.mxu0 0
    %7527 = vmatpush2.bf16.msra.mxu0 0
    %7528 = vmatprep.subr.bf16.mxu0 0
    %7529 = vmatpush2.bf16.msra.mxu0 0
    %7530 = vmatprep.subr.bf16.mxu0 0
    %7531 = vmatpush2.bf16.msra.mxu0 0
    %7532 = vmatprep.subr.bf16.mxu0 0
    %7533 = vmatpush2.bf16.msra.mxu0 0
    %7534 = vmatprep.subr.bf16.mxu0 0
    %7535 = vmatpush2.bf16.msra.mxu0 0
    %7536 = vmatprep.subr.bf16.mxu0 0
    %7537 = vmatpush2.bf16.msra.mxu0 0
    %7538 = vmatprep.subr.bf16.mxu0 0
    %7539 = vmatpush2.bf16.msra.mxu0 0
    %7540 = vmatprep.subr.bf16.mxu0 0
    %7541 = vmatpush2.bf16.msra.mxu0 0
    %7542 = vmatprep.mubr.bf16.mxu0 0
    %7543 = vmatmul.mubr.bf16.gmra.mxu0 %v7502
    %v7544 = vpop.f32.mrf.mxu0
    %v7545 = vadd.f32 0.0, %v7544
    %v7546 = vpop.f32.mrf.mxu0
    %v7547 = vpop.f32.mrf.mxu0
    %v7548 = vadd.f32 0.0, %v7547
    %v7549 = vpop.f32.mrf.mxu0
    %7550 = vmatprep.mubr.bf16.mxu0 0
    %7551 = vmatmul.mubr.bf16.gmra.mxu0 %v7505
    %v7552 = vpop.f32.mrf.mxu0
    %v7553 = vadd.f32 0.0, %v7552
    %v7554 = vpop.f32.mrf.mxu0
    %v7555 = vpop.f32.mrf.mxu0
    %v7556 = vadd.f32 0.0, %v7555
    %v7557 = vpop.f32.mrf.mxu0
    %7558 = vdwg.mxu0
    %v7559 = vadd.f32 %v7423, %v7545
    %v7560 = vadd.f32 %v7424, %v7548
    %v7561 = vadd.f32 %v7425, %v7553
    %v7562 = vadd.f32 %v7426, %v7556
    %s7563 = scalar_lea.vmem [#allocation6], 24
    %v7564 = vld [vmem:[%s7563] sm:$0xf]
    %s7565 = scalar_lea.vmem [#allocation7], 96
    %v7566 = vld [vmem:[%s7565] sm:$0xf]
    %v7567 = vld [vmem:[%s7565 + $0x4] sm:$0xf]
    %v7568 = vld [vmem:[%s7565 + $0x8] sm:$0xf]
    %v7569 = vld [vmem:[%s7565 + $0xc] sm:$0xf]
    %v7574 = vunpack.c.l.b16 %v7566
    %v7575 = vunpack.c.l.b16 %v7567
    %v7576 = vunpack.c.l.b16 %v7568
    %v7577 = vunpack.c.l.b16 %v7569
    %v7578 = vpack.c.b16 %v7575, %v7574
    %v7579 = vpack.c.b16 %v7577, %v7576
    %v7581 = vsel %vm5454, %v7578, 0
    %v7584 = vsel %vm5454, %v7579, 0
    %7586 = vmatprep.subr.bf16.mxu0 0
    %7587 = vmatpush1.bf16.msra.mxu0 0
    %7588 = vmatprep.subr.bf16.mxu0 0
    %7589 = vmatpush1.bf16.msra.mxu0 0
    %7590 = vmatprep.subr.bf16.mxu0 0
    %7591 = vmatpush1.bf16.msra.mxu0 0
    %7592 = vmatprep.subr.bf16.mxu0 0
    %7593 = vmatpush1.bf16.msra.mxu0 0
    %7594 = vmatprep.subr.bf16.mxu0 0
    %7595 = vmatpush1.bf16.msra.mxu0 0
    %7596 = vmatprep.subr.bf16.mxu0 0
    %7597 = vmatpush1.bf16.msra.mxu0 0
    %7598 = vmatprep.subr.bf16.mxu0 0
    %7599 = vmatpush1.bf16.msra.mxu0 %v6755
    %7600 = vmatprep.subr.bf16.mxu0 0
    %7601 = vmatpush1.bf16.msra.mxu0 %v6754
    %7602 = vmatprep.subr.bf16.mxu0 0
    %7603 = vmatpush2.bf16.msra.mxu0 0
    %7604 = vmatprep.subr.bf16.mxu0 0
    %7605 = vmatpush2.bf16.msra.mxu0 0
    %7606 = vmatprep.subr.bf16.mxu0 0
    %7607 = vmatpush2.bf16.msra.mxu0 0
    %7608 = vmatprep.subr.bf16.mxu0 0
    %7609 = vmatpush2.bf16.msra.mxu0 0
    %7610 = vmatprep.subr.bf16.mxu0 0
    %7611 = vmatpush2.bf16.msra.mxu0 0
    %7612 = vmatprep.subr.bf16.mxu0 0
    %7613 = vmatpush2.bf16.msra.mxu0 0
    %7614 = vmatprep.subr.bf16.mxu0 0
    %7615 = vmatpush2.bf16.msra.mxu0 0
    %7616 = vmatprep.subr.bf16.mxu0 0
    %7617 = vmatpush2.bf16.msra.mxu0 0
    %7618 = vmatprep.mubr.bf16.mxu0 0
    %7619 = vmatmul.mubr.bf16.gmra.mxu0 %v7581
    %v7620 = vpop.f32.mrf.mxu0
    %v7621 = vadd.f32 0.0, %v7620
    %v7622 = vpop.f32.mrf.mxu0
    %v7623 = vpop.f32.mrf.mxu0
    %v7624 = vadd.f32 0.0, %v7623
    %v7625 = vpop.f32.mrf.mxu0
    %7626 = vmatprep.mubr.bf16.mxu0 0
    %7627 = vmatmul.mubr.bf16.gmra.mxu0 %v7584
    %v7628 = vpop.f32.mrf.mxu0
    %v7629 = vadd.f32 0.0, %v7628
    %v7630 = vpop.f32.mrf.mxu0
    %v7631 = vpop.f32.mrf.mxu0
    %v7632 = vadd.f32 0.0, %v7631
    %v7633 = vpop.f32.mrf.mxu0
    %7634 = vdwg.mxu0
    %v7635 = vpack.c.bf16 %v7624, %v7621
    %v7636 = vpack.c.bf16 %v7632, %v7629
    %v7638 = vsel %vm6749, %v7635, 0
    %v7641 = vsel %vm6749, %v7636, 0
    %v7644 = vsel %vm6908, %v7564, 0
    %7646 = vmatprep.subr.bf16.mxu0 0
    %7647 = vmatpush1.bf16.msra.mxu0 0
    %7648 = vmatprep.subr.bf16.mxu0 0
    %7649 = vmatpush1.bf16.msra.mxu0 0
    %7650 = vmatprep.subr.bf16.mxu0 0
    %7651 = vmatpush1.bf16.msra.mxu0 0
    %7652 = vmatprep.subr.bf16.mxu0 0
    %7653 = vmatpush1.bf16.msra.mxu0 0
    %7654 = vmatprep.subr.bf16.mxu0 0
    %7655 = vmatpush1.bf16.msra.mxu0 0
    %7656 = vmatprep.subr.bf16.mxu0 0
    %7657 = vmatpush1.bf16.msra.mxu0 0
    %7658 = vmatprep.subr.bf16.mxu0 0
    %7659 = vmatpush1.bf16.msra.mxu0 0
    %7660 = vmatprep.subr.bf16.mxu0 0
    %7661 = vmatpush1.bf16.msra.mxu0 %v7644
    %7662 = vmatprep.subr.bf16.mxu0 0
    %7663 = vmatpush2.bf16.msra.mxu0 0
    %7664 = vmatprep.subr.bf16.mxu0 0
    %7665 = vmatpush2.bf16.msra.mxu0 0
    %7666 = vmatprep.subr.bf16.mxu0 0
    %7667 = vmatpush2.bf16.msra.mxu0 0
    %7668 = vmatprep.subr.bf16.mxu0 0
    %7669 = vmatpush2.bf16.msra.mxu0 0
    %7670 = vmatprep.subr.bf16.mxu0 0
    %7671 = vmatpush2.bf16.msra.mxu0 0
    %7672 = vmatprep.subr.bf16.mxu0 0
    %7673 = vmatpush2.bf16.msra.mxu0 0
    %7674 = vmatprep.subr.bf16.mxu0 0
    %7675 = vmatpush2.bf16.msra.mxu0 0
    %7676 = vmatprep.subr.bf16.mxu0 0
    %7677 = vmatpush2.bf16.msra.mxu0 0
    %7678 = vmatprep.mubr.bf16.mxu0 0
    %7679 = vmatmul.mubr.bf16.gmra.mxu0 %v7638
    %v7680 = vpop.f32.mrf.mxu0
    %v7681 = vadd.f32 0.0, %v7680
    %v7682 = vpop.f32.mrf.mxu0
    %v7683 = vpop.f32.mrf.mxu0
    %v7684 = vadd.f32 0.0, %v7683
    %v7685 = vpop.f32.mrf.mxu0
    %7686 = vmatprep.mubr.bf16.mxu0 0
    %7687 = vmatmul.mubr.bf16.gmra.mxu0 %v7641
    %v7688 = vpop.f32.mrf.mxu0
    %v7689 = vadd.f32 0.0, %v7688
    %v7690 = vpop.f32.mrf.mxu0
    %v7691 = vpop.f32.mrf.mxu0
    %v7692 = vadd.f32 0.0, %v7691
    %v7693 = vpop.f32.mrf.mxu0
    %7694 = vdwg.mxu0
    %v7695 = vadd.f32 %v7559, %v7681
    %v7696 = vadd.f32 %v7560, %v7684
    %v7697 = vadd.f32 %v7561, %v7689
    %v7698 = vadd.f32 %v7562, %v7692
    %s7699 = scalar_lea.vmem [#allocation6], 28
    %v7700 = vld [vmem:[%s7699] sm:$0xf]
    %s7701 = scalar_lea.vmem [#allocation7], 112
    %v7702 = vld [vmem:[%s7701] sm:$0xf]
    %v7703 = vld [vmem:[%s7701 + $0x4] sm:$0xf]
    %v7704 = vld [vmem:[%s7701 + $0x8] sm:$0xf]
    %v7705 = vld [vmem:[%s7701 + $0xc] sm:$0xf]
    %v7710 = vunpack.c.l.b16 %v7702
    %v7711 = vunpack.c.l.b16 %v7703
    %v7712 = vunpack.c.l.b16 %v7704
    %v7713 = vunpack.c.l.b16 %v7705
    %v7714 = vpack.c.b16 %v7711, %v7710
    %v7715 = vpack.c.b16 %v7713, %v7712
    %v7717 = vsel %vm5454, %v7714, 0
    %v7720 = vsel %vm5454, %v7715, 0
    %7722 = vmatprep.subr.bf16.mxu0 0
    %7723 = vmatpush1.bf16.msra.mxu0 0
    %7724 = vmatprep.subr.bf16.mxu0 0
    %7725 = vmatpush1.bf16.msra.mxu0 0
    %7726 = vmatprep.subr.bf16.mxu0 0
    %7727 = vmatpush1.bf16.msra.mxu0 0
    %7728 = vmatprep.subr.bf16.mxu0 0
    %7729 = vmatpush1.bf16.msra.mxu0 0
    %7730 = vmatprep.subr.bf16.mxu0 0
    %7731 = vmatpush1.bf16.msra.mxu0 0
    %7732 = vmatprep.subr.bf16.mxu0 0
    %7733 = vmatpush1.bf16.msra.mxu0 0
    %7734 = vmatprep.subr.bf16.mxu0 0
    %7735 = vmatpush1.bf16.msra.mxu0 %v6755
    %7736 = vmatprep.subr.bf16.mxu0 0
    %7737 = vmatpush1.bf16.msra.mxu0 %v6754
    %7738 = vmatprep.subr.bf16.mxu0 0
    %7739 = vmatpush2.bf16.msra.mxu0 0
    %7740 = vmatprep.subr.bf16.mxu0 0
    %7741 = vmatpush2.bf16.msra.mxu0 0
    %7742 = vmatprep.subr.bf16.mxu0 0
    %7743 = vmatpush2.bf16.msra.mxu0 0
    %7744 = vmatprep.subr.bf16.mxu0 0
    %7745 = vmatpush2.bf16.msra.mxu0 0
    %7746 = vmatprep.subr.bf16.mxu0 0
    %7747 = vmatpush2.bf16.msra.mxu0 0
    %7748 = vmatprep.subr.bf16.mxu0 0
    %7749 = vmatpush2.bf16.msra.mxu0 0
    %7750 = vmatprep.subr.bf16.mxu0 0
    %7751 = vmatpush2.bf16.msra.mxu0 0
    %7752 = vmatprep.subr.bf16.mxu0 0
    %7753 = vmatpush2.bf16.msra.mxu0 0
    %7754 = vmatprep.mubr.bf16.mxu0 0
    %7755 = vmatmul.mubr.bf16.gmra.mxu0 %v7717
    %v7756 = vpop.f32.mrf.mxu0
    %v7757 = vadd.f32 0.0, %v7756
    %v7758 = vpop.f32.mrf.mxu0
    %v7759 = vpop.f32.mrf.mxu0
    %v7760 = vadd.f32 0.0, %v7759
    %v7761 = vpop.f32.mrf.mxu0
    %7762 = vmatprep.mubr.bf16.mxu0 0
    %7763 = vmatmul.mubr.bf16.gmra.mxu0 %v7720
    %v7764 = vpop.f32.mrf.mxu0
    %v7765 = vadd.f32 0.0, %v7764
    %v7766 = vpop.f32.mrf.mxu0
    %v7767 = vpop.f32.mrf.mxu0
    %v7768 = vadd.f32 0.0, %v7767
    %v7769 = vpop.f32.mrf.mxu0
    %7770 = vdwg.mxu0
    %v7771 = vpack.c.bf16 %v7760, %v7757
    %v7772 = vpack.c.bf16 %v7768, %v7765
    %v7774 = vsel %vm6749, %v7771, 0
    %v7777 = vsel %vm6749, %v7772, 0
    %v7780 = vsel %vm6908, %v7700, 0
    %7782 = vmatprep.subr.bf16.mxu0 0
    %7783 = vmatpush1.bf16.msra.mxu0 0
    %7784 = vmatprep.subr.bf16.mxu0 0
    %7785 = vmatpush1.bf16.msra.mxu0 0
    %7786 = vmatprep.subr.bf16.mxu0 0
    %7787 = vmatpush1.bf16.msra.mxu0 0
    %7788 = vmatprep.subr.bf16.mxu0 0
    %7789 = vmatpush1.bf16.msra.mxu0 0
    %7790 = vmatprep.subr.bf16.mxu0 0
    %7791 = vmatpush1.bf16.msra.mxu0 0
    %7792 = vmatprep.subr.bf16.mxu0 0
    %7793 = vmatpush1.bf16.msra.mxu0 0
    %7794 = vmatprep.subr.bf16.mxu0 0
    %7795 = vmatpush1.bf16.msra.mxu0 0
    %7796 = vmatprep.subr.bf16.mxu0 0
    %7797 = vmatpush1.bf16.msra.mxu0 %v7780
    %7798 = vmatprep.subr.bf16.mxu0 0
    %7799 = vmatpush2.bf16.msra.mxu0 0
    %7800 = vmatprep.subr.bf16.mxu0 0
    %7801 = vmatpush2.bf16.msra.mxu0 0
    %7802 = vmatprep.subr.bf16.mxu0 0
    %7803 = vmatpush2.bf16.msra.mxu0 0
    %7804 = vmatprep.subr.bf16.mxu0 0
    %7805 = vmatpush2.bf16.msra.mxu0 0
    %7806 = vmatprep.subr.bf16.mxu0 0
    %7807 = vmatpush2.bf16.msra.mxu0 0
    %7808 = vmatprep.subr.bf16.mxu0 0
    %7809 = vmatpush2.bf16.msra.mxu0 0
    %7810 = vmatprep.subr.bf16.mxu0 0
    %7811 = vmatpush2.bf16.msra.mxu0 0
    %7812 = vmatprep.subr.bf16.mxu0 0
    %7813 = vmatpush2.bf16.msra.mxu0 0
    %7814 = vmatprep.mubr.bf16.mxu0 0
    %7815 = vmatmul.mubr.bf16.gmra.mxu0 %v7774
    %v7816 = vpop.f32.mrf.mxu0
    %v7817 = vadd.f32 0.0, %v7816
    %v7818 = vpop.f32.mrf.mxu0
    %v7819 = vpop.f32.mrf.mxu0
    %v7820 = vadd.f32 0.0, %v7819
    %v7821 = vpop.f32.mrf.mxu0
    %7822 = vmatprep.mubr.bf16.mxu0 0
    %7823 = vmatmul.mubr.bf16.gmra.mxu0 %v7777
    %v7824 = vpop.f32.mrf.mxu0
    %v7825 = vadd.f32 0.0, %v7824
    %v7826 = vpop.f32.mrf.mxu0
    %v7827 = vpop.f32.mrf.mxu0
    %v7828 = vadd.f32 0.0, %v7827
    %v7829 = vpop.f32.mrf.mxu0
    %7830 = vdwg.mxu0
    %v7831 = vadd.f32 %v7695, %v7817
    %v7832 = vadd.f32 %v7696, %v7820
    %v7833 = vadd.f32 %v7697, %v7825
    %v7834 = vadd.f32 %v7698, %v7828
    %s7835 = scalar_lea.vmem [#allocation6], 32
    %v7836 = vld [vmem:[%s7835] sm:$0xf]
    %s7837 = scalar_lea.vmem [#allocation7], 128
    %v7838 = vld [vmem:[%s7837] sm:$0xf]
    %v7839 = vld [vmem:[%s7837 + $0x4] sm:$0xf]
    %v7840 = vld [vmem:[%s7837 + $0x8] sm:$0xf]
    %v7841 = vld [vmem:[%s7837 + $0xc] sm:$0xf]
    %v7846 = vunpack.c.l.b16 %v7838
    %v7847 = vunpack.c.l.b16 %v7839
    %v7848 = vunpack.c.l.b16 %v7840
    %v7849 = vunpack.c.l.b16 %v7841
    %v7850 = vpack.c.b16 %v7847, %v7846
    %v7851 = vpack.c.b16 %v7849, %v7848
    %v7853 = vsel %vm5454, %v7850, 0
    %v7856 = vsel %vm5454, %v7851, 0
    %7858 = vmatprep.subr.bf16.mxu0 0
    %7859 = vmatpush1.bf16.msra.mxu0 0
    %7860 = vmatprep.subr.bf16.mxu0 0
    %7861 = vmatpush1.bf16.msra.mxu0 0
    %7862 = vmatprep.subr.bf16.mxu0 0
    %7863 = vmatpush1.bf16.msra.mxu0 0
    %7864 = vmatprep.subr.bf16.mxu0 0
    %7865 = vmatpush1.bf16.msra.mxu0 0
    %7866 = vmatprep.subr.bf16.mxu0 0
    %7867 = vmatpush1.bf16.msra.mxu0 0
    %7868 = vmatprep.subr.bf16.mxu0 0
    %7869 = vmatpush1.bf16.msra.mxu0 0
    %7870 = vmatprep.subr.bf16.mxu0 0
    %7871 = vmatpush1.bf16.msra.mxu0 %v6755
    %7872 = vmatprep.subr.bf16.mxu0 0
    %7873 = vmatpush1.bf16.msra.mxu0 %v6754
    %7874 = vmatprep.subr.bf16.mxu0 0
    %7875 = vmatpush2.bf16.msra.mxu0 0
    %7876 = vmatprep.subr.bf16.mxu0 0
    %7877 = vmatpush2.bf16.msra.mxu0 0
    %7878 = vmatprep.subr.bf16.mxu0 0
    %7879 = vmatpush2.bf16.msra.mxu0 0
    %7880 = vmatprep.subr.bf16.mxu0 0
    %7881 = vmatpush2.bf16.msra.mxu0 0
    %7882 = vmatprep.subr.bf16.mxu0 0
    %7883 = vmatpush2.bf16.msra.mxu0 0
    %7884 = vmatprep.subr.bf16.mxu0 0
    %7885 = vmatpush2.bf16.msra.mxu0 0
    %7886 = vmatprep.subr.bf16.mxu0 0
    %7887 = vmatpush2.bf16.msra.mxu0 0
    %7888 = vmatprep.subr.bf16.mxu0 0
    %7889 = vmatpush2.bf16.msra.mxu0 0
    %7890 = vmatprep.mubr.bf16.mxu0 0
    %7891 = vmatmul.mubr.bf16.gmra.mxu0 %v7853
    %v7892 = vpop.f32.mrf.mxu0
    %v7893 = vadd.f32 0.0, %v7892
    %v7894 = vpop.f32.mrf.mxu0
    %v7895 = vpop.f32.mrf.mxu0
    %v7896 = vadd.f32 0.0, %v7895
    %v7897 = vpop.f32.mrf.mxu0
    %7898 = vmatprep.mubr.bf16.mxu0 0
    %7899 = vmatmul.mubr.bf16.gmra.mxu0 %v7856
    %v7900 = vpop.f32.mrf.mxu0
    %v7901 = vadd.f32 0.0, %v7900
    %v7902 = vpop.f32.mrf.mxu0
    %v7903 = vpop.f32.mrf.mxu0
    %v7904 = vadd.f32 0.0, %v7903
    %v7905 = vpop.f32.mrf.mxu0
    %7906 = vdwg.mxu0
    %v7907 = vpack.c.bf16 %v7896, %v7893
    %v7908 = vpack.c.bf16 %v7904, %v7901
    %v7910 = vsel %vm6749, %v7907, 0
    %v7913 = vsel %vm6749, %v7908, 0
    %v7916 = vsel %vm6908, %v7836, 0
    %7918 = vmatprep.subr.bf16.mxu0 0
    %7919 = vmatpush1.bf16.msra.mxu0 0
    %7920 = vmatprep.subr.bf16.mxu0 0
    %7921 = vmatpush1.bf16.msra.mxu0 0
    %7922 = vmatprep.subr.bf16.mxu0 0
    %7923 = vmatpush1.bf16.msra.mxu0 0
    %7924 = vmatprep.subr.bf16.mxu0 0
    %7925 = vmatpush1.bf16.msra.mxu0 0
    %7926 = vmatprep.subr.bf16.mxu0 0
    %7927 = vmatpush1.bf16.msra.mxu0 0
    %7928 = vmatprep.subr.bf16.mxu0 0
    %7929 = vmatpush1.bf16.msra.mxu0 0
    %7930 = vmatprep.subr.bf16.mxu0 0
    %7931 = vmatpush1.bf16.msra.mxu0 0
    %7932 = vmatprep.subr.bf16.mxu0 0
    %7933 = vmatpush1.bf16.msra.mxu0 %v7916
    %7934 = vmatprep.subr.bf16.mxu0 0
    %7935 = vmatpush2.bf16.msra.mxu0 0
    %7936 = vmatprep.subr.bf16.mxu0 0
    %7937 = vmatpush2.bf16.msra.mxu0 0
    %7938 = vmatprep.subr.bf16.mxu0 0
    %7939 = vmatpush2.bf16.msra.mxu0 0
    %7940 = vmatprep.subr.bf16.mxu0 0
    %7941 = vmatpush2.bf16.msra.mxu0 0
    %7942 = vmatprep.subr.bf16.mxu0 0
    %7943 = vmatpush2.bf16.msra.mxu0 0
    %7944 = vmatprep.subr.bf16.mxu0 0
    %7945 = vmatpush2.bf16.msra.mxu0 0
    %7946 = vmatprep.subr.bf16.mxu0 0
    %7947 = vmatpush2.bf16.msra.mxu0 0
    %7948 = vmatprep.subr.bf16.mxu0 0
    %7949 = vmatpush2.bf16.msra.mxu0 0
    %7950 = vmatprep.mubr.bf16.mxu0 0
    %7951 = vmatmul.mubr.bf16.gmra.mxu0 %v7910
    %v7952 = vpop.f32.mrf.mxu0
    %v7953 = vadd.f32 0.0, %v7952
    %v7954 = vpop.f32.mrf.mxu0
    %v7955 = vpop.f32.mrf.mxu0
    %v7956 = vadd.f32 0.0, %v7955
    %v7957 = vpop.f32.mrf.mxu0
    %7958 = vmatprep.mubr.bf16.mxu0 0
    %7959 = vmatmul.mubr.bf16.gmra.mxu0 %v7913
    %v7960 = vpop.f32.mrf.mxu0
    %v7961 = vadd.f32 0.0, %v7960
    %v7962 = vpop.f32.mrf.mxu0
    %v7963 = vpop.f32.mrf.mxu0
    %v7964 = vadd.f32 0.0, %v7963
    %v7965 = vpop.f32.mrf.mxu0
    %7966 = vdwg.mxu0
    %v7967 = vadd.f32 %v7831, %v7953
    %v7968 = vadd.f32 %v7832, %v7956
    %v7969 = vadd.f32 %v7833, %v7961
    %v7970 = vadd.f32 %v7834, %v7964
    %v7971 = vld [vmem:[%s12] sm:$0xff]
    %v7972 = vld [vmem:[%s12 + $0x8] sm:$0xff]
    %v7973 = vld [vmem:[%s12 + $0x10] sm:$0xff]
    %v7974 = vld [vmem:[%s12 + $0x18] sm:$0xff]
    %7976 = vset.pattern.permute.xlu0 0
    %7977 = vperm.xlu0 %7976, %v7971
    %v7978 = vpop.permute.xlu0 %7977
    %7981 = vset.pattern.permute.xlu0 0
    %7982 = vperm.xlu0 %7981, %v7972
    %v7983 = vpop.permute.xlu0 %7982
    %7986 = vset.pattern.permute.xlu0 0
    %7987 = vperm.xlu0 %7986, %v7973
    %v7988 = vpop.permute.xlu0 %7987
    %7991 = vset.pattern.permute.xlu0 0
    %7992 = vperm.xlu0 %7991, %v7974
    %v7993 = vpop.permute.xlu0 %7992
    %v7995 = vadd.f32 %v7967, %v7978
    %v7996 = vadd.f32 %v7968, %v7983
    %v7997 = vadd.f32 %v7969, %v7988
    %v7998 = vadd.f32 %v7970, %v7993
    %vm7999 = vcmp.ge.f32.partialorder %v7995, 0.0
    %vm8000 = vcmp.ge.f32.partialorder %v7996, 0.0
    %vm8001 = vcmp.ge.f32.partialorder %v7997, 0.0
    %vm8002 = vcmp.ge.f32.partialorder %v7998, 0.0
    %v8003 = vmul.f32 %v7995, 0.2
    %v8004 = vmul.f32 %v7996, 0.2
    %v8005 = vmul.f32 %v7997, 0.2
    %v8006 = vmul.f32 %v7998, 0.2
    %v8007 = vsel %vm7999, %v7995, %v8003
    %v8008 = vsel %vm8000, %v7996, %v8004
    %v8009 = vsel %vm8001, %v7997, %v8005
    %v8010 = vsel %vm8002, %v7998, %v8006
    %v8011 = vpack.c.bf16 %v8008, %v8007
    %v8012 = vpack.c.bf16 %v8010, %v8009
    %v8013 = vld [vmem:[#allocation9] sm:$0xf]
    %v8014 = vld [vmem:[#allocation9 + $0x4] sm:$0xf]
    %v8015 = vld [vmem:[#allocation9 + $0x8] sm:$0xf]
    %v8016 = vld [vmem:[#allocation9 + $0xc] sm:$0xf]
    %v8017 = vld [vmem:[#allocation10] sm:$0xf]
    %v8018 = vld [vmem:[#allocation10 + $0x4] sm:$0xf]
    %v8021 = vunpack.c.l.b16 %v8017
    %v8022 = vunpack.c.l.b16 %v8018
    %v8023 = vpack.c.b16 %v8022, %v8021
    %v8025 = vsel %vm5454, %v8023, 0
    %8027 = vmatprep.subr.bf16.mxu0 0
    %8028 = vmatpush1.bf16.msra.mxu0 0
    %8029 = vmatprep.subr.bf16.mxu0 0
    %8030 = vmatpush1.bf16.msra.mxu0 0
    %8031 = vmatprep.subr.bf16.mxu0 0
    %8032 = vmatpush1.bf16.msra.mxu0 0
    %8033 = vmatprep.subr.bf16.mxu0 0
    %8034 = vmatpush1.bf16.msra.mxu0 0
    %8035 = vmatprep.subr.bf16.mxu0 0
    %8036 = vmatpush1.bf16.msra.mxu0 0
    %8037 = vmatprep.subr.bf16.mxu0 0
    %8038 = vmatpush1.bf16.msra.mxu0 0
    %8039 = vmatprep.subr.bf16.mxu0 0
    %8040 = vmatpush1.bf16.msra.mxu0 %v8012
    %8041 = vmatprep.subr.bf16.mxu0 0
    %8042 = vmatpush1.bf16.msra.mxu0 %v8011
    %8043 = vmatprep.subr.bf16.mxu0 0
    %8044 = vmatpush2.bf16.msra.mxu0 0
    %8045 = vmatprep.subr.bf16.mxu0 0
    %8046 = vmatpush2.bf16.msra.mxu0 0
    %8047 = vmatprep.subr.bf16.mxu0 0
    %8048 = vmatpush2.bf16.msra.mxu0 0
    %8049 = vmatprep.subr.bf16.mxu0 0
    %8050 = vmatpush2.bf16.msra.mxu0 0
    %8051 = vmatprep.subr.bf16.mxu0 0
    %8052 = vmatpush2.bf16.msra.mxu0 0
    %8053 = vmatprep.subr.bf16.mxu0 0
    %8054 = vmatpush2.bf16.msra.mxu0 0
    %8055 = vmatprep.subr.bf16.mxu0 0
    %8056 = vmatpush2.bf16.msra.mxu0 0
    %8057 = vmatprep.subr.bf16.mxu0 0
    %8058 = vmatpush2.bf16.msra.mxu0 0
    %8059 = vmatprep.mubr.bf16.mxu0 0
    %8060 = vmatmul.mubr.bf16.gmra.mxu0 %v8025
    %v8061 = vpop.f32.mrf.mxu0
    %v8062 = vadd.f32 0.0, %v8061
    %v8063 = vpop.f32.mrf.mxu0
    %v8064 = vpop.f32.mrf.mxu0
    %v8065 = vadd.f32 0.0, %v8064
    %v8066 = vpop.f32.mrf.mxu0
    %8067 = vdwg.mxu0
    %v8068 = vpack.c.bf16 %v8065, %v8062
    %s8069 = scalar_lea.vmem [#allocation9], 16
    %v8070 = vld [vmem:[%s8069] sm:$0xf]
    %v8071 = vld [vmem:[%s8069 + $0x4] sm:$0xf]
    %v8072 = vld [vmem:[%s8069 + $0x8] sm:$0xf]
    %v8073 = vld [vmem:[%s8069 + $0xc] sm:$0xf]
    %s8074 = scalar_lea.vmem [#allocation10], 8
    %v8075 = vld [vmem:[%s8074] sm:$0xf]
    %v8076 = vld [vmem:[%s8074 + $0x4] sm:$0xf]
    %v8079 = vunpack.c.l.b16 %v8075
    %v8080 = vunpack.c.l.b16 %v8076
    %v8081 = vpack.c.b16 %v8080, %v8079
    %v8083 = vsel %vm5454, %v8081, 0
    %8085 = vmatprep.subr.bf16.mxu0 0
    %8086 = vmatpush1.bf16.msra.mxu0 0
    %8087 = vmatprep.subr.bf16.mxu0 0
    %8088 = vmatpush1.bf16.msra.mxu0 0
    %8089 = vmatprep.subr.bf16.mxu0 0
    %8090 = vmatpush1.bf16.msra.mxu0 0
    %8091 = vmatprep.subr.bf16.mxu0 0
    %8092 = vmatpush1.bf16.msra.mxu0 0
    %8093 = vmatprep.subr.bf16.mxu0 0
    %8094 = vmatpush1.bf16.msra.mxu0 0
    %8095 = vmatprep.subr.bf16.mxu0 0
    %8096 = vmatpush1.bf16.msra.mxu0 0
    %8097 = vmatprep.subr.bf16.mxu0 0
    %8098 = vmatpush1.bf16.msra.mxu0 %v8012
    %8099 = vmatprep.subr.bf16.mxu0 0
    %8100 = vmatpush1.bf16.msra.mxu0 %v8011
    %8101 = vmatprep.subr.bf16.mxu0 0
    %8102 = vmatpush2.bf16.msra.mxu0 0
    %8103 = vmatprep.subr.bf16.mxu0 0
    %8104 = vmatpush2.bf16.msra.mxu0 0
    %8105 = vmatprep.subr.bf16.mxu0 0
    %8106 = vmatpush2.bf16.msra.mxu0 0
    %8107 = vmatprep.subr.bf16.mxu0 0
    %8108 = vmatpush2.bf16.msra.mxu0 0
    %8109 = vmatprep.subr.bf16.mxu0 0
    %8110 = vmatpush2.bf16.msra.mxu0 0
    %8111 = vmatprep.subr.bf16.mxu0 0
    %8112 = vmatpush2.bf16.msra.mxu0 0
    %8113 = vmatprep.subr.bf16.mxu0 0
    %8114 = vmatpush2.bf16.msra.mxu0 0
    %8115 = vmatprep.subr.bf16.mxu0 0
    %8116 = vmatpush2.bf16.msra.mxu0 0
    %8117 = vmatprep.mubr.bf16.mxu0 0
    %8118 = vmatmul.mubr.bf16.gmra.mxu0 %v8083
    %v8119 = vpop.f32.mrf.mxu0
    %v8120 = vadd.f32 0.0, %v8119
    %v8121 = vpop.f32.mrf.mxu0
    %v8122 = vpop.f32.mrf.mxu0
    %v8123 = vadd.f32 0.0, %v8122
    %v8124 = vpop.f32.mrf.mxu0
    %8125 = vdwg.mxu0
    %v8126 = vpack.c.bf16 %v8123, %v8120
    %v8131 = vunpack.c.l.b16 %v8070
    %v8132 = vunpack.c.l.b16 %v8071
    %v8133 = vunpack.c.l.b16 %v8072
    %v8134 = vunpack.c.l.b16 %v8073
    %v8135 = vpack.c.b16 %v8132, %v8131
    %v8136 = vpack.c.b16 %v8134, %v8133
    %v8140 = vsel %vm5454, %v8126, 0
    %8142 = vmatprep.subr.bf16.mxu0 0
    %8143 = vmatpush1.bf16.msra.mxu0 0
    %8144 = vmatprep.subr.bf16.mxu0 0
    %8145 = vmatpush1.bf16.msra.mxu0 0
    %8146 = vmatprep.subr.bf16.mxu0 0
    %8147 = vmatpush1.bf16.msra.mxu0 0
    %8148 = vmatprep.subr.bf16.mxu0 0
    %8149 = vmatpush1.bf16.msra.mxu0 0
    %8150 = vmatprep.subr.bf16.mxu0 0
    %8151 = vmatpush1.bf16.msra.mxu0 0
    %8152 = vmatprep.subr.bf16.mxu0 0
    %8153 = vmatpush1.bf16.msra.mxu0 0
    %8154 = vmatprep.subr.bf16.mxu0 0
    %8155 = vmatpush1.bf16.msra.mxu0 %v8136
    %8156 = vmatprep.subr.bf16.mxu0 0
    %8157 = vmatpush1.bf16.msra.mxu0 %v8135
    %8158 = vmatprep.subr.bf16.mxu0 0
    %8159 = vmatpush2.bf16.msra.mxu0 0
    %8160 = vmatprep.subr.bf16.mxu0 0
    %8161 = vmatpush2.bf16.msra.mxu0 0
    %8162 = vmatprep.subr.bf16.mxu0 0
    %8163 = vmatpush2.bf16.msra.mxu0 0
    %8164 = vmatprep.subr.bf16.mxu0 0
    %8165 = vmatpush2.bf16.msra.mxu0 0
    %8166 = vmatprep.subr.bf16.mxu0 0
    %8167 = vmatpush2.bf16.msra.mxu0 0
    %8168 = vmatprep.subr.bf16.mxu0 0
    %8169 = vmatpush2.bf16.msra.mxu0 0
    %8170 = vmatprep.subr.bf16.mxu0 0
    %8171 = vmatpush2.bf16.msra.mxu0 0
    %8172 = vmatprep.subr.bf16.mxu0 0
    %8173 = vmatpush2.bf16.msra.mxu0 0
    %8174 = vmatprep.mubr.bf16.mxu0 0
    %8175 = vmatmul.mubr.bf16.gmra.mxu0 %v8140
    %v8176 = vpop.f32.mrf.mxu0
    %v8177 = vadd.f32 0.0, %v8176
    %v8178 = vpop.f32.mrf.mxu0
    %v8179 = vpop.f32.mrf.mxu0
    %v8180 = vadd.f32 0.0, %v8179
    %v8181 = vpop.f32.mrf.mxu0
    %8182 = vdwg.mxu0
    %v8187 = vunpack.c.l.b16 %v8013
    %v8188 = vunpack.c.l.b16 %v8014
    %v8189 = vunpack.c.l.b16 %v8015
    %v8190 = vunpack.c.l.b16 %v8016
    %v8191 = vpack.c.b16 %v8188, %v8187
    %v8192 = vpack.c.b16 %v8190, %v8189
    %v8196 = vsel %vm5454, %v8068, 0
    %8198 = vmatprep.subr.bf16.mxu0 0
    %8199 = vmatpush1.bf16.msra.mxu0 0
    %8200 = vmatprep.subr.bf16.mxu0 0
    %8201 = vmatpush1.bf16.msra.mxu0 0
    %8202 = vmatprep.subr.bf16.mxu0 0
    %8203 = vmatpush1.bf16.msra.mxu0 0
    %8204 = vmatprep.subr.bf16.mxu0 0
    %8205 = vmatpush1.bf16.msra.mxu0 0
    %8206 = vmatprep.subr.bf16.mxu0 0
    %8207 = vmatpush1.bf16.msra.mxu0 0
    %8208 = vmatprep.subr.bf16.mxu0 0
    %8209 = vmatpush1.bf16.msra.mxu0 0
    %8210 = vmatprep.subr.bf16.mxu0 0
    %8211 = vmatpush1.bf16.msra.mxu0 %v8192
    %8212 = vmatprep.subr.bf16.mxu0 0
    %8213 = vmatpush1.bf16.msra.mxu0 %v8191
    %8214 = vmatprep.subr.bf16.mxu0 0
    %8215 = vmatpush2.bf16.msra.mxu0 0
    %8216 = vmatprep.subr.bf16.mxu0 0
    %8217 = vmatpush2.bf16.msra.mxu0 0
    %8218 = vmatprep.subr.bf16.mxu0 0
    %8219 = vmatpush2.bf16.msra.mxu0 0
    %8220 = vmatprep.subr.bf16.mxu0 0
    %8221 = vmatpush2.bf16.msra.mxu0 0
    %8222 = vmatprep.subr.bf16.mxu0 0
    %8223 = vmatpush2.bf16.msra.mxu0 0
    %8224 = vmatprep.subr.bf16.mxu0 0
    %8225 = vmatpush2.bf16.msra.mxu0 0
    %8226 = vmatprep.subr.bf16.mxu0 0
    %8227 = vmatpush2.bf16.msra.mxu0 0
    %8228 = vmatprep.subr.bf16.mxu0 0
    %8229 = vmatpush2.bf16.msra.mxu0 0
    %8230 = vmatprep.mubr.bf16.mxu0 0
    %8231 = vmatmul.mubr.bf16.gmra.mxu0 %v8196
    %v8232 = vpop.f32.mrf.mxu0
    %v8233 = vadd.f32 %v8177, %v8232
    %v8234 = vpop.f32.mrf.mxu0
    %v8235 = vpop.f32.mrf.mxu0
    %v8236 = vadd.f32 %v8180, %v8235
    %v8237 = vpop.f32.mrf.mxu0
    %8238 = vdwg.mxu0
    %s8239 = scalar_lea.vmem [#allocation9], 32
    %v8240 = vld [vmem:[%s8239] sm:$0xf]
    %v8241 = vld [vmem:[%s8239 + $0x4] sm:$0xf]
    %v8242 = vld [vmem:[%s8239 + $0x8] sm:$0xf]
    %v8243 = vld [vmem:[%s8239 + $0xc] sm:$0xf]
    %s8244 = scalar_lea.vmem [#allocation10], 16
    %v8245 = vld [vmem:[%s8244] sm:$0xf]
    %v8246 = vld [vmem:[%s8244 + $0x4] sm:$0xf]
    %v8249 = vunpack.c.l.b16 %v8245
    %v8250 = vunpack.c.l.b16 %v8246
    %v8251 = vpack.c.b16 %v8250, %v8249
    %v8253 = vsel %vm5454, %v8251, 0
    %8255 = vmatprep.subr.bf16.mxu0 0
    %8256 = vmatpush1.bf16.msra.mxu0 0
    %8257 = vmatprep.subr.bf16.mxu0 0
    %8258 = vmatpush1.bf16.msra.mxu0 0
    %8259 = vmatprep.subr.bf16.mxu0 0
    %8260 = vmatpush1.bf16.msra.mxu0 0
    %8261 = vmatprep.subr.bf16.mxu0 0
    %8262 = vmatpush1.bf16.msra.mxu0 0
    %8263 = vmatprep.subr.bf16.mxu0 0
    %8264 = vmatpush1.bf16.msra.mxu0 0
    %8265 = vmatprep.subr.bf16.mxu0 0
    %8266 = vmatpush1.bf16.msra.mxu0 0
    %8267 = vmatprep.subr.bf16.mxu0 0
    %8268 = vmatpush1.bf16.msra.mxu0 %v8012
    %8269 = vmatprep.subr.bf16.mxu0 0
    %8270 = vmatpush1.bf16.msra.mxu0 %v8011
    %8271 = vmatprep.subr.bf16.mxu0 0
    %8272 = vmatpush2.bf16.msra.mxu0 0
    %8273 = vmatprep.subr.bf16.mxu0 0
    %8274 = vmatpush2.bf16.msra.mxu0 0
    %8275 = vmatprep.subr.bf16.mxu0 0
    %8276 = vmatpush2.bf16.msra.mxu0 0
    %8277 = vmatprep.subr.bf16.mxu0 0
    %8278 = vmatpush2.bf16.msra.mxu0 0
    %8279 = vmatprep.subr.bf16.mxu0 0
    %8280 = vmatpush2.bf16.msra.mxu0 0
    %8281 = vmatprep.subr.bf16.mxu0 0
    %8282 = vmatpush2.bf16.msra.mxu0 0
    %8283 = vmatprep.subr.bf16.mxu0 0
    %8284 = vmatpush2.bf16.msra.mxu0 0
    %8285 = vmatprep.subr.bf16.mxu0 0
    %8286 = vmatpush2.bf16.msra.mxu0 0
    %8287 = vmatprep.mubr.bf16.mxu0 0
    %8288 = vmatmul.mubr.bf16.gmra.mxu0 %v8253
    %v8289 = vpop.f32.mrf.mxu0
    %v8290 = vadd.f32 0.0, %v8289
    %v8291 = vpop.f32.mrf.mxu0
    %v8292 = vpop.f32.mrf.mxu0
    %v8293 = vadd.f32 0.0, %v8292
    %v8294 = vpop.f32.mrf.mxu0
    %8295 = vdwg.mxu0
    %v8296 = vpack.c.bf16 %v8293, %v8290
    %v8301 = vunpack.c.l.b16 %v8240
    %v8302 = vunpack.c.l.b16 %v8241
    %v8303 = vunpack.c.l.b16 %v8242
    %v8304 = vunpack.c.l.b16 %v8243
    %v8305 = vpack.c.b16 %v8302, %v8301
    %v8306 = vpack.c.b16 %v8304, %v8303
    %v8310 = vsel %vm5454, %v8296, 0
    %8312 = vmatprep.subr.bf16.mxu0 0
    %8313 = vmatpush1.bf16.msra.mxu0 0
    %8314 = vmatprep.subr.bf16.mxu0 0
    %8315 = vmatpush1.bf16.msra.mxu0 0
    %8316 = vmatprep.subr.bf16.mxu0 0
    %8317 = vmatpush1.bf16.msra.mxu0 0
    %8318 = vmatprep.subr.bf16.mxu0 0
    %8319 = vmatpush1.bf16.msra.mxu0 0
    %8320 = vmatprep.subr.bf16.mxu0 0
    %8321 = vmatpush1.bf16.msra.mxu0 0
    %8322 = vmatprep.subr.bf16.mxu0 0
    %8323 = vmatpush1.bf16.msra.mxu0 0
    %8324 = vmatprep.subr.bf16.mxu0 0
    %8325 = vmatpush1.bf16.msra.mxu0 %v8306
    %8326 = vmatprep.subr.bf16.mxu0 0
    %8327 = vmatpush1.bf16.msra.mxu0 %v8305
    %8328 = vmatprep.subr.bf16.mxu0 0
    %8329 = vmatpush2.bf16.msra.mxu0 0
    %8330 = vmatprep.subr.bf16.mxu0 0
    %8331 = vmatpush2.bf16.msra.mxu0 0
    %8332 = vmatprep.subr.bf16.mxu0 0
    %8333 = vmatpush2.bf16.msra.mxu0 0
    %8334 = vmatprep.subr.bf16.mxu0 0
    %8335 = vmatpush2.bf16.msra.mxu0 0
    %8336 = vmatprep.subr.bf16.mxu0 0
    %8337 = vmatpush2.bf16.msra.mxu0 0
    %8338 = vmatprep.subr.bf16.mxu0 0
    %8339 = vmatpush2.bf16.msra.mxu0 0
    %8340 = vmatprep.subr.bf16.mxu0 0
    %8341 = vmatpush2.bf16.msra.mxu0 0
    %8342 = vmatprep.subr.bf16.mxu0 0
    %8343 = vmatpush2.bf16.msra.mxu0 0
    %8344 = vmatprep.mubr.bf16.mxu0 0
    %8345 = vmatmul.mubr.bf16.gmra.mxu0 %v8310
    %v8346 = vpop.f32.mrf.mxu0
    %v8347 = vadd.f32 0.0, %v8346
    %v8348 = vpop.f32.mrf.mxu0
    %v8349 = vpop.f32.mrf.mxu0
    %v8350 = vadd.f32 0.0, %v8349
    %v8351 = vpop.f32.mrf.mxu0
    %8352 = vdwg.mxu0
    %v8353 = vadd.f32 %v8233, %v8347
    %v8354 = vadd.f32 %v8236, %v8350
    %s8355 = scalar_lea.vmem [#allocation9], 48
    %v8356 = vld [vmem:[%s8355] sm:$0xf]
    %v8357 = vld [vmem:[%s8355 + $0x4] sm:$0xf]
    %v8358 = vld [vmem:[%s8355 + $0x8] sm:$0xf]
    %v8359 = vld [vmem:[%s8355 + $0xc] sm:$0xf]
    %s8360 = scalar_lea.vmem [#allocation10], 24
    %v8361 = vld [vmem:[%s8360] sm:$0xf]
    %v8362 = vld [vmem:[%s8360 + $0x4] sm:$0xf]
    %v8365 = vunpack.c.l.b16 %v8361
    %v8366 = vunpack.c.l.b16 %v8362
    %v8367 = vpack.c.b16 %v8366, %v8365
    %v8369 = vsel %vm5454, %v8367, 0
    %8371 = vmatprep.subr.bf16.mxu0 0
    %8372 = vmatpush1.bf16.msra.mxu0 0
    %8373 = vmatprep.subr.bf16.mxu0 0
    %8374 = vmatpush1.bf16.msra.mxu0 0
    %8375 = vmatprep.subr.bf16.mxu0 0
    %8376 = vmatpush1.bf16.msra.mxu0 0
    %8377 = vmatprep.subr.bf16.mxu0 0
    %8378 = vmatpush1.bf16.msra.mxu0 0
    %8379 = vmatprep.subr.bf16.mxu0 0
    %8380 = vmatpush1.bf16.msra.mxu0 0
    %8381 = vmatprep.subr.bf16.mxu0 0
    %8382 = vmatpush1.bf16.msra.mxu0 0
    %8383 = vmatprep.subr.bf16.mxu0 0
    %8384 = vmatpush1.bf16.msra.mxu0 %v8012
    %8385 = vmatprep.subr.bf16.mxu0 0
    %8386 = vmatpush1.bf16.msra.mxu0 %v8011
    %8387 = vmatprep.subr.bf16.mxu0 0
    %8388 = vmatpush2.bf16.msra.mxu0 0
    %8389 = vmatprep.subr.bf16.mxu0 0
    %8390 = vmatpush2.bf16.msra.mxu0 0
    %8391 = vmatprep.subr.bf16.mxu0 0
    %8392 = vmatpush2.bf16.msra.mxu0 0
    %8393 = vmatprep.subr.bf16.mxu0 0
    %8394 = vmatpush2.bf16.msra.mxu0 0
    %8395 = vmatprep.subr.bf16.mxu0 0
    %8396 = vmatpush2.bf16.msra.mxu0 0
    %8397 = vmatprep.subr.bf16.mxu0 0
    %8398 = vmatpush2.bf16.msra.mxu0 0
    %8399 = vmatprep.subr.bf16.mxu0 0
    %8400 = vmatpush2.bf16.msra.mxu0 0
    %8401 = vmatprep.subr.bf16.mxu0 0
    %8402 = vmatpush2.bf16.msra.mxu0 0
    %8403 = vmatprep.mubr.bf16.mxu0 0
    %8404 = vmatmul.mubr.bf16.gmra.mxu0 %v8369
    %v8405 = vpop.f32.mrf.mxu0
    %v8406 = vadd.f32 0.0, %v8405
    %v8407 = vpop.f32.mrf.mxu0
    %v8408 = vpop.f32.mrf.mxu0
    %v8409 = vadd.f32 0.0, %v8408
    %v8410 = vpop.f32.mrf.mxu0
    %8411 = vdwg.mxu0
    %v8412 = vpack.c.bf16 %v8409, %v8406
    %v8417 = vunpack.c.l.b16 %v8356
    %v8418 = vunpack.c.l.b16 %v8357
    %v8419 = vunpack.c.l.b16 %v8358
    %v8420 = vunpack.c.l.b16 %v8359
    %v8421 = vpack.c.b16 %v8418, %v8417
    %v8422 = vpack.c.b16 %v8420, %v8419
    %v8426 = vsel %vm5454, %v8412, 0
    %8428 = vmatprep.subr.bf16.mxu0 0
    %8429 = vmatpush1.bf16.msra.mxu0 0
    %8430 = vmatprep.subr.bf16.mxu0 0
    %8431 = vmatpush1.bf16.msra.mxu0 0
    %8432 = vmatprep.subr.bf16.mxu0 0
    %8433 = vmatpush1.bf16.msra.mxu0 0
    %8434 = vmatprep.subr.bf16.mxu0 0
    %8435 = vmatpush1.bf16.msra.mxu0 0
    %8436 = vmatprep.subr.bf16.mxu0 0
    %8437 = vmatpush1.bf16.msra.mxu0 0
    %8438 = vmatprep.subr.bf16.mxu0 0
    %8439 = vmatpush1.bf16.msra.mxu0 0
    %8440 = vmatprep.subr.bf16.mxu0 0
    %8441 = vmatpush1.bf16.msra.mxu0 %v8422
    %8442 = vmatprep.subr.bf16.mxu0 0
    %8443 = vmatpush1.bf16.msra.mxu0 %v8421
    %8444 = vmatprep.subr.bf16.mxu0 0
    %8445 = vmatpush2.bf16.msra.mxu0 0
    %8446 = vmatprep.subr.bf16.mxu0 0
    %8447 = vmatpush2.bf16.msra.mxu0 0
    %8448 = vmatprep.subr.bf16.mxu0 0
    %8449 = vmatpush2.bf16.msra.mxu0 0
    %8450 = vmatprep.subr.bf16.mxu0 0
    %8451 = vmatpush2.bf16.msra.mxu0 0
    %8452 = vmatprep.subr.bf16.mxu0 0
    %8453 = vmatpush2.bf16.msra.mxu0 0
    %8454 = vmatprep.subr.bf16.mxu0 0
    %8455 = vmatpush2.bf16.msra.mxu0 0
    %8456 = vmatprep.subr.bf16.mxu0 0
    %8457 = vmatpush2.bf16.msra.mxu0 0
    %8458 = vmatprep.subr.bf16.mxu0 0
    %8459 = vmatpush2.bf16.msra.mxu0 0
    %8460 = vmatprep.mubr.bf16.mxu0 0
    %8461 = vmatmul.mubr.bf16.gmra.mxu0 %v8426
    %v8462 = vpop.f32.mrf.mxu0
    %v8463 = vadd.f32 0.0, %v8462
    %v8464 = vpop.f32.mrf.mxu0
    %v8465 = vpop.f32.mrf.mxu0
    %v8466 = vadd.f32 0.0, %v8465
    %v8467 = vpop.f32.mrf.mxu0
    %8468 = vdwg.mxu0
    %v8469 = vadd.f32 %v8353, %v8463
    %v8470 = vadd.f32 %v8354, %v8466
    %s8471 = scalar_lea.vmem [#allocation9], 64
    %v8472 = vld [vmem:[%s8471] sm:$0xf]
    %v8473 = vld [vmem:[%s8471 + $0x4] sm:$0xf]
    %v8474 = vld [vmem:[%s8471 + $0x8] sm:$0xf]
    %v8475 = vld [vmem:[%s8471 + $0xc] sm:$0xf]
    %s8476 = scalar_lea.vmem [#allocation10], 32
    %v8477 = vld [vmem:[%s8476] sm:$0xf]
    %v8478 = vld [vmem:[%s8476 + $0x4] sm:$0xf]
    %v8481 = vunpack.c.l.b16 %v8477
    %v8482 = vunpack.c.l.b16 %v8478
    %v8483 = vpack.c.b16 %v8482, %v8481
    %v8485 = vsel %vm5454, %v8483, 0
    %8487 = vmatprep.subr.bf16.mxu0 0
    %8488 = vmatpush1.bf16.msra.mxu0 0
    %8489 = vmatprep.subr.bf16.mxu0 0
    %8490 = vmatpush1.bf16.msra.mxu0 0
    %8491 = vmatprep.subr.bf16.mxu0 0
    %8492 = vmatpush1.bf16.msra.mxu0 0
    %8493 = vmatprep.subr.bf16.mxu0 0
    %8494 = vmatpush1.bf16.msra.mxu0 0
    %8495 = vmatprep.subr.bf16.mxu0 0
    %8496 = vmatpush1.bf16.msra.mxu0 0
    %8497 = vmatprep.subr.bf16.mxu0 0
    %8498 = vmatpush1.bf16.msra.mxu0 0
    %8499 = vmatprep.subr.bf16.mxu0 0
    %8500 = vmatpush1.bf16.msra.mxu0 %v8012
    %8501 = vmatprep.subr.bf16.mxu0 0
    %8502 = vmatpush1.bf16.msra.mxu0 %v8011
    %8503 = vmatprep.subr.bf16.mxu0 0
    %8504 = vmatpush2.bf16.msra.mxu0 0
    %8505 = vmatprep.subr.bf16.mxu0 0
    %8506 = vmatpush2.bf16.msra.mxu0 0
    %8507 = vmatprep.subr.bf16.mxu0 0
    %8508 = vmatpush2.bf16.msra.mxu0 0
    %8509 = vmatprep.subr.bf16.mxu0 0
    %8510 = vmatpush2.bf16.msra.mxu0 0
    %8511 = vmatprep.subr.bf16.mxu0 0
    %8512 = vmatpush2.bf16.msra.mxu0 0
    %8513 = vmatprep.subr.bf16.mxu0 0
    %8514 = vmatpush2.bf16.msra.mxu0 0
    %8515 = vmatprep.subr.bf16.mxu0 0
    %8516 = vmatpush2.bf16.msra.mxu0 0
    %8517 = vmatprep.subr.bf16.mxu0 0
    %8518 = vmatpush2.bf16.msra.mxu0 0
    %8519 = vmatprep.mubr.bf16.mxu0 0
    %8520 = vmatmul.mubr.bf16.gmra.mxu0 %v8485
    %v8521 = vpop.f32.mrf.mxu0
    %v8522 = vadd.f32 0.0, %v8521
    %v8523 = vpop.f32.mrf.mxu0
    %v8524 = vpop.f32.mrf.mxu0
    %v8525 = vadd.f32 0.0, %v8524
    %v8526 = vpop.f32.mrf.mxu0
    %8527 = vdwg.mxu0
    %v8528 = vpack.c.bf16 %v8525, %v8522
    %v8533 = vunpack.c.l.b16 %v8472
    %v8534 = vunpack.c.l.b16 %v8473
    %v8535 = vunpack.c.l.b16 %v8474
    %v8536 = vunpack.c.l.b16 %v8475
    %v8537 = vpack.c.b16 %v8534, %v8533
    %v8538 = vpack.c.b16 %v8536, %v8535
    %v8542 = vsel %vm5454, %v8528, 0
    %8544 = vmatprep.subr.bf16.mxu0 0
    %8545 = vmatpush1.bf16.msra.mxu0 0
    %8546 = vmatprep.subr.bf16.mxu0 0
    %8547 = vmatpush1.bf16.msra.mxu0 0
    %8548 = vmatprep.subr.bf16.mxu0 0
    %8549 = vmatpush1.bf16.msra.mxu0 0
    %8550 = vmatprep.subr.bf16.mxu0 0
    %8551 = vmatpush1.bf16.msra.mxu0 0
    %8552 = vmatprep.subr.bf16.mxu0 0
    %8553 = vmatpush1.bf16.msra.mxu0 0
    %8554 = vmatprep.subr.bf16.mxu0 0
    %8555 = vmatpush1.bf16.msra.mxu0 0
    %8556 = vmatprep.subr.bf16.mxu0 0
    %8557 = vmatpush1.bf16.msra.mxu0 %v8538
    %8558 = vmatprep.subr.bf16.mxu0 0
    %8559 = vmatpush1.bf16.msra.mxu0 %v8537
    %8560 = vmatprep.subr.bf16.mxu0 0
    %8561 = vmatpush2.bf16.msra.mxu0 0
    %8562 = vmatprep.subr.bf16.mxu0 0
    %8563 = vmatpush2.bf16.msra.mxu0 0
    %8564 = vmatprep.subr.bf16.mxu0 0
    %8565 = vmatpush2.bf16.msra.mxu0 0
    %8566 = vmatprep.subr.bf16.mxu0 0
    %8567 = vmatpush2.bf16.msra.mxu0 0
    %8568 = vmatprep.subr.bf16.mxu0 0
    %8569 = vmatpush2.bf16.msra.mxu0 0
    %8570 = vmatprep.subr.bf16.mxu0 0
    %8571 = vmatpush2.bf16.msra.mxu0 0
    %8572 = vmatprep.subr.bf16.mxu0 0
    %8573 = vmatpush2.bf16.msra.mxu0 0
    %8574 = vmatprep.subr.bf16.mxu0 0
    %8575 = vmatpush2.bf16.msra.mxu0 0
    %8576 = vmatprep.mubr.bf16.mxu0 0
    %8577 = vmatmul.mubr.bf16.gmra.mxu0 %v8542
    %v8578 = vpop.f32.mrf.mxu0
    %v8579 = vadd.f32 0.0, %v8578
    %v8580 = vpop.f32.mrf.mxu0
    %v8581 = vpop.f32.mrf.mxu0
    %v8582 = vadd.f32 0.0, %v8581
    %v8583 = vpop.f32.mrf.mxu0
    %8584 = vdwg.mxu0
    %v8585 = vadd.f32 %v8469, %v8579
    %v8586 = vadd.f32 %v8470, %v8582
    %s8587 = scalar_lea.vmem [#allocation9], 80
    %v8588 = vld [vmem:[%s8587] sm:$0xf]
    %v8589 = vld [vmem:[%s8587 + $0x4] sm:$0xf]
    %v8590 = vld [vmem:[%s8587 + $0x8] sm:$0xf]
    %v8591 = vld [vmem:[%s8587 + $0xc] sm:$0xf]
    %s8592 = scalar_lea.vmem [#allocation10], 40
    %v8593 = vld [vmem:[%s8592] sm:$0xf]
    %v8594 = vld [vmem:[%s8592 + $0x4] sm:$0xf]
    %v8597 = vunpack.c.l.b16 %v8593
    %v8598 = vunpack.c.l.b16 %v8594
    %v8599 = vpack.c.b16 %v8598, %v8597
    %v8601 = vsel %vm5454, %v8599, 0
    %8603 = vmatprep.subr.bf16.mxu0 0
    %8604 = vmatpush1.bf16.msra.mxu0 0
    %8605 = vmatprep.subr.bf16.mxu0 0
    %8606 = vmatpush1.bf16.msra.mxu0 0
    %8607 = vmatprep.subr.bf16.mxu0 0
    %8608 = vmatpush1.bf16.msra.mxu0 0
    %8609 = vmatprep.subr.bf16.mxu0 0
    %8610 = vmatpush1.bf16.msra.mxu0 0
    %8611 = vmatprep.subr.bf16.mxu0 0
    %8612 = vmatpush1.bf16.msra.mxu0 0
    %8613 = vmatprep.subr.bf16.mxu0 0
    %8614 = vmatpush1.bf16.msra.mxu0 0
    %8615 = vmatprep.subr.bf16.mxu0 0
    %8616 = vmatpush1.bf16.msra.mxu0 %v8012
    %8617 = vmatprep.subr.bf16.mxu0 0
    %8618 = vmatpush1.bf16.msra.mxu0 %v8011
    %8619 = vmatprep.subr.bf16.mxu0 0
    %8620 = vmatpush2.bf16.msra.mxu0 0
    %8621 = vmatprep.subr.bf16.mxu0 0
    %8622 = vmatpush2.bf16.msra.mxu0 0
    %8623 = vmatprep.subr.bf16.mxu0 0
    %8624 = vmatpush2.bf16.msra.mxu0 0
    %8625 = vmatprep.subr.bf16.mxu0 0
    %8626 = vmatpush2.bf16.msra.mxu0 0
    %8627 = vmatprep.subr.bf16.mxu0 0
    %8628 = vmatpush2.bf16.msra.mxu0 0
    %8629 = vmatprep.subr.bf16.mxu0 0
    %8630 = vmatpush2.bf16.msra.mxu0 0
    %8631 = vmatprep.subr.bf16.mxu0 0
    %8632 = vmatpush2.bf16.msra.mxu0 0
    %8633 = vmatprep.subr.bf16.mxu0 0
    %8634 = vmatpush2.bf16.msra.mxu0 0
    %8635 = vmatprep.mubr.bf16.mxu0 0
    %8636 = vmatmul.mubr.bf16.gmra.mxu0 %v8601
    %v8637 = vpop.f32.mrf.mxu0
    %v8638 = vadd.f32 0.0, %v8637
    %v8639 = vpop.f32.mrf.mxu0
    %v8640 = vpop.f32.mrf.mxu0
    %v8641 = vadd.f32 0.0, %v8640
    %v8642 = vpop.f32.mrf.mxu0
    %8643 = vdwg.mxu0
    %v8644 = vpack.c.bf16 %v8641, %v8638
    %v8649 = vunpack.c.l.b16 %v8588
    %v8650 = vunpack.c.l.b16 %v8589
    %v8651 = vunpack.c.l.b16 %v8590
    %v8652 = vunpack.c.l.b16 %v8591
    %v8653 = vpack.c.b16 %v8650, %v8649
    %v8654 = vpack.c.b16 %v8652, %v8651
    %v8658 = vsel %vm5454, %v8644, 0
    %8660 = vmatprep.subr.bf16.mxu0 0
    %8661 = vmatpush1.bf16.msra.mxu0 0
    %8662 = vmatprep.subr.bf16.mxu0 0
    %8663 = vmatpush1.bf16.msra.mxu0 0
    %8664 = vmatprep.subr.bf16.mxu0 0
    %8665 = vmatpush1.bf16.msra.mxu0 0
    %8666 = vmatprep.subr.bf16.mxu0 0
    %8667 = vmatpush1.bf16.msra.mxu0 0
    %8668 = vmatprep.subr.bf16.mxu0 0
    %8669 = vmatpush1.bf16.msra.mxu0 0
    %8670 = vmatprep.subr.bf16.mxu0 0
    %8671 = vmatpush1.bf16.msra.mxu0 0
    %8672 = vmatprep.subr.bf16.mxu0 0
    %8673 = vmatpush1.bf16.msra.mxu0 %v8654
    %8674 = vmatprep.subr.bf16.mxu0 0
    %8675 = vmatpush1.bf16.msra.mxu0 %v8653
    %8676 = vmatprep.subr.bf16.mxu0 0
    %8677 = vmatpush2.bf16.msra.mxu0 0
    %8678 = vmatprep.subr.bf16.mxu0 0
    %8679 = vmatpush2.bf16.msra.mxu0 0
    %8680 = vmatprep.subr.bf16.mxu0 0
    %8681 = vmatpush2.bf16.msra.mxu0 0
    %8682 = vmatprep.subr.bf16.mxu0 0
    %8683 = vmatpush2.bf16.msra.mxu0 0
    %8684 = vmatprep.subr.bf16.mxu0 0
    %8685 = vmatpush2.bf16.msra.mxu0 0
    %8686 = vmatprep.subr.bf16.mxu0 0
    %8687 = vmatpush2.bf16.msra.mxu0 0
    %8688 = vmatprep.subr.bf16.mxu0 0
    %8689 = vmatpush2.bf16.msra.mxu0 0
    %8690 = vmatprep.subr.bf16.mxu0 0
    %8691 = vmatpush2.bf16.msra.mxu0 0
    %8692 = vmatprep.mubr.bf16.mxu0 0
    %8693 = vmatmul.mubr.bf16.gmra.mxu0 %v8658
    %v8694 = vpop.f32.mrf.mxu0
    %v8695 = vadd.f32 0.0, %v8694
    %v8696 = vpop.f32.mrf.mxu0
    %v8697 = vpop.f32.mrf.mxu0
    %v8698 = vadd.f32 0.0, %v8697
    %v8699 = vpop.f32.mrf.mxu0
    %8700 = vdwg.mxu0
    %v8701 = vadd.f32 %v8585, %v8695
    %v8702 = vadd.f32 %v8586, %v8698
    %s8703 = scalar_lea.vmem [#allocation9], 96
    %v8704 = vld [vmem:[%s8703] sm:$0xf]
    %v8705 = vld [vmem:[%s8703 + $0x4] sm:$0xf]
    %v8706 = vld [vmem:[%s8703 + $0x8] sm:$0xf]
    %v8707 = vld [vmem:[%s8703 + $0xc] sm:$0xf]
    %s8708 = scalar_lea.vmem [#allocation10], 48
    %v8709 = vld [vmem:[%s8708] sm:$0xf]
    %v8710 = vld [vmem:[%s8708 + $0x4] sm:$0xf]
    %v8713 = vunpack.c.l.b16 %v8709
    %v8714 = vunpack.c.l.b16 %v8710
    %v8715 = vpack.c.b16 %v8714, %v8713
    %v8717 = vsel %vm5454, %v8715, 0
    %8719 = vmatprep.subr.bf16.mxu0 0
    %8720 = vmatpush1.bf16.msra.mxu0 0
    %8721 = vmatprep.subr.bf16.mxu0 0
    %8722 = vmatpush1.bf16.msra.mxu0 0
    %8723 = vmatprep.subr.bf16.mxu0 0
    %8724 = vmatpush1.bf16.msra.mxu0 0
    %8725 = vmatprep.subr.bf16.mxu0 0
    %8726 = vmatpush1.bf16.msra.mxu0 0
    %8727 = vmatprep.subr.bf16.mxu0 0
    %8728 = vmatpush1.bf16.msra.mxu0 0
    %8729 = vmatprep.subr.bf16.mxu0 0
    %8730 = vmatpush1.bf16.msra.mxu0 0
    %8731 = vmatprep.subr.bf16.mxu0 0
    %8732 = vmatpush1.bf16.msra.mxu0 %v8012
    %8733 = vmatprep.subr.bf16.mxu0 0
    %8734 = vmatpush1.bf16.msra.mxu0 %v8011
    %8735 = vmatprep.subr.bf16.mxu0 0
    %8736 = vmatpush2.bf16.msra.mxu0 0
    %8737 = vmatprep.subr.bf16.mxu0 0
    %8738 = vmatpush2.bf16.msra.mxu0 0
    %8739 = vmatprep.subr.bf16.mxu0 0
    %8740 = vmatpush2.bf16.msra.mxu0 0
    %8741 = vmatprep.subr.bf16.mxu0 0
    %8742 = vmatpush2.bf16.msra.mxu0 0
    %8743 = vmatprep.subr.bf16.mxu0 0
    %8744 = vmatpush2.bf16.msra.mxu0 0
    %8745 = vmatprep.subr.bf16.mxu0 0
    %8746 = vmatpush2.bf16.msra.mxu0 0
    %8747 = vmatprep.subr.bf16.mxu0 0
    %8748 = vmatpush2.bf16.msra.mxu0 0
    %8749 = vmatprep.subr.bf16.mxu0 0
    %8750 = vmatpush2.bf16.msra.mxu0 0
    %8751 = vmatprep.mubr.bf16.mxu0 0
    %8752 = vmatmul.mubr.bf16.gmra.mxu0 %v8717
    %v8753 = vpop.f32.mrf.mxu0
    %v8754 = vadd.f32 0.0, %v8753
    %v8755 = vpop.f32.mrf.mxu0
    %v8756 = vpop.f32.mrf.mxu0
    %v8757 = vadd.f32 0.0, %v8756
    %v8758 = vpop.f32.mrf.mxu0
    %8759 = vdwg.mxu0
    %v8760 = vpack.c.bf16 %v8757, %v8754
    %v8765 = vunpack.c.l.b16 %v8704
    %v8766 = vunpack.c.l.b16 %v8705
    %v8767 = vunpack.c.l.b16 %v8706
    %v8768 = vunpack.c.l.b16 %v8707
    %v8769 = vpack.c.b16 %v8766, %v8765
    %v8770 = vpack.c.b16 %v8768, %v8767
    %v8774 = vsel %vm5454, %v8760, 0
    %8776 = vmatprep.subr.bf16.mxu0 0
    %8777 = vmatpush1.bf16.msra.mxu0 0
    %8778 = vmatprep.subr.bf16.mxu0 0
    %8779 = vmatpush1.bf16.msra.mxu0 0
    %8780 = vmatprep.subr.bf16.mxu0 0
    %8781 = vmatpush1.bf16.msra.mxu0 0
    %8782 = vmatprep.subr.bf16.mxu0 0
    %8783 = vmatpush1.bf16.msra.mxu0 0
    %8784 = vmatprep.subr.bf16.mxu0 0
    %8785 = vmatpush1.bf16.msra.mxu0 0
    %8786 = vmatprep.subr.bf16.mxu0 0
    %8787 = vmatpush1.bf16.msra.mxu0 0
    %8788 = vmatprep.subr.bf16.mxu0 0
    %8789 = vmatpush1.bf16.msra.mxu0 %v8770
    %8790 = vmatprep.subr.bf16.mxu0 0
    %8791 = vmatpush1.bf16.msra.mxu0 %v8769
    %8792 = vmatprep.subr.bf16.mxu0 0
    %8793 = vmatpush2.bf16.msra.mxu0 0
    %8794 = vmatprep.subr.bf16.mxu0 0
    %8795 = vmatpush2.bf16.msra.mxu0 0
    %8796 = vmatprep.subr.bf16.mxu0 0
    %8797 = vmatpush2.bf16.msra.mxu0 0
    %8798 = vmatprep.subr.bf16.mxu0 0
    %8799 = vmatpush2.bf16.msra.mxu0 0
    %8800 = vmatprep.subr.bf16.mxu0 0
    %8801 = vmatpush2.bf16.msra.mxu0 0
    %8802 = vmatprep.subr.bf16.mxu0 0
    %8803 = vmatpush2.bf16.msra.mxu0 0
    %8804 = vmatprep.subr.bf16.mxu0 0
    %8805 = vmatpush2.bf16.msra.mxu0 0
    %8806 = vmatprep.subr.bf16.mxu0 0
    %8807 = vmatpush2.bf16.msra.mxu0 0
    %8808 = vmatprep.mubr.bf16.mxu0 0
    %8809 = vmatmul.mubr.bf16.gmra.mxu0 %v8774
    %v8810 = vpop.f32.mrf.mxu0
    %v8811 = vadd.f32 0.0, %v8810
    %v8812 = vpop.f32.mrf.mxu0
    %v8813 = vpop.f32.mrf.mxu0
    %v8814 = vadd.f32 0.0, %v8813
    %v8815 = vpop.f32.mrf.mxu0
    %8816 = vdwg.mxu0
    %v8817 = vadd.f32 %v8701, %v8811
    %v8818 = vadd.f32 %v8702, %v8814
    %s8819 = scalar_lea.vmem [#allocation9], 112
    %v8820 = vld [vmem:[%s8819] sm:$0xf]
    %v8821 = vld [vmem:[%s8819 + $0x4] sm:$0xf]
    %v8822 = vld [vmem:[%s8819 + $0x8] sm:$0xf]
    %v8823 = vld [vmem:[%s8819 + $0xc] sm:$0xf]
    %s8824 = scalar_lea.vmem [#allocation10], 56
    %v8825 = vld [vmem:[%s8824] sm:$0xf]
    %v8826 = vld [vmem:[%s8824 + $0x4] sm:$0xf]
    %v8829 = vunpack.c.l.b16 %v8825
    %v8830 = vunpack.c.l.b16 %v8826
    %v8831 = vpack.c.b16 %v8830, %v8829
    %v8833 = vsel %vm5454, %v8831, 0
    %8835 = vmatprep.subr.bf16.mxu0 0
    %8836 = vmatpush1.bf16.msra.mxu0 0
    %8837 = vmatprep.subr.bf16.mxu0 0
    %8838 = vmatpush1.bf16.msra.mxu0 0
    %8839 = vmatprep.subr.bf16.mxu0 0
    %8840 = vmatpush1.bf16.msra.mxu0 0
    %8841 = vmatprep.subr.bf16.mxu0 0
    %8842 = vmatpush1.bf16.msra.mxu0 0
    %8843 = vmatprep.subr.bf16.mxu0 0
    %8844 = vmatpush1.bf16.msra.mxu0 0
    %8845 = vmatprep.subr.bf16.mxu0 0
    %8846 = vmatpush1.bf16.msra.mxu0 0
    %8847 = vmatprep.subr.bf16.mxu0 0
    %8848 = vmatpush1.bf16.msra.mxu0 %v8012
    %8849 = vmatprep.subr.bf16.mxu0 0
    %8850 = vmatpush1.bf16.msra.mxu0 %v8011
    %8851 = vmatprep.subr.bf16.mxu0 0
    %8852 = vmatpush2.bf16.msra.mxu0 0
    %8853 = vmatprep.subr.bf16.mxu0 0
    %8854 = vmatpush2.bf16.msra.mxu0 0
    %8855 = vmatprep.subr.bf16.mxu0 0
    %8856 = vmatpush2.bf16.msra.mxu0 0
    %8857 = vmatprep.subr.bf16.mxu0 0
    %8858 = vmatpush2.bf16.msra.mxu0 0
    %8859 = vmatprep.subr.bf16.mxu0 0
    %8860 = vmatpush2.bf16.msra.mxu0 0
    %8861 = vmatprep.subr.bf16.mxu0 0
    %8862 = vmatpush2.bf16.msra.mxu0 0
    %8863 = vmatprep.subr.bf16.mxu0 0
    %8864 = vmatpush2.bf16.msra.mxu0 0
    %8865 = vmatprep.subr.bf16.mxu0 0
    %8866 = vmatpush2.bf16.msra.mxu0 0
    %8867 = vmatprep.mubr.bf16.mxu0 0
    %8868 = vmatmul.mubr.bf16.gmra.mxu0 %v8833
    %v8869 = vpop.f32.mrf.mxu0
    %v8870 = vadd.f32 0.0, %v8869
    %v8871 = vpop.f32.mrf.mxu0
    %v8872 = vpop.f32.mrf.mxu0
    %v8873 = vadd.f32 0.0, %v8872
    %v8874 = vpop.f32.mrf.mxu0
    %8875 = vdwg.mxu0
    %v8876 = vpack.c.bf16 %v8873, %v8870
    %v8881 = vunpack.c.l.b16 %v8820
    %v8882 = vunpack.c.l.b16 %v8821
    %v8883 = vunpack.c.l.b16 %v8822
    %v8884 = vunpack.c.l.b16 %v8823
    %v8885 = vpack.c.b16 %v8882, %v8881
    %v8886 = vpack.c.b16 %v8884, %v8883
    %v8890 = vsel %vm5454, %v8876, 0
    %8892 = vmatprep.subr.bf16.mxu0 0
    %8893 = vmatpush1.bf16.msra.mxu0 0
    %8894 = vmatprep.subr.bf16.mxu0 0
    %8895 = vmatpush1.bf16.msra.mxu0 0
    %8896 = vmatprep.subr.bf16.mxu0 0
    %8897 = vmatpush1.bf16.msra.mxu0 0
    %8898 = vmatprep.subr.bf16.mxu0 0
    %8899 = vmatpush1.bf16.msra.mxu0 0
    %8900 = vmatprep.subr.bf16.mxu0 0
    %8901 = vmatpush1.bf16.msra.mxu0 0
    %8902 = vmatprep.subr.bf16.mxu0 0
    %8903 = vmatpush1.bf16.msra.mxu0 0
    %8904 = vmatprep.subr.bf16.mxu0 0
    %8905 = vmatpush1.bf16.msra.mxu0 %v8886
    %8906 = vmatprep.subr.bf16.mxu0 0
    %8907 = vmatpush1.bf16.msra.mxu0 %v8885
    %8908 = vmatprep.subr.bf16.mxu0 0
    %8909 = vmatpush2.bf16.msra.mxu0 0
    %8910 = vmatprep.subr.bf16.mxu0 0
    %8911 = vmatpush2.bf16.msra.mxu0 0
    %8912 = vmatprep.subr.bf16.mxu0 0
    %8913 = vmatpush2.bf16.msra.mxu0 0
    %8914 = vmatprep.subr.bf16.mxu0 0
    %8915 = vmatpush2.bf16.msra.mxu0 0
    %8916 = vmatprep.subr.bf16.mxu0 0
    %8917 = vmatpush2.bf16.msra.mxu0 0
    %8918 = vmatprep.subr.bf16.mxu0 0
    %8919 = vmatpush2.bf16.msra.mxu0 0
    %8920 = vmatprep.subr.bf16.mxu0 0
    %8921 = vmatpush2.bf16.msra.mxu0 0
    %8922 = vmatprep.subr.bf16.mxu0 0
    %8923 = vmatpush2.bf16.msra.mxu0 0
    %8924 = vmatprep.mubr.bf16.mxu0 0
    %8925 = vmatmul.mubr.bf16.gmra.mxu0 %v8890
    %v8926 = vpop.f32.mrf.mxu0
    %v8927 = vadd.f32 0.0, %v8926
    %v8928 = vpop.f32.mrf.mxu0
    %v8929 = vpop.f32.mrf.mxu0
    %v8930 = vadd.f32 0.0, %v8929
    %v8931 = vpop.f32.mrf.mxu0
    %8932 = vdwg.mxu0
    %v8933 = vadd.f32 %v8817, %v8927
    %v8934 = vadd.f32 %v8818, %v8930
    %s8935 = scalar_lea.vmem [#allocation9], 128
    %v8936 = vld [vmem:[%s8935] sm:$0xf]
    %v8937 = vld [vmem:[%s8935 + $0x4] sm:$0xf]
    %v8938 = vld [vmem:[%s8935 + $0x8] sm:$0xf]
    %v8939 = vld [vmem:[%s8935 + $0xc] sm:$0xf]
    %s8940 = scalar_lea.vmem [#allocation10], 64
    %v8941 = vld [vmem:[%s8940] sm:$0xf]
    %v8942 = vld [vmem:[%s8940 + $0x4] sm:$0xf]
    %v8945 = vunpack.c.l.b16 %v8941
    %v8946 = vunpack.c.l.b16 %v8942
    %v8947 = vpack.c.b16 %v8946, %v8945
    %v8949 = vsel %vm5454, %v8947, 0
    %8951 = vmatprep.subr.bf16.mxu0 0
    %8952 = vmatpush1.bf16.msra.mxu0 0
    %8953 = vmatprep.subr.bf16.mxu0 0
    %8954 = vmatpush1.bf16.msra.mxu0 0
    %8955 = vmatprep.subr.bf16.mxu0 0
    %8956 = vmatpush1.bf16.msra.mxu0 0
    %8957 = vmatprep.subr.bf16.mxu0 0
    %8958 = vmatpush1.bf16.msra.mxu0 0
    %8959 = vmatprep.subr.bf16.mxu0 0
    %8960 = vmatpush1.bf16.msra.mxu0 0
    %8961 = vmatprep.subr.bf16.mxu0 0
    %8962 = vmatpush1.bf16.msra.mxu0 0
    %8963 = vmatprep.subr.bf16.mxu0 0
    %8964 = vmatpush1.bf16.msra.mxu0 %v8012
    %8965 = vmatprep.subr.bf16.mxu0 0
    %8966 = vmatpush1.bf16.msra.mxu0 %v8011
    %8967 = vmatprep.subr.bf16.mxu0 0
    %8968 = vmatpush2.bf16.msra.mxu0 0
    %8969 = vmatprep.subr.bf16.mxu0 0
    %8970 = vmatpush2.bf16.msra.mxu0 0
    %8971 = vmatprep.subr.bf16.mxu0 0
    %8972 = vmatpush2.bf16.msra.mxu0 0
    %8973 = vmatprep.subr.bf16.mxu0 0
    %8974 = vmatpush2.bf16.msra.mxu0 0
    %8975 = vmatprep.subr.bf16.mxu0 0
    %8976 = vmatpush2.bf16.msra.mxu0 0
    %8977 = vmatprep.subr.bf16.mxu0 0
    %8978 = vmatpush2.bf16.msra.mxu0 0
    %8979 = vmatprep.subr.bf16.mxu0 0
    %8980 = vmatpush2.bf16.msra.mxu0 0
    %8981 = vmatprep.subr.bf16.mxu0 0
    %8982 = vmatpush2.bf16.msra.mxu0 0
    %8983 = vmatprep.mubr.bf16.mxu0 0
    %8984 = vmatmul.mubr.bf16.gmra.mxu0 %v8949
    %v8985 = vpop.f32.mrf.mxu0
    %v8986 = vadd.f32 0.0, %v8985
    %v8987 = vpop.f32.mrf.mxu0
    %v8988 = vpop.f32.mrf.mxu0
    %v8989 = vadd.f32 0.0, %v8988
    %v8990 = vpop.f32.mrf.mxu0
    %8991 = vdwg.mxu0
    %v8992 = vpack.c.bf16 %v8989, %v8986
    %v8997 = vunpack.c.l.b16 %v8936
    %v8998 = vunpack.c.l.b16 %v8937
    %v8999 = vunpack.c.l.b16 %v8938
    %v9000 = vunpack.c.l.b16 %v8939
    %v9001 = vpack.c.b16 %v8998, %v8997
    %v9002 = vpack.c.b16 %v9000, %v8999
    %v9006 = vsel %vm5454, %v8992, 0
    %9008 = vmatprep.subr.bf16.mxu0 0
    %9009 = vmatpush1.bf16.msra.mxu0 0
    %9010 = vmatprep.subr.bf16.mxu0 0
    %9011 = vmatpush1.bf16.msra.mxu0 0
    %9012 = vmatprep.subr.bf16.mxu0 0
    %9013 = vmatpush1.bf16.msra.mxu0 0
    %9014 = vmatprep.subr.bf16.mxu0 0
    %9015 = vmatpush1.bf16.msra.mxu0 0
    %9016 = vmatprep.subr.bf16.mxu0 0
    %9017 = vmatpush1.bf16.msra.mxu0 0
    %9018 = vmatprep.subr.bf16.mxu0 0
    %9019 = vmatpush1.bf16.msra.mxu0 0
    %9020 = vmatprep.subr.bf16.mxu0 0
    %9021 = vmatpush1.bf16.msra.mxu0 %v9002
    %9022 = vmatprep.subr.bf16.mxu0 0
    %9023 = vmatpush1.bf16.msra.mxu0 %v9001
    %9024 = vmatprep.subr.bf16.mxu0 0
    %9025 = vmatpush2.bf16.msra.mxu0 0
    %9026 = vmatprep.subr.bf16.mxu0 0
    %9027 = vmatpush2.bf16.msra.mxu0 0
    %9028 = vmatprep.subr.bf16.mxu0 0
    %9029 = vmatpush2.bf16.msra.mxu0 0
    %9030 = vmatprep.subr.bf16.mxu0 0
    %9031 = vmatpush2.bf16.msra.mxu0 0
    %9032 = vmatprep.subr.bf16.mxu0 0
    %9033 = vmatpush2.bf16.msra.mxu0 0
    %9034 = vmatprep.subr.bf16.mxu0 0
    %9035 = vmatpush2.bf16.msra.mxu0 0
    %9036 = vmatprep.subr.bf16.mxu0 0
    %9037 = vmatpush2.bf16.msra.mxu0 0
    %9038 = vmatprep.subr.bf16.mxu0 0
    %9039 = vmatpush2.bf16.msra.mxu0 0
    %9040 = vmatprep.mubr.bf16.mxu0 0
    %9041 = vmatmul.mubr.bf16.gmra.mxu0 %v9006
    %v9042 = vpop.f32.mrf.mxu0
    %v9043 = vadd.f32 0.0, %v9042
    %v9044 = vpop.f32.mrf.mxu0
    %v9045 = vpop.f32.mrf.mxu0
    %v9046 = vadd.f32 0.0, %v9045
    %v9047 = vpop.f32.mrf.mxu0
    %9048 = vdwg.mxu0
    %v9049 = vadd.f32 %v8933, %v9043
    %v9050 = vadd.f32 %v8934, %v9046
    %v9051 = vld [vmem:[%s15] sm:$0xff]
    %v9052 = vld [vmem:[%s15 + $0x8] sm:$0xff]
    %9054 = vset.pattern.permute.xlu0 0
    %9055 = vperm.xlu0 %9054, %v9051
    %v9056 = vpop.permute.xlu0 %9055
    %9059 = vset.pattern.permute.xlu0 0
    %9060 = vperm.xlu0 %9059, %v9052
    %v9061 = vpop.permute.xlu0 %9060
    %v9063 = vadd.f32 %v9049, %v9056
    %v9064 = vadd.f32 %v9050, %v9061
    %vm9065 = vcmp.ge.f32.partialorder %v9063, 0.0
    %vm9066 = vcmp.ge.f32.partialorder %v9064, 0.0
    %v9067 = vmul.f32 %v9063, 0.2
    %v9068 = vmul.f32 %v9064, 0.2
    %v9069 = vsel %vm9065, %v9063, %v9067
    %v9070 = vsel %vm9066, %v9064, %v9068
    %v9071 = vpack.c.bf16 %v9070, %v9069
    %v9072 = vld [vmem:[#allocation12] sm:$0xff]
    %v9073 = vld [vmem:[#allocation12 + $0x8] sm:$0xff]
    %v9074 = vld [vmem:[#allocation12 + $0x10] sm:$0xff]
    %v9075 = vld [vmem:[#allocation12 + $0x18] sm:$0xff]
    %v9076 = vld [vmem:[#allocation12 + $0x20] sm:$0xff]
    %v9077 = vld [vmem:[#allocation12 + $0x28] sm:$0xff]
    %v9078 = vld [vmem:[#allocation12 + $0x30] sm:$0xff]
    %v9079 = vld [vmem:[#allocation12 + $0x38] sm:$0xff]
    %v9080 = vld [vmem:[#allocation12 + $0x40] sm:$0xff]
    %v9081 = vld [vmem:[#allocation12 + $0x48] sm:$0xff]
    %v9082 = vld [vmem:[#allocation12 + $0x50] sm:$0xff]
    %v9083 = vld [vmem:[#allocation12 + $0x58] sm:$0xff]
    %v9084 = vld [vmem:[#allocation12 + $0x60] sm:$0xff]
    %v9085 = vld [vmem:[#allocation12 + $0x68] sm:$0xff]
    %v9086 = vld [vmem:[#allocation12 + $0x70] sm:$0xff]
    %v9087 = vld [vmem:[#allocation12 + $0x78] sm:$0xff]
    %v9088 = vld [vmem:[#allocation12 + $0x80] sm:$0xff]
    %v9089 = vld [vmem:[#allocation12 + $0x88] sm:$0xff]
    %v9090 = vld [vmem:[#allocation12 + $0x90] sm:$0xff]
    %v9091 = vld [vmem:[#allocation12 + $0x98] sm:$0xff]
    %v9092 = vld [vmem:[#allocation12 + $0xa0] sm:$0xff]
    %v9093 = vld [vmem:[#allocation12 + $0xa8] sm:$0xff]
    %v9094 = vld [vmem:[#allocation12 + $0xb0] sm:$0xff]
    %v9095 = vld [vmem:[#allocation12 + $0xb8] sm:$0xff]
    %v9096 = vld [vmem:[#allocation12 + $0xc0] sm:$0xff]
    %v9097 = vld [vmem:[#allocation12 + $0xc8] sm:$0xff]
    %v9098 = vld [vmem:[#allocation12 + $0xd0] sm:$0xff]
    %v9099 = vld [vmem:[#allocation12 + $0xd8] sm:$0xff]
    %v9100 = vld [vmem:[#allocation12 + $0xe0] sm:$0xff]
    %v9101 = vld [vmem:[#allocation12 + $0xe8] sm:$0xff]
    %v9102 = vld [vmem:[#allocation12 + $0xf0] sm:$0xff]
    %v9103 = vld [vmem:[#allocation12 + $0xf8] sm:$0xff]
    %v9104 = vld [vmem:[#allocation13] sm:$0x3]
    %v9106 = vsel %vm4004, %v9104, 0
    %9108 = vmatprep.subr.bf16.mxu0 0
    %9109 = vmatpush1.bf16.msra.mxu0 0
    %9110 = vmatprep.subr.bf16.mxu0 0
    %9111 = vmatpush1.bf16.msra.mxu0 0
    %9112 = vmatprep.subr.bf16.mxu0 0
    %9113 = vmatpush1.bf16.msra.mxu0 0
    %9114 = vmatprep.subr.bf16.mxu0 0
    %9115 = vmatpush1.bf16.msra.mxu0 0
    %9116 = vmatprep.subr.bf16.mxu0 0
    %9117 = vmatpush1.bf16.msra.mxu0 0
    %9118 = vmatprep.subr.bf16.mxu0 0
    %9119 = vmatpush1.bf16.msra.mxu0 0
    %9120 = vmatprep.subr.bf16.mxu0 0
    %9121 = vmatpush1.bf16.msra.mxu0 0
    %9122 = vmatprep.subr.bf16.mxu0 0
    %9123 = vmatpush1.bf16.msra.mxu0 %v9071
    %9124 = vmatprep.subr.bf16.mxu0 0
    %9125 = vmatpush2.bf16.msra.mxu0 0
    %9126 = vmatprep.subr.bf16.mxu0 0
    %9127 = vmatpush2.bf16.msra.mxu0 0
    %9128 = vmatprep.subr.bf16.mxu0 0
    %9129 = vmatpush2.bf16.msra.mxu0 0
    %9130 = vmatprep.subr.bf16.mxu0 0
    %9131 = vmatpush2.bf16.msra.mxu0 0
    %9132 = vmatprep.subr.bf16.mxu0 0
    %9133 = vmatpush2.bf16.msra.mxu0 0
    %9134 = vmatprep.subr.bf16.mxu0 0
    %9135 = vmatpush2.bf16.msra.mxu0 0
    %9136 = vmatprep.subr.bf16.mxu0 0
    %9137 = vmatpush2.bf16.msra.mxu0 0
    %9138 = vmatprep.subr.bf16.mxu0 0
    %9139 = vmatpush2.bf16.msra.mxu0 0
    %9140 = vmatprep.mubr.bf16.mxu0 0
    %9141 = vmatmul.mubr.bf16.gmra.mxu0 %v9106
    %v9142 = vpop.f32.mrf.mxu0
    %v9143 = vadd.f32 0.0, %v9142
    %v9144 = vpop.f32.mrf.mxu0
    %v9145 = vpop.f32.mrf.mxu0
    %v9146 = vpop.f32.mrf.mxu0
    %9147 = vdwg.mxu0
    %v9148 = vpack.c.bf16 %v9143, %v9143
    %s9149 = scalar_lea.vmem [#allocation12], 256
    %v9150 = vld [vmem:[%s9149] sm:$0xff]
    %v9151 = vld [vmem:[%s9149 + $0x8] sm:$0xff]
    %v9152 = vld [vmem:[%s9149 + $0x10] sm:$0xff]
    %v9153 = vld [vmem:[%s9149 + $0x18] sm:$0xff]
    %v9154 = vld [vmem:[%s9149 + $0x20] sm:$0xff]
    %v9155 = vld [vmem:[%s9149 + $0x28] sm:$0xff]
    %v9156 = vld [vmem:[%s9149 + $0x30] sm:$0xff]
    %v9157 = vld [vmem:[%s9149 + $0x38] sm:$0xff]
    %v9158 = vld [vmem:[%s9149 + $0x40] sm:$0xff]
    %v9159 = vld [vmem:[%s9149 + $0x48] sm:$0xff]
    %v9160 = vld [vmem:[%s9149 + $0x50] sm:$0xff]
    %v9161 = vld [vmem:[%s9149 + $0x58] sm:$0xff]
    %v9162 = vld [vmem:[%s9149 + $0x60] sm:$0xff]
    %v9163 = vld [vmem:[%s9149 + $0x68] sm:$0xff]
    %v9164 = vld [vmem:[%s9149 + $0x70] sm:$0xff]
    %v9165 = vld [vmem:[%s9149 + $0x78] sm:$0xff]
    %v9166 = vld [vmem:[%s9149 + $0x80] sm:$0xff]
    %v9167 = vld [vmem:[%s9149 + $0x88] sm:$0xff]
    %v9168 = vld [vmem:[%s9149 + $0x90] sm:$0xff]
    %v9169 = vld [vmem:[%s9149 + $0x98] sm:$0xff]
    %v9170 = vld [vmem:[%s9149 + $0xa0] sm:$0xff]
    %v9171 = vld [vmem:[%s9149 + $0xa8] sm:$0xff]
    %v9172 = vld [vmem:[%s9149 + $0xb0] sm:$0xff]
    %v9173 = vld [vmem:[%s9149 + $0xb8] sm:$0xff]
    %v9174 = vld [vmem:[%s9149 + $0xc0] sm:$0xff]
    %v9175 = vld [vmem:[%s9149 + $0xc8] sm:$0xff]
    %v9176 = vld [vmem:[%s9149 + $0xd0] sm:$0xff]
    %v9177 = vld [vmem:[%s9149 + $0xd8] sm:$0xff]
    %v9178 = vld [vmem:[%s9149 + $0xe0] sm:$0xff]
    %v9179 = vld [vmem:[%s9149 + $0xe8] sm:$0xff]
    %v9180 = vld [vmem:[%s9149 + $0xf0] sm:$0xff]
    %v9181 = vld [vmem:[%s9149 + $0xf8] sm:$0xff]
    %s9182 = scalar_lea.vmem [#allocation13], 2
    %v9183 = vld [vmem:[%s9182] sm:$0x3]
    %v9185 = vsel %vm4004, %v9183, 0
    %9187 = vmatprep.subr.bf16.mxu0 0
    %9188 = vmatpush1.bf16.msra.mxu0 0
    %9189 = vmatprep.subr.bf16.mxu0 0
    %9190 = vmatpush1.bf16.msra.mxu0 0
    %9191 = vmatprep.subr.bf16.mxu0 0
    %9192 = vmatpush1.bf16.msra.mxu0 0
    %9193 = vmatprep.subr.bf16.mxu0 0
    %9194 = vmatpush1.bf16.msra.mxu0 0
    %9195 = vmatprep.subr.bf16.mxu0 0
    %9196 = vmatpush1.bf16.msra.mxu0 0
    %9197 = vmatprep.subr.bf16.mxu0 0
    %9198 = vmatpush1.bf16.msra.mxu0 0
    %9199 = vmatprep.subr.bf16.mxu0 0
    %9200 = vmatpush1.bf16.msra.mxu0 0
    %9201 = vmatprep.subr.bf16.mxu0 0
    %9202 = vmatpush1.bf16.msra.mxu0 %v9071
    %9203 = vmatprep.subr.bf16.mxu0 0
    %9204 = vmatpush2.bf16.msra.mxu0 0
    %9205 = vmatprep.subr.bf16.mxu0 0
    %9206 = vmatpush2.bf16.msra.mxu0 0
    %9207 = vmatprep.subr.bf16.mxu0 0
    %9208 = vmatpush2.bf16.msra.mxu0 0
    %9209 = vmatprep.subr.bf16.mxu0 0
    %9210 = vmatpush2.bf16.msra.mxu0 0
    %9211 = vmatprep.subr.bf16.mxu0 0
    %9212 = vmatpush2.bf16.msra.mxu0 0
    %9213 = vmatprep.subr.bf16.mxu0 0
    %9214 = vmatpush2.bf16.msra.mxu0 0
    %9215 = vmatprep.subr.bf16.mxu0 0
    %9216 = vmatpush2.bf16.msra.mxu0 0
    %9217 = vmatprep.subr.bf16.mxu0 0
    %9218 = vmatpush2.bf16.msra.mxu0 0
    %9219 = vmatprep.mubr.bf16.mxu0 0
    %9220 = vmatmul.mubr.bf16.gmra.mxu0 %v9185
    %v9221 = vpop.f32.mrf.mxu0
    %v9222 = vadd.f32 0.0, %v9221
    %v9223 = vpop.f32.mrf.mxu0
    %v9224 = vpop.f32.mrf.mxu0
    %v9225 = vpop.f32.mrf.mxu0
    %9226 = vdwg.mxu0
    %v9227 = vpack.c.bf16 %v9222, %v9222
    %v9260 = vunpack.c.l.b16 %v9150
    %v9261 = vunpack.c.h.b16 %v9150
    %v9262 = vunpack.c.l.b16 %v9151
    %v9263 = vunpack.c.h.b16 %v9151
    %v9264 = vunpack.c.l.b16 %v9152
    %v9265 = vunpack.c.h.b16 %v9152
    %v9266 = vunpack.c.l.b16 %v9153
    %v9267 = vunpack.c.h.b16 %v9153
    %v9268 = vunpack.c.l.b16 %v9154
    %v9269 = vunpack.c.h.b16 %v9154
    %v9270 = vunpack.c.l.b16 %v9155
    %v9271 = vunpack.c.h.b16 %v9155
    %v9272 = vunpack.c.l.b16 %v9156
    %v9273 = vunpack.c.h.b16 %v9156
    %v9274 = vunpack.c.l.b16 %v9157
    %v9275 = vunpack.c.h.b16 %v9157
    %v9276 = vunpack.c.l.b16 %v9158
    %v9277 = vunpack.c.h.b16 %v9158
    %v9278 = vunpack.c.l.b16 %v9159
    %v9279 = vunpack.c.h.b16 %v9159
    %v9280 = vunpack.c.l.b16 %v9160
    %v9281 = vunpack.c.h.b16 %v9160
    %v9282 = vunpack.c.l.b16 %v9161
    %v9283 = vunpack.c.h.b16 %v9161
    %v9284 = vunpack.c.l.b16 %v9162
    %v9285 = vunpack.c.h.b16 %v9162
    %v9286 = vunpack.c.l.b16 %v9163
    %v9287 = vunpack.c.h.b16 %v9163
    %v9288 = vunpack.c.l.b16 %v9164
    %v9289 = vunpack.c.h.b16 %v9164
    %v9290 = vunpack.c.l.b16 %v9165
    %v9291 = vunpack.c.h.b16 %v9165
    %v9292 = vunpack.c.l.b16 %v9166
    %v9293 = vunpack.c.h.b16 %v9166
    %v9294 = vunpack.c.l.b16 %v9167
    %v9295 = vunpack.c.h.b16 %v9167
    %v9296 = vunpack.c.l.b16 %v9168
    %v9297 = vunpack.c.h.b16 %v9168
    %v9298 = vunpack.c.l.b16 %v9169
    %v9299 = vunpack.c.h.b16 %v9169
    %v9300 = vunpack.c.l.b16 %v9170
    %v9301 = vunpack.c.h.b16 %v9170
    %v9302 = vunpack.c.l.b16 %v9171
    %v9303 = vunpack.c.h.b16 %v9171
    %v9304 = vunpack.c.l.b16 %v9172
    %v9305 = vunpack.c.h.b16 %v9172
    %v9306 = vunpack.c.l.b16 %v9173
    %v9307 = vunpack.c.h.b16 %v9173
    %v9308 = vunpack.c.l.b16 %v9174
    %v9309 = vunpack.c.h.b16 %v9174
    %v9310 = vunpack.c.l.b16 %v9175
    %v9311 = vunpack.c.h.b16 %v9175
    %v9312 = vunpack.c.l.b16 %v9176
    %v9313 = vunpack.c.h.b16 %v9176
    %v9314 = vunpack.c.l.b16 %v9177
    %v9315 = vunpack.c.h.b16 %v9177
    %v9316 = vunpack.c.l.b16 %v9178
    %v9317 = vunpack.c.h.b16 %v9178
    %v9318 = vunpack.c.l.b16 %v9179
    %v9319 = vunpack.c.h.b16 %v9179
    %v9320 = vunpack.c.l.b16 %v9180
    %v9321 = vunpack.c.h.b16 %v9180
    %v9322 = vunpack.c.l.b16 %v9181
    %v9323 = vunpack.c.h.b16 %v9181
    %v9324 = vpack.c.b16 %v9264, %v9260
    %v9325 = vpack.c.b16 %v9265, %v9261
    %v9326 = vpack.c.b16 %v9266, %v9262
    %v9327 = vpack.c.b16 %v9267, %v9263
    %v9328 = vpack.c.b16 %v9272, %v9268
    %v9329 = vpack.c.b16 %v9273, %v9269
    %v9330 = vpack.c.b16 %v9274, %v9270
    %v9331 = vpack.c.b16 %v9275, %v9271
    %v9332 = vpack.c.b16 %v9280, %v9276
    %v9333 = vpack.c.b16 %v9281, %v9277
    %v9334 = vpack.c.b16 %v9282, %v9278
    %v9335 = vpack.c.b16 %v9283, %v9279
    %v9336 = vpack.c.b16 %v9288, %v9284
    %v9337 = vpack.c.b16 %v9289, %v9285
    %v9338 = vpack.c.b16 %v9290, %v9286
    %v9339 = vpack.c.b16 %v9291, %v9287
    %v9340 = vpack.c.b16 %v9296, %v9292
    %v9341 = vpack.c.b16 %v9297, %v9293
    %v9342 = vpack.c.b16 %v9298, %v9294
    %v9343 = vpack.c.b16 %v9299, %v9295
    %v9344 = vpack.c.b16 %v9304, %v9300
    %v9345 = vpack.c.b16 %v9305, %v9301
    %v9346 = vpack.c.b16 %v9306, %v9302
    %v9347 = vpack.c.b16 %v9307, %v9303
    %v9348 = vpack.c.b16 %v9312, %v9308
    %v9349 = vpack.c.b16 %v9313, %v9309
    %v9350 = vpack.c.b16 %v9314, %v9310
    %v9351 = vpack.c.b16 %v9315, %v9311
    %v9352 = vpack.c.b16 %v9320, %v9316
    %v9353 = vpack.c.b16 %v9321, %v9317
    %v9354 = vpack.c.b16 %v9322, %v9318
    %v9355 = vpack.c.b16 %v9323, %v9319
    %9388 = vmatprep.subr.bf16.mxu0 %v9353
    %9389 = vmatpush1.bf16.msra.mxu0 %v9352
    %9390 = vmatprep.subr.bf16.mxu0 %v9349
    %9391 = vmatpush1.bf16.msra.mxu0 %v9348
    %9392 = vmatprep.subr.bf16.mxu0 %v9345
    %9393 = vmatpush1.bf16.msra.mxu0 %v9344
    %9394 = vmatprep.subr.bf16.mxu0 %v9341
    %9395 = vmatpush1.bf16.msra.mxu0 %v9340
    %9396 = vmatprep.subr.bf16.mxu0 %v9337
    %9397 = vmatpush1.bf16.msra.mxu0 %v9336
    %9398 = vmatprep.subr.bf16.mxu0 %v9333
    %9399 = vmatpush1.bf16.msra.mxu0 %v9332
    %9400 = vmatprep.subr.bf16.mxu0 %v9329
    %9401 = vmatpush1.bf16.msra.mxu0 %v9328
    %9402 = vmatprep.subr.bf16.mxu0 %v9325
    %9403 = vmatpush1.bf16.msra.mxu0 %v9324
    %9404 = vmatprep.subr.bf16.mxu0 0
    %9405 = vmatpush2.bf16.msra.mxu0 0
    %9406 = vmatprep.subr.bf16.mxu0 0
    %9407 = vmatpush2.bf16.msra.mxu0 0
    %9408 = vmatprep.subr.bf16.mxu0 0
    %9409 = vmatpush2.bf16.msra.mxu0 0
    %9410 = vmatprep.subr.bf16.mxu0 0
    %9411 = vmatpush2.bf16.msra.mxu0 0
    %9412 = vmatprep.subr.bf16.mxu0 0
    %9413 = vmatpush2.bf16.msra.mxu0 0
    %9414 = vmatprep.subr.bf16.mxu0 0
    %9415 = vmatpush2.bf16.msra.mxu0 0
    %9416 = vmatprep.subr.bf16.mxu0 0
    %9417 = vmatpush2.bf16.msra.mxu0 0
    %9418 = vmatprep.subr.bf16.mxu0 0
    %9419 = vmatpush2.bf16.msra.mxu0 0
    %9420 = vmatprep.mubr.bf16.mxu0 0
    %9421 = vmatmul.mubr.bf16.gmra.mxu0 %v9227
    %v9422 = vpop.f32.mrf.mxu0
    %v9423 = vadd.f32 0.0, %v9422
    %v9424 = vpop.f32.mrf.mxu0
    %v9425 = vadd.f32 0.0, %v9424
    %v9426 = vpop.f32.mrf.mxu0
    %v9427 = vpop.f32.mrf.mxu0
    %9428 = vdwg.mxu0
    %9429 = vmatprep.subr.bf16.mxu0 %v9355
    %9430 = vmatpush1.bf16.msra.mxu0 %v9354
    %9431 = vmatprep.subr.bf16.mxu0 %v9351
    %9432 = vmatpush1.bf16.msra.mxu0 %v9350
    %9433 = vmatprep.subr.bf16.mxu0 %v9347
    %9434 = vmatpush1.bf16.msra.mxu0 %v9346
    %9435 = vmatprep.subr.bf16.mxu0 %v9343
    %9436 = vmatpush1.bf16.msra.mxu0 %v9342
    %9437 = vmatprep.subr.bf16.mxu0 %v9339
    %9438 = vmatpush1.bf16.msra.mxu0 %v9338
    %9439 = vmatprep.subr.bf16.mxu0 %v9335
    %9440 = vmatpush1.bf16.msra.mxu0 %v9334
    %9441 = vmatprep.subr.bf16.mxu0 %v9331
    %9442 = vmatpush1.bf16.msra.mxu0 %v9330
    %9443 = vmatprep.subr.bf16.mxu0 %v9327
    %9444 = vmatpush1.bf16.msra.mxu0 %v9326
    %9445 = vmatprep.subr.bf16.mxu0 0
    %9446 = vmatpush2.bf16.msra.mxu0 0
    %9447 = vmatprep.subr.bf16.mxu0 0
    %9448 = vmatpush2.bf16.msra.mxu0 0
    %9449 = vmatprep.subr.bf16.mxu0 0
    %9450 = vmatpush2.bf16.msra.mxu0 0
    %9451 = vmatprep.subr.bf16.mxu0 0
    %9452 = vmatpush2.bf16.msra.mxu0 0
    %9453 = vmatprep.subr.bf16.mxu0 0
    %9454 = vmatpush2.bf16.msra.mxu0 0
    %9455 = vmatprep.subr.bf16.mxu0 0
    %9456 = vmatpush2.bf16.msra.mxu0 0
    %9457 = vmatprep.subr.bf16.mxu0 0
    %9458 = vmatpush2.bf16.msra.mxu0 0
    %9459 = vmatprep.subr.bf16.mxu0 0
    %9460 = vmatpush2.bf16.msra.mxu0 0
    %9461 = vmatprep.mubr.bf16.mxu0 0
    %9462 = vmatmul.mubr.bf16.gmra.mxu0 %v9227
    %v9463 = vpop.f32.mrf.mxu0
    %v9464 = vadd.f32 0.0, %v9463
    %v9465 = vpop.f32.mrf.mxu0
    %v9466 = vadd.f32 0.0, %v9465
    %v9467 = vpop.f32.mrf.mxu0
    %v9468 = vpop.f32.mrf.mxu0
    %9469 = vdwg.mxu0
    %v9502 = vunpack.c.l.b16 %v9072
    %v9503 = vunpack.c.h.b16 %v9072
    %v9504 = vunpack.c.l.b16 %v9073
    %v9505 = vunpack.c.h.b16 %v9073
    %v9506 = vunpack.c.l.b16 %v9074
    %v9507 = vunpack.c.h.b16 %v9074
    %v9508 = vunpack.c.l.b16 %v9075
    %v9509 = vunpack.c.h.b16 %v9075
    %v9510 = vunpack.c.l.b16 %v9076
    %v9511 = vunpack.c.h.b16 %v9076
    %v9512 = vunpack.c.l.b16 %v9077
    %v9513 = vunpack.c.h.b16 %v9077
    %v9514 = vunpack.c.l.b16 %v9078
    %v9515 = vunpack.c.h.b16 %v9078
    %v9516 = vunpack.c.l.b16 %v9079
    %v9517 = vunpack.c.h.b16 %v9079
    %v9518 = vunpack.c.l.b16 %v9080
    %v9519 = vunpack.c.h.b16 %v9080
    %v9520 = vunpack.c.l.b16 %v9081
    %v9521 = vunpack.c.h.b16 %v9081
    %v9522 = vunpack.c.l.b16 %v9082
    %v9523 = vunpack.c.h.b16 %v9082
    %v9524 = vunpack.c.l.b16 %v9083
    %v9525 = vunpack.c.h.b16 %v9083
    %v9526 = vunpack.c.l.b16 %v9084
    %v9527 = vunpack.c.h.b16 %v9084
    %v9528 = vunpack.c.l.b16 %v9085
    %v9529 = vunpack.c.h.b16 %v9085
    %v9530 = vunpack.c.l.b16 %v9086
    %v9531 = vunpack.c.h.b16 %v9086
    %v9532 = vunpack.c.l.b16 %v9087
    %v9533 = vunpack.c.h.b16 %v9087
    %v9534 = vunpack.c.l.b16 %v9088
    %v9535 = vunpack.c.h.b16 %v9088
    %v9536 = vunpack.c.l.b16 %v9089
    %v9537 = vunpack.c.h.b16 %v9089
    %v9538 = vunpack.c.l.b16 %v9090
    %v9539 = vunpack.c.h.b16 %v9090
    %v9540 = vunpack.c.l.b16 %v9091
    %v9541 = vunpack.c.h.b16 %v9091
    %v9542 = vunpack.c.l.b16 %v9092
    %v9543 = vunpack.c.h.b16 %v9092
    %v9544 = vunpack.c.l.b16 %v9093
    %v9545 = vunpack.c.h.b16 %v9093
    %v9546 = vunpack.c.l.b16 %v9094
    %v9547 = vunpack.c.h.b16 %v9094
    %v9548 = vunpack.c.l.b16 %v9095
    %v9549 = vunpack.c.h.b16 %v9095
    %v9550 = vunpack.c.l.b16 %v9096
    %v9551 = vunpack.c.h.b16 %v9096
    %v9552 = vunpack.c.l.b16 %v9097
    %v9553 = vunpack.c.h.b16 %v9097
    %v9554 = vunpack.c.l.b16 %v9098
    %v9555 = vunpack.c.h.b16 %v9098
    %v9556 = vunpack.c.l.b16 %v9099
    %v9557 = vunpack.c.h.b16 %v9099
    %v9558 = vunpack.c.l.b16 %v9100
    %v9559 = vunpack.c.h.b16 %v9100
    %v9560 = vunpack.c.l.b16 %v9101
    %v9561 = vunpack.c.h.b16 %v9101
    %v9562 = vunpack.c.l.b16 %v9102
    %v9563 = vunpack.c.h.b16 %v9102
    %v9564 = vunpack.c.l.b16 %v9103
    %v9565 = vunpack.c.h.b16 %v9103
    %v9566 = vpack.c.b16 %v9506, %v9502
    %v9567 = vpack.c.b16 %v9507, %v9503
    %v9568 = vpack.c.b16 %v9508, %v9504
    %v9569 = vpack.c.b16 %v9509, %v9505
    %v9570 = vpack.c.b16 %v9514, %v9510
    %v9571 = vpack.c.b16 %v9515, %v9511
    %v9572 = vpack.c.b16 %v9516, %v9512
    %v9573 = vpack.c.b16 %v9517, %v9513
    %v9574 = vpack.c.b16 %v9522, %v9518
    %v9575 = vpack.c.b16 %v9523, %v9519
    %v9576 = vpack.c.b16 %v9524, %v9520
    %v9577 = vpack.c.b16 %v9525, %v9521
    %v9578 = vpack.c.b16 %v9530, %v9526
    %v9579 = vpack.c.b16 %v9531, %v9527
    %v9580 = vpack.c.b16 %v9532, %v9528
    %v9581 = vpack.c.b16 %v9533, %v9529
    %v9582 = vpack.c.b16 %v9538, %v9534
    %v9583 = vpack.c.b16 %v9539, %v9535
    %v9584 = vpack.c.b16 %v9540, %v9536
    %v9585 = vpack.c.b16 %v9541, %v9537
    %v9586 = vpack.c.b16 %v9546, %v9542
    %v9587 = vpack.c.b16 %v9547, %v9543
    %v9588 = vpack.c.b16 %v9548, %v9544
    %v9589 = vpack.c.b16 %v9549, %v9545
    %v9590 = vpack.c.b16 %v9554, %v9550
    %v9591 = vpack.c.b16 %v9555, %v9551
    %v9592 = vpack.c.b16 %v9556, %v9552
    %v9593 = vpack.c.b16 %v9557, %v9553
    %v9594 = vpack.c.b16 %v9562, %v9558
    %v9595 = vpack.c.b16 %v9563, %v9559
    %v9596 = vpack.c.b16 %v9564, %v9560
    %v9597 = vpack.c.b16 %v9565, %v9561
    %9630 = vmatprep.subr.bf16.mxu0 %v9595
    %9631 = vmatpush1.bf16.msra.mxu0 %v9594
    %9632 = vmatprep.subr.bf16.mxu0 %v9591
    %9633 = vmatpush1.bf16.msra.mxu0 %v9590
    %9634 = vmatprep.subr.bf16.mxu0 %v9587
    %9635 = vmatpush1.bf16.msra.mxu0 %v9586
    %9636 = vmatprep.subr.bf16.mxu0 %v9583
    %9637 = vmatpush1.bf16.msra.mxu0 %v9582
    %9638 = vmatprep.subr.bf16.mxu0 %v9579
    %9639 = vmatpush1.bf16.msra.mxu0 %v9578
    %9640 = vmatprep.subr.bf16.mxu0 %v9575
    %9641 = vmatpush1.bf16.msra.mxu0 %v9574
    %9642 = vmatprep.subr.bf16.mxu0 %v9571
    %9643 = vmatpush1.bf16.msra.mxu0 %v9570
    %9644 = vmatprep.subr.bf16.mxu0 %v9567
    %9645 = vmatpush1.bf16.msra.mxu0 %v9566
    %9646 = vmatprep.subr.bf16.mxu0 0
    %9647 = vmatpush2.bf16.msra.mxu0 0
    %9648 = vmatprep.subr.bf16.mxu0 0
    %9649 = vmatpush2.bf16.msra.mxu0 0
    %9650 = vmatprep.subr.bf16.mxu0 0
    %9651 = vmatpush2.bf16.msra.mxu0 0
    %9652 = vmatprep.subr.bf16.mxu0 0
    %9653 = vmatpush2.bf16.msra.mxu0 0
    %9654 = vmatprep.subr.bf16.mxu0 0
    %9655 = vmatpush2.bf16.msra.mxu0 0
    %9656 = vmatprep.subr.bf16.mxu0 0
    %9657 = vmatpush2.bf16.msra.mxu0 0
    %9658 = vmatprep.subr.bf16.mxu0 0
    %9659 = vmatpush2.bf16.msra.mxu0 0
    %9660 = vmatprep.subr.bf16.mxu0 0
    %9661 = vmatpush2.bf16.msra.mxu0 0
    %9662 = vmatprep.mubr.bf16.mxu0 0
    %9663 = vmatmul.mubr.bf16.gmra.mxu0 %v9148
    %v9664 = vpop.f32.mrf.mxu0
    %v9665 = vadd.f32 %v9423, %v9664
    %v9666 = vpop.f32.mrf.mxu0
    %v9667 = vadd.f32 %v9425, %v9666
    %v9668 = vpop.f32.mrf.mxu0
    %v9669 = vpop.f32.mrf.mxu0
    %9670 = vdwg.mxu0
    %9671 = vmatprep.subr.bf16.mxu0 %v9597
    %9672 = vmatpush1.bf16.msra.mxu0 %v9596
    %9673 = vmatprep.subr.bf16.mxu0 %v9593
    %9674 = vmatpush1.bf16.msra.mxu0 %v9592
    %9675 = vmatprep.subr.bf16.mxu0 %v9589
    %9676 = vmatpush1.bf16.msra.mxu0 %v9588
    %9677 = vmatprep.subr.bf16.mxu0 %v9585
    %9678 = vmatpush1.bf16.msra.mxu0 %v9584
    %9679 = vmatprep.subr.bf16.mxu0 %v9581
    %9680 = vmatpush1.bf16.msra.mxu0 %v9580
    %9681 = vmatprep.subr.bf16.mxu0 %v9577
    %9682 = vmatpush1.bf16.msra.mxu0 %v9576
    %9683 = vmatprep.subr.bf16.mxu0 %v9573
    %9684 = vmatpush1.bf16.msra.mxu0 %v9572
    %9685 = vmatprep.subr.bf16.mxu0 %v9569
    %9686 = vmatpush1.bf16.msra.mxu0 %v9568
    %9687 = vmatprep.subr.bf16.mxu0 0
    %9688 = vmatpush2.bf16.msra.mxu0 0
    %9689 = vmatprep.subr.bf16.mxu0 0
    %9690 = vmatpush2.bf16.msra.mxu0 0
    %9691 = vmatprep.subr.bf16.mxu0 0
    %9692 = vmatpush2.bf16.msra.mxu0 0
    %9693 = vmatprep.subr.bf16.mxu0 0
    %9694 = vmatpush2.bf16.msra.mxu0 0
    %9695 = vmatprep.subr.bf16.mxu0 0
    %9696 = vmatpush2.bf16.msra.mxu0 0
    %9697 = vmatprep.subr.bf16.mxu0 0
    %9698 = vmatpush2.bf16.msra.mxu0 0
    %9699 = vmatprep.subr.bf16.mxu0 0
    %9700 = vmatpush2.bf16.msra.mxu0 0
    %9701 = vmatprep.subr.bf16.mxu0 0
    %9702 = vmatpush2.bf16.msra.mxu0 0
    %9703 = vmatprep.mubr.bf16.mxu0 0
    %9704 = vmatmul.mubr.bf16.gmra.mxu0 %v9148
    %v9705 = vpop.f32.mrf.mxu0
    %v9706 = vadd.f32 %v9464, %v9705
    %v9707 = vpop.f32.mrf.mxu0
    %v9708 = vadd.f32 %v9466, %v9707
    %v9709 = vpop.f32.mrf.mxu0
    %v9710 = vpop.f32.mrf.mxu0
    %9711 = vdwg.mxu0
    %s9712 = scalar_lea.vmem [#allocation12], 512
    %v9713 = vld [vmem:[%s9712] sm:$0xff]
    %v9714 = vld [vmem:[%s9712 + $0x8] sm:$0xff]
    %v9715 = vld [vmem:[%s9712 + $0x10] sm:$0xff]
    %v9716 = vld [vmem:[%s9712 + $0x18] sm:$0xff]
    %v9717 = vld [vmem:[%s9712 + $0x20] sm:$0xff]
    %v9718 = vld [vmem:[%s9712 + $0x28] sm:$0xff]
    %v9719 = vld [vmem:[%s9712 + $0x30] sm:$0xff]
    %v9720 = vld [vmem:[%s9712 + $0x38] sm:$0xff]
    %v9721 = vld [vmem:[%s9712 + $0x40] sm:$0xff]
    %v9722 = vld [vmem:[%s9712 + $0x48] sm:$0xff]
    %v9723 = vld [vmem:[%s9712 + $0x50] sm:$0xff]
    %v9724 = vld [vmem:[%s9712 + $0x58] sm:$0xff]
    %v9725 = vld [vmem:[%s9712 + $0x60] sm:$0xff]
    %v9726 = vld [vmem:[%s9712 + $0x68] sm:$0xff]
    %v9727 = vld [vmem:[%s9712 + $0x70] sm:$0xff]
    %v9728 = vld [vmem:[%s9712 + $0x78] sm:$0xff]
    %v9729 = vld [vmem:[%s9712 + $0x80] sm:$0xff]
    %v9730 = vld [vmem:[%s9712 + $0x88] sm:$0xff]
    %v9731 = vld [vmem:[%s9712 + $0x90] sm:$0xff]
    %v9732 = vld [vmem:[%s9712 + $0x98] sm:$0xff]
    %v9733 = vld [vmem:[%s9712 + $0xa0] sm:$0xff]
    %v9734 = vld [vmem:[%s9712 + $0xa8] sm:$0xff]
    %v9735 = vld [vmem:[%s9712 + $0xb0] sm:$0xff]
    %v9736 = vld [vmem:[%s9712 + $0xb8] sm:$0xff]
    %v9737 = vld [vmem:[%s9712 + $0xc0] sm:$0xff]
    %v9738 = vld [vmem:[%s9712 + $0xc8] sm:$0xff]
    %v9739 = vld [vmem:[%s9712 + $0xd0] sm:$0xff]
    %v9740 = vld [vmem:[%s9712 + $0xd8] sm:$0xff]
    %v9741 = vld [vmem:[%s9712 + $0xe0] sm:$0xff]
    %v9742 = vld [vmem:[%s9712 + $0xe8] sm:$0xff]
    %v9743 = vld [vmem:[%s9712 + $0xf0] sm:$0xff]
    %v9744 = vld [vmem:[%s9712 + $0xf8] sm:$0xff]
    %s9745 = scalar_lea.vmem [#allocation13], 4
    %v9746 = vld [vmem:[%s9745] sm:$0x3]
    %v9748 = vsel %vm4004, %v9746, 0
    %9750 = vmatprep.subr.bf16.mxu0 0
    %9751 = vmatpush1.bf16.msra.mxu0 0
    %9752 = vmatprep.subr.bf16.mxu0 0
    %9753 = vmatpush1.bf16.msra.mxu0 0
    %9754 = vmatprep.subr.bf16.mxu0 0
    %9755 = vmatpush1.bf16.msra.mxu0 0
    %9756 = vmatprep.subr.bf16.mxu0 0
    %9757 = vmatpush1.bf16.msra.mxu0 0
    %9758 = vmatprep.subr.bf16.mxu0 0
    %9759 = vmatpush1.bf16.msra.mxu0 0
    %9760 = vmatprep.subr.bf16.mxu0 0
    %9761 = vmatpush1.bf16.msra.mxu0 0
    %9762 = vmatprep.subr.bf16.mxu0 0
    %9763 = vmatpush1.bf16.msra.mxu0 0
    %9764 = vmatprep.subr.bf16.mxu0 0
    %9765 = vmatpush1.bf16.msra.mxu0 %v9071
    %9766 = vmatprep.subr.bf16.mxu0 0
    %9767 = vmatpush2.bf16.msra.mxu0 0
    %9768 = vmatprep.subr.bf16.mxu0 0
    %9769 = vmatpush2.bf16.msra.mxu0 0
    %9770 = vmatprep.subr.bf16.mxu0 0
    %9771 = vmatpush2.bf16.msra.mxu0 0
    %9772 = vmatprep.subr.bf16.mxu0 0
    %9773 = vmatpush2.bf16.msra.mxu0 0
    %9774 = vmatprep.subr.bf16.mxu0 0
    %9775 = vmatpush2.bf16.msra.mxu0 0
    %9776 = vmatprep.subr.bf16.mxu0 0
    %9777 = vmatpush2.bf16.msra.mxu0 0
    %9778 = vmatprep.subr.bf16.mxu0 0
    %9779 = vmatpush2.bf16.msra.mxu0 0
    %9780 = vmatprep.subr.bf16.mxu0 0
    %9781 = vmatpush2.bf16.msra.mxu0 0
    %9782 = vmatprep.mubr.bf16.mxu0 0
    %9783 = vmatmul.mubr.bf16.gmra.mxu0 %v9748
    %v9784 = vpop.f32.mrf.mxu0
    %v9785 = vadd.f32 0.0, %v9784
    %v9786 = vpop.f32.mrf.mxu0
    %v9787 = vpop.f32.mrf.mxu0
    %v9788 = vpop.f32.mrf.mxu0
    %9789 = vdwg.mxu0
    %v9790 = vpack.c.bf16 %v9785, %v9785
    %v9823 = vunpack.c.l.b16 %v9713
    %v9824 = vunpack.c.h.b16 %v9713
    %v9825 = vunpack.c.l.b16 %v9714
    %v9826 = vunpack.c.h.b16 %v9714
    %v9827 = vunpack.c.l.b16 %v9715
    %v9828 = vunpack.c.h.b16 %v9715
    %v9829 = vunpack.c.l.b16 %v9716
    %v9830 = vunpack.c.h.b16 %v9716
    %v9831 = vunpack.c.l.b16 %v9717
    %v9832 = vunpack.c.h.b16 %v9717
    %v9833 = vunpack.c.l.b16 %v9718
    %v9834 = vunpack.c.h.b16 %v9718
    %v9835 = vunpack.c.l.b16 %v9719
    %v9836 = vunpack.c.h.b16 %v9719
    %v9837 = vunpack.c.l.b16 %v9720
    %v9838 = vunpack.c.h.b16 %v9720
    %v9839 = vunpack.c.l.b16 %v9721
    %v9840 = vunpack.c.h.b16 %v9721
    %v9841 = vunpack.c.l.b16 %v9722
    %v9842 = vunpack.c.h.b16 %v9722
    %v9843 = vunpack.c.l.b16 %v9723
    %v9844 = vunpack.c.h.b16 %v9723
    %v9845 = vunpack.c.l.b16 %v9724
    %v9846 = vunpack.c.h.b16 %v9724
    %v9847 = vunpack.c.l.b16 %v9725
    %v9848 = vunpack.c.h.b16 %v9725
    %v9849 = vunpack.c.l.b16 %v9726
    %v9850 = vunpack.c.h.b16 %v9726
    %v9851 = vunpack.c.l.b16 %v9727
    %v9852 = vunpack.c.h.b16 %v9727
    %v9853 = vunpack.c.l.b16 %v9728
    %v9854 = vunpack.c.h.b16 %v9728
    %v9855 = vunpack.c.l.b16 %v9729
    %v9856 = vunpack.c.h.b16 %v9729
    %v9857 = vunpack.c.l.b16 %v9730
    %v9858 = vunpack.c.h.b16 %v9730
    %v9859 = vunpack.c.l.b16 %v9731
    %v9860 = vunpack.c.h.b16 %v9731
    %v9861 = vunpack.c.l.b16 %v9732
    %v9862 = vunpack.c.h.b16 %v9732
    %v9863 = vunpack.c.l.b16 %v9733
    %v9864 = vunpack.c.h.b16 %v9733
    %v9865 = vunpack.c.l.b16 %v9734
    %v9866 = vunpack.c.h.b16 %v9734
    %v9867 = vunpack.c.l.b16 %v9735
    %v9868 = vunpack.c.h.b16 %v9735
    %v9869 = vunpack.c.l.b16 %v9736
    %v9870 = vunpack.c.h.b16 %v9736
    %v9871 = vunpack.c.l.b16 %v9737
    %v9872 = vunpack.c.h.b16 %v9737
    %v9873 = vunpack.c.l.b16 %v9738
    %v9874 = vunpack.c.h.b16 %v9738
    %v9875 = vunpack.c.l.b16 %v9739
    %v9876 = vunpack.c.h.b16 %v9739
    %v9877 = vunpack.c.l.b16 %v9740
    %v9878 = vunpack.c.h.b16 %v9740
    %v9879 = vunpack.c.l.b16 %v9741
    %v9880 = vunpack.c.h.b16 %v9741
    %v9881 = vunpack.c.l.b16 %v9742
    %v9882 = vunpack.c.h.b16 %v9742
    %v9883 = vunpack.c.l.b16 %v9743
    %v9884 = vunpack.c.h.b16 %v9743
    %v9885 = vunpack.c.l.b16 %v9744
    %v9886 = vunpack.c.h.b16 %v9744
    %v9887 = vpack.c.b16 %v9827, %v9823
    %v9888 = vpack.c.b16 %v9828, %v9824
    %v9889 = vpack.c.b16 %v9829, %v9825
    %v9890 = vpack.c.b16 %v9830, %v9826
    %v9891 = vpack.c.b16 %v9835, %v9831
    %v9892 = vpack.c.b16 %v9836, %v9832
    %v9893 = vpack.c.b16 %v9837, %v9833
    %v9894 = vpack.c.b16 %v9838, %v9834
    %v9895 = vpack.c.b16 %v9843, %v9839
    %v9896 = vpack.c.b16 %v9844, %v9840
    %v9897 = vpack.c.b16 %v9845, %v9841
    %v9898 = vpack.c.b16 %v9846, %v9842
    %v9899 = vpack.c.b16 %v9851, %v9847
    %v9900 = vpack.c.b16 %v9852, %v9848
    %v9901 = vpack.c.b16 %v9853, %v9849
    %v9902 = vpack.c.b16 %v9854, %v9850
    %v9903 = vpack.c.b16 %v9859, %v9855
    %v9904 = vpack.c.b16 %v9860, %v9856
    %v9905 = vpack.c.b16 %v9861, %v9857
    %v9906 = vpack.c.b16 %v9862, %v9858
    %v9907 = vpack.c.b16 %v9867, %v9863
    %v9908 = vpack.c.b16 %v9868, %v9864
    %v9909 = vpack.c.b16 %v9869, %v9865
    %v9910 = vpack.c.b16 %v9870, %v9866
    %v9911 = vpack.c.b16 %v9875, %v9871
    %v9912 = vpack.c.b16 %v9876, %v9872
    %v9913 = vpack.c.b16 %v9877, %v9873
    %v9914 = vpack.c.b16 %v9878, %v9874
    %v9915 = vpack.c.b16 %v9883, %v9879
    %v9916 = vpack.c.b16 %v9884, %v9880
    %v9917 = vpack.c.b16 %v9885, %v9881
    %v9918 = vpack.c.b16 %v9886, %v9882
    %9951 = vmatprep.subr.bf16.mxu0 %v9916
    %9952 = vmatpush1.bf16.msra.mxu0 %v9915
    %9953 = vmatprep.subr.bf16.mxu0 %v9912
    %9954 = vmatpush1.bf16.msra.mxu0 %v9911
    %9955 = vmatprep.subr.bf16.mxu0 %v9908
    %9956 = vmatpush1.bf16.msra.mxu0 %v9907
    %9957 = vmatprep.subr.bf16.mxu0 %v9904
    %9958 = vmatpush1.bf16.msra.mxu0 %v9903
    %9959 = vmatprep.subr.bf16.mxu0 %v9900
    %9960 = vmatpush1.bf16.msra.mxu0 %v9899
    %9961 = vmatprep.subr.bf16.mxu0 %v9896
    %9962 = vmatpush1.bf16.msra.mxu0 %v9895
    %9963 = vmatprep.subr.bf16.mxu0 %v9892
    %9964 = vmatpush1.bf16.msra.mxu0 %v9891
    %9965 = vmatprep.subr.bf16.mxu0 %v9888
    %9966 = vmatpush1.bf16.msra.mxu0 %v9887
    %9967 = vmatprep.subr.bf16.mxu0 0
    %9968 = vmatpush2.bf16.msra.mxu0 0
    %9969 = vmatprep.subr.bf16.mxu0 0
    %9970 = vmatpush2.bf16.msra.mxu0 0
    %9971 = vmatprep.subr.bf16.mxu0 0
    %9972 = vmatpush2.bf16.msra.mxu0 0
    %9973 = vmatprep.subr.bf16.mxu0 0
    %9974 = vmatpush2.bf16.msra.mxu0 0
    %9975 = vmatprep.subr.bf16.mxu0 0
    %9976 = vmatpush2.bf16.msra.mxu0 0
    %9977 = vmatprep.subr.bf16.mxu0 0
    %9978 = vmatpush2.bf16.msra.mxu0 0
    %9979 = vmatprep.subr.bf16.mxu0 0
    %9980 = vmatpush2.bf16.msra.mxu0 0
    %9981 = vmatprep.subr.bf16.mxu0 0
    %9982 = vmatpush2.bf16.msra.mxu0 0
    %9983 = vmatprep.mubr.bf16.mxu0 0
    %9984 = vmatmul.mubr.bf16.gmra.mxu0 %v9790
    %v9985 = vpop.f32.mrf.mxu0
    %v9986 = vadd.f32 0.0, %v9985
    %v9987 = vpop.f32.mrf.mxu0
    %v9988 = vadd.f32 0.0, %v9987
    %v9989 = vpop.f32.mrf.mxu0
    %v9990 = vpop.f32.mrf.mxu0
    %9991 = vdwg.mxu0
    %9992 = vmatprep.subr.bf16.mxu0 %v9918
    %9993 = vmatpush1.bf16.msra.mxu0 %v9917
    %9994 = vmatprep.subr.bf16.mxu0 %v9914
    %9995 = vmatpush1.bf16.msra.mxu0 %v9913
    %9996 = vmatprep.subr.bf16.mxu0 %v9910
    %9997 = vmatpush1.bf16.msra.mxu0 %v9909
    %9998 = vmatprep.subr.bf16.mxu0 %v9906
    %9999 = vmatpush1.bf16.msra.mxu0 %v9905
    %10000 = vmatprep.subr.bf16.mxu0 %v9902
    %10001 = vmatpush1.bf16.msra.mxu0 %v9901
    %10002 = vmatprep.subr.bf16.mxu0 %v9898
    %10003 = vmatpush1.bf16.msra.mxu0 %v9897
    %10004 = vmatprep.subr.bf16.mxu0 %v9894
    %10005 = vmatpush1.bf16.msra.mxu0 %v9893
    %10006 = vmatprep.subr.bf16.mxu0 %v9890
    %10007 = vmatpush1.bf16.msra.mxu0 %v9889
    %10008 = vmatprep.subr.bf16.mxu0 0
    %10009 = vmatpush2.bf16.msra.mxu0 0
    %10010 = vmatprep.subr.bf16.mxu0 0
    %10011 = vmatpush2.bf16.msra.mxu0 0
    %10012 = vmatprep.subr.bf16.mxu0 0
    %10013 = vmatpush2.bf16.msra.mxu0 0
    %10014 = vmatprep.subr.bf16.mxu0 0
    %10015 = vmatpush2.bf16.msra.mxu0 0
    %10016 = vmatprep.subr.bf16.mxu0 0
    %10017 = vmatpush2.bf16.msra.mxu0 0
    %10018 = vmatprep.subr.bf16.mxu0 0
    %10019 = vmatpush2.bf16.msra.mxu0 0
    %10020 = vmatprep.subr.bf16.mxu0 0
    %10021 = vmatpush2.bf16.msra.mxu0 0
    %10022 = vmatprep.subr.bf16.mxu0 0
    %10023 = vmatpush2.bf16.msra.mxu0 0
    %10024 = vmatprep.mubr.bf16.mxu0 0
    %10025 = vmatmul.mubr.bf16.gmra.mxu0 %v9790
    %v10026 = vpop.f32.mrf.mxu0
    %v10027 = vadd.f32 0.0, %v10026
    %v10028 = vpop.f32.mrf.mxu0
    %v10029 = vadd.f32 0.0, %v10028
    %v10030 = vpop.f32.mrf.mxu0
    %v10031 = vpop.f32.mrf.mxu0
    %10032 = vdwg.mxu0
    %v10033 = vadd.f32 %v9665, %v9986
    %v10034 = vadd.f32 %v9667, %v9988
    %v10035 = vadd.f32 %v9706, %v10027
    %v10036 = vadd.f32 %v9708, %v10029
    %s10037 = scalar_lea.vmem [#allocation12], 768
    %v10038 = vld [vmem:[%s10037] sm:$0xff]
    %v10039 = vld [vmem:[%s10037 + $0x8] sm:$0xff]
    %v10040 = vld [vmem:[%s10037 + $0x10] sm:$0xff]
    %v10041 = vld [vmem:[%s10037 + $0x18] sm:$0xff]
    %v10042 = vld [vmem:[%s10037 + $0x20] sm:$0xff]
    %v10043 = vld [vmem:[%s10037 + $0x28] sm:$0xff]
    %v10044 = vld [vmem:[%s10037 + $0x30] sm:$0xff]
    %v10045 = vld [vmem:[%s10037 + $0x38] sm:$0xff]
    %v10046 = vld [vmem:[%s10037 + $0x40] sm:$0xff]
    %v10047 = vld [vmem:[%s10037 + $0x48] sm:$0xff]
    %v10048 = vld [vmem:[%s10037 + $0x50] sm:$0xff]
    %v10049 = vld [vmem:[%s10037 + $0x58] sm:$0xff]
    %v10050 = vld [vmem:[%s10037 + $0x60] sm:$0xff]
    %v10051 = vld [vmem:[%s10037 + $0x68] sm:$0xff]
    %v10052 = vld [vmem:[%s10037 + $0x70] sm:$0xff]
    %v10053 = vld [vmem:[%s10037 + $0x78] sm:$0xff]
    %v10054 = vld [vmem:[%s10037 + $0x80] sm:$0xff]
    %v10055 = vld [vmem:[%s10037 + $0x88] sm:$0xff]
    %v10056 = vld [vmem:[%s10037 + $0x90] sm:$0xff]
    %v10057 = vld [vmem:[%s10037 + $0x98] sm:$0xff]
    %v10058 = vld [vmem:[%s10037 + $0xa0] sm:$0xff]
    %v10059 = vld [vmem:[%s10037 + $0xa8] sm:$0xff]
    %v10060 = vld [vmem:[%s10037 + $0xb0] sm:$0xff]
    %v10061 = vld [vmem:[%s10037 + $0xb8] sm:$0xff]
    %v10062 = vld [vmem:[%s10037 + $0xc0] sm:$0xff]
    %v10063 = vld [vmem:[%s10037 + $0xc8] sm:$0xff]
    %v10064 = vld [vmem:[%s10037 + $0xd0] sm:$0xff]
    %v10065 = vld [vmem:[%s10037 + $0xd8] sm:$0xff]
    %v10066 = vld [vmem:[%s10037 + $0xe0] sm:$0xff]
    %v10067 = vld [vmem:[%s10037 + $0xe8] sm:$0xff]
    %v10068 = vld [vmem:[%s10037 + $0xf0] sm:$0xff]
    %v10069 = vld [vmem:[%s10037 + $0xf8] sm:$0xff]
    %s10070 = scalar_lea.vmem [#allocation13], 6
    %v10071 = vld [vmem:[%s10070] sm:$0x3]
    %v10073 = vsel %vm4004, %v10071, 0
    %10075 = vmatprep.subr.bf16.mxu0 0
    %10076 = vmatpush1.bf16.msra.mxu0 0
    %10077 = vmatprep.subr.bf16.mxu0 0
    %10078 = vmatpush1.bf16.msra.mxu0 0
    %10079 = vmatprep.subr.bf16.mxu0 0
    %10080 = vmatpush1.bf16.msra.mxu0 0
    %10081 = vmatprep.subr.bf16.mxu0 0
    %10082 = vmatpush1.bf16.msra.mxu0 0
    %10083 = vmatprep.subr.bf16.mxu0 0
    %10084 = vmatpush1.bf16.msra.mxu0 0
    %10085 = vmatprep.subr.bf16.mxu0 0
    %10086 = vmatpush1.bf16.msra.mxu0 0
    %10087 = vmatprep.subr.bf16.mxu0 0
    %10088 = vmatpush1.bf16.msra.mxu0 0
    %10089 = vmatprep.subr.bf16.mxu0 0
    %10090 = vmatpush1.bf16.msra.mxu0 %v9071
    %10091 = vmatprep.subr.bf16.mxu0 0
    %10092 = vmatpush2.bf16.msra.mxu0 0
    %10093 = vmatprep.subr.bf16.mxu0 0
    %10094 = vmatpush2.bf16.msra.mxu0 0
    %10095 = vmatprep.subr.bf16.mxu0 0
    %10096 = vmatpush2.bf16.msra.mxu0 0
    %10097 = vmatprep.subr.bf16.mxu0 0
    %10098 = vmatpush2.bf16.msra.mxu0 0
    %10099 = vmatprep.subr.bf16.mxu0 0
    %10100 = vmatpush2.bf16.msra.mxu0 0
    %10101 = vmatprep.subr.bf16.mxu0 0
    %10102 = vmatpush2.bf16.msra.mxu0 0
    %10103 = vmatprep.subr.bf16.mxu0 0
    %10104 = vmatpush2.bf16.msra.mxu0 0
    %10105 = vmatprep.subr.bf16.mxu0 0
    %10106 = vmatpush2.bf16.msra.mxu0 0
    %10107 = vmatprep.mubr.bf16.mxu0 0
    %10108 = vmatmul.mubr.bf16.gmra.mxu0 %v10073
    %v10109 = vpop.f32.mrf.mxu0
    %v10110 = vadd.f32 0.0, %v10109
    %v10111 = vpop.f32.mrf.mxu0
    %v10112 = vpop.f32.mrf.mxu0
    %v10113 = vpop.f32.mrf.mxu0
    %10114 = vdwg.mxu0
    %v10115 = vpack.c.bf16 %v10110, %v10110
    %v10148 = vunpack.c.l.b16 %v10038
    %v10149 = vunpack.c.h.b16 %v10038
    %v10150 = vunpack.c.l.b16 %v10039
    %v10151 = vunpack.c.h.b16 %v10039
    %v10152 = vunpack.c.l.b16 %v10040
    %v10153 = vunpack.c.h.b16 %v10040
    %v10154 = vunpack.c.l.b16 %v10041
    %v10155 = vunpack.c.h.b16 %v10041
    %v10156 = vunpack.c.l.b16 %v10042
    %v10157 = vunpack.c.h.b16 %v10042
    %v10158 = vunpack.c.l.b16 %v10043
    %v10159 = vunpack.c.h.b16 %v10043
    %v10160 = vunpack.c.l.b16 %v10044
    %v10161 = vunpack.c.h.b16 %v10044
    %v10162 = vunpack.c.l.b16 %v10045
    %v10163 = vunpack.c.h.b16 %v10045
    %v10164 = vunpack.c.l.b16 %v10046
    %v10165 = vunpack.c.h.b16 %v10046
    %v10166 = vunpack.c.l.b16 %v10047
    %v10167 = vunpack.c.h.b16 %v10047
    %v10168 = vunpack.c.l.b16 %v10048
    %v10169 = vunpack.c.h.b16 %v10048
    %v10170 = vunpack.c.l.b16 %v10049
    %v10171 = vunpack.c.h.b16 %v10049
    %v10172 = vunpack.c.l.b16 %v10050
    %v10173 = vunpack.c.h.b16 %v10050
    %v10174 = vunpack.c.l.b16 %v10051
    %v10175 = vunpack.c.h.b16 %v10051
    %v10176 = vunpack.c.l.b16 %v10052
    %v10177 = vunpack.c.h.b16 %v10052
    %v10178 = vunpack.c.l.b16 %v10053
    %v10179 = vunpack.c.h.b16 %v10053
    %v10180 = vunpack.c.l.b16 %v10054
    %v10181 = vunpack.c.h.b16 %v10054
    %v10182 = vunpack.c.l.b16 %v10055
    %v10183 = vunpack.c.h.b16 %v10055
    %v10184 = vunpack.c.l.b16 %v10056
    %v10185 = vunpack.c.h.b16 %v10056
    %v10186 = vunpack.c.l.b16 %v10057
    %v10187 = vunpack.c.h.b16 %v10057
    %v10188 = vunpack.c.l.b16 %v10058
    %v10189 = vunpack.c.h.b16 %v10058
    %v10190 = vunpack.c.l.b16 %v10059
    %v10191 = vunpack.c.h.b16 %v10059
    %v10192 = vunpack.c.l.b16 %v10060
    %v10193 = vunpack.c.h.b16 %v10060
    %v10194 = vunpack.c.l.b16 %v10061
    %v10195 = vunpack.c.h.b16 %v10061
    %v10196 = vunpack.c.l.b16 %v10062
    %v10197 = vunpack.c.h.b16 %v10062
    %v10198 = vunpack.c.l.b16 %v10063
    %v10199 = vunpack.c.h.b16 %v10063
    %v10200 = vunpack.c.l.b16 %v10064
    %v10201 = vunpack.c.h.b16 %v10064
    %v10202 = vunpack.c.l.b16 %v10065
    %v10203 = vunpack.c.h.b16 %v10065
    %v10204 = vunpack.c.l.b16 %v10066
    %v10205 = vunpack.c.h.b16 %v10066
    %v10206 = vunpack.c.l.b16 %v10067
    %v10207 = vunpack.c.h.b16 %v10067
    %v10208 = vunpack.c.l.b16 %v10068
    %v10209 = vunpack.c.h.b16 %v10068
    %v10210 = vunpack.c.l.b16 %v10069
    %v10211 = vunpack.c.h.b16 %v10069
    %v10212 = vpack.c.b16 %v10152, %v10148
    %v10213 = vpack.c.b16 %v10153, %v10149
    %v10214 = vpack.c.b16 %v10154, %v10150
    %v10215 = vpack.c.b16 %v10155, %v10151
    %v10216 = vpack.c.b16 %v10160, %v10156
    %v10217 = vpack.c.b16 %v10161, %v10157
    %v10218 = vpack.c.b16 %v10162, %v10158
    %v10219 = vpack.c.b16 %v10163, %v10159
    %v10220 = vpack.c.b16 %v10168, %v10164
    %v10221 = vpack.c.b16 %v10169, %v10165
    %v10222 = vpack.c.b16 %v10170, %v10166
    %v10223 = vpack.c.b16 %v10171, %v10167
    %v10224 = vpack.c.b16 %v10176, %v10172
    %v10225 = vpack.c.b16 %v10177, %v10173
    %v10226 = vpack.c.b16 %v10178, %v10174
    %v10227 = vpack.c.b16 %v10179, %v10175
    %v10228 = vpack.c.b16 %v10184, %v10180
    %v10229 = vpack.c.b16 %v10185, %v10181
    %v10230 = vpack.c.b16 %v10186, %v10182
    %v10231 = vpack.c.b16 %v10187, %v10183
    %v10232 = vpack.c.b16 %v10192, %v10188
    %v10233 = vpack.c.b16 %v10193, %v10189
    %v10234 = vpack.c.b16 %v10194, %v10190
    %v10235 = vpack.c.b16 %v10195, %v10191
    %v10236 = vpack.c.b16 %v10200, %v10196
    %v10237 = vpack.c.b16 %v10201, %v10197
    %v10238 = vpack.c.b16 %v10202, %v10198
    %v10239 = vpack.c.b16 %v10203, %v10199
    %v10240 = vpack.c.b16 %v10208, %v10204
    %v10241 = vpack.c.b16 %v10209, %v10205
    %v10242 = vpack.c.b16 %v10210, %v10206
    %v10243 = vpack.c.b16 %v10211, %v10207
    %10276 = vmatprep.subr.bf16.mxu0 %v10241
    %10277 = vmatpush1.bf16.msra.mxu0 %v10240
    %10278 = vmatprep.subr.bf16.mxu0 %v10237
    %10279 = vmatpush1.bf16.msra.mxu0 %v10236
    %10280 = vmatprep.subr.bf16.mxu0 %v10233
    %10281 = vmatpush1.bf16.msra.mxu0 %v10232
    %10282 = vmatprep.subr.bf16.mxu0 %v10229
    %10283 = vmatpush1.bf16.msra.mxu0 %v10228
    %10284 = vmatprep.subr.bf16.mxu0 %v10225
    %10285 = vmatpush1.bf16.msra.mxu0 %v10224
    %10286 = vmatprep.subr.bf16.mxu0 %v10221
    %10287 = vmatpush1.bf16.msra.mxu0 %v10220
    %10288 = vmatprep.subr.bf16.mxu0 %v10217
    %10289 = vmatpush1.bf16.msra.mxu0 %v10216
    %10290 = vmatprep.subr.bf16.mxu0 %v10213
    %10291 = vmatpush1.bf16.msra.mxu0 %v10212
    %10292 = vmatprep.subr.bf16.mxu0 0
    %10293 = vmatpush2.bf16.msra.mxu0 0
    %10294 = vmatprep.subr.bf16.mxu0 0
    %10295 = vmatpush2.bf16.msra.mxu0 0
    %10296 = vmatprep.subr.bf16.mxu0 0
    %10297 = vmatpush2.bf16.msra.mxu0 0
    %10298 = vmatprep.subr.bf16.mxu0 0
    %10299 = vmatpush2.bf16.msra.mxu0 0
    %10300 = vmatprep.subr.bf16.mxu0 0
    %10301 = vmatpush2.bf16.msra.mxu0 0
    %10302 = vmatprep.subr.bf16.mxu0 0
    %10303 = vmatpush2.bf16.msra.mxu0 0
    %10304 = vmatprep.subr.bf16.mxu0 0
    %10305 = vmatpush2.bf16.msra.mxu0 0
    %10306 = vmatprep.subr.bf16.mxu0 0
    %10307 = vmatpush2.bf16.msra.mxu0 0
    %10308 = vmatprep.mubr.bf16.mxu0 0
    %10309 = vmatmul.mubr.bf16.gmra.mxu0 %v10115
    %v10310 = vpop.f32.mrf.mxu0
    %v10311 = vadd.f32 0.0, %v10310
    %v10312 = vpop.f32.mrf.mxu0
    %v10313 = vadd.f32 0.0, %v10312
    %v10314 = vpop.f32.mrf.mxu0
    %v10315 = vpop.f32.mrf.mxu0
    %10316 = vdwg.mxu0
    %10317 = vmatprep.subr.bf16.mxu0 %v10243
    %10318 = vmatpush1.bf16.msra.mxu0 %v10242
    %10319 = vmatprep.subr.bf16.mxu0 %v10239
    %10320 = vmatpush1.bf16.msra.mxu0 %v10238
    %10321 = vmatprep.subr.bf16.mxu0 %v10235
    %10322 = vmatpush1.bf16.msra.mxu0 %v10234
    %10323 = vmatprep.subr.bf16.mxu0 %v10231
    %10324 = vmatpush1.bf16.msra.mxu0 %v10230
    %10325 = vmatprep.subr.bf16.mxu0 %v10227
    %10326 = vmatpush1.bf16.msra.mxu0 %v10226
    %10327 = vmatprep.subr.bf16.mxu0 %v10223
    %10328 = vmatpush1.bf16.msra.mxu0 %v10222
    %10329 = vmatprep.subr.bf16.mxu0 %v10219
    %10330 = vmatpush1.bf16.msra.mxu0 %v10218
    %10331 = vmatprep.subr.bf16.mxu0 %v10215
    %10332 = vmatpush1.bf16.msra.mxu0 %v10214
    %10333 = vmatprep.subr.bf16.mxu0 0
    %10334 = vmatpush2.bf16.msra.mxu0 0
    %10335 = vmatprep.subr.bf16.mxu0 0
    %10336 = vmatpush2.bf16.msra.mxu0 0
    %10337 = vmatprep.subr.bf16.mxu0 0
    %10338 = vmatpush2.bf16.msra.mxu0 0
    %10339 = vmatprep.subr.bf16.mxu0 0
    %10340 = vmatpush2.bf16.msra.mxu0 0
    %10341 = vmatprep.subr.bf16.mxu0 0
    %10342 = vmatpush2.bf16.msra.mxu0 0
    %10343 = vmatprep.subr.bf16.mxu0 0
    %10344 = vmatpush2.bf16.msra.mxu0 0
    %10345 = vmatprep.subr.bf16.mxu0 0
    %10346 = vmatpush2.bf16.msra.mxu0 0
    %10347 = vmatprep.subr.bf16.mxu0 0
    %10348 = vmatpush2.bf16.msra.mxu0 0
    %10349 = vmatprep.mubr.bf16.mxu0 0
    %10350 = vmatmul.mubr.bf16.gmra.mxu0 %v10115
    %v10351 = vpop.f32.mrf.mxu0
    %v10352 = vadd.f32 0.0, %v10351
    %v10353 = vpop.f32.mrf.mxu0
    %v10354 = vadd.f32 0.0, %v10353
    %v10355 = vpop.f32.mrf.mxu0
    %v10356 = vpop.f32.mrf.mxu0
    %10357 = vdwg.mxu0
    %v10358 = vadd.f32 %v10033, %v10311
    %v10359 = vadd.f32 %v10034, %v10313
    %v10360 = vadd.f32 %v10035, %v10352
    %v10361 = vadd.f32 %v10036, %v10354
    %s10362 = scalar_lea.vmem [#allocation12], 1024
    %v10363 = vld [vmem:[%s10362] sm:$0xff]
    %v10364 = vld [vmem:[%s10362 + $0x8] sm:$0xff]
    %v10365 = vld [vmem:[%s10362 + $0x10] sm:$0xff]
    %v10366 = vld [vmem:[%s10362 + $0x18] sm:$0xff]
    %v10367 = vld [vmem:[%s10362 + $0x20] sm:$0xff]
    %v10368 = vld [vmem:[%s10362 + $0x28] sm:$0xff]
    %v10369 = vld [vmem:[%s10362 + $0x30] sm:$0xff]
    %v10370 = vld [vmem:[%s10362 + $0x38] sm:$0xff]
    %v10371 = vld [vmem:[%s10362 + $0x40] sm:$0xff]
    %v10372 = vld [vmem:[%s10362 + $0x48] sm:$0xff]
    %v10373 = vld [vmem:[%s10362 + $0x50] sm:$0xff]
    %v10374 = vld [vmem:[%s10362 + $0x58] sm:$0xff]
    %v10375 = vld [vmem:[%s10362 + $0x60] sm:$0xff]
    %v10376 = vld [vmem:[%s10362 + $0x68] sm:$0xff]
    %v10377 = vld [vmem:[%s10362 + $0x70] sm:$0xff]
    %v10378 = vld [vmem:[%s10362 + $0x78] sm:$0xff]
    %v10379 = vld [vmem:[%s10362 + $0x80] sm:$0xff]
    %v10380 = vld [vmem:[%s10362 + $0x88] sm:$0xff]
    %v10381 = vld [vmem:[%s10362 + $0x90] sm:$0xff]
    %v10382 = vld [vmem:[%s10362 + $0x98] sm:$0xff]
    %v10383 = vld [vmem:[%s10362 + $0xa0] sm:$0xff]
    %v10384 = vld [vmem:[%s10362 + $0xa8] sm:$0xff]
    %v10385 = vld [vmem:[%s10362 + $0xb0] sm:$0xff]
    %v10386 = vld [vmem:[%s10362 + $0xb8] sm:$0xff]
    %v10387 = vld [vmem:[%s10362 + $0xc0] sm:$0xff]
    %v10388 = vld [vmem:[%s10362 + $0xc8] sm:$0xff]
    %v10389 = vld [vmem:[%s10362 + $0xd0] sm:$0xff]
    %v10390 = vld [vmem:[%s10362 + $0xd8] sm:$0xff]
    %v10391 = vld [vmem:[%s10362 + $0xe0] sm:$0xff]
    %v10392 = vld [vmem:[%s10362 + $0xe8] sm:$0xff]
    %v10393 = vld [vmem:[%s10362 + $0xf0] sm:$0xff]
    %v10394 = vld [vmem:[%s10362 + $0xf8] sm:$0xff]
    %s10395 = scalar_lea.vmem [#allocation13], 8
    %v10396 = vld [vmem:[%s10395] sm:$0x3]
    %v10398 = vsel %vm4004, %v10396, 0
    %10400 = vmatprep.subr.bf16.mxu0 0
    %10401 = vmatpush1.bf16.msra.mxu0 0
    %10402 = vmatprep.subr.bf16.mxu0 0
    %10403 = vmatpush1.bf16.msra.mxu0 0
    %10404 = vmatprep.subr.bf16.mxu0 0
    %10405 = vmatpush1.bf16.msra.mxu0 0
    %10406 = vmatprep.subr.bf16.mxu0 0
    %10407 = vmatpush1.bf16.msra.mxu0 0
    %10408 = vmatprep.subr.bf16.mxu0 0
    %10409 = vmatpush1.bf16.msra.mxu0 0
    %10410 = vmatprep.subr.bf16.mxu0 0
    %10411 = vmatpush1.bf16.msra.mxu0 0
    %10412 = vmatprep.subr.bf16.mxu0 0
    %10413 = vmatpush1.bf16.msra.mxu0 0
    %10414 = vmatprep.subr.bf16.mxu0 0
    %10415 = vmatpush1.bf16.msra.mxu0 %v9071
    %10416 = vmatprep.subr.bf16.mxu0 0
    %10417 = vmatpush2.bf16.msra.mxu0 0
    %10418 = vmatprep.subr.bf16.mxu0 0
    %10419 = vmatpush2.bf16.msra.mxu0 0
    %10420 = vmatprep.subr.bf16.mxu0 0
    %10421 = vmatpush2.bf16.msra.mxu0 0
    %10422 = vmatprep.subr.bf16.mxu0 0
    %10423 = vmatpush2.bf16.msra.mxu0 0
    %10424 = vmatprep.subr.bf16.mxu0 0
    %10425 = vmatpush2.bf16.msra.mxu0 0
    %10426 = vmatprep.subr.bf16.mxu0 0
    %10427 = vmatpush2.bf16.msra.mxu0 0
    %10428 = vmatprep.subr.bf16.mxu0 0
    %10429 = vmatpush2.bf16.msra.mxu0 0
    %10430 = vmatprep.subr.bf16.mxu0 0
    %10431 = vmatpush2.bf16.msra.mxu0 0
    %10432 = vmatprep.mubr.bf16.mxu0 0
    %10433 = vmatmul.mubr.bf16.gmra.mxu0 %v10398
    %v10434 = vpop.f32.mrf.mxu0
    %v10435 = vadd.f32 0.0, %v10434
    %v10436 = vpop.f32.mrf.mxu0
    %v10437 = vpop.f32.mrf.mxu0
    %v10438 = vpop.f32.mrf.mxu0
    %10439 = vdwg.mxu0
    %v10440 = vpack.c.bf16 %v10435, %v10435
    %v10473 = vunpack.c.l.b16 %v10363
    %v10474 = vunpack.c.h.b16 %v10363
    %v10475 = vunpack.c.l.b16 %v10364
    %v10476 = vunpack.c.h.b16 %v10364
    %v10477 = vunpack.c.l.b16 %v10365
    %v10478 = vunpack.c.h.b16 %v10365
    %v10479 = vunpack.c.l.b16 %v10366
    %v10480 = vunpack.c.h.b16 %v10366
    %v10481 = vunpack.c.l.b16 %v10367
    %v10482 = vunpack.c.h.b16 %v10367
    %v10483 = vunpack.c.l.b16 %v10368
    %v10484 = vunpack.c.h.b16 %v10368
    %v10485 = vunpack.c.l.b16 %v10369
    %v10486 = vunpack.c.h.b16 %v10369
    %v10487 = vunpack.c.l.b16 %v10370
    %v10488 = vunpack.c.h.b16 %v10370
    %v10489 = vunpack.c.l.b16 %v10371
    %v10490 = vunpack.c.h.b16 %v10371
    %v10491 = vunpack.c.l.b16 %v10372
    %v10492 = vunpack.c.h.b16 %v10372
    %v10493 = vunpack.c.l.b16 %v10373
    %v10494 = vunpack.c.h.b16 %v10373
    %v10495 = vunpack.c.l.b16 %v10374
    %v10496 = vunpack.c.h.b16 %v10374
    %v10497 = vunpack.c.l.b16 %v10375
    %v10498 = vunpack.c.h.b16 %v10375
    %v10499 = vunpack.c.l.b16 %v10376
    %v10500 = vunpack.c.h.b16 %v10376
    %v10501 = vunpack.c.l.b16 %v10377
    %v10502 = vunpack.c.h.b16 %v10377
    %v10503 = vunpack.c.l.b16 %v10378
    %v10504 = vunpack.c.h.b16 %v10378
    %v10505 = vunpack.c.l.b16 %v10379
    %v10506 = vunpack.c.h.b16 %v10379
    %v10507 = vunpack.c.l.b16 %v10380
    %v10508 = vunpack.c.h.b16 %v10380
    %v10509 = vunpack.c.l.b16 %v10381
    %v10510 = vunpack.c.h.b16 %v10381
    %v10511 = vunpack.c.l.b16 %v10382
    %v10512 = vunpack.c.h.b16 %v10382
    %v10513 = vunpack.c.l.b16 %v10383
    %v10514 = vunpack.c.h.b16 %v10383
    %v10515 = vunpack.c.l.b16 %v10384
    %v10516 = vunpack.c.h.b16 %v10384
    %v10517 = vunpack.c.l.b16 %v10385
    %v10518 = vunpack.c.h.b16 %v10385
    %v10519 = vunpack.c.l.b16 %v10386
    %v10520 = vunpack.c.h.b16 %v10386
    %v10521 = vunpack.c.l.b16 %v10387
    %v10522 = vunpack.c.h.b16 %v10387
    %v10523 = vunpack.c.l.b16 %v10388
    %v10524 = vunpack.c.h.b16 %v10388
    %v10525 = vunpack.c.l.b16 %v10389
    %v10526 = vunpack.c.h.b16 %v10389
    %v10527 = vunpack.c.l.b16 %v10390
    %v10528 = vunpack.c.h.b16 %v10390
    %v10529 = vunpack.c.l.b16 %v10391
    %v10530 = vunpack.c.h.b16 %v10391
    %v10531 = vunpack.c.l.b16 %v10392
    %v10532 = vunpack.c.h.b16 %v10392
    %v10533 = vunpack.c.l.b16 %v10393
    %v10534 = vunpack.c.h.b16 %v10393
    %v10535 = vunpack.c.l.b16 %v10394
    %v10536 = vunpack.c.h.b16 %v10394
    %v10537 = vpack.c.b16 %v10477, %v10473
    %v10538 = vpack.c.b16 %v10478, %v10474
    %v10539 = vpack.c.b16 %v10479, %v10475
    %v10540 = vpack.c.b16 %v10480, %v10476
    %v10541 = vpack.c.b16 %v10485, %v10481
    %v10542 = vpack.c.b16 %v10486, %v10482
    %v10543 = vpack.c.b16 %v10487, %v10483
    %v10544 = vpack.c.b16 %v10488, %v10484
    %v10545 = vpack.c.b16 %v10493, %v10489
    %v10546 = vpack.c.b16 %v10494, %v10490
    %v10547 = vpack.c.b16 %v10495, %v10491
    %v10548 = vpack.c.b16 %v10496, %v10492
    %v10549 = vpack.c.b16 %v10501, %v10497
    %v10550 = vpack.c.b16 %v10502, %v10498
    %v10551 = vpack.c.b16 %v10503, %v10499
    %v10552 = vpack.c.b16 %v10504, %v10500
    %v10553 = vpack.c.b16 %v10509, %v10505
    %v10554 = vpack.c.b16 %v10510, %v10506
    %v10555 = vpack.c.b16 %v10511, %v10507
    %v10556 = vpack.c.b16 %v10512, %v10508
    %v10557 = vpack.c.b16 %v10517, %v10513
    %v10558 = vpack.c.b16 %v10518, %v10514
    %v10559 = vpack.c.b16 %v10519, %v10515
    %v10560 = vpack.c.b16 %v10520, %v10516
    %v10561 = vpack.c.b16 %v10525, %v10521
    %v10562 = vpack.c.b16 %v10526, %v10522
    %v10563 = vpack.c.b16 %v10527, %v10523
    %v10564 = vpack.c.b16 %v10528, %v10524
    %v10565 = vpack.c.b16 %v10533, %v10529
    %v10566 = vpack.c.b16 %v10534, %v10530
    %v10567 = vpack.c.b16 %v10535, %v10531
    %v10568 = vpack.c.b16 %v10536, %v10532
    %10601 = vmatprep.subr.bf16.mxu0 %v10566
    %10602 = vmatpush1.bf16.msra.mxu0 %v10565
    %10603 = vmatprep.subr.bf16.mxu0 %v10562
    %10604 = vmatpush1.bf16.msra.mxu0 %v10561
    %10605 = vmatprep.subr.bf16.mxu0 %v10558
    %10606 = vmatpush1.bf16.msra.mxu0 %v10557
    %10607 = vmatprep.subr.bf16.mxu0 %v10554
    %10608 = vmatpush1.bf16.msra.mxu0 %v10553
    %10609 = vmatprep.subr.bf16.mxu0 %v10550
    %10610 = vmatpush1.bf16.msra.mxu0 %v10549
    %10611 = vmatprep.subr.bf16.mxu0 %v10546
    %10612 = vmatpush1.bf16.msra.mxu0 %v10545
    %10613 = vmatprep.subr.bf16.mxu0 %v10542
    %10614 = vmatpush1.bf16.msra.mxu0 %v10541
    %10615 = vmatprep.subr.bf16.mxu0 %v10538
    %10616 = vmatpush1.bf16.msra.mxu0 %v10537
    %10617 = vmatprep.subr.bf16.mxu0 0
    %10618 = vmatpush2.bf16.msra.mxu0 0
    %10619 = vmatprep.subr.bf16.mxu0 0
    %10620 = vmatpush2.bf16.msra.mxu0 0
    %10621 = vmatprep.subr.bf16.mxu0 0
    %10622 = vmatpush2.bf16.msra.mxu0 0
    %10623 = vmatprep.subr.bf16.mxu0 0
    %10624 = vmatpush2.bf16.msra.mxu0 0
    %10625 = vmatprep.subr.bf16.mxu0 0
    %10626 = vmatpush2.bf16.msra.mxu0 0
    %10627 = vmatprep.subr.bf16.mxu0 0
    %10628 = vmatpush2.bf16.msra.mxu0 0
    %10629 = vmatprep.subr.bf16.mxu0 0
    %10630 = vmatpush2.bf16.msra.mxu0 0
    %10631 = vmatprep.subr.bf16.mxu0 0
    %10632 = vmatpush2.bf16.msra.mxu0 0
    %10633 = vmatprep.mubr.bf16.mxu0 0
    %10634 = vmatmul.mubr.bf16.gmra.mxu0 %v10440
    %v10635 = vpop.f32.mrf.mxu0
    %v10636 = vadd.f32 0.0, %v10635
    %v10637 = vpop.f32.mrf.mxu0
    %v10638 = vadd.f32 0.0, %v10637
    %v10639 = vpop.f32.mrf.mxu0
    %v10640 = vpop.f32.mrf.mxu0
    %10641 = vdwg.mxu0
    %10642 = vmatprep.subr.bf16.mxu0 %v10568
    %10643 = vmatpush1.bf16.msra.mxu0 %v10567
    %10644 = vmatprep.subr.bf16.mxu0 %v10564
    %10645 = vmatpush1.bf16.msra.mxu0 %v10563
    %10646 = vmatprep.subr.bf16.mxu0 %v10560
    %10647 = vmatpush1.bf16.msra.mxu0 %v10559
    %10648 = vmatprep.subr.bf16.mxu0 %v10556
    %10649 = vmatpush1.bf16.msra.mxu0 %v10555
    %10650 = vmatprep.subr.bf16.mxu0 %v10552
    %10651 = vmatpush1.bf16.msra.mxu0 %v10551
    %10652 = vmatprep.subr.bf16.mxu0 %v10548
    %10653 = vmatpush1.bf16.msra.mxu0 %v10547
    %10654 = vmatprep.subr.bf16.mxu0 %v10544
    %10655 = vmatpush1.bf16.msra.mxu0 %v10543
    %10656 = vmatprep.subr.bf16.mxu0 %v10540
    %10657 = vmatpush1.bf16.msra.mxu0 %v10539
    %10658 = vmatprep.subr.bf16.mxu0 0
    %10659 = vmatpush2.bf16.msra.mxu0 0
    %10660 = vmatprep.subr.bf16.mxu0 0
    %10661 = vmatpush2.bf16.msra.mxu0 0
    %10662 = vmatprep.subr.bf16.mxu0 0
    %10663 = vmatpush2.bf16.msra.mxu0 0
    %10664 = vmatprep.subr.bf16.mxu0 0
    %10665 = vmatpush2.bf16.msra.mxu0 0
    %10666 = vmatprep.subr.bf16.mxu0 0
    %10667 = vmatpush2.bf16.msra.mxu0 0
    %10668 = vmatprep.subr.bf16.mxu0 0
    %10669 = vmatpush2.bf16.msra.mxu0 0
    %10670 = vmatprep.subr.bf16.mxu0 0
    %10671 = vmatpush2.bf16.msra.mxu0 0
    %10672 = vmatprep.subr.bf16.mxu0 0
    %10673 = vmatpush2.bf16.msra.mxu0 0
    %10674 = vmatprep.mubr.bf16.mxu0 0
    %10675 = vmatmul.mubr.bf16.gmra.mxu0 %v10440
    %v10676 = vpop.f32.mrf.mxu0
    %v10677 = vadd.f32 0.0, %v10676
    %v10678 = vpop.f32.mrf.mxu0
    %v10679 = vadd.f32 0.0, %v10678
    %v10680 = vpop.f32.mrf.mxu0
    %v10681 = vpop.f32.mrf.mxu0
    %10682 = vdwg.mxu0
    %v10683 = vadd.f32 %v10358, %v10636
    %v10684 = vadd.f32 %v10359, %v10638
    %v10685 = vadd.f32 %v10360, %v10677
    %v10686 = vadd.f32 %v10361, %v10679
    %s10687 = scalar_lea.vmem [#allocation12], 1280
    %v10688 = vld [vmem:[%s10687] sm:$0xff]
    %v10689 = vld [vmem:[%s10687 + $0x8] sm:$0xff]
    %v10690 = vld [vmem:[%s10687 + $0x10] sm:$0xff]
    %v10691 = vld [vmem:[%s10687 + $0x18] sm:$0xff]
    %v10692 = vld [vmem:[%s10687 + $0x20] sm:$0xff]
    %v10693 = vld [vmem:[%s10687 + $0x28] sm:$0xff]
    %v10694 = vld [vmem:[%s10687 + $0x30] sm:$0xff]
    %v10695 = vld [vmem:[%s10687 + $0x38] sm:$0xff]
    %v10696 = vld [vmem:[%s10687 + $0x40] sm:$0xff]
    %v10697 = vld [vmem:[%s10687 + $0x48] sm:$0xff]
    %v10698 = vld [vmem:[%s10687 + $0x50] sm:$0xff]
    %v10699 = vld [vmem:[%s10687 + $0x58] sm:$0xff]
    %v10700 = vld [vmem:[%s10687 + $0x60] sm:$0xff]
    %v10701 = vld [vmem:[%s10687 + $0x68] sm:$0xff]
    %v10702 = vld [vmem:[%s10687 + $0x70] sm:$0xff]
    %v10703 = vld [vmem:[%s10687 + $0x78] sm:$0xff]
    %v10704 = vld [vmem:[%s10687 + $0x80] sm:$0xff]
    %v10705 = vld [vmem:[%s10687 + $0x88] sm:$0xff]
    %v10706 = vld [vmem:[%s10687 + $0x90] sm:$0xff]
    %v10707 = vld [vmem:[%s10687 + $0x98] sm:$0xff]
    %v10708 = vld [vmem:[%s10687 + $0xa0] sm:$0xff]
    %v10709 = vld [vmem:[%s10687 + $0xa8] sm:$0xff]
    %v10710 = vld [vmem:[%s10687 + $0xb0] sm:$0xff]
    %v10711 = vld [vmem:[%s10687 + $0xb8] sm:$0xff]
    %v10712 = vld [vmem:[%s10687 + $0xc0] sm:$0xff]
    %v10713 = vld [vmem:[%s10687 + $0xc8] sm:$0xff]
    %v10714 = vld [vmem:[%s10687 + $0xd0] sm:$0xff]
    %v10715 = vld [vmem:[%s10687 + $0xd8] sm:$0xff]
    %v10716 = vld [vmem:[%s10687 + $0xe0] sm:$0xff]
    %v10717 = vld [vmem:[%s10687 + $0xe8] sm:$0xff]
    %v10718 = vld [vmem:[%s10687 + $0xf0] sm:$0xff]
    %v10719 = vld [vmem:[%s10687 + $0xf8] sm:$0xff]
    %s10720 = scalar_lea.vmem [#allocation13], 10
    %v10721 = vld [vmem:[%s10720] sm:$0x3]
    %v10723 = vsel %vm4004, %v10721, 0
    %10725 = vmatprep.subr.bf16.mxu0 0
    %10726 = vmatpush1.bf16.msra.mxu0 0
    %10727 = vmatprep.subr.bf16.mxu0 0
    %10728 = vmatpush1.bf16.msra.mxu0 0
    %10729 = vmatprep.subr.bf16.mxu0 0
    %10730 = vmatpush1.bf16.msra.mxu0 0
    %10731 = vmatprep.subr.bf16.mxu0 0
    %10732 = vmatpush1.bf16.msra.mxu0 0
    %10733 = vmatprep.subr.bf16.mxu0 0
    %10734 = vmatpush1.bf16.msra.mxu0 0
    %10735 = vmatprep.subr.bf16.mxu0 0
    %10736 = vmatpush1.bf16.msra.mxu0 0
    %10737 = vmatprep.subr.bf16.mxu0 0
    %10738 = vmatpush1.bf16.msra.mxu0 0
    %10739 = vmatprep.subr.bf16.mxu0 0
    %10740 = vmatpush1.bf16.msra.mxu0 %v9071
    %10741 = vmatprep.subr.bf16.mxu0 0
    %10742 = vmatpush2.bf16.msra.mxu0 0
    %10743 = vmatprep.subr.bf16.mxu0 0
    %10744 = vmatpush2.bf16.msra.mxu0 0
    %10745 = vmatprep.subr.bf16.mxu0 0
    %10746 = vmatpush2.bf16.msra.mxu0 0
    %10747 = vmatprep.subr.bf16.mxu0 0
    %10748 = vmatpush2.bf16.msra.mxu0 0
    %10749 = vmatprep.subr.bf16.mxu0 0
    %10750 = vmatpush2.bf16.msra.mxu0 0
    %10751 = vmatprep.subr.bf16.mxu0 0
    %10752 = vmatpush2.bf16.msra.mxu0 0
    %10753 = vmatprep.subr.bf16.mxu0 0
    %10754 = vmatpush2.bf16.msra.mxu0 0
    %10755 = vmatprep.subr.bf16.mxu0 0
    %10756 = vmatpush2.bf16.msra.mxu0 0
    %10757 = vmatprep.mubr.bf16.mxu0 0
    %10758 = vmatmul.mubr.bf16.gmra.mxu0 %v10723
    %v10759 = vpop.f32.mrf.mxu0
    %v10760 = vadd.f32 0.0, %v10759
    %v10761 = vpop.f32.mrf.mxu0
    %v10762 = vpop.f32.mrf.mxu0
    %v10763 = vpop.f32.mrf.mxu0
    %10764 = vdwg.mxu0
    %v10765 = vpack.c.bf16 %v10760, %v10760
    %v10798 = vunpack.c.l.b16 %v10688
    %v10799 = vunpack.c.h.b16 %v10688
    %v10800 = vunpack.c.l.b16 %v10689
    %v10801 = vunpack.c.h.b16 %v10689
    %v10802 = vunpack.c.l.b16 %v10690
    %v10803 = vunpack.c.h.b16 %v10690
    %v10804 = vunpack.c.l.b16 %v10691
    %v10805 = vunpack.c.h.b16 %v10691
    %v10806 = vunpack.c.l.b16 %v10692
    %v10807 = vunpack.c.h.b16 %v10692
    %v10808 = vunpack.c.l.b16 %v10693
    %v10809 = vunpack.c.h.b16 %v10693
    %v10810 = vunpack.c.l.b16 %v10694
    %v10811 = vunpack.c.h.b16 %v10694
    %v10812 = vunpack.c.l.b16 %v10695
    %v10813 = vunpack.c.h.b16 %v10695
    %v10814 = vunpack.c.l.b16 %v10696
    %v10815 = vunpack.c.h.b16 %v10696
    %v10816 = vunpack.c.l.b16 %v10697
    %v10817 = vunpack.c.h.b16 %v10697
    %v10818 = vunpack.c.l.b16 %v10698
    %v10819 = vunpack.c.h.b16 %v10698
    %v10820 = vunpack.c.l.b16 %v10699
    %v10821 = vunpack.c.h.b16 %v10699
    %v10822 = vunpack.c.l.b16 %v10700
    %v10823 = vunpack.c.h.b16 %v10700
    %v10824 = vunpack.c.l.b16 %v10701
    %v10825 = vunpack.c.h.b16 %v10701
    %v10826 = vunpack.c.l.b16 %v10702
    %v10827 = vunpack.c.h.b16 %v10702
    %v10828 = vunpack.c.l.b16 %v10703
    %v10829 = vunpack.c.h.b16 %v10703
    %v10830 = vunpack.c.l.b16 %v10704
    %v10831 = vunpack.c.h.b16 %v10704
    %v10832 = vunpack.c.l.b16 %v10705
    %v10833 = vunpack.c.h.b16 %v10705
    %v10834 = vunpack.c.l.b16 %v10706
    %v10835 = vunpack.c.h.b16 %v10706
    %v10836 = vunpack.c.l.b16 %v10707
    %v10837 = vunpack.c.h.b16 %v10707
    %v10838 = vunpack.c.l.b16 %v10708
    %v10839 = vunpack.c.h.b16 %v10708
    %v10840 = vunpack.c.l.b16 %v10709
    %v10841 = vunpack.c.h.b16 %v10709
    %v10842 = vunpack.c.l.b16 %v10710
    %v10843 = vunpack.c.h.b16 %v10710
    %v10844 = vunpack.c.l.b16 %v10711
    %v10845 = vunpack.c.h.b16 %v10711
    %v10846 = vunpack.c.l.b16 %v10712
    %v10847 = vunpack.c.h.b16 %v10712
    %v10848 = vunpack.c.l.b16 %v10713
    %v10849 = vunpack.c.h.b16 %v10713
    %v10850 = vunpack.c.l.b16 %v10714
    %v10851 = vunpack.c.h.b16 %v10714
    %v10852 = vunpack.c.l.b16 %v10715
    %v10853 = vunpack.c.h.b16 %v10715
    %v10854 = vunpack.c.l.b16 %v10716
    %v10855 = vunpack.c.h.b16 %v10716
    %v10856 = vunpack.c.l.b16 %v10717
    %v10857 = vunpack.c.h.b16 %v10717
    %v10858 = vunpack.c.l.b16 %v10718
    %v10859 = vunpack.c.h.b16 %v10718
    %v10860 = vunpack.c.l.b16 %v10719
    %v10861 = vunpack.c.h.b16 %v10719
    %v10862 = vpack.c.b16 %v10802, %v10798
    %v10863 = vpack.c.b16 %v10803, %v10799
    %v10864 = vpack.c.b16 %v10804, %v10800
    %v10865 = vpack.c.b16 %v10805, %v10801
    %v10866 = vpack.c.b16 %v10810, %v10806
    %v10867 = vpack.c.b16 %v10811, %v10807
    %v10868 = vpack.c.b16 %v10812, %v10808
    %v10869 = vpack.c.b16 %v10813, %v10809
    %v10870 = vpack.c.b16 %v10818, %v10814
    %v10871 = vpack.c.b16 %v10819, %v10815
    %v10872 = vpack.c.b16 %v10820, %v10816
    %v10873 = vpack.c.b16 %v10821, %v10817
    %v10874 = vpack.c.b16 %v10826, %v10822
    %v10875 = vpack.c.b16 %v10827, %v10823
    %v10876 = vpack.c.b16 %v10828, %v10824
    %v10877 = vpack.c.b16 %v10829, %v10825
    %v10878 = vpack.c.b16 %v10834, %v10830
    %v10879 = vpack.c.b16 %v10835, %v10831
    %v10880 = vpack.c.b16 %v10836, %v10832
    %v10881 = vpack.c.b16 %v10837, %v10833
    %v10882 = vpack.c.b16 %v10842, %v10838
    %v10883 = vpack.c.b16 %v10843, %v10839
    %v10884 = vpack.c.b16 %v10844, %v10840
    %v10885 = vpack.c.b16 %v10845, %v10841
    %v10886 = vpack.c.b16 %v10850, %v10846
    %v10887 = vpack.c.b16 %v10851, %v10847
    %v10888 = vpack.c.b16 %v10852, %v10848
    %v10889 = vpack.c.b16 %v10853, %v10849
    %v10890 = vpack.c.b16 %v10858, %v10854
    %v10891 = vpack.c.b16 %v10859, %v10855
    %v10892 = vpack.c.b16 %v10860, %v10856
    %v10893 = vpack.c.b16 %v10861, %v10857
    %10926 = vmatprep.subr.bf16.mxu0 %v10891
    %10927 = vmatpush1.bf16.msra.mxu0 %v10890
    %10928 = vmatprep.subr.bf16.mxu0 %v10887
    %10929 = vmatpush1.bf16.msra.mxu0 %v10886
    %10930 = vmatprep.subr.bf16.mxu0 %v10883
    %10931 = vmatpush1.bf16.msra.mxu0 %v10882
    %10932 = vmatprep.subr.bf16.mxu0 %v10879
    %10933 = vmatpush1.bf16.msra.mxu0 %v10878
    %10934 = vmatprep.subr.bf16.mxu0 %v10875
    %10935 = vmatpush1.bf16.msra.mxu0 %v10874
    %10936 = vmatprep.subr.bf16.mxu0 %v10871
    %10937 = vmatpush1.bf16.msra.mxu0 %v10870
    %10938 = vmatprep.subr.bf16.mxu0 %v10867
    %10939 = vmatpush1.bf16.msra.mxu0 %v10866
    %10940 = vmatprep.subr.bf16.mxu0 %v10863
    %10941 = vmatpush1.bf16.msra.mxu0 %v10862
    %10942 = vmatprep.subr.bf16.mxu0 0
    %10943 = vmatpush2.bf16.msra.mxu0 0
    %10944 = vmatprep.subr.bf16.mxu0 0
    %10945 = vmatpush2.bf16.msra.mxu0 0
    %10946 = vmatprep.subr.bf16.mxu0 0
    %10947 = vmatpush2.bf16.msra.mxu0 0
    %10948 = vmatprep.subr.bf16.mxu0 0
    %10949 = vmatpush2.bf16.msra.mxu0 0
    %10950 = vmatprep.subr.bf16.mxu0 0
    %10951 = vmatpush2.bf16.msra.mxu0 0
    %10952 = vmatprep.subr.bf16.mxu0 0
    %10953 = vmatpush2.bf16.msra.mxu0 0
    %10954 = vmatprep.subr.bf16.mxu0 0
    %10955 = vmatpush2.bf16.msra.mxu0 0
    %10956 = vmatprep.subr.bf16.mxu0 0
    %10957 = vmatpush2.bf16.msra.mxu0 0
    %10958 = vmatprep.mubr.bf16.mxu0 0
    %10959 = vmatmul.mubr.bf16.gmra.mxu0 %v10765
    %v10960 = vpop.f32.mrf.mxu0
    %v10961 = vadd.f32 0.0, %v10960
    %v10962 = vpop.f32.mrf.mxu0
    %v10963 = vadd.f32 0.0, %v10962
    %v10964 = vpop.f32.mrf.mxu0
    %v10965 = vpop.f32.mrf.mxu0
    %10966 = vdwg.mxu0
    %10967 = vmatprep.subr.bf16.mxu0 %v10893
    %10968 = vmatpush1.bf16.msra.mxu0 %v10892
    %10969 = vmatprep.subr.bf16.mxu0 %v10889
    %10970 = vmatpush1.bf16.msra.mxu0 %v10888
    %10971 = vmatprep.subr.bf16.mxu0 %v10885
    %10972 = vmatpush1.bf16.msra.mxu0 %v10884
    %10973 = vmatprep.subr.bf16.mxu0 %v10881
    %10974 = vmatpush1.bf16.msra.mxu0 %v10880
    %10975 = vmatprep.subr.bf16.mxu0 %v10877
    %10976 = vmatpush1.bf16.msra.mxu0 %v10876
    %10977 = vmatprep.subr.bf16.mxu0 %v10873
    %10978 = vmatpush1.bf16.msra.mxu0 %v10872
    %10979 = vmatprep.subr.bf16.mxu0 %v10869
    %10980 = vmatpush1.bf16.msra.mxu0 %v10868
    %10981 = vmatprep.subr.bf16.mxu0 %v10865
    %10982 = vmatpush1.bf16.msra.mxu0 %v10864
    %10983 = vmatprep.subr.bf16.mxu0 0
    %10984 = vmatpush2.bf16.msra.mxu0 0
    %10985 = vmatprep.subr.bf16.mxu0 0
    %10986 = vmatpush2.bf16.msra.mxu0 0
    %10987 = vmatprep.subr.bf16.mxu0 0
    %10988 = vmatpush2.bf16.msra.mxu0 0
    %10989 = vmatprep.subr.bf16.mxu0 0
    %10990 = vmatpush2.bf16.msra.mxu0 0
    %10991 = vmatprep.subr.bf16.mxu0 0
    %10992 = vmatpush2.bf16.msra.mxu0 0
    %10993 = vmatprep.subr.bf16.mxu0 0
    %10994 = vmatpush2.bf16.msra.mxu0 0
    %10995 = vmatprep.subr.bf16.mxu0 0
    %10996 = vmatpush2.bf16.msra.mxu0 0
    %10997 = vmatprep.subr.bf16.mxu0 0
    %10998 = vmatpush2.bf16.msra.mxu0 0
    %10999 = vmatprep.mubr.bf16.mxu0 0
    %11000 = vmatmul.mubr.bf16.gmra.mxu0 %v10765
    %v11001 = vpop.f32.mrf.mxu0
    %v11002 = vadd.f32 0.0, %v11001
    %v11003 = vpop.f32.mrf.mxu0
    %v11004 = vadd.f32 0.0, %v11003
    %v11005 = vpop.f32.mrf.mxu0
    %v11006 = vpop.f32.mrf.mxu0
    %11007 = vdwg.mxu0
    %v11008 = vadd.f32 %v10683, %v10961
    %v11009 = vadd.f32 %v10684, %v10963
    %v11010 = vadd.f32 %v10685, %v11002
    %v11011 = vadd.f32 %v10686, %v11004
    %s11012 = scalar_lea.vmem [#allocation12], 1536
    %v11013 = vld [vmem:[%s11012] sm:$0xff]
    %v11014 = vld [vmem:[%s11012 + $0x8] sm:$0xff]
    %v11015 = vld [vmem:[%s11012 + $0x10] sm:$0xff]
    %v11016 = vld [vmem:[%s11012 + $0x18] sm:$0xff]
    %v11017 = vld [vmem:[%s11012 + $0x20] sm:$0xff]
    %v11018 = vld [vmem:[%s11012 + $0x28] sm:$0xff]
    %v11019 = vld [vmem:[%s11012 + $0x30] sm:$0xff]
    %v11020 = vld [vmem:[%s11012 + $0x38] sm:$0xff]
    %v11021 = vld [vmem:[%s11012 + $0x40] sm:$0xff]
    %v11022 = vld [vmem:[%s11012 + $0x48] sm:$0xff]
    %v11023 = vld [vmem:[%s11012 + $0x50] sm:$0xff]
    %v11024 = vld [vmem:[%s11012 + $0x58] sm:$0xff]
    %v11025 = vld [vmem:[%s11012 + $0x60] sm:$0xff]
    %v11026 = vld [vmem:[%s11012 + $0x68] sm:$0xff]
    %v11027 = vld [vmem:[%s11012 + $0x70] sm:$0xff]
    %v11028 = vld [vmem:[%s11012 + $0x78] sm:$0xff]
    %v11029 = vld [vmem:[%s11012 + $0x80] sm:$0xff]
    %v11030 = vld [vmem:[%s11012 + $0x88] sm:$0xff]
    %v11031 = vld [vmem:[%s11012 + $0x90] sm:$0xff]
    %v11032 = vld [vmem:[%s11012 + $0x98] sm:$0xff]
    %v11033 = vld [vmem:[%s11012 + $0xa0] sm:$0xff]
    %v11034 = vld [vmem:[%s11012 + $0xa8] sm:$0xff]
    %v11035 = vld [vmem:[%s11012 + $0xb0] sm:$0xff]
    %v11036 = vld [vmem:[%s11012 + $0xb8] sm:$0xff]
    %v11037 = vld [vmem:[%s11012 + $0xc0] sm:$0xff]
    %v11038 = vld [vmem:[%s11012 + $0xc8] sm:$0xff]
    %v11039 = vld [vmem:[%s11012 + $0xd0] sm:$0xff]
    %v11040 = vld [vmem:[%s11012 + $0xd8] sm:$0xff]
    %v11041 = vld [vmem:[%s11012 + $0xe0] sm:$0xff]
    %v11042 = vld [vmem:[%s11012 + $0xe8] sm:$0xff]
    %v11043 = vld [vmem:[%s11012 + $0xf0] sm:$0xff]
    %v11044 = vld [vmem:[%s11012 + $0xf8] sm:$0xff]
    %s11045 = scalar_lea.vmem [#allocation13], 12
    %v11046 = vld [vmem:[%s11045] sm:$0x3]
    %v11048 = vsel %vm4004, %v11046, 0
    %11050 = vmatprep.subr.bf16.mxu0 0
    %11051 = vmatpush1.bf16.msra.mxu0 0
    %11052 = vmatprep.subr.bf16.mxu0 0
    %11053 = vmatpush1.bf16.msra.mxu0 0
    %11054 = vmatprep.subr.bf16.mxu0 0
    %11055 = vmatpush1.bf16.msra.mxu0 0
    %11056 = vmatprep.subr.bf16.mxu0 0
    %11057 = vmatpush1.bf16.msra.mxu0 0
    %11058 = vmatprep.subr.bf16.mxu0 0
    %11059 = vmatpush1.bf16.msra.mxu0 0
    %11060 = vmatprep.subr.bf16.mxu0 0
    %11061 = vmatpush1.bf16.msra.mxu0 0
    %11062 = vmatprep.subr.bf16.mxu0 0
    %11063 = vmatpush1.bf16.msra.mxu0 0
    %11064 = vmatprep.subr.bf16.mxu0 0
    %11065 = vmatpush1.bf16.msra.mxu0 %v9071
    %11066 = vmatprep.subr.bf16.mxu0 0
    %11067 = vmatpush2.bf16.msra.mxu0 0
    %11068 = vmatprep.subr.bf16.mxu0 0
    %11069 = vmatpush2.bf16.msra.mxu0 0
    %11070 = vmatprep.subr.bf16.mxu0 0
    %11071 = vmatpush2.bf16.msra.mxu0 0
    %11072 = vmatprep.subr.bf16.mxu0 0
    %11073 = vmatpush2.bf16.msra.mxu0 0
    %11074 = vmatprep.subr.bf16.mxu0 0
    %11075 = vmatpush2.bf16.msra.mxu0 0
    %11076 = vmatprep.subr.bf16.mxu0 0
    %11077 = vmatpush2.bf16.msra.mxu0 0
    %11078 = vmatprep.subr.bf16.mxu0 0
    %11079 = vmatpush2.bf16.msra.mxu0 0
    %11080 = vmatprep.subr.bf16.mxu0 0
    %11081 = vmatpush2.bf16.msra.mxu0 0
    %11082 = vmatprep.mubr.bf16.mxu0 0
    %11083 = vmatmul.mubr.bf16.gmra.mxu0 %v11048
    %v11084 = vpop.f32.mrf.mxu0
    %v11085 = vadd.f32 0.0, %v11084
    %v11086 = vpop.f32.mrf.mxu0
    %v11087 = vpop.f32.mrf.mxu0
    %v11088 = vpop.f32.mrf.mxu0
    %11089 = vdwg.mxu0
    %v11090 = vpack.c.bf16 %v11085, %v11085
    %v11123 = vunpack.c.l.b16 %v11013
    %v11124 = vunpack.c.h.b16 %v11013
    %v11125 = vunpack.c.l.b16 %v11014
    %v11126 = vunpack.c.h.b16 %v11014
    %v11127 = vunpack.c.l.b16 %v11015
    %v11128 = vunpack.c.h.b16 %v11015
    %v11129 = vunpack.c.l.b16 %v11016
    %v11130 = vunpack.c.h.b16 %v11016
    %v11131 = vunpack.c.l.b16 %v11017
    %v11132 = vunpack.c.h.b16 %v11017
    %v11133 = vunpack.c.l.b16 %v11018
    %v11134 = vunpack.c.h.b16 %v11018
    %v11135 = vunpack.c.l.b16 %v11019
    %v11136 = vunpack.c.h.b16 %v11019
    %v11137 = vunpack.c.l.b16 %v11020
    %v11138 = vunpack.c.h.b16 %v11020
    %v11139 = vunpack.c.l.b16 %v11021
    %v11140 = vunpack.c.h.b16 %v11021
    %v11141 = vunpack.c.l.b16 %v11022
    %v11142 = vunpack.c.h.b16 %v11022
    %v11143 = vunpack.c.l.b16 %v11023
    %v11144 = vunpack.c.h.b16 %v11023
    %v11145 = vunpack.c.l.b16 %v11024
    %v11146 = vunpack.c.h.b16 %v11024
    %v11147 = vunpack.c.l.b16 %v11025
    %v11148 = vunpack.c.h.b16 %v11025
    %v11149 = vunpack.c.l.b16 %v11026
    %v11150 = vunpack.c.h.b16 %v11026
    %v11151 = vunpack.c.l.b16 %v11027
    %v11152 = vunpack.c.h.b16 %v11027
    %v11153 = vunpack.c.l.b16 %v11028
    %v11154 = vunpack.c.h.b16 %v11028
    %v11155 = vunpack.c.l.b16 %v11029
    %v11156 = vunpack.c.h.b16 %v11029
    %v11157 = vunpack.c.l.b16 %v11030
    %v11158 = vunpack.c.h.b16 %v11030
    %v11159 = vunpack.c.l.b16 %v11031
    %v11160 = vunpack.c.h.b16 %v11031
    %v11161 = vunpack.c.l.b16 %v11032
    %v11162 = vunpack.c.h.b16 %v11032
    %v11163 = vunpack.c.l.b16 %v11033
    %v11164 = vunpack.c.h.b16 %v11033
    %v11165 = vunpack.c.l.b16 %v11034
    %v11166 = vunpack.c.h.b16 %v11034
    %v11167 = vunpack.c.l.b16 %v11035
    %v11168 = vunpack.c.h.b16 %v11035
    %v11169 = vunpack.c.l.b16 %v11036
    %v11170 = vunpack.c.h.b16 %v11036
    %v11171 = vunpack.c.l.b16 %v11037
    %v11172 = vunpack.c.h.b16 %v11037
    %v11173 = vunpack.c.l.b16 %v11038
    %v11174 = vunpack.c.h.b16 %v11038
    %v11175 = vunpack.c.l.b16 %v11039
    %v11176 = vunpack.c.h.b16 %v11039
    %v11177 = vunpack.c.l.b16 %v11040
    %v11178 = vunpack.c.h.b16 %v11040
    %v11179 = vunpack.c.l.b16 %v11041
    %v11180 = vunpack.c.h.b16 %v11041
    %v11181 = vunpack.c.l.b16 %v11042
    %v11182 = vunpack.c.h.b16 %v11042
    %v11183 = vunpack.c.l.b16 %v11043
    %v11184 = vunpack.c.h.b16 %v11043
    %v11185 = vunpack.c.l.b16 %v11044
    %v11186 = vunpack.c.h.b16 %v11044
    %v11187 = vpack.c.b16 %v11127, %v11123
    %v11188 = vpack.c.b16 %v11128, %v11124
    %v11189 = vpack.c.b16 %v11129, %v11125
    %v11190 = vpack.c.b16 %v11130, %v11126
    %v11191 = vpack.c.b16 %v11135, %v11131
    %v11192 = vpack.c.b16 %v11136, %v11132
    %v11193 = vpack.c.b16 %v11137, %v11133
    %v11194 = vpack.c.b16 %v11138, %v11134
    %v11195 = vpack.c.b16 %v11143, %v11139
    %v11196 = vpack.c.b16 %v11144, %v11140
    %v11197 = vpack.c.b16 %v11145, %v11141
    %v11198 = vpack.c.b16 %v11146, %v11142
    %v11199 = vpack.c.b16 %v11151, %v11147
    %v11200 = vpack.c.b16 %v11152, %v11148
    %v11201 = vpack.c.b16 %v11153, %v11149
    %v11202 = vpack.c.b16 %v11154, %v11150
    %v11203 = vpack.c.b16 %v11159, %v11155
    %v11204 = vpack.c.b16 %v11160, %v11156
    %v11205 = vpack.c.b16 %v11161, %v11157
    %v11206 = vpack.c.b16 %v11162, %v11158
    %v11207 = vpack.c.b16 %v11167, %v11163
    %v11208 = vpack.c.b16 %v11168, %v11164
    %v11209 = vpack.c.b16 %v11169, %v11165
    %v11210 = vpack.c.b16 %v11170, %v11166
    %v11211 = vpack.c.b16 %v11175, %v11171
    %v11212 = vpack.c.b16 %v11176, %v11172
    %v11213 = vpack.c.b16 %v11177, %v11173
    %v11214 = vpack.c.b16 %v11178, %v11174
    %v11215 = vpack.c.b16 %v11183, %v11179
    %v11216 = vpack.c.b16 %v11184, %v11180
    %v11217 = vpack.c.b16 %v11185, %v11181
    %v11218 = vpack.c.b16 %v11186, %v11182
    %11251 = vmatprep.subr.bf16.mxu0 %v11216
    %11252 = vmatpush1.bf16.msra.mxu0 %v11215
    %11253 = vmatprep.subr.bf16.mxu0 %v11212
    %11254 = vmatpush1.bf16.msra.mxu0 %v11211
    %11255 = vmatprep.subr.bf16.mxu0 %v11208
    %11256 = vmatpush1.bf16.msra.mxu0 %v11207
    %11257 = vmatprep.subr.bf16.mxu0 %v11204
    %11258 = vmatpush1.bf16.msra.mxu0 %v11203
    %11259 = vmatprep.subr.bf16.mxu0 %v11200
    %11260 = vmatpush1.bf16.msra.mxu0 %v11199
    %11261 = vmatprep.subr.bf16.mxu0 %v11196
    %11262 = vmatpush1.bf16.msra.mxu0 %v11195
    %11263 = vmatprep.subr.bf16.mxu0 %v11192
    %11264 = vmatpush1.bf16.msra.mxu0 %v11191
    %11265 = vmatprep.subr.bf16.mxu0 %v11188
    %11266 = vmatpush1.bf16.msra.mxu0 %v11187
    %11267 = vmatprep.subr.bf16.mxu0 0
    %11268 = vmatpush2.bf16.msra.mxu0 0
    %11269 = vmatprep.subr.bf16.mxu0 0
    %11270 = vmatpush2.bf16.msra.mxu0 0
    %11271 = vmatprep.subr.bf16.mxu0 0
    %11272 = vmatpush2.bf16.msra.mxu0 0
    %11273 = vmatprep.subr.bf16.mxu0 0
    %11274 = vmatpush2.bf16.msra.mxu0 0
    %11275 = vmatprep.subr.bf16.mxu0 0
    %11276 = vmatpush2.bf16.msra.mxu0 0
    %11277 = vmatprep.subr.bf16.mxu0 0
    %11278 = vmatpush2.bf16.msra.mxu0 0
    %11279 = vmatprep.subr.bf16.mxu0 0
    %11280 = vmatpush2.bf16.msra.mxu0 0
    %11281 = vmatprep.subr.bf16.mxu0 0
    %11282 = vmatpush2.bf16.msra.mxu0 0
    %11283 = vmatprep.mubr.bf16.mxu0 0
    %11284 = vmatmul.mubr.bf16.gmra.mxu0 %v11090
    %v11285 = vpop.f32.mrf.mxu0
    %v11286 = vadd.f32 0.0, %v11285
    %v11287 = vpop.f32.mrf.mxu0
    %v11288 = vadd.f32 0.0, %v11287
    %v11289 = vpop.f32.mrf.mxu0
    %v11290 = vpop.f32.mrf.mxu0
    %11291 = vdwg.mxu0
    %11292 = vmatprep.subr.bf16.mxu0 %v11218
    %11293 = vmatpush1.bf16.msra.mxu0 %v11217
    %11294 = vmatprep.subr.bf16.mxu0 %v11214
    %11295 = vmatpush1.bf16.msra.mxu0 %v11213
    %11296 = vmatprep.subr.bf16.mxu0 %v11210
    %11297 = vmatpush1.bf16.msra.mxu0 %v11209
    %11298 = vmatprep.subr.bf16.mxu0 %v11206
    %11299 = vmatpush1.bf16.msra.mxu0 %v11205
    %11300 = vmatprep.subr.bf16.mxu0 %v11202
    %11301 = vmatpush1.bf16.msra.mxu0 %v11201
    %11302 = vmatprep.subr.bf16.mxu0 %v11198
    %11303 = vmatpush1.bf16.msra.mxu0 %v11197
    %11304 = vmatprep.subr.bf16.mxu0 %v11194
    %11305 = vmatpush1.bf16.msra.mxu0 %v11193
    %11306 = vmatprep.subr.bf16.mxu0 %v11190
    %11307 = vmatpush1.bf16.msra.mxu0 %v11189
    %11308 = vmatprep.subr.bf16.mxu0 0
    %11309 = vmatpush2.bf16.msra.mxu0 0
    %11310 = vmatprep.subr.bf16.mxu0 0
    %11311 = vmatpush2.bf16.msra.mxu0 0
    %11312 = vmatprep.subr.bf16.mxu0 0
    %11313 = vmatpush2.bf16.msra.mxu0 0
    %11314 = vmatprep.subr.bf16.mxu0 0
    %11315 = vmatpush2.bf16.msra.mxu0 0
    %11316 = vmatprep.subr.bf16.mxu0 0
    %11317 = vmatpush2.bf16.msra.mxu0 0
    %11318 = vmatprep.subr.bf16.mxu0 0
    %11319 = vmatpush2.bf16.msra.mxu0 0
    %11320 = vmatprep.subr.bf16.mxu0 0
    %11321 = vmatpush2.bf16.msra.mxu0 0
    %11322 = vmatprep.subr.bf16.mxu0 0
    %11323 = vmatpush2.bf16.msra.mxu0 0
    %11324 = vmatprep.mubr.bf16.mxu0 0
    %11325 = vmatmul.mubr.bf16.gmra.mxu0 %v11090
    %v11326 = vpop.f32.mrf.mxu0
    %v11327 = vadd.f32 0.0, %v11326
    %v11328 = vpop.f32.mrf.mxu0
    %v11329 = vadd.f32 0.0, %v11328
    %v11330 = vpop.f32.mrf.mxu0
    %v11331 = vpop.f32.mrf.mxu0
    %11332 = vdwg.mxu0
    %v11333 = vadd.f32 %v11008, %v11286
    %v11334 = vadd.f32 %v11009, %v11288
    %v11335 = vadd.f32 %v11010, %v11327
    %v11336 = vadd.f32 %v11011, %v11329
    %s11337 = scalar_lea.vmem [#allocation12], 1792
    %v11338 = vld [vmem:[%s11337] sm:$0xff]
    %v11339 = vld [vmem:[%s11337 + $0x8] sm:$0xff]
    %v11340 = vld [vmem:[%s11337 + $0x10] sm:$0xff]
    %v11341 = vld [vmem:[%s11337 + $0x18] sm:$0xff]
    %v11342 = vld [vmem:[%s11337 + $0x20] sm:$0xff]
    %v11343 = vld [vmem:[%s11337 + $0x28] sm:$0xff]
    %v11344 = vld [vmem:[%s11337 + $0x30] sm:$0xff]
    %v11345 = vld [vmem:[%s11337 + $0x38] sm:$0xff]
    %v11346 = vld [vmem:[%s11337 + $0x40] sm:$0xff]
    %v11347 = vld [vmem:[%s11337 + $0x48] sm:$0xff]
    %v11348 = vld [vmem:[%s11337 + $0x50] sm:$0xff]
    %v11349 = vld [vmem:[%s11337 + $0x58] sm:$0xff]
    %v11350 = vld [vmem:[%s11337 + $0x60] sm:$0xff]
    %v11351 = vld [vmem:[%s11337 + $0x68] sm:$0xff]
    %v11352 = vld [vmem:[%s11337 + $0x70] sm:$0xff]
    %v11353 = vld [vmem:[%s11337 + $0x78] sm:$0xff]
    %v11354 = vld [vmem:[%s11337 + $0x80] sm:$0xff]
    %v11355 = vld [vmem:[%s11337 + $0x88] sm:$0xff]
    %v11356 = vld [vmem:[%s11337 + $0x90] sm:$0xff]
    %v11357 = vld [vmem:[%s11337 + $0x98] sm:$0xff]
    %v11358 = vld [vmem:[%s11337 + $0xa0] sm:$0xff]
    %v11359 = vld [vmem:[%s11337 + $0xa8] sm:$0xff]
    %v11360 = vld [vmem:[%s11337 + $0xb0] sm:$0xff]
    %v11361 = vld [vmem:[%s11337 + $0xb8] sm:$0xff]
    %v11362 = vld [vmem:[%s11337 + $0xc0] sm:$0xff]
    %v11363 = vld [vmem:[%s11337 + $0xc8] sm:$0xff]
    %v11364 = vld [vmem:[%s11337 + $0xd0] sm:$0xff]
    %v11365 = vld [vmem:[%s11337 + $0xd8] sm:$0xff]
    %v11366 = vld [vmem:[%s11337 + $0xe0] sm:$0xff]
    %v11367 = vld [vmem:[%s11337 + $0xe8] sm:$0xff]
    %v11368 = vld [vmem:[%s11337 + $0xf0] sm:$0xff]
    %v11369 = vld [vmem:[%s11337 + $0xf8] sm:$0xff]
    %s11370 = scalar_lea.vmem [#allocation13], 14
    %v11371 = vld [vmem:[%s11370] sm:$0x3]
    %v11373 = vsel %vm4004, %v11371, 0
    %11375 = vmatprep.subr.bf16.mxu0 0
    %11376 = vmatpush1.bf16.msra.mxu0 0
    %11377 = vmatprep.subr.bf16.mxu0 0
    %11378 = vmatpush1.bf16.msra.mxu0 0
    %11379 = vmatprep.subr.bf16.mxu0 0
    %11380 = vmatpush1.bf16.msra.mxu0 0
    %11381 = vmatprep.subr.bf16.mxu0 0
    %11382 = vmatpush1.bf16.msra.mxu0 0
    %11383 = vmatprep.subr.bf16.mxu0 0
    %11384 = vmatpush1.bf16.msra.mxu0 0
    %11385 = vmatprep.subr.bf16.mxu0 0
    %11386 = vmatpush1.bf16.msra.mxu0 0
    %11387 = vmatprep.subr.bf16.mxu0 0
    %11388 = vmatpush1.bf16.msra.mxu0 0
    %11389 = vmatprep.subr.bf16.mxu0 0
    %11390 = vmatpush1.bf16.msra.mxu0 %v9071
    %11391 = vmatprep.subr.bf16.mxu0 0
    %11392 = vmatpush2.bf16.msra.mxu0 0
    %11393 = vmatprep.subr.bf16.mxu0 0
    %11394 = vmatpush2.bf16.msra.mxu0 0
    %11395 = vmatprep.subr.bf16.mxu0 0
    %11396 = vmatpush2.bf16.msra.mxu0 0
    %11397 = vmatprep.subr.bf16.mxu0 0
    %11398 = vmatpush2.bf16.msra.mxu0 0
    %11399 = vmatprep.subr.bf16.mxu0 0
    %11400 = vmatpush2.bf16.msra.mxu0 0
    %11401 = vmatprep.subr.bf16.mxu0 0
    %11402 = vmatpush2.bf16.msra.mxu0 0
    %11403 = vmatprep.subr.bf16.mxu0 0
    %11404 = vmatpush2.bf16.msra.mxu0 0
    %11405 = vmatprep.subr.bf16.mxu0 0
    %11406 = vmatpush2.bf16.msra.mxu0 0
    %11407 = vmatprep.mubr.bf16.mxu0 0
    %11408 = vmatmul.mubr.bf16.gmra.mxu0 %v11373
    %v11409 = vpop.f32.mrf.mxu0
    %v11410 = vadd.f32 0.0, %v11409
    %v11411 = vpop.f32.mrf.mxu0
    %v11412 = vpop.f32.mrf.mxu0
    %v11413 = vpop.f32.mrf.mxu0
    %11414 = vdwg.mxu0
    %v11415 = vpack.c.bf16 %v11410, %v11410
    %v11448 = vunpack.c.l.b16 %v11338
    %v11449 = vunpack.c.h.b16 %v11338
    %v11450 = vunpack.c.l.b16 %v11339
    %v11451 = vunpack.c.h.b16 %v11339
    %v11452 = vunpack.c.l.b16 %v11340
    %v11453 = vunpack.c.h.b16 %v11340
    %v11454 = vunpack.c.l.b16 %v11341
    %v11455 = vunpack.c.h.b16 %v11341
    %v11456 = vunpack.c.l.b16 %v11342
    %v11457 = vunpack.c.h.b16 %v11342
    %v11458 = vunpack.c.l.b16 %v11343
    %v11459 = vunpack.c.h.b16 %v11343
    %v11460 = vunpack.c.l.b16 %v11344
    %v11461 = vunpack.c.h.b16 %v11344
    %v11462 = vunpack.c.l.b16 %v11345
    %v11463 = vunpack.c.h.b16 %v11345
    %v11464 = vunpack.c.l.b16 %v11346
    %v11465 = vunpack.c.h.b16 %v11346
    %v11466 = vunpack.c.l.b16 %v11347
    %v11467 = vunpack.c.h.b16 %v11347
    %v11468 = vunpack.c.l.b16 %v11348
    %v11469 = vunpack.c.h.b16 %v11348
    %v11470 = vunpack.c.l.b16 %v11349
    %v11471 = vunpack.c.h.b16 %v11349
    %v11472 = vunpack.c.l.b16 %v11350
    %v11473 = vunpack.c.h.b16 %v11350
    %v11474 = vunpack.c.l.b16 %v11351
    %v11475 = vunpack.c.h.b16 %v11351
    %v11476 = vunpack.c.l.b16 %v11352
    %v11477 = vunpack.c.h.b16 %v11352
    %v11478 = vunpack.c.l.b16 %v11353
    %v11479 = vunpack.c.h.b16 %v11353
    %v11480 = vunpack.c.l.b16 %v11354
    %v11481 = vunpack.c.h.b16 %v11354
    %v11482 = vunpack.c.l.b16 %v11355
    %v11483 = vunpack.c.h.b16 %v11355
    %v11484 = vunpack.c.l.b16 %v11356
    %v11485 = vunpack.c.h.b16 %v11356
    %v11486 = vunpack.c.l.b16 %v11357
    %v11487 = vunpack.c.h.b16 %v11357
    %v11488 = vunpack.c.l.b16 %v11358
    %v11489 = vunpack.c.h.b16 %v11358
    %v11490 = vunpack.c.l.b16 %v11359
    %v11491 = vunpack.c.h.b16 %v11359
    %v11492 = vunpack.c.l.b16 %v11360
    %v11493 = vunpack.c.h.b16 %v11360
    %v11494 = vunpack.c.l.b16 %v11361
    %v11495 = vunpack.c.h.b16 %v11361
    %v11496 = vunpack.c.l.b16 %v11362
    %v11497 = vunpack.c.h.b16 %v11362
    %v11498 = vunpack.c.l.b16 %v11363
    %v11499 = vunpack.c.h.b16 %v11363
    %v11500 = vunpack.c.l.b16 %v11364
    %v11501 = vunpack.c.h.b16 %v11364
    %v11502 = vunpack.c.l.b16 %v11365
    %v11503 = vunpack.c.h.b16 %v11365
    %v11504 = vunpack.c.l.b16 %v11366
    %v11505 = vunpack.c.h.b16 %v11366
    %v11506 = vunpack.c.l.b16 %v11367
    %v11507 = vunpack.c.h.b16 %v11367
    %v11508 = vunpack.c.l.b16 %v11368
    %v11509 = vunpack.c.h.b16 %v11368
    %v11510 = vunpack.c.l.b16 %v11369
    %v11511 = vunpack.c.h.b16 %v11369
    %v11512 = vpack.c.b16 %v11452, %v11448
    %v11513 = vpack.c.b16 %v11453, %v11449
    %v11514 = vpack.c.b16 %v11454, %v11450
    %v11515 = vpack.c.b16 %v11455, %v11451
    %v11516 = vpack.c.b16 %v11460, %v11456
    %v11517 = vpack.c.b16 %v11461, %v11457
    %v11518 = vpack.c.b16 %v11462, %v11458
    %v11519 = vpack.c.b16 %v11463, %v11459
    %v11520 = vpack.c.b16 %v11468, %v11464
    %v11521 = vpack.c.b16 %v11469, %v11465
    %v11522 = vpack.c.b16 %v11470, %v11466
    %v11523 = vpack.c.b16 %v11471, %v11467
    %v11524 = vpack.c.b16 %v11476, %v11472
    %v11525 = vpack.c.b16 %v11477, %v11473
    %v11526 = vpack.c.b16 %v11478, %v11474
    %v11527 = vpack.c.b16 %v11479, %v11475
    %v11528 = vpack.c.b16 %v11484, %v11480
    %v11529 = vpack.c.b16 %v11485, %v11481
    %v11530 = vpack.c.b16 %v11486, %v11482
    %v11531 = vpack.c.b16 %v11487, %v11483
    %v11532 = vpack.c.b16 %v11492, %v11488
    %v11533 = vpack.c.b16 %v11493, %v11489
    %v11534 = vpack.c.b16 %v11494, %v11490
    %v11535 = vpack.c.b16 %v11495, %v11491
    %v11536 = vpack.c.b16 %v11500, %v11496
    %v11537 = vpack.c.b16 %v11501, %v11497
    %v11538 = vpack.c.b16 %v11502, %v11498
    %v11539 = vpack.c.b16 %v11503, %v11499
    %v11540 = vpack.c.b16 %v11508, %v11504
    %v11541 = vpack.c.b16 %v11509, %v11505
    %v11542 = vpack.c.b16 %v11510, %v11506
    %v11543 = vpack.c.b16 %v11511, %v11507
    %11576 = vmatprep.subr.bf16.mxu0 %v11541
    %11577 = vmatpush1.bf16.msra.mxu0 %v11540
    %11578 = vmatprep.subr.bf16.mxu0 %v11537
    %11579 = vmatpush1.bf16.msra.mxu0 %v11536
    %11580 = vmatprep.subr.bf16.mxu0 %v11533
    %11581 = vmatpush1.bf16.msra.mxu0 %v11532
    %11582 = vmatprep.subr.bf16.mxu0 %v11529
    %11583 = vmatpush1.bf16.msra.mxu0 %v11528
    %11584 = vmatprep.subr.bf16.mxu0 %v11525
    %11585 = vmatpush1.bf16.msra.mxu0 %v11524
    %11586 = vmatprep.subr.bf16.mxu0 %v11521
    %11587 = vmatpush1.bf16.msra.mxu0 %v11520
    %11588 = vmatprep.subr.bf16.mxu0 %v11517
    %11589 = vmatpush1.bf16.msra.mxu0 %v11516
    %11590 = vmatprep.subr.bf16.mxu0 %v11513
    %11591 = vmatpush1.bf16.msra.mxu0 %v11512
    %11592 = vmatprep.subr.bf16.mxu0 0
    %11593 = vmatpush2.bf16.msra.mxu0 0
    %11594 = vmatprep.subr.bf16.mxu0 0
    %11595 = vmatpush2.bf16.msra.mxu0 0
    %11596 = vmatprep.subr.bf16.mxu0 0
    %11597 = vmatpush2.bf16.msra.mxu0 0
    %11598 = vmatprep.subr.bf16.mxu0 0
    %11599 = vmatpush2.bf16.msra.mxu0 0
    %11600 = vmatprep.subr.bf16.mxu0 0
    %11601 = vmatpush2.bf16.msra.mxu0 0
    %11602 = vmatprep.subr.bf16.mxu0 0
    %11603 = vmatpush2.bf16.msra.mxu0 0
    %11604 = vmatprep.subr.bf16.mxu0 0
    %11605 = vmatpush2.bf16.msra.mxu0 0
    %11606 = vmatprep.subr.bf16.mxu0 0
    %11607 = vmatpush2.bf16.msra.mxu0 0
    %11608 = vmatprep.mubr.bf16.mxu0 0
    %11609 = vmatmul.mubr.bf16.gmra.mxu0 %v11415
    %v11610 = vpop.f32.mrf.mxu0
    %v11611 = vadd.f32 0.0, %v11610
    %v11612 = vpop.f32.mrf.mxu0
    %v11613 = vadd.f32 0.0, %v11612
    %v11614 = vpop.f32.mrf.mxu0
    %v11615 = vpop.f32.mrf.mxu0
    %11616 = vdwg.mxu0
    %11617 = vmatprep.subr.bf16.mxu0 %v11543
    %11618 = vmatpush1.bf16.msra.mxu0 %v11542
    %11619 = vmatprep.subr.bf16.mxu0 %v11539
    %11620 = vmatpush1.bf16.msra.mxu0 %v11538
    %11621 = vmatprep.subr.bf16.mxu0 %v11535
    %11622 = vmatpush1.bf16.msra.mxu0 %v11534
    %11623 = vmatprep.subr.bf16.mxu0 %v11531
    %11624 = vmatpush1.bf16.msra.mxu0 %v11530
    %11625 = vmatprep.subr.bf16.mxu0 %v11527
    %11626 = vmatpush1.bf16.msra.mxu0 %v11526
    %11627 = vmatprep.subr.bf16.mxu0 %v11523
    %11628 = vmatpush1.bf16.msra.mxu0 %v11522
    %11629 = vmatprep.subr.bf16.mxu0 %v11519
    %11630 = vmatpush1.bf16.msra.mxu0 %v11518
    %11631 = vmatprep.subr.bf16.mxu0 %v11515
    %11632 = vmatpush1.bf16.msra.mxu0 %v11514
    %11633 = vmatprep.subr.bf16.mxu0 0
    %11634 = vmatpush2.bf16.msra.mxu0 0
    %11635 = vmatprep.subr.bf16.mxu0 0
    %11636 = vmatpush2.bf16.msra.mxu0 0
    %11637 = vmatprep.subr.bf16.mxu0 0
    %11638 = vmatpush2.bf16.msra.mxu0 0
    %11639 = vmatprep.subr.bf16.mxu0 0
    %11640 = vmatpush2.bf16.msra.mxu0 0
    %11641 = vmatprep.subr.bf16.mxu0 0
    %11642 = vmatpush2.bf16.msra.mxu0 0
    %11643 = vmatprep.subr.bf16.mxu0 0
    %11644 = vmatpush2.bf16.msra.mxu0 0
    %11645 = vmatprep.subr.bf16.mxu0 0
    %11646 = vmatpush2.bf16.msra.mxu0 0
    %11647 = vmatprep.subr.bf16.mxu0 0
    %11648 = vmatpush2.bf16.msra.mxu0 0
    %11649 = vmatprep.mubr.bf16.mxu0 0
    %11650 = vmatmul.mubr.bf16.gmra.mxu0 %v11415
    %v11651 = vpop.f32.mrf.mxu0
    %v11652 = vadd.f32 0.0, %v11651
    %v11653 = vpop.f32.mrf.mxu0
    %v11654 = vadd.f32 0.0, %v11653
    %v11655 = vpop.f32.mrf.mxu0
    %v11656 = vpop.f32.mrf.mxu0
    %11657 = vdwg.mxu0
    %v11658 = vadd.f32 %v11333, %v11611
    %v11659 = vadd.f32 %v11334, %v11613
    %v11660 = vadd.f32 %v11335, %v11652
    %v11661 = vadd.f32 %v11336, %v11654
    %s11662 = scalar_lea.vmem [#allocation12], 2048
    %v11663 = vld [vmem:[%s11662] sm:$0xff]
    %v11664 = vld [vmem:[%s11662 + $0x8] sm:$0xff]
    %v11665 = vld [vmem:[%s11662 + $0x10] sm:$0xff]
    %v11666 = vld [vmem:[%s11662 + $0x18] sm:$0xff]
    %v11667 = vld [vmem:[%s11662 + $0x20] sm:$0xff]
    %v11668 = vld [vmem:[%s11662 + $0x28] sm:$0xff]
    %v11669 = vld [vmem:[%s11662 + $0x30] sm:$0xff]
    %v11670 = vld [vmem:[%s11662 + $0x38] sm:$0xff]
    %v11671 = vld [vmem:[%s11662 + $0x40] sm:$0xff]
    %v11672 = vld [vmem:[%s11662 + $0x48] sm:$0xff]
    %v11673 = vld [vmem:[%s11662 + $0x50] sm:$0xff]
    %v11674 = vld [vmem:[%s11662 + $0x58] sm:$0xff]
    %v11675 = vld [vmem:[%s11662 + $0x60] sm:$0xff]
    %v11676 = vld [vmem:[%s11662 + $0x68] sm:$0xff]
    %v11677 = vld [vmem:[%s11662 + $0x70] sm:$0xff]
    %v11678 = vld [vmem:[%s11662 + $0x78] sm:$0xff]
    %v11679 = vld [vmem:[%s11662 + $0x80] sm:$0xff]
    %v11680 = vld [vmem:[%s11662 + $0x88] sm:$0xff]
    %v11681 = vld [vmem:[%s11662 + $0x90] sm:$0xff]
    %v11682 = vld [vmem:[%s11662 + $0x98] sm:$0xff]
    %v11683 = vld [vmem:[%s11662 + $0xa0] sm:$0xff]
    %v11684 = vld [vmem:[%s11662 + $0xa8] sm:$0xff]
    %v11685 = vld [vmem:[%s11662 + $0xb0] sm:$0xff]
    %v11686 = vld [vmem:[%s11662 + $0xb8] sm:$0xff]
    %v11687 = vld [vmem:[%s11662 + $0xc0] sm:$0xff]
    %v11688 = vld [vmem:[%s11662 + $0xc8] sm:$0xff]
    %v11689 = vld [vmem:[%s11662 + $0xd0] sm:$0xff]
    %v11690 = vld [vmem:[%s11662 + $0xd8] sm:$0xff]
    %v11691 = vld [vmem:[%s11662 + $0xe0] sm:$0xff]
    %v11692 = vld [vmem:[%s11662 + $0xe8] sm:$0xff]
    %v11693 = vld [vmem:[%s11662 + $0xf0] sm:$0xff]
    %v11694 = vld [vmem:[%s11662 + $0xf8] sm:$0xff]
    %s11695 = scalar_lea.vmem [#allocation13], 16
    %v11696 = vld [vmem:[%s11695] sm:$0x3]
    %v11698 = vsel %vm4004, %v11696, 0
    %11700 = vmatprep.subr.bf16.mxu0 0
    %11701 = vmatpush1.bf16.msra.mxu0 0
    %11702 = vmatprep.subr.bf16.mxu0 0
    %11703 = vmatpush1.bf16.msra.mxu0 0
    %11704 = vmatprep.subr.bf16.mxu0 0
    %11705 = vmatpush1.bf16.msra.mxu0 0
    %11706 = vmatprep.subr.bf16.mxu0 0
    %11707 = vmatpush1.bf16.msra.mxu0 0
    %11708 = vmatprep.subr.bf16.mxu0 0
    %11709 = vmatpush1.bf16.msra.mxu0 0
    %11710 = vmatprep.subr.bf16.mxu0 0
    %11711 = vmatpush1.bf16.msra.mxu0 0
    %11712 = vmatprep.subr.bf16.mxu0 0
    %11713 = vmatpush1.bf16.msra.mxu0 0
    %11714 = vmatprep.subr.bf16.mxu0 0
    %11715 = vmatpush1.bf16.msra.mxu0 %v9071
    %11716 = vmatprep.subr.bf16.mxu0 0
    %11717 = vmatpush2.bf16.msra.mxu0 0
    %11718 = vmatprep.subr.bf16.mxu0 0
    %11719 = vmatpush2.bf16.msra.mxu0 0
    %11720 = vmatprep.subr.bf16.mxu0 0
    %11721 = vmatpush2.bf16.msra.mxu0 0
    %11722 = vmatprep.subr.bf16.mxu0 0
    %11723 = vmatpush2.bf16.msra.mxu0 0
    %11724 = vmatprep.subr.bf16.mxu0 0
    %11725 = vmatpush2.bf16.msra.mxu0 0
    %11726 = vmatprep.subr.bf16.mxu0 0
    %11727 = vmatpush2.bf16.msra.mxu0 0
    %11728 = vmatprep.subr.bf16.mxu0 0
    %11729 = vmatpush2.bf16.msra.mxu0 0
    %11730 = vmatprep.subr.bf16.mxu0 0
    %11731 = vmatpush2.bf16.msra.mxu0 0
    %11732 = vmatprep.mubr.bf16.mxu0 0
    %11733 = vmatmul.mubr.bf16.gmra.mxu0 %v11698
    %v11734 = vpop.f32.mrf.mxu0
    %v11735 = vadd.f32 0.0, %v11734
    %v11736 = vpop.f32.mrf.mxu0
    %v11737 = vpop.f32.mrf.mxu0
    %v11738 = vpop.f32.mrf.mxu0
    %11739 = vdwg.mxu0
    %v11740 = vpack.c.bf16 %v11735, %v11735
    %v11773 = vunpack.c.l.b16 %v11663
    %v11774 = vunpack.c.h.b16 %v11663
    %v11775 = vunpack.c.l.b16 %v11664
    %v11776 = vunpack.c.h.b16 %v11664
    %v11777 = vunpack.c.l.b16 %v11665
    %v11778 = vunpack.c.h.b16 %v11665
    %v11779 = vunpack.c.l.b16 %v11666
    %v11780 = vunpack.c.h.b16 %v11666
    %v11781 = vunpack.c.l.b16 %v11667
    %v11782 = vunpack.c.h.b16 %v11667
    %v11783 = vunpack.c.l.b16 %v11668
    %v11784 = vunpack.c.h.b16 %v11668
    %v11785 = vunpack.c.l.b16 %v11669
    %v11786 = vunpack.c.h.b16 %v11669
    %v11787 = vunpack.c.l.b16 %v11670
    %v11788 = vunpack.c.h.b16 %v11670
    %v11789 = vunpack.c.l.b16 %v11671
    %v11790 = vunpack.c.h.b16 %v11671
    %v11791 = vunpack.c.l.b16 %v11672
    %v11792 = vunpack.c.h.b16 %v11672
    %v11793 = vunpack.c.l.b16 %v11673
    %v11794 = vunpack.c.h.b16 %v11673
    %v11795 = vunpack.c.l.b16 %v11674
    %v11796 = vunpack.c.h.b16 %v11674
    %v11797 = vunpack.c.l.b16 %v11675
    %v11798 = vunpack.c.h.b16 %v11675
    %v11799 = vunpack.c.l.b16 %v11676
    %v11800 = vunpack.c.h.b16 %v11676
    %v11801 = vunpack.c.l.b16 %v11677
    %v11802 = vunpack.c.h.b16 %v11677
    %v11803 = vunpack.c.l.b16 %v11678
    %v11804 = vunpack.c.h.b16 %v11678
    %v11805 = vunpack.c.l.b16 %v11679
    %v11806 = vunpack.c.h.b16 %v11679
    %v11807 = vunpack.c.l.b16 %v11680
    %v11808 = vunpack.c.h.b16 %v11680
    %v11809 = vunpack.c.l.b16 %v11681
    %v11810 = vunpack.c.h.b16 %v11681
    %v11811 = vunpack.c.l.b16 %v11682
    %v11812 = vunpack.c.h.b16 %v11682
    %v11813 = vunpack.c.l.b16 %v11683
    %v11814 = vunpack.c.h.b16 %v11683
    %v11815 = vunpack.c.l.b16 %v11684
    %v11816 = vunpack.c.h.b16 %v11684
    %v11817 = vunpack.c.l.b16 %v11685
    %v11818 = vunpack.c.h.b16 %v11685
    %v11819 = vunpack.c.l.b16 %v11686
    %v11820 = vunpack.c.h.b16 %v11686
    %v11821 = vunpack.c.l.b16 %v11687
    %v11822 = vunpack.c.h.b16 %v11687
    %v11823 = vunpack.c.l.b16 %v11688
    %v11824 = vunpack.c.h.b16 %v11688
    %v11825 = vunpack.c.l.b16 %v11689
    %v11826 = vunpack.c.h.b16 %v11689
    %v11827 = vunpack.c.l.b16 %v11690
    %v11828 = vunpack.c.h.b16 %v11690
    %v11829 = vunpack.c.l.b16 %v11691
    %v11830 = vunpack.c.h.b16 %v11691
    %v11831 = vunpack.c.l.b16 %v11692
    %v11832 = vunpack.c.h.b16 %v11692
    %v11833 = vunpack.c.l.b16 %v11693
    %v11834 = vunpack.c.h.b16 %v11693
    %v11835 = vunpack.c.l.b16 %v11694
    %v11836 = vunpack.c.h.b16 %v11694
    %v11837 = vpack.c.b16 %v11777, %v11773
    %v11838 = vpack.c.b16 %v11778, %v11774
    %v11839 = vpack.c.b16 %v11779, %v11775
    %v11840 = vpack.c.b16 %v11780, %v11776
    %v11841 = vpack.c.b16 %v11785, %v11781
    %v11842 = vpack.c.b16 %v11786, %v11782
    %v11843 = vpack.c.b16 %v11787, %v11783
    %v11844 = vpack.c.b16 %v11788, %v11784
    %v11845 = vpack.c.b16 %v11793, %v11789
    %v11846 = vpack.c.b16 %v11794, %v11790
    %v11847 = vpack.c.b16 %v11795, %v11791
    %v11848 = vpack.c.b16 %v11796, %v11792
    %v11849 = vpack.c.b16 %v11801, %v11797
    %v11850 = vpack.c.b16 %v11802, %v11798
    %v11851 = vpack.c.b16 %v11803, %v11799
    %v11852 = vpack.c.b16 %v11804, %v11800
    %v11853 = vpack.c.b16 %v11809, %v11805
    %v11854 = vpack.c.b16 %v11810, %v11806
    %v11855 = vpack.c.b16 %v11811, %v11807
    %v11856 = vpack.c.b16 %v11812, %v11808
    %v11857 = vpack.c.b16 %v11817, %v11813
    %v11858 = vpack.c.b16 %v11818, %v11814
    %v11859 = vpack.c.b16 %v11819, %v11815
    %v11860 = vpack.c.b16 %v11820, %v11816
    %v11861 = vpack.c.b16 %v11825, %v11821
    %v11862 = vpack.c.b16 %v11826, %v11822
    %v11863 = vpack.c.b16 %v11827, %v11823
    %v11864 = vpack.c.b16 %v11828, %v11824
    %v11865 = vpack.c.b16 %v11833, %v11829
    %v11866 = vpack.c.b16 %v11834, %v11830
    %v11867 = vpack.c.b16 %v11835, %v11831
    %v11868 = vpack.c.b16 %v11836, %v11832
    %11901 = vmatprep.subr.bf16.mxu0 %v11866
    %11902 = vmatpush1.bf16.msra.mxu0 %v11865
    %11903 = vmatprep.subr.bf16.mxu0 %v11862
    %11904 = vmatpush1.bf16.msra.mxu0 %v11861
    %11905 = vmatprep.subr.bf16.mxu0 %v11858
    %11906 = vmatpush1.bf16.msra.mxu0 %v11857
    %11907 = vmatprep.subr.bf16.mxu0 %v11854
    %11908 = vmatpush1.bf16.msra.mxu0 %v11853
    %11909 = vmatprep.subr.bf16.mxu0 %v11850
    %11910 = vmatpush1.bf16.msra.mxu0 %v11849
    %11911 = vmatprep.subr.bf16.mxu0 %v11846
    %11912 = vmatpush1.bf16.msra.mxu0 %v11845
    %11913 = vmatprep.subr.bf16.mxu0 %v11842
    %11914 = vmatpush1.bf16.msra.mxu0 %v11841
    %11915 = vmatprep.subr.bf16.mxu0 %v11838
    %11916 = vmatpush1.bf16.msra.mxu0 %v11837
    %11917 = vmatprep.subr.bf16.mxu0 0
    %11918 = vmatpush2.bf16.msra.mxu0 0
    %11919 = vmatprep.subr.bf16.mxu0 0
    %11920 = vmatpush2.bf16.msra.mxu0 0
    %11921 = vmatprep.subr.bf16.mxu0 0
    %11922 = vmatpush2.bf16.msra.mxu0 0
    %11923 = vmatprep.subr.bf16.mxu0 0
    %11924 = vmatpush2.bf16.msra.mxu0 0
    %11925 = vmatprep.subr.bf16.mxu0 0
    %11926 = vmatpush2.bf16.msra.mxu0 0
    %11927 = vmatprep.subr.bf16.mxu0 0
    %11928 = vmatpush2.bf16.msra.mxu0 0
    %11929 = vmatprep.subr.bf16.mxu0 0
    %11930 = vmatpush2.bf16.msra.mxu0 0
    %11931 = vmatprep.subr.bf16.mxu0 0
    %11932 = vmatpush2.bf16.msra.mxu0 0
    %11933 = vmatprep.mubr.bf16.mxu0 0
    %11934 = vmatmul.mubr.bf16.gmra.mxu0 %v11740
    %v11935 = vpop.f32.mrf.mxu0
    %v11936 = vadd.f32 0.0, %v11935
    %v11937 = vpop.f32.mrf.mxu0
    %v11938 = vadd.f32 0.0, %v11937
    %v11939 = vpop.f32.mrf.mxu0
    %v11940 = vpop.f32.mrf.mxu0
    %11941 = vdwg.mxu0
    %11942 = vmatprep.subr.bf16.mxu0 %v11868
    %11943 = vmatpush1.bf16.msra.mxu0 %v11867
    %11944 = vmatprep.subr.bf16.mxu0 %v11864
    %11945 = vmatpush1.bf16.msra.mxu0 %v11863
    %11946 = vmatprep.subr.bf16.mxu0 %v11860
    %11947 = vmatpush1.bf16.msra.mxu0 %v11859
    %11948 = vmatprep.subr.bf16.mxu0 %v11856
    %11949 = vmatpush1.bf16.msra.mxu0 %v11855
    %11950 = vmatprep.subr.bf16.mxu0 %v11852
    %11951 = vmatpush1.bf16.msra.mxu0 %v11851
    %11952 = vmatprep.subr.bf16.mxu0 %v11848
    %11953 = vmatpush1.bf16.msra.mxu0 %v11847
    %11954 = vmatprep.subr.bf16.mxu0 %v11844
    %11955 = vmatpush1.bf16.msra.mxu0 %v11843
    %11956 = vmatprep.subr.bf16.mxu0 %v11840
    %11957 = vmatpush1.bf16.msra.mxu0 %v11839
    %11958 = vmatprep.subr.bf16.mxu0 0
    %11959 = vmatpush2.bf16.msra.mxu0 0
    %11960 = vmatprep.subr.bf16.mxu0 0
    %11961 = vmatpush2.bf16.msra.mxu0 0
    %11962 = vmatprep.subr.bf16.mxu0 0
    %11963 = vmatpush2.bf16.msra.mxu0 0
    %11964 = vmatprep.subr.bf16.mxu0 0
    %11965 = vmatpush2.bf16.msra.mxu0 0
    %11966 = vmatprep.subr.bf16.mxu0 0
    %11967 = vmatpush2.bf16.msra.mxu0 0
    %11968 = vmatprep.subr.bf16.mxu0 0
    %11969 = vmatpush2.bf16.msra.mxu0 0
    %11970 = vmatprep.subr.bf16.mxu0 0
    %11971 = vmatpush2.bf16.msra.mxu0 0
    %11972 = vmatprep.subr.bf16.mxu0 0
    %11973 = vmatpush2.bf16.msra.mxu0 0
    %11974 = vmatprep.mubr.bf16.mxu0 0
    %11975 = vmatmul.mubr.bf16.gmra.mxu0 %v11740
    %v11976 = vpop.f32.mrf.mxu0
    %v11977 = vadd.f32 0.0, %v11976
    %v11978 = vpop.f32.mrf.mxu0
    %v11979 = vadd.f32 0.0, %v11978
    %v11980 = vpop.f32.mrf.mxu0
    %v11981 = vpop.f32.mrf.mxu0
    %11982 = vdwg.mxu0
    %v11983 = vadd.f32 %v11658, %v11936
    %v11984 = vadd.f32 %v11659, %v11938
    %v11985 = vadd.f32 %v11660, %v11977
    %v11986 = vadd.f32 %v11661, %v11979
    %v11987 = vld [vmem:[%s18] sm:$0x7]
    %11989 = vset.pattern.permute.xlu0 0
    %11990 = vperm.xlu0 %11989, %v11987
    %v11991 = vpop.permute.xlu0 %11990
    %v11993 = vadd.f32 %v11983, %v11991
    %v11994 = vadd.f32 %v11984, %v11991
    %v11995 = vadd.f32 %v11985, %v11991
    %v11996 = vadd.f32 %v11986, %v11991
    %v11997 = vtanh.pop %v11993
    %v11998 = vtanh.pop %v11994
    %v11999 = vtanh.pop %v11995
    %v12000 = vtanh.pop %v11996
    %v12005 = vcombine.low %v11997, %v11998
    %v12006 = vcombine.low %v11999, %v12000
    %12009 = vst [vmem:[%s20] sm:$0x77] %v12005
    %12010 = vst [vmem:[%s20 + $0x8] sm:$0x77] %v12006
    // Predicated region
    $region110: #{_forward_impl.1} parent=1 // pred_check
      _
    $region111: #{_forward_impl.1} parent=1 // pred_check_branch
      %12012 = sbr.rel (0) target = $region113
    $region112: #{_forward_impl.1} parent=1 // pred_region
      _
    $region113: #{_forward_impl.1} parent=1 // pred_fallthru
      _
    // Predicated region
    $region114: #{_forward_impl.1} parent=1 // pred_check
      _
    $region115: #{_forward_impl.1} parent=1 // pred_check_branch
      %12014 = sbr.rel (0) target = $region117
    $region116: #{_forward_impl.1} parent=1 // pred_region
      _
    $region117: #{_forward_impl.1} parent=1 // pred_fallthru
      _
    // Predicated region
    $region118: #{_forward_impl.1} parent=1 // pred_check
      _
    $region119: #{_forward_impl.1} parent=1 // pred_check_branch
      %12016 = sbr.rel (0) target = $region121
    $region120: #{_forward_impl.1} parent=1 // pred_region
      _
    $region121: #{_forward_impl.1} parent=1 // pred_fallthru
      _
    // Predicated region
    $region122: #{_forward_impl.1} parent=1 // pred_check
      _
    $region123: #{_forward_impl.1} parent=1 // pred_check_branch
      %12018 = sbr.rel (0) target = $region125
    $region124: #{_forward_impl.1} parent=1 // pred_region
      _
    $region125: #{_forward_impl.1} parent=1 // pred_fallthru
      _
    %12019 = vsyncpa [#allocation3], 1
    %12020 = vsyncpa [#allocation5], 1
    %12021 = vsyncpa [#allocation8], 1
    %12022 = vsyncpa [#allocation11], 1
    %12023 = vsyncpa [#allocation14], 1

</llo_original>
